<compile_context>
chip_gen: v7x
topology: tpu7x:2x2x1
jax: 0.10.0
libtpu: 0.0.40
codegen_flags: <defaults>
</compile_context>

<pallas_src>
import functools

import jax
import jax.numpy as jnp
from jax.experimental import pallas as pl
from jax.experimental.pallas import tpu as pltpu


_LANE = 128                      # channel padding target (TPU lane width)
_VMEM_BUDGET = 18 * 1024 * 1024  # per-step working-set budget (safe on v5e/v6e/v7x)


def _round_up(a, b):
    return (a + b - 1) // b * b


def _pick_row_tile(H, Wp, CPI, CPO):
    """Largest output-row tile whose (double-buffered) working set fits the budget."""
    best = 8
    cap = max(_round_up(H, 8), 8)
    for th in (8, 16, 24, 32, 48, 64):
        if th > cap:
            break
        x_b = (th + 8) * Wp * CPI * 4 * 2                       # f32 input tile, 2 bufs
        y_b = (th + 4) * Wp * CPO * 4                           # f32 y1 scratch
        o_b = th * Wp * CPO * 4 * 2                             # f32 output tile, 2 bufs
        m_b = (th + 4) * Wp * 4 * 2                             # f32 mask, 2 bufs
        w_b = (9 * CPI * CPO + 9 * CPO * CPO + CPI * CPO) * 2 * 2  # bf16 weights, 2 bufs
        s_b = 4 * CPO * 4 * 2
        if x_b + y_b + o_b + m_b + w_b + s_b <= _VMEM_BUDGET:
            best = th
    return best


# ----------------------------- Pallas kernel ------------------------------- #

def _resblock_kernel(x_ref, m_ref, w1_ref, w2_ref, wsk_ref,
                     s1_ref, b1_ref, s2_ref, b2_ref, o_ref, ybuf,
                     *, Wp, R_Y1, R_OUT):
    bf16 = jnp.bfloat16

    # ---- conv1: 3x3 SAME conv as 9 shifted (rows, Cin) x (Cin, Cout) MXU matmuls ----
    acc1 = None
    for dy in range(3):
        for dx in range(3):
            off = (dy - 1) * Wp + (dx - 1)                     # static flat offset
            xs = x_ref[pl.ds(2 * Wp + off, R_Y1), :].astype(bf16)
            d = jnp.dot(xs, w1_ref[dy * 3 + dx], preferred_element_type=jnp.float32)
            acc1 = d if acc1 is None else acc1 + d
    # folded conv-bias + BN(eval) scale/shift, ReLU; zero everything outside the real
    # image (rows beyond H, W-padding columns) so conv2 sees proper SAME padding.
    y1 = jnp.maximum(acc1 * s1_ref[...] + b1_ref[...], 0.0) * m_ref[...]
    ybuf[...] = y1

    # ---- conv2: 3x3 SAME conv over y1 + 1x1 skip conv from the same resident x tile ----
    acc2 = None
    for dy in range(3):
        for dx in range(3):
            off = (dy - 1) * Wp + (dx - 1)
            ys = ybuf[pl.ds(2 * Wp + off, R_OUT), :].astype(bf16)
            d = jnp.dot(ys, w2_ref[dy * 3 + dx], preferred_element_type=jnp.float32)
            acc2 = d if acc2 is None else acc2 + d
    skip = jnp.dot(x_ref[pl.ds(4 * Wp, R_OUT), :].astype(bf16), wsk_ref[...],
                   preferred_element_type=jnp.float32)
    out = jnp.maximum(acc2 * s2_ref[...] + skip + b2_ref[...], 0.0)
    # TODO(synk): nn.Dropout(p=0.25) is identity at inference; training-mode random
    # masking (pltpu.prng_seed / prng_random_bits) is not implemented here.
    o_ref[...] = out.astype(o_ref.dtype)


# ------------------------------ JAX wrapper --------------------------------- #

@jax.jit
def resblock_forward(x_nchw, params):
    """ResBlock forward (eval mode: BN uses running stats, Dropout = identity)."""
    N, Cin, H, W = x_nchw.shape
    Cout = params["w1"].shape[-1]

    Wp = _round_up(W + 2, 8)              # zero col each side, row width multiple of 8
    CPI = _round_up(max(Cin, _LANE), _LANE)
    CPO = _round_up(max(Cout, _LANE), _LANE)
    TH = _pick_row_tile(H, Wp, CPI, CPO)  # adaptive output-row tile
    n_tiles = -(-H // TH)
    H_pad = n_tiles * TH
    R_IN = (TH + 8) * Wp                  # rows per input tile  (4-row halo each side)
    R_Y1 = (TH + 4) * Wp                  # rows of y1 computed  (2-row halo each side)
    R_OUT = TH * Wp                       # rows per output tile

    # activations: NCHW -> NHWC, zero-pad H/W/C, cut into overlapping row tiles
    x = jnp.transpose(x_nchw, (0, 2, 3, 1)).astype(jnp.float32)
    xg = jnp.zeros((N, H_pad + 8, Wp, CPI), jnp.float32)
    xg = xg.at[:, 4:4 + H, 1:1 + W, :Cin].set(x)
    tiles = jnp.stack([xg[:, t * TH:t * TH + TH + 8] for t in range(n_tiles)], axis=1)
    x_flat = tiles.reshape(N * n_tiles * R_IN, CPI)

    # per-row-tile validity mask for y1 (depends only on the tile index t)
    t_idx = jnp.arange(n_tiles, dtype=jnp.int32)[:, None, None]
    r_idx = jnp.arange(TH + 4, dtype=jnp.int32)[None, :, None]
    c_idx = jnp.arange(Wp, dtype=jnp.int32)[None, None, :]
    img_r = t_idx * TH + r_idx - 2
    valid = (img_r >= 0) & (img_r < H) & (c_idx >= 1) & (c_idx <= W)
    y1_mask = valid.astype(jnp.float32).reshape(n_tiles * R_Y1, 1)

    # weights: pad to lane-dense 128-channel blocks, bf16 for the MXU
    w1 = jnp.zeros((3, 3, CPI, CPO), jnp.bfloat16)
    w1 = w1.at[:, :, :Cin, :Cout].set(params["w1"].astype(jnp.bfloat16))
    w1 = w1.reshape(9, CPI, CPO)
    w2 = jnp.zeros((3, 3, CPO, CPO), jnp.bfloat16)
    w2 = w2.at[:, :, :Cout, :Cout].set(params["w2"].astype(jnp.bfloat16))
    w2 = w2.reshape(9, CPO, CPO)
    wsk = jnp.zeros((CPI, CPO), jnp.bfloat16)
    wsk = wsk.at[:Cin, :Cout].set(params["wsk"].astype(jnp.bfloat16))

    # fold conv bias + BN(eval) into one scale/shift; fold skip bias into shift2
    s1 = params["s1"]
    s2 = params["s2"]
    beta1 = params["b1"] * s1 + params["bn_b1"]
    beta2 = params["b2"] * s2 + params["bn_b2"] + params["bsk"]

    def pad_param(p):
        return jnp.zeros((1, CPO), jnp.float32).at[:, :Cout].set(p.astype(jnp.float32))

    s1p, b1p, s2p, b2p = pad_param(s1), pad_param(beta1), pad_param(s2), pad_param(beta2)

    kern = functools.partial(_resblock_kernel, Wp=Wp, R_Y1=R_Y1, R_OUT=R_OUT)
    out_flat = pl.pallas_call(
        kern,
        out_shape=jax.ShapeDtypeStruct((N * n_tiles * R_OUT, CPO), jnp.float32),
        grid_spec=pltpu.PrefetchScalarGridSpec(
            num_scalar_prefetch=0,
            grid=(N, n_tiles),
            in_specs=[
                pl.BlockSpec((R_IN, CPI), lambda n, t: (n * n_tiles + t, 0)),
                pl.BlockSpec((R_Y1, 1), lambda n, t: (t, 0)),
                pl.BlockSpec((9, CPI, CPO), lambda n, t: (0, 0, 0)),
                pl.BlockSpec((9, CPO, CPO), lambda n, t: (0, 0, 0)),
                pl.BlockSpec((CPI, CPO), lambda n, t: (0, 0)),
                pl.BlockSpec((1, CPO), lambda n, t: (0, 0)),
                pl.BlockSpec((1, CPO), lambda n, t: (0, 0)),
                pl.BlockSpec((1, CPO), lambda n, t: (0, 0)),
                pl.BlockSpec((1, CPO), lambda n, t: (0, 0)),
            ],
            out_specs=pl.BlockSpec((R_OUT, CPO), lambda n, t: (n * n_tiles + t, 0)),
            scratch_shapes=[pltpu.VMEM((R_Y1, CPO), jnp.float32)],
        ),
        compiler_params=pltpu.CompilerParams(
            dimension_semantics=("parallel", "parallel"),
            vmem_limit_bytes=32 * 1024 * 1024,
        ),
    )(x_flat, y1_mask, w1, w2, wsk, s1p, b1p, s2p, b2p)

    out = out_flat.reshape(N, H_pad, Wp, CPO)[:, :H, 1:1 + W, :Cout]
    return jnp.transpose(out, (0, 3, 1, 2))                 # NHWC -> NCHW


# --------------------------- parameter init -------------------------------- #

def init_params(key, in_count, out_count):
    k1, k2, k3, kb1, kb2, kb3 = jax.random.split(key, 6)
    # kaiming_normal_(mode='fan_out', nonlinearity='relu'): std = sqrt(2 / (Cout*kH*kW))
    std3 = (2.0 / (out_count * 9)) ** 0.5
    std1 = (2.0 / (out_count * 1)) ** 0.5
    w1 = jax.random.normal(k1, (3, 3, in_count, out_count), jnp.float32) * std3   # HWIO
    w2 = jax.random.normal(k2, (3, 3, out_count, out_count), jnp.float32) * std3
    wsk = jax.random.normal(k3, (in_count, out_count), jnp.float32) * std1        # 1x1
    # PyTorch default conv bias init: U(-1/sqrt(fan_in), 1/sqrt(fan_in))
    bnd1, bnd2, bnds = (in_count * 9) ** -0.5, (out_count * 9) ** -0.5, in_count ** -0.5
    b1 = jax.random.uniform(kb1, (1, out_count), jnp.float32, -bnd1, bnd1)
    b2 = jax.random.uniform(kb2, (1, out_count), jnp.float32, -bnd2, bnd2)
    bsk = jax.random.uniform(kb3, (1, out_count), jnp.float32, -bnds, bnds)
    # BatchNorm2d at init, eval mode: gamma=1, beta=0, running_mean=0, running_var=1
    eps = 1e-5
    gamma = jnp.ones((1, out_count), jnp.float32)
    beta = jnp.zeros((1, out_count), jnp.float32)
    mean = jnp.zeros((1, out_count), jnp.float32)
    var = jnp.ones((1, out_count), jnp.float32)
    s = gamma / jnp.sqrt(var + eps)
    bshift = beta - mean * s
    return dict(w1=w1, b1=b1, s1=s, bn_b1=bshift,
                w2=w2, b2=b2, s2=s, bn_b2=bshift,
                wsk=wsk, bsk=bsk)


# --------------------------- pure-JAX reference ----------------------------- #

def _ref_forward(x_nchw, p):
    """Reference with the same bf16 operand quantization as the kernel (f32 accum)."""
    hi = jax.lax.Precision.HIGHEST
    q = lambda a: a.astype(jnp.bfloat16).astype(jnp.float32)
    x = q(jnp.transpose(x_nchw, (0, 2, 3, 1)))
    dn = ("NHWC", "HWIO", "NHWC")
    y = jax.lax.conv_general_dilated(x, q(p["w1"]), (1, 1), "SAME",
                                     dimension_numbers=dn, precision=hi)
    y = jnp.maximum(y * p["s1"] + (p["b1"] * p["s1"] + p["bn_b1"]), 0.0)
    enc = jax.lax.conv_general_dilated(q(y), q(p["w2"]), (1, 1), "SAME",
                                       dimension_numbers=dn, precision=hi)
    skip = jnp.einsum("nhwc,co->nhwo", x, q(p["wsk"]), precision=hi)
    out = jnp.maximum(enc * p["s2"] + skip +
                      (p["b2"] * p["s2"] + p["bn_b2"] + p["bsk"]), 0.0)
    return jnp.transpose(out, (0, 3, 1, 2))


if __name__ == "__main__":
    key = jax.random.PRNGKey(0)
    kx, kp = jax.random.split(key)
    N, Cin, Cout, H, W = 2, 4, 8, 16, 16
    x = jax.random.normal(kx, (N, Cin, H, W), jnp.float32)      # NCHW, like PyTorch
    params = init_params(kp, Cin, Cout)

    out = resblock_forward(x, params)
    out = jax.block_until_ready(out)

    assert out.shape == (N, Cout, H, W)
    ref = _ref_forward(x, params)
    err = float(jnp.max(jnp.abs(out - ref)))
    assert jnp.allclose(out, ref, atol=5e-3, rtol=5e-3), f"max abs err {err}"
    print("KERNEL_OK")
</pallas_src>

<mosaic_0001>
module attributes {stable_mosaic.version = 11 : i64} {
  func.func @_resblock_kernel(%arg0: i32, %arg1: i32, %arg2: memref<576x128xf32, #tpu.memory_space<vmem>>, %arg3: memref<480x1xf32, #tpu.memory_space<vmem>>, %arg4: memref<9x128x128xbf16, #tpu.memory_space<vmem>>, %arg5: memref<9x128x128xbf16, #tpu.memory_space<vmem>>, %arg6: memref<128x128xbf16, #tpu.memory_space<vmem>>, %arg7: memref<1x128xf32, #tpu.memory_space<vmem>>, %arg8: memref<1x128xf32, #tpu.memory_space<vmem>>, %arg9: memref<1x128xf32, #tpu.memory_space<vmem>>, %arg10: memref<1x128xf32, #tpu.memory_space<vmem>>, %arg11: memref<384x128xf32, #tpu.memory_space<vmem>>, %arg12: memref<480x128xf32, #tpu.memory_space<vmem>>) attributes {dimension_semantics = [#tpu.dimension_semantics<parallel>, #tpu.dimension_semantics<parallel>], iteration_bounds = array<i64: 2, 1>, scalar_prefetch = 0 : i64, scratch_operands = 1 : i64, tpu.core_type = #tpu.core_type<tc>, window_params = [{transform_indices = @transform_0, window_bounds = array<i64: 576, 128>}, {transform_indices = @transform_1, window_bounds = array<i64: 480, 1>}, {pipeline_mode = #tpu.pipeline_mode<synchronous>, transform_indices = @transform_2, window_bounds = array<i64: 9, 128, 128>}, {pipeline_mode = #tpu.pipeline_mode<synchronous>, transform_indices = @transform_3, window_bounds = array<i64: 9, 128, 128>}, {pipeline_mode = #tpu.pipeline_mode<synchronous>, transform_indices = @transform_4, window_bounds = array<i64: 128, 128>}, {pipeline_mode = #tpu.pipeline_mode<synchronous>, transform_indices = @transform_5, window_bounds = array<i64: 1, 128>}, {pipeline_mode = #tpu.pipeline_mode<synchronous>, transform_indices = @transform_6, window_bounds = array<i64: 1, 128>}, {pipeline_mode = #tpu.pipeline_mode<synchronous>, transform_indices = @transform_7, window_bounds = array<i64: 1, 128>}, {pipeline_mode = #tpu.pipeline_mode<synchronous>, transform_indices = @transform_8, window_bounds = array<i64: 1, 128>}, {transform_indices = @transform_9, window_bounds = array<i64: 384, 128>}]} {
    %c23 = arith.constant 23 : index
    %c0 = arith.constant 0 : index
    %0 = vector.load %arg2[%c23, %c0] : memref<576x128xf32, #tpu.memory_space<vmem>>, vector<480x128xf32>
    %1 = arith.truncf %0 : vector<480x128xf32> to vector<480x128xbf16>
    %c0_0 = arith.constant 0 : index
    %c0_1 = arith.constant 0 : index
    %c0_2 = arith.constant 0 : index
    %2 = vector.load %arg4[%c0_0, %c0_1, %c0_2] : memref<9x128x128xbf16, #tpu.memory_space<vmem>>, vector<1x128x128xbf16>
    %3 = vector.shape_cast %2 : vector<1x128x128xbf16> to vector<128x128xbf16>
    %cst = arith.constant dense<0.000000e+00> : vector<480x128xf32>
    %4 = tpu.matmul %1, %3, %cst {dimension_numbers = #tpu.dot_dimension_numbers<[1], [0], [0], [1], [0, 0, 1, 1], [], []>} : vector<480x128xbf16>, vector<128x128xbf16>, vector<480x128xf32> -> vector<480x128xf32>
    %c24 = arith.constant 24 : index
    %c0_3 = arith.constant 0 : index
    %5 = vector.load %arg2[%c24, %c0_3] : memref<576x128xf32, #tpu.memory_space<vmem>>, vector<480x128xf32>
    %6 = arith.truncf %5 : vector<480x128xf32> to vector<480x128xbf16>
    %c1 = arith.constant 1 : index
    %c0_4 = arith.constant 0 : index
    %c0_5 = arith.constant 0 : index
    %7 = vector.load %arg4[%c1, %c0_4, %c0_5] : memref<9x128x128xbf16, #tpu.memory_space<vmem>>, vector<1x128x128xbf16>
    %8 = vector.shape_cast %7 : vector<1x128x128xbf16> to vector<128x128xbf16>
    %cst_6 = arith.constant dense<0.000000e+00> : vector<480x128xf32>
    %9 = tpu.matmul %6, %8, %cst_6 {dimension_numbers = #tpu.dot_dimension_numbers<[1], [0], [0], [1], [0, 0, 1, 1], [], []>} : vector<480x128xbf16>, vector<128x128xbf16>, vector<480x128xf32> -> vector<480x128xf32>
    %10 = arith.addf %4, %9 : vector<480x128xf32>
    %c25 = arith.constant 25 : index
    %c0_7 = arith.constant 0 : index
    %11 = vector.load %arg2[%c25, %c0_7] : memref<576x128xf32, #tpu.memory_space<vmem>>, vector<480x128xf32>
    %12 = arith.truncf %11 : vector<480x128xf32> to vector<480x128xbf16>
    %c2 = arith.constant 2 : index
    %c0_8 = arith.constant 0 : index
    %c0_9 = arith.constant 0 : index
    %13 = vector.load %arg4[%c2, %c0_8, %c0_9] : memref<9x128x128xbf16, #tpu.memory_space<vmem>>, vector<1x128x128xbf16>
    %14 = vector.shape_cast %13 : vector<1x128x128xbf16> to vector<128x128xbf16>
    %cst_10 = arith.constant dense<0.000000e+00> : vector<480x128xf32>
    %15 = tpu.matmul %12, %14, %cst_10 {dimension_numbers = #tpu.dot_dimension_numbers<[1], [0], [0], [1], [0, 0, 1, 1], [], []>} : vector<480x128xbf16>, vector<128x128xbf16>, vector<480x128xf32> -> vector<480x128xf32>
    %16 = arith.addf %10, %15 : vector<480x128xf32>
    %c47 = arith.constant 47 : index
    %c0_11 = arith.constant 0 : index
    %17 = vector.load %arg2[%c47, %c0_11] : memref<576x128xf32, #tpu.memory_space<vmem>>, vector<480x128xf32>
    %18 = arith.truncf %17 : vector<480x128xf32> to vector<480x128xbf16>
    %c3 = arith.constant 3 : index
    %c0_12 = arith.constant 0 : index
    %c0_13 = arith.constant 0 : index
    %19 = vector.load %arg4[%c3, %c0_12, %c0_13] : memref<9x128x128xbf16, #tpu.memory_space<vmem>>, vector<1x128x128xbf16>
    %20 = vector.shape_cast %19 : vector<1x128x128xbf16> to vector<128x128xbf16>
    %cst_14 = arith.constant dense<0.000000e+00> : vector<480x128xf32>
    %21 = tpu.matmul %18, %20, %cst_14 {dimension_numbers = #tpu.dot_dimension_numbers<[1], [0], [0], [1], [0, 0, 1, 1], [], []>} : vector<480x128xbf16>, vector<128x128xbf16>, vector<480x128xf32> -> vector<480x128xf32>
    %22 = arith.addf %16, %21 : vector<480x128xf32>
    %c48 = arith.constant 48 : index
    %c0_15 = arith.constant 0 : index
    %23 = vector.load %arg2[%c48, %c0_15] : memref<576x128xf32, #tpu.memory_space<vmem>>, vector<480x128xf32>
    %24 = arith.truncf %23 : vector<480x128xf32> to vector<480x128xbf16>
    %c4 = arith.constant 4 : index
    %c0_16 = arith.constant 0 : index
    %c0_17 = arith.constant 0 : index
    %25 = vector.load %arg4[%c4, %c0_16, %c0_17] : memref<9x128x128xbf16, #tpu.memory_space<vmem>>, vector<1x128x128xbf16>
    %26 = vector.shape_cast %25 : vector<1x128x128xbf16> to vector<128x128xbf16>
    %cst_18 = arith.constant dense<0.000000e+00> : vector<480x128xf32>
    %27 = tpu.matmul %24, %26, %cst_18 {dimension_numbers = #tpu.dot_dimension_numbers<[1], [0], [0], [1], [0, 0, 1, 1], [], []>} : vector<480x128xbf16>, vector<128x128xbf16>, vector<480x128xf32> -> vector<480x128xf32>
    %28 = arith.addf %22, %27 : vector<480x128xf32>
    %c49 = arith.constant 49 : index
    %c0_19 = arith.constant 0 : index
    %29 = vector.load %arg2[%c49, %c0_19] : memref<576x128xf32, #tpu.memory_space<vmem>>, vector<480x128xf32>
    %30 = arith.truncf %29 : vector<480x128xf32> to vector<480x128xbf16>
    %c5 = arith.constant 5 : index
    %c0_20 = arith.constant 0 : index
    %c0_21 = arith.constant 0 : index
    %31 = vector.load %arg4[%c5, %c0_20, %c0_21] : memref<9x128x128xbf16, #tpu.memory_space<vmem>>, vector<1x128x128xbf16>
    %32 = vector.shape_cast %31 : vector<1x128x128xbf16> to vector<128x128xbf16>
    %cst_22 = arith.constant dense<0.000000e+00> : vector<480x128xf32>
    %33 = tpu.matmul %30, %32, %cst_22 {dimension_numbers = #tpu.dot_dimension_numbers<[1], [0], [0], [1], [0, 0, 1, 1], [], []>} : vector<480x128xbf16>, vector<128x128xbf16>, vector<480x128xf32> -> vector<480x128xf32>
    %34 = arith.addf %28, %33 : vector<480x128xf32>
    %c71 = arith.constant 71 : index
    %c0_23 = arith.constant 0 : index
    %35 = vector.load %arg2[%c71, %c0_23] : memref<576x128xf32, #tpu.memory_space<vmem>>, vector<480x128xf32>
    %36 = arith.truncf %35 : vector<480x128xf32> to vector<480x128xbf16>
    %c6 = arith.constant 6 : index
    %c0_24 = arith.constant 0 : index
    %c0_25 = arith.constant 0 : index
    %37 = vector.load %arg4[%c6, %c0_24, %c0_25] : memref<9x128x128xbf16, #tpu.memory_space<vmem>>, vector<1x128x128xbf16>
    %38 = vector.shape_cast %37 : vector<1x128x128xbf16> to vector<128x128xbf16>
    %cst_26 = arith.constant dense<0.000000e+00> : vector<480x128xf32>
    %39 = tpu.matmul %36, %38, %cst_26 {dimension_numbers = #tpu.dot_dimension_numbers<[1], [0], [0], [1], [0, 0, 1, 1], [], []>} : vector<480x128xbf16>, vector<128x128xbf16>, vector<480x128xf32> -> vector<480x128xf32>
    %40 = arith.addf %34, %39 : vector<480x128xf32>
    %c72 = arith.constant 72 : index
    %c0_27 = arith.constant 0 : index
    %41 = vector.load %arg2[%c72, %c0_27] : memref<576x128xf32, #tpu.memory_space<vmem>>, vector<480x128xf32>
    %42 = arith.truncf %41 : vector<480x128xf32> to vector<480x128xbf16>
    %c7 = arith.constant 7 : index
    %c0_28 = arith.constant 0 : index
    %c0_29 = arith.constant 0 : index
    %43 = vector.load %arg4[%c7, %c0_28, %c0_29] : memref<9x128x128xbf16, #tpu.memory_space<vmem>>, vector<1x128x128xbf16>
    %44 = vector.shape_cast %43 : vector<1x128x128xbf16> to vector<128x128xbf16>
    %cst_30 = arith.constant dense<0.000000e+00> : vector<480x128xf32>
    %45 = tpu.matmul %42, %44, %cst_30 {dimension_numbers = #tpu.dot_dimension_numbers<[1], [0], [0], [1], [0, 0, 1, 1], [], []>} : vector<480x128xbf16>, vector<128x128xbf16>, vector<480x128xf32> -> vector<480x128xf32>
    %46 = arith.addf %40, %45 : vector<480x128xf32>
    %c73 = arith.constant 73 : index
    %c0_31 = arith.constant 0 : index
    %47 = vector.load %arg2[%c73, %c0_31] : memref<576x128xf32, #tpu.memory_space<vmem>>, vector<480x128xf32>
    %48 = arith.truncf %47 : vector<480x128xf32> to vector<480x128xbf16>
    %c8 = arith.constant 8 : index
    %c0_32 = arith.constant 0 : index
    %c0_33 = arith.constant 0 : index
    %49 = vector.load %arg4[%c8, %c0_32, %c0_33] : memref<9x128x128xbf16, #tpu.memory_space<vmem>>, vector<1x128x128xbf16>
    %50 = vector.shape_cast %49 : vector<1x128x128xbf16> to vector<128x128xbf16>
    %cst_34 = arith.constant dense<0.000000e+00> : vector<480x128xf32>
    %51 = tpu.matmul %48, %50, %cst_34 {dimension_numbers = #tpu.dot_dimension_numbers<[1], [0], [0], [1], [0, 0, 1, 1], [], []>} : vector<480x128xbf16>, vector<128x128xbf16>, vector<480x128xf32> -> vector<480x128xf32>
    %52 = arith.addf %46, %51 : vector<480x128xf32>
    %c0_35 = arith.constant 0 : index
    %c0_36 = arith.constant 0 : index
    %53 = vector.load %arg7[%c0_35, %c0_36] : memref<1x128xf32, #tpu.memory_space<vmem>>, vector<1x128xf32>
    %54 = vector.broadcast %53 : vector<1x128xf32> to vector<480x128xf32>
    %55 = arith.mulf %52, %54 : vector<480x128xf32>
    %c0_37 = arith.constant 0 : index
    %c0_38 = arith.constant 0 : index
    %56 = vector.load %arg8[%c0_37, %c0_38] : memref<1x128xf32, #tpu.memory_space<vmem>>, vector<1x128xf32>
    %57 = vector.broadcast %56 : vector<1x128xf32> to vector<480x128xf32>
    %58 = arith.addf %55, %57 : vector<480x128xf32>
    %cst_39 = arith.constant 0.000000e+00 : f32
    %59 = vector.broadcast %cst_39 : f32 to vector<480x128xf32>
    %60 = arith.maximumf %58, %59 : vector<480x128xf32>
    %c0_40 = arith.constant 0 : index
    %c0_41 = arith.constant 0 : index
    %61 = vector.load %arg3[%c0_40, %c0_41] : memref<480x1xf32, #tpu.memory_space<vmem>>, vector<480x1xf32>
    %62 = vector.broadcast %61 : vector<480x1xf32> to vector<480x128xf32>
    %63 = arith.mulf %60, %62 : vector<480x128xf32>
    %c0_42 = arith.constant 0 : index
    %c0_43 = arith.constant 0 : index
    %64 = vector.load %arg12[%c0_42, %c0_43] : memref<480x128xf32, #tpu.memory_space<vmem>>, vector<480x128xf32>
    tpu.vector_store %arg12[%c0_42, %c0_43], %63 {strides = array<i32>} : memref<480x128xf32, #tpu.memory_space<vmem>>, vector<480x128xf32>,
    %c23_44 = arith.constant 23 : index
    %c0_45 = arith.constant 0 : index
    %65 = vector.load %arg12[%c23_44, %c0_45] : memref<480x128xf32, #tpu.memory_space<vmem>>, vector<384x128xf32>
    %66 = arith.truncf %65 : vector<384x128xf32> to vector<384x128xbf16>
    %c0_46 = arith.constant 0 : index
    %c0_47 = arith.constant 0 : index
    %c0_48 = arith.constant 0 : index
    %67 = vector.load %arg5[%c0_46, %c0_47, %c0_48] : memref<9x128x128xbf16, #tpu.memory_space<vmem>>, vector<1x128x128xbf16>
    %68 = vector.shape_cast %67 : vector<1x128x128xbf16> to vector<128x128xbf16>
    %cst_49 = arith.constant dense<0.000000e+00> : vector<384x128xf32>
    %69 = tpu.matmul %66, %68, %cst_49 {dimension_numbers = #tpu.dot_dimension_numbers<[1], [0], [0], [1], [0, 0, 1, 1], [], []>} : vector<384x128xbf16>, vector<128x128xbf16>, vector<384x128xf32> -> vector<384x128xf32>
    %c24_50 = arith.constant 24 : index
    %c0_51 = arith.constant 0 : index
    %70 = vector.load %arg12[%c24_50, %c0_51] : memref<480x128xf32, #tpu.memory_space<vmem>>, vector<384x128xf32>
    %71 = arith.truncf %70 : vector<384x128xf32> to vector<384x128xbf16>
    %c1_52 = arith.constant 1 : index
    %c0_53 = arith.constant 0 : index
    %c0_54 = arith.constant 0 : index
    %72 = vector.load %arg5[%c1_52, %c0_53, %c0_54] : memref<9x128x128xbf16, #tpu.memory_space<vmem>>, vector<1x128x128xbf16>
    %73 = vector.shape_cast %72 : vector<1x128x128xbf16> to vector<128x128xbf16>
    %cst_55 = arith.constant dense<0.000000e+00> : vector<384x128xf32>
    %74 = tpu.matmul %71, %73, %cst_55 {dimension_numbers = #tpu.dot_dimension_numbers<[1], [0], [0], [1], [0, 0, 1, 1], [], []>} : vector<384x128xbf16>, vector<128x128xbf16>, vector<384x128xf32> -> vector<384x128xf32>
    %75 = arith.addf %69, %74 : vector<384x128xf32>
    %c25_56 = arith.constant 25 : index
    %c0_57 = arith.constant 0 : index
    %76 = vector.load %arg12[%c25_56, %c0_57] : memref<480x128xf32, #tpu.memory_space<vmem>>, vector<384x128xf32>
    %77 = arith.truncf %76 : vector<384x128xf32> to vector<384x128xbf16>
    %c2_58 = arith.constant 2 : index
    %c0_59 = arith.constant 0 : index
    %c0_60 = arith.constant 0 : index
    %78 = vector.load %arg5[%c2_58, %c0_59, %c0_60] : memref<9x128x128xbf16, #tpu.memory_space<vmem>>, vector<1x128x128xbf16>
    %79 = vector.shape_cast %78 : vector<1x128x128xbf16> to vector<128x128xbf16>
    %cst_61 = arith.constant dense<0.000000e+00> : vector<384x128xf32>
    %80 = tpu.matmul %77, %79, %cst_61 {dimension_numbers = #tpu.dot_dimension_numbers<[1], [0], [0], [1], [0, 0, 1, 1], [], []>} : vector<384x128xbf16>, vector<128x128xbf16>, vector<384x128xf32> -> vector<384x128xf32>
    %81 = arith.addf %75, %80 : vector<384x128xf32>
    %c47_62 = arith.constant 47 : index
    %c0_63 = arith.constant 0 : index
    %82 = vector.load %arg12[%c47_62, %c0_63] : memref<480x128xf32, #tpu.memory_space<vmem>>, vector<384x128xf32>
    %83 = arith.truncf %82 : vector<384x128xf32> to vector<384x128xbf16>
    %c3_64 = arith.constant 3 : index
    %c0_65 = arith.constant 0 : index
    %c0_66 = arith.constant 0 : index
    %84 = vector.load %arg5[%c3_64, %c0_65, %c0_66] : memref<9x128x128xbf16, #tpu.memory_space<vmem>>, vector<1x128x128xbf16>
    %85 = vector.shape_cast %84 : vector<1x128x128xbf16> to vector<128x128xbf16>
    %cst_67 = arith.constant dense<0.000000e+00> : vector<384x128xf32>
    %86 = tpu.matmul %83, %85, %cst_67 {dimension_numbers = #tpu.dot_dimension_numbers<[1], [0], [0], [1], [0, 0, 1, 1], [], []>} : vector<384x128xbf16>, vector<128x128xbf16>, vector<384x128xf32> -> vector<384x128xf32>
    %87 = arith.addf %81, %86 : vector<384x128xf32>
    %c48_68 = arith.constant 48 : index
    %c0_69 = arith.constant 0 : index
    %88 = vector.load %arg12[%c48_68, %c0_69] : memref<480x128xf32, #tpu.memory_space<vmem>>, vector<384x128xf32>
    %89 = arith.truncf %88 : vector<384x128xf32> to vector<384x128xbf16>
    %c4_70 = arith.constant 4 : index
    %c0_71 = arith.constant 0 : index
    %c0_72 = arith.constant 0 : index
    %90 = vector.load %arg5[%c4_70, %c0_71, %c0_72] : memref<9x128x128xbf16, #tpu.memory_space<vmem>>, vector<1x128x128xbf16>
    %91 = vector.shape_cast %90 : vector<1x128x128xbf16> to vector<128x128xbf16>
    %cst_73 = arith.constant dense<0.000000e+00> : vector<384x128xf32>
    %92 = tpu.matmul %89, %91, %cst_73 {dimension_numbers = #tpu.dot_dimension_numbers<[1], [0], [0], [1], [0, 0, 1, 1], [], []>} : vector<384x128xbf16>, vector<128x128xbf16>, vector<384x128xf32> -> vector<384x128xf32>
    %93 = arith.addf %87, %92 : vector<384x128xf32>
    %c49_74 = arith.constant 49 : index
    %c0_75 = arith.constant 0 : index
    %94 = vector.load %arg12[%c49_74, %c0_75] : memref<480x128xf32, #tpu.memory_space<vmem>>, vector<384x128xf32>
    %95 = arith.truncf %94 : vector<384x128xf32> to vector<384x128xbf16>
    %c5_76 = arith.constant 5 : index
    %c0_77 = arith.constant 0 : index
    %c0_78 = arith.constant 0 : index
    %96 = vector.load %arg5[%c5_76, %c0_77, %c0_78] : memref<9x128x128xbf16, #tpu.memory_space<vmem>>, vector<1x128x128xbf16>
    %97 = vector.shape_cast %96 : vector<1x128x128xbf16> to vector<128x128xbf16>
    %cst_79 = arith.constant dense<0.000000e+00> : vector<384x128xf32>
    %98 = tpu.matmul %95, %97, %cst_79 {dimension_numbers = #tpu.dot_dimension_numbers<[1], [0], [0], [1], [0, 0, 1, 1], [], []>} : vector<384x128xbf16>, vector<128x128xbf16>, vector<384x128xf32> -> vector<384x128xf32>
    %99 = arith.addf %93, %98 : vector<384x128xf32>
    %c71_80 = arith.constant 71 : index
    %c0_81 = arith.constant 0 : index
    %100 = vector.load %arg12[%c71_80, %c0_81] : memref<480x128xf32, #tpu.memory_space<vmem>>, vector<384x128xf32>
    %101 = arith.truncf %100 : vector<384x128xf32> to vector<384x128xbf16>
    %c6_82 = arith.constant 6 : index
    %c0_83 = arith.constant 0 : index
    %c0_84 = arith.constant 0 : index
    %102 = vector.load %arg5[%c6_82, %c0_83, %c0_84] : memref<9x128x128xbf16, #tpu.memory_space<vmem>>, vector<1x128x128xbf16>
    %103 = vector.shape_cast %102 : vector<1x128x128xbf16> to vector<128x128xbf16>
    %cst_85 = arith.constant dense<0.000000e+00> : vector<384x128xf32>
    %104 = tpu.matmul %101, %103, %cst_85 {dimension_numbers = #tpu.dot_dimension_numbers<[1], [0], [0], [1], [0, 0, 1, 1], [], []>} : vector<384x128xbf16>, vector<128x128xbf16>, vector<384x128xf32> -> vector<384x128xf32>
    %105 = arith.addf %99, %104 : vector<384x128xf32>
    %c72_86 = arith.constant 72 : index
    %c0_87 = arith.constant 0 : index
    %106 = vector.load %arg12[%c72_86, %c0_87] : memref<480x128xf32, #tpu.memory_space<vmem>>, vector<384x128xf32>
    %107 = arith.truncf %106 : vector<384x128xf32> to vector<384x128xbf16>
    %c7_88 = arith.constant 7 : index
    %c0_89 = arith.constant 0 : index
    %c0_90 = arith.constant 0 : index
    %108 = vector.load %arg5[%c7_88, %c0_89, %c0_90] : memref<9x128x128xbf16, #tpu.memory_space<vmem>>, vector<1x128x128xbf16>
    %109 = vector.shape_cast %108 : vector<1x128x128xbf16> to vector<128x128xbf16>
    %cst_91 = arith.constant dense<0.000000e+00> : vector<384x128xf32>
    %110 = tpu.matmul %107, %109, %cst_91 {dimension_numbers = #tpu.dot_dimension_numbers<[1], [0], [0], [1], [0, 0, 1, 1], [], []>} : vector<384x128xbf16>, vector<128x128xbf16>, vector<384x128xf32> -> vector<384x128xf32>
    %111 = arith.addf %105, %110 : vector<384x128xf32>
    %c73_92 = arith.constant 73 : index
    %c0_93 = arith.constant 0 : index
    %112 = vector.load %arg12[%c73_92, %c0_93] : memref<480x128xf32, #tpu.memory_space<vmem>>, vector<384x128xf32>
    %113 = arith.truncf %112 : vector<384x128xf32> to vector<384x128xbf16>
    %c8_94 = arith.constant 8 : index
    %c0_95 = arith.constant 0 : index
    %c0_96 = arith.constant 0 : index
    %114 = vector.load %arg5[%c8_94, %c0_95, %c0_96] : memref<9x128x128xbf16, #tpu.memory_space<vmem>>, vector<1x128x128xbf16>
    %115 = vector.shape_cast %114 : vector<1x128x128xbf16> to vector<128x128xbf16>
    %cst_97 = arith.constant dense<0.000000e+00> : vector<384x128xf32>
    %116 = tpu.matmul %113, %115, %cst_97 {dimension_numbers = #tpu.dot_dimension_numbers<[1], [0], [0], [1], [0, 0, 1, 1], [], []>} : vector<384x128xbf16>, vector<128x128xbf16>, vector<384x128xf32> -> vector<384x128xf32>
    %117 = arith.addf %111, %116 : vector<384x128xf32>
    %c96 = arith.constant 96 : index
    %c0_98 = arith.constant 0 : index
    %118 = vector.load %arg2[%c96, %c0_98] : memref<576x128xf32, #tpu.memory_space<vmem>>, vector<384x128xf32>
    %119 = arith.truncf %118 : vector<384x128xf32> to vector<384x128xbf16>
    %c0_99 = arith.constant 0 : index
    %c0_100 = arith.constant 0 : index
    %120 = vector.load %arg6[%c0_99, %c0_100] : memref<128x128xbf16, #tpu.memory_space<vmem>>, vector<128x128xbf16>
    %cst_101 = arith.constant dense<0.000000e+00> : vector<384x128xf32>
    %121 = tpu.matmul %119, %120, %cst_101 {dimension_numbers = #tpu.dot_dimension_numbers<[1], [0], [0], [1], [0, 0, 1, 1], [], []>} : vector<384x128xbf16>, vector<128x128xbf16>, vector<384x128xf32> -> vector<384x128xf32>
    %c0_102 = arith.constant 0 : index
    %c0_103 = arith.constant 0 : index
    %122 = vector.load %arg9[%c0_102, %c0_103] : memref<1x128xf32, #tpu.memory_space<vmem>>, vector<1x128xf32>
    %123 = vector.broadcast %122 : vector<1x128xf32> to vector<384x128xf32>
    %124 = arith.mulf %117, %123 : vector<384x128xf32>
    %125 = arith.addf %124, %121 : vector<384x128xf32>
    %c0_104 = arith.constant 0 : index
    %c0_105 = arith.constant 0 : index
    %126 = vector.load %arg10[%c0_104, %c0_105] : memref<1x128xf32, #tpu.memory_space<vmem>>, vector<1x128xf32>
    %127 = vector.broadcast %126 : vector<1x128xf32> to vector<384x128xf32>
    %128 = arith.addf %125, %127 : vector<384x128xf32>
    %cst_106 = arith.constant 0.000000e+00 : f32
    %129 = vector.broadcast %cst_106 : f32 to vector<384x128xf32>
    %130 = arith.maximumf %128, %129 : vector<384x128xf32>
    %c0_107 = arith.constant 0 : index
    %c0_108 = arith.constant 0 : index
    %131 = vector.load %arg11[%c0_107, %c0_108] : memref<384x128xf32, #tpu.memory_space<vmem>>, vector<384x128xf32>
    tpu.vector_store %arg11[%c0_107, %c0_108], %130 {strides = array<i32>} : memref<384x128xf32, #tpu.memory_space<vmem>>, vector<384x128xf32>,
    return
  }
  func.func @transform_0(%arg0: i32, %arg1: i32) -> (i32, i32) {
    %c1_i32 = arith.constant 1 : i32
    %0 = arith.muli %arg0, %c1_i32 : i32
    %1 = arith.addi %0, %arg1 : i32
    %c0_i32 = arith.constant 0 : i32
    %c0_i32_0 = arith.constant 0 : i32
    return %1, %c0_i32 : i32, i32
  }
  func.func @transform_1(%arg0: i32, %arg1: i32) -> (i32, i32) {
    %c0_i32 = arith.constant 0 : i32
    %c0_i32_0 = arith.constant 0 : i32
    return %arg1, %c0_i32 : i32, i32
  }
  func.func @transform_2(%arg0: i32, %arg1: i32) -> (i32, i32, i32) {
    %c0_i32 = arith.constant 0 : i32
    %c0_i32_0 = arith.constant 0 : i32
    %c0_i32_1 = arith.constant 0 : i32
    %c0_i32_2 = arith.constant 0 : i32
    return %c0_i32, %c0_i32_0, %c0_i32_1 : i32, i32, i32
  }
  func.func @transform_3(%arg0: i32, %arg1: i32) -> (i32, i32, i32) {
    %c0_i32 = arith.constant 0 : i32
    %c0_i32_0 = arith.constant 0 : i32
    %c0_i32_1 = arith.constant 0 : i32
    %c0_i32_2 = arith.constant 0 : i32
    return %c0_i32, %c0_i32_0, %c0_i32_1 : i32, i32, i32
  }
  func.func @transform_4(%arg0: i32, %arg1: i32) -> (i32, i32) {
    %c0_i32 = arith.constant 0 : i32
    %c0_i32_0 = arith.constant 0 : i32
    %c0_i32_1 = arith.constant 0 : i32
    return %c0_i32, %c0_i32_0 : i32, i32
  }
  func.func @transform_5(%arg0: i32, %arg1: i32) -> (i32, i32) {
    %c0_i32 = arith.constant 0 : i32
    %c0_i32_0 = arith.constant 0 : i32
    %c0_i32_1 = arith.constant 0 : i32
    return %c0_i32, %c0_i32_0 : i32, i32
  }
  func.func @transform_6(%arg0: i32, %arg1: i32) -> (i32, i32) {
    %c0_i32 = arith.constant 0 : i32
    %c0_i32_0 = arith.constant 0 : i32
    %c0_i32_1 = arith.constant 0 : i32
    return %c0_i32, %c0_i32_0 : i32, i32
  }
  func.func @transform_7(%arg0: i32, %arg1: i32) -> (i32, i32) {
    %c0_i32 = arith.constant 0 : i32
    %c0_i32_0 = arith.constant 0 : i32
    %c0_i32_1 = arith.constant 0 : i32
    return %c0_i32, %c0_i32_0 : i32, i32
  }
  func.func @transform_8(%arg0: i32, %arg1: i32) -> (i32, i32) {
    %c0_i32 = arith.constant 0 : i32
    %c0_i32_0 = arith.constant 0 : i32
    %c0_i32_1 = arith.constant 0 : i32
    return %c0_i32, %c0_i32_0 : i32, i32
  }
  func.func @transform_9(%arg0: i32, %arg1: i32) -> (i32, i32) {
    %c1_i32 = arith.constant 1 : i32
    %0 = arith.muli %arg0, %c1_i32 : i32
    %1 = arith.addi %0, %arg1 : i32
    %c0_i32 = arith.constant 0 : i32
    %c0_i32_0 = arith.constant 0 : i32
    return %1, %c0_i32 : i32, i32
  }
}

</mosaic_0001>

<llo_original>
// kernel: resblock_forward.1
$region0: #{resblock_forward.1}
  #allocation0 [shape = 'u32[]', space=smem, size = 0x4, offset = 0x4, fixed_abs, tag = 'smem constant byte address 0x4 - core index']
  #allocation1 [shape = 'u32[144,128]{1,0:T(1,128)}', space=vmem, size = 0x12000, scoped, tag = 'internal scratch']
  #allocation2 [shape = 'f32[480,128]{1,0:T(8,128)}', space=vmem, size = 0x3c000, scoped, tag = 'scratch operand']
  %s0 = inlined_call_operand.vmem [shape: f32[1152,128], index: 0, kind: input, shape index: {}]
  %s1 = inlined_call_operand.vmem [shape: f32[480,1], index: 1, kind: input, shape index: {}]
  %s2 = inlined_call_operand.vmem [shape: bf16[9,128,128], index: 2, kind: input, shape index: {}]
  %s3 = inlined_call_operand.vmem [shape: bf16[9,128,128], index: 3, kind: input, shape index: {}]
  %s4 = inlined_call_operand.vmem [shape: bf16[128,128], index: 4, kind: input, shape index: {}]
  %s5 = inlined_call_operand.vmem [shape: f32[1,128], index: 5, kind: input, shape index: {}]
  %s6 = inlined_call_operand.vmem [shape: f32[1,128], index: 6, kind: input, shape index: {}]
  %s7 = inlined_call_operand.vmem [shape: f32[1,128], index: 7, kind: input, shape index: {}]
  %s8 = inlined_call_operand.vmem [shape: f32[1,128], index: 8, kind: input, shape index: {}]
  %s9 = inlined_call_operand.vmem [shape: f32[768,128], index: 9, kind: output, shape index: {}]
  %s10 = sld [smem:[#allocation0]]
  $region69: #{resblock_forward.1} parent=0
    _
  %s12 = ssub.s32 1, %s10
  %s13 = scalar_select 0, %s12, %s10
  loop: start=0, step=1, limit=4
  $region2: #{resblock_forward.1} parent=0 // loop_pre_header
    _
  $region3: #{resblock_forward.1} parent=0 // loop_header
    %s15 = sphi 0, %s19
    %p16 = scmp.ge.s32.totalorder %s15, 4
    %s22 = sphi 0, %s34
    %s23 = sphi 0, %s30
    %s24 = sphi 0, %s22
    %s25 = sphi 0, %s23
    %s26 = sphi 0, %s24
    %s27 = sphi 0, %s25
    %s39 = sphi 0, %s41
    %s42 = sphi 0, %s39
    %s43 = sphi 0, %s42
    %s59 = sphi 0, %s43
    %s65 = sphi 0, %s67
    %s68 = sphi 0, %s65
    %s69 = sphi 0, %s68
    %s85 = sphi 0, %s69
    %s89 = sphi 0, %s89
    %s91 = sphi 0, %s89
    %s92 = sphi 0, %s91
    %s106 = sphi 0, %s92
    %s110 = sphi 0, %s110
    %s112 = sphi 0, %s110
    %s113 = sphi 0, %s112
    %s127 = sphi 0, %s113
    %s131 = sphi 0, %s131
    %s133 = sphi 0, %s131
    %s134 = sphi 0, %s133
    %s148 = sphi 0, %s134
    %s152 = sphi 0, %s152
    %s154 = sphi 0, %s152
    %s155 = sphi 0, %s154
    %s169 = sphi 0, %s155
    %s173 = sphi 0, %s173
    %s175 = sphi 0, %s173
    %s176 = sphi 0, %s175
    %s190 = sphi 0, %s176
    %s194 = sphi 0, %s194
    %s196 = sphi 0, %s194
    %s197 = sphi 0, %s196
    %s211 = sphi 0, %s197
    %s215 = sphi 0, %s215
    %s217 = sphi 0, %s215
    %s218 = sphi 0, %s217
    %s232 = sphi 0, %s218
    %s240 = sphi 0, %s242
    %s243 = sphi 0, %s240
    %s244 = sphi 0, %s243
    %s260 = sphi 0, %s244
  $region4: #{resblock_forward.1} parent=0 // loop_header_branch
    %18 = sbr.rel (%p16) target = $region8
  $region5: #{resblock_forward.1} parent=0 // loop_body
    %s20 = ssub.s32 %s15, 1
    %s21 = ssub.s32 %s15, 2
    %s28 = sadd.s32 1, %s23
    %p29 = scmp.ge.s32.totalorder %s28, 1
    %s30 = scalar_select %p29, 0, %s28
    %s31 = sadd.s32 1, %s22
    %s32 = scalar_select %p29, %s31, %s22
    %p33 = scmp.ge.s32.totalorder %s32, 2
    %s34 = scalar_select %p33, 0, %s32
    %s35 = sadd.s32 %s22, %s23
    %s36 = sadd.s32 %s34, %s30
    %s37 = ssub.s32 %s35, %s36
    %p38 = scmp.eq.s32.totalorder %s37, 0
    %s40 = sadd.s32 %s39, 1
    %s41 = scalar_select %p38, %s39, %s40
    %p44 = pneg %p38
    %p45 = scmp.eq.s32.totalorder %s15, 1
    %p46 = por %p44, %p45
    %p47 = scmp.ne.s32.totalorder %s39, %s42
    %p48 = scmp.eq.s32.totalorder %s15, 0
    %p49 = por %p47, %p48
    %p50 = scmp.ne.s32.totalorder %s39, %s42
    %p51 = scmp.eq.s32.totalorder %s20, 1
    %p52 = por %p50, %p51
    %p53 = scmp.ne.s32.totalorder %s42, %s43
    %p54 = scmp.eq.s32.totalorder %s20, 0
    %p55 = por %p53, %p54
    %p56 = scmp.ne.s32.totalorder %s42, %s43
    %p57 = scmp.eq.s32.totalorder %s21, 1
    %p58 = por %p56, %p57
    %p60 = scmp.ne.s32.totalorder %s43, %s59
    %p61 = scmp.eq.s32.totalorder %s21, 0
    %p62 = por %p60, %p61
    %s63 = ssub.s32 %s23, %s30
    %p64 = scmp.eq.s32.totalorder %s63, 0
    %s66 = sadd.s32 %s65, 1
    %s67 = scalar_select %p64, %s65, %s66
    %p70 = pneg %p64
    %p71 = scmp.eq.s32.totalorder %s15, 1
    %p72 = por %p70, %p71
    %p73 = scmp.ne.s32.totalorder %s65, %s68
    %p74 = scmp.eq.s32.totalorder %s15, 0
    %p75 = por %p73, %p74
    %p76 = scmp.ne.s32.totalorder %s65, %s68
    %p77 = scmp.eq.s32.totalorder %s20, 1
    %p78 = por %p76, %p77
    %p79 = scmp.ne.s32.totalorder %s68, %s69
    %p80 = scmp.eq.s32.totalorder %s20, 0
    %p81 = por %p79, %p80
    %p82 = scmp.ne.s32.totalorder %s68, %s69
    %p83 = scmp.eq.s32.totalorder %s21, 1
    %p84 = por %p82, %p83
    %p86 = scmp.ne.s32.totalorder %s69, %s85
    %p87 = scmp.eq.s32.totalorder %s21, 0
    %p88 = por %p86, %p87
    %s90 = sadd.s32 %s89, 1
    %p93 = scmp.eq.s32.totalorder %s15, 1
    %p94 = scmp.ne.s32.totalorder %s89, %s91
    %p95 = scmp.eq.s32.totalorder %s15, 0
    %p96 = por %p94, %p95
    %p97 = scmp.ne.s32.totalorder %s89, %s91
    %p98 = scmp.eq.s32.totalorder %s20, 1
    %p99 = por %p97, %p98
    %p100 = scmp.ne.s32.totalorder %s91, %s92
    %p101 = scmp.eq.s32.totalorder %s20, 0
    %p102 = por %p100, %p101
    %p103 = scmp.ne.s32.totalorder %s91, %s92
    %p104 = scmp.eq.s32.totalorder %s21, 1
    %p105 = por %p103, %p104
    %p107 = scmp.ne.s32.totalorder %s92, %s106
    %p108 = scmp.eq.s32.totalorder %s21, 0
    %p109 = por %p107, %p108
    %s111 = sadd.s32 %s110, 1
    %p114 = scmp.eq.s32.totalorder %s15, 1
    %p115 = scmp.ne.s32.totalorder %s110, %s112
    %p116 = scmp.eq.s32.totalorder %s15, 0
    %p117 = por %p115, %p116
    %p118 = scmp.ne.s32.totalorder %s110, %s112
    %p119 = scmp.eq.s32.totalorder %s20, 1
    %p120 = por %p118, %p119
    %p121 = scmp.ne.s32.totalorder %s112, %s113
    %p122 = scmp.eq.s32.totalorder %s20, 0
    %p123 = por %p121, %p122
    %p124 = scmp.ne.s32.totalorder %s112, %s113
    %p125 = scmp.eq.s32.totalorder %s21, 1
    %p126 = por %p124, %p125
    %p128 = scmp.ne.s32.totalorder %s113, %s127
    %p129 = scmp.eq.s32.totalorder %s21, 0
    %p130 = por %p128, %p129
    %s132 = sadd.s32 %s131, 1
    %p135 = scmp.eq.s32.totalorder %s15, 1
    %p136 = scmp.ne.s32.totalorder %s131, %s133
    %p137 = scmp.eq.s32.totalorder %s15, 0
    %p138 = por %p136, %p137
    %p139 = scmp.ne.s32.totalorder %s131, %s133
    %p140 = scmp.eq.s32.totalorder %s20, 1
    %p141 = por %p139, %p140
    %p142 = scmp.ne.s32.totalorder %s133, %s134
    %p143 = scmp.eq.s32.totalorder %s20, 0
    %p144 = por %p142, %p143
    %p145 = scmp.ne.s32.totalorder %s133, %s134
    %p146 = scmp.eq.s32.totalorder %s21, 1
    %p147 = por %p145, %p146
    %p149 = scmp.ne.s32.totalorder %s134, %s148
    %p150 = scmp.eq.s32.totalorder %s21, 0
    %p151 = por %p149, %p150
    %s153 = sadd.s32 %s152, 1
    %p156 = scmp.eq.s32.totalorder %s15, 1
    %p157 = scmp.ne.s32.totalorder %s152, %s154
    %p158 = scmp.eq.s32.totalorder %s15, 0
    %p159 = por %p157, %p158
    %p160 = scmp.ne.s32.totalorder %s152, %s154
    %p161 = scmp.eq.s32.totalorder %s20, 1
    %p162 = por %p160, %p161
    %p163 = scmp.ne.s32.totalorder %s154, %s155
    %p164 = scmp.eq.s32.totalorder %s20, 0
    %p165 = por %p163, %p164
    %p166 = scmp.ne.s32.totalorder %s154, %s155
    %p167 = scmp.eq.s32.totalorder %s21, 1
    %p168 = por %p166, %p167
    %p170 = scmp.ne.s32.totalorder %s155, %s169
    %p171 = scmp.eq.s32.totalorder %s21, 0
    %p172 = por %p170, %p171
    %s174 = sadd.s32 %s173, 1
    %p177 = scmp.eq.s32.totalorder %s15, 1
    %p178 = scmp.ne.s32.totalorder %s173, %s175
    %p179 = scmp.eq.s32.totalorder %s15, 0
    %p180 = por %p178, %p179
    %p181 = scmp.ne.s32.totalorder %s173, %s175
    %p182 = scmp.eq.s32.totalorder %s20, 1
    %p183 = por %p181, %p182
    %p184 = scmp.ne.s32.totalorder %s175, %s176
    %p185 = scmp.eq.s32.totalorder %s20, 0
    %p186 = por %p184, %p185
    %p187 = scmp.ne.s32.totalorder %s175, %s176
    %p188 = scmp.eq.s32.totalorder %s21, 1
    %p189 = por %p187, %p188
    %p191 = scmp.ne.s32.totalorder %s176, %s190
    %p192 = scmp.eq.s32.totalorder %s21, 0
    %p193 = por %p191, %p192
    %s195 = sadd.s32 %s194, 1
    %p198 = scmp.eq.s32.totalorder %s15, 1
    %p199 = scmp.ne.s32.totalorder %s194, %s196
    %p200 = scmp.eq.s32.totalorder %s15, 0
    %p201 = por %p199, %p200
    %p202 = scmp.ne.s32.totalorder %s194, %s196
    %p203 = scmp.eq.s32.totalorder %s20, 1
    %p204 = por %p202, %p203
    %p205 = scmp.ne.s32.totalorder %s196, %s197
    %p206 = scmp.eq.s32.totalorder %s20, 0
    %p207 = por %p205, %p206
    %p208 = scmp.ne.s32.totalorder %s196, %s197
    %p209 = scmp.eq.s32.totalorder %s21, 1
    %p210 = por %p208, %p209
    %p212 = scmp.ne.s32.totalorder %s197, %s211
    %p213 = scmp.eq.s32.totalorder %s21, 0
    %p214 = por %p212, %p213
    %s216 = sadd.s32 %s215, 1
    %p219 = scmp.eq.s32.totalorder %s15, 1
    %p220 = scmp.ne.s32.totalorder %s215, %s217
    %p221 = scmp.eq.s32.totalorder %s15, 0
    %p222 = por %p220, %p221
    %p223 = scmp.ne.s32.totalorder %s215, %s217
    %p224 = scmp.eq.s32.totalorder %s20, 1
    %p225 = por %p223, %p224
    %p226 = scmp.ne.s32.totalorder %s217, %s218
    %p227 = scmp.eq.s32.totalorder %s20, 0
    %p228 = por %p226, %p227
    %p229 = scmp.ne.s32.totalorder %s217, %s218
    %p230 = scmp.eq.s32.totalorder %s21, 1
    %p231 = por %p229, %p230
    %p233 = scmp.ne.s32.totalorder %s218, %s232
    %p234 = scmp.eq.s32.totalorder %s21, 0
    %p235 = por %p233, %p234
    %s236 = sadd.s32 %s22, %s23
    %s237 = sadd.s32 %s34, %s30
    %s238 = ssub.s32 %s236, %s237
    %p239 = scmp.eq.s32.totalorder %s238, 0
    %s241 = sadd.s32 %s240, 1
    %s242 = scalar_select %p239, %s240, %s241
    %p245 = pneg %p239
    %p246 = scmp.eq.s32.totalorder %s15, 1
    %p247 = por %p245, %p246
    %p248 = scmp.ne.s32.totalorder %s240, %s243
    %p249 = scmp.eq.s32.totalorder %s15, 0
    %p250 = por %p248, %p249
    %p251 = scmp.ne.s32.totalorder %s240, %s243
    %p252 = scmp.eq.s32.totalorder %s20, 1
    %p253 = por %p251, %p252
    %p254 = scmp.ne.s32.totalorder %s243, %s244
    %p255 = scmp.eq.s32.totalorder %s20, 0
    %p256 = por %p254, %p255
    %p257 = scmp.ne.s32.totalorder %s243, %s244
    %p258 = scmp.eq.s32.totalorder %s21, 1
    %p259 = por %p257, %p258
    %p261 = scmp.ne.s32.totalorder %s244, %s260
    %p262 = scmp.eq.s32.totalorder %s21, 0
    %p263 = por %p261, %p262
    %p264 = scmp.le.s32.totalorder 1, %s15
    %p265 = scmp.lt.s32.totalorder %s15, 3
    %p266 = pnand %p264, %p265
    %p267 = pneg %p266
    // Predicated region
    $region9: #{resblock_forward.1} parent=5 // pred_check
      _
    $region10: #{resblock_forward.1} parent=5 // pred_check_branch
      %269 = sbr.rel (%p266) target = $region12
    $region11: #{resblock_forward.1} parent=5 // pred_region
      %s270 = ssub.s32 %s15, 1
      // Predicated region
      $region13: #{resblock_forward.1} parent=11 // pred_check
        %p271 = pneg %p81
      $region14: #{resblock_forward.1} parent=11 // pred_check_branch
        %273 = sbr.rel (%p271) target = $region16
      $region15: #{resblock_forward.1} parent=11 // pred_region
        %s274 = smul.u32 60, %s25
        %p275 = scmp.lt.s32.totalorder %s274, 59
        %s276 = scalar_select %p275, %s274, 59
        %s277 = smul.addr %s276, 8
        %s278 = scalar_lea.vmem %s1, %s277
        %s279 = smul.u32 60, %s25
      $region16: #{resblock_forward.1} parent=11 // pred_fallthru
        _
      // Predicated region
      $region17: #{resblock_forward.1} parent=11 // pred_check
        %p280 = pneg %p102
      $region18: #{resblock_forward.1} parent=11 // pred_check_branch
        %282 = sbr.rel (%p280) target = $region20
      $region19: #{resblock_forward.1} parent=11 // pred_region
        _
      $region20: #{resblock_forward.1} parent=11 // pred_fallthru
        _
      // Predicated region
      $region21: #{resblock_forward.1} parent=11 // pred_check
        %p283 = pneg %p123
      $region22: #{resblock_forward.1} parent=11 // pred_check_branch
        %285 = sbr.rel (%p283) target = $region24
      $region23: #{resblock_forward.1} parent=11 // pred_region
        _
      $region24: #{resblock_forward.1} parent=11 // pred_fallthru
        _
      // Predicated region
      $region25: #{resblock_forward.1} parent=11 // pred_check
        %p286 = pneg %p144
      $region26: #{resblock_forward.1} parent=11 // pred_check_branch
        %288 = sbr.rel (%p286) target = $region28
      $region27: #{resblock_forward.1} parent=11 // pred_region
        _
      $region28: #{resblock_forward.1} parent=11 // pred_fallthru
        _
      // Predicated region
      $region29: #{resblock_forward.1} parent=11 // pred_check
        %p289 = pneg %p165
      $region30: #{resblock_forward.1} parent=11 // pred_check_branch
        %291 = sbr.rel (%p289) target = $region32
      $region31: #{resblock_forward.1} parent=11 // pred_region
        _
      $region32: #{resblock_forward.1} parent=11 // pred_fallthru
        _
      // Predicated region
      $region33: #{resblock_forward.1} parent=11 // pred_check
        %p292 = pneg %p186
      $region34: #{resblock_forward.1} parent=11 // pred_check_branch
        %294 = sbr.rel (%p292) target = $region36
      $region35: #{resblock_forward.1} parent=11 // pred_region
        _
      $region36: #{resblock_forward.1} parent=11 // pred_fallthru
        _
      // Predicated region
      $region37: #{resblock_forward.1} parent=11 // pred_check
        %p295 = pneg %p207
      $region38: #{resblock_forward.1} parent=11 // pred_check_branch
        %297 = sbr.rel (%p295) target = $region40
      $region39: #{resblock_forward.1} parent=11 // pred_region
        _
      $region40: #{resblock_forward.1} parent=11 // pred_fallthru
        _
      // Predicated region
      $region41: #{resblock_forward.1} parent=11 // pred_check
        %p298 = pneg %p228
      $region42: #{resblock_forward.1} parent=11 // pred_check_branch
        %300 = sbr.rel (%p298) target = $region44
      $region43: #{resblock_forward.1} parent=11 // pred_region
        _
      $region44: #{resblock_forward.1} parent=11 // pred_fallthru
        _
    $region12: #{resblock_forward.1} parent=5 // pred_fallthru
      _
    %p301 = scmp.lt.s32.totalorder %s15, 2
    // Predicated region
    $region45: #{resblock_forward.1} parent=5 // pred_check
      %p302 = pneg %p301
    $region46: #{resblock_forward.1} parent=5 // pred_check_branch
      %304 = sbr.rel (%p302) target = $region48
    $region47: #{resblock_forward.1} parent=5 // pred_region
      // Predicated region
      $region49: #{resblock_forward.1} parent=47 // pred_check
        %p305 = pneg %p49
      $region50: #{resblock_forward.1} parent=47 // pred_check_branch
        %307 = sbr.rel (%p305) target = $region52
      $region51: #{resblock_forward.1} parent=47 // pred_region
        %s308 = sadd.s32 %s22, %s23
        %s309 = smul.u32 72, %s308
        %p310 = scmp.lt.s32.totalorder %s309, 143
        %s311 = scalar_select %p310, %s309, 143
        %s312 = smul.addr %s311, 8
        %s313 = scalar_lea.vmem %s0, %s312
        %s314 = sadd.s32 %s22, %s23
        %s315 = smul.u32 72, %s314
      $region52: #{resblock_forward.1} parent=47 // pred_fallthru
        _
    $region48: #{resblock_forward.1} parent=5 // pred_fallthru
      _
    %p316 = scmp.le.s32.totalorder 1, %s15
    %p317 = scmp.lt.s32.totalorder %s15, 3
    %p318 = pnand %p316, %p317
    %p319 = pneg %p318
    // Predicated region
    $region53: #{resblock_forward.1} parent=5 // pred_check
      _
    $region54: #{resblock_forward.1} parent=5 // pred_check_branch
      %321 = sbr.rel (%p318) target = $region56
    $region55: #{resblock_forward.1} parent=5 // pred_region
      %s322 = ssub.s32 %s15, 1
      %s323 = sadd.s32 %s24, %s25
      %s324 = smul.u32 72, %s323
      %p325 = scmp.lt.s32.totalorder %s324, 143
      %s326 = scalar_select %p325, %s324, 143
      %s327 = smul.addr %s326, 8
      %s328 = scalar_lea.vmem %s0, %s327
      %p329 = pneg %p55
      %p330 = pneg %p52
      %s331 = smul.u32 60, %s25
      %p332 = scmp.lt.s32.totalorder %s331, 59
      %s333 = scalar_select %p332, %s331, 59
      %s334 = smul.addr %s333, 8
      %s335 = scalar_lea.vmem %s1, %s334
      %p336 = pneg %p81
      %p337 = pneg %p78
      %p338 = pneg %p102
      %p339 = pneg %p99
      %p340 = pneg %p123
      %p341 = pneg %p120
      %p342 = pneg %p144
      %p343 = pneg %p141
      %p344 = pneg %p165
      %p345 = pneg %p162
      %p346 = pneg %p186
      %p347 = pneg %p183
      %p348 = pneg %p207
      %p349 = pneg %p204
      %p350 = pneg %p228
      %p351 = pneg %p225
      %p352 = pneg %p256
      %p353 = pneg %p253
      %s354 = sadd.s32 %s24, %s25
      %s355 = smul.u32 48, %s354
      %p356 = scmp.lt.s32.totalorder %s355, 95
      %s357 = scalar_select %p356, %s355, 95
      %s358 = smul.addr %s357, 8
      %s359 = scalar_lea.vmem %s9, %s358
      %s360 = sadd.s32 %s24, %s25
      %s361 = smul.u32 72, %s360
      %p362 = scmp.lt.s32.totalorder %s361, 143
      %s363 = scalar_select %p362, %s361, 143
      %s364 = smul.addr %s363, 8
      %s365 = scalar_lea.vmem %s0, %s364
      %s366 = sadd.s32 %s24, %s25
      %s367 = smul.u32 72, %s366
      %s368 = smul.u32 60, %s25
      %p369 = scmp.lt.s32.totalorder %s368, 59
      %s370 = scalar_select %p369, %s368, 59
      %s371 = smul.addr %s370, 8
      %s372 = scalar_lea.vmem %s1, %s371
      %s373 = smul.u32 60, %s25
      %s374 = sadd.s32 %s24, %s25
      %s375 = smul.u32 48, %s374
      %p376 = scmp.lt.s32.totalorder %s375, 95
      %s377 = scalar_select %p376, %s375, 95
      %s378 = smul.addr %s377, 8
      %s379 = scalar_lea.vmem %s9, %s378
      %s380 = sadd.s32 %s24, %s25
      %s381 = smul.u32 48, %s380
      %v383 = vld [vmem:[%s365 + $0x17] sm:$0xff]
      %v384 = vld [vmem:[%s365 + $0x1f] sm:$0xff]
      %v385 = vld [vmem:[%s365 + $0x27] sm:$0xff]
      %v386 = vld [vmem:[%s365 + $0x2f] sm:$0xff]
      %v387 = vld [vmem:[%s365 + $0x37] sm:$0xff]
      %v388 = vld [vmem:[%s365 + $0x3f] sm:$0xff]
      %v389 = vld [vmem:[%s365 + $0x47] sm:$0xff]
      %v390 = vld [vmem:[%s365 + $0x4f] sm:$0xff]
      %v391 = vld [vmem:[%s365 + $0x57] sm:$0xff]
      %v392 = vld [vmem:[%s365 + $0x5f] sm:$0xff]
      %v393 = vld [vmem:[%s365 + $0x67] sm:$0xff]
      %v394 = vld [vmem:[%s365 + $0x6f] sm:$0xff]
      %v395 = vld [vmem:[%s365 + $0x77] sm:$0xff]
      %v396 = vld [vmem:[%s365 + $0x7f] sm:$0xff]
      %v397 = vld [vmem:[%s365 + $0x87] sm:$0xff]
      %v398 = vld [vmem:[%s365 + $0x8f] sm:$0xff]
      %v399 = vld [vmem:[%s365 + $0x97] sm:$0xff]
      %v400 = vld [vmem:[%s365 + $0x9f] sm:$0xff]
      %v401 = vld [vmem:[%s365 + $0xa7] sm:$0xff]
      %v402 = vld [vmem:[%s365 + $0xaf] sm:$0xff]
      %v403 = vld [vmem:[%s365 + $0xb7] sm:$0xff]
      %v404 = vld [vmem:[%s365 + $0xbf] sm:$0xff]
      %v405 = vld [vmem:[%s365 + $0xc7] sm:$0xff]
      %v406 = vld [vmem:[%s365 + $0xcf] sm:$0xff]
      %v407 = vld [vmem:[%s365 + $0xd7] sm:$0xff]
      %v408 = vld [vmem:[%s365 + $0xdf] sm:$0xff]
      %v409 = vld [vmem:[%s365 + $0xe7] sm:$0xff]
      %v410 = vld [vmem:[%s365 + $0xef] sm:$0xff]
      %v411 = vld [vmem:[%s365 + $0xf7] sm:$0xff]
      %v412 = vld [vmem:[%s365 + $0xff] sm:$0xff]
      %v413 = vld [vmem:[%s365 + $0x107] sm:$0xff]
      %v414 = vld [vmem:[%s365 + $0x10f] sm:$0xff]
      %v415 = vld [vmem:[%s365 + $0x117] sm:$0xff]
      %v416 = vld [vmem:[%s365 + $0x11f] sm:$0xff]
      %v417 = vld [vmem:[%s365 + $0x127] sm:$0xff]
      %v418 = vld [vmem:[%s365 + $0x12f] sm:$0xff]
      %v419 = vld [vmem:[%s365 + $0x137] sm:$0xff]
      %v420 = vld [vmem:[%s365 + $0x13f] sm:$0xff]
      %v421 = vld [vmem:[%s365 + $0x147] sm:$0xff]
      %v422 = vld [vmem:[%s365 + $0x14f] sm:$0xff]
      %v423 = vld [vmem:[%s365 + $0x157] sm:$0xff]
      %v424 = vld [vmem:[%s365 + $0x15f] sm:$0xff]
      %v425 = vld [vmem:[%s365 + $0x167] sm:$0xff]
      %v426 = vld [vmem:[%s365 + $0x16f] sm:$0xff]
      %v427 = vld [vmem:[%s365 + $0x177] sm:$0xff]
      %v428 = vld [vmem:[%s365 + $0x17f] sm:$0xff]
      %v429 = vld [vmem:[%s365 + $0x187] sm:$0xff]
      %v430 = vld [vmem:[%s365 + $0x18f] sm:$0xff]
      %v431 = vld [vmem:[%s365 + $0x197] sm:$0xff]
      %v432 = vld [vmem:[%s365 + $0x19f] sm:$0xff]
      %v433 = vld [vmem:[%s365 + $0x1a7] sm:$0xff]
      %v434 = vld [vmem:[%s365 + $0x1af] sm:$0xff]
      %v435 = vld [vmem:[%s365 + $0x1b7] sm:$0xff]
      %v436 = vld [vmem:[%s365 + $0x1bf] sm:$0xff]
      %v437 = vld [vmem:[%s365 + $0x1c7] sm:$0xff]
      %v438 = vld [vmem:[%s365 + $0x1cf] sm:$0xff]
      %v439 = vld [vmem:[%s365 + $0x1d7] sm:$0xff]
      %v440 = vld [vmem:[%s365 + $0x1df] sm:$0xff]
      %v441 = vld [vmem:[%s365 + $0x1e7] sm:$0xff]
      %v442 = vld [vmem:[%s365 + $0x1ef] sm:$0xff]
      %v443 = vpack.c.bf16 %v384, %v383
      %v444 = vpack.c.bf16 %v386, %v385
      %v445 = vpack.c.bf16 %v388, %v387
      %v446 = vpack.c.bf16 %v390, %v389
      %v447 = vpack.c.bf16 %v392, %v391
      %v448 = vpack.c.bf16 %v394, %v393
      %v449 = vpack.c.bf16 %v396, %v395
      %v450 = vpack.c.bf16 %v398, %v397
      %v451 = vpack.c.bf16 %v400, %v399
      %v452 = vpack.c.bf16 %v402, %v401
      %v453 = vpack.c.bf16 %v404, %v403
      %v454 = vpack.c.bf16 %v406, %v405
      %v455 = vpack.c.bf16 %v408, %v407
      %v456 = vpack.c.bf16 %v410, %v409
      %v457 = vpack.c.bf16 %v412, %v411
      %v458 = vpack.c.bf16 %v414, %v413
      %v459 = vpack.c.bf16 %v416, %v415
      %v460 = vpack.c.bf16 %v418, %v417
      %v461 = vpack.c.bf16 %v420, %v419
      %v462 = vpack.c.bf16 %v422, %v421
      %v463 = vpack.c.bf16 %v424, %v423
      %v464 = vpack.c.bf16 %v426, %v425
      %v465 = vpack.c.bf16 %v428, %v427
      %v466 = vpack.c.bf16 %v430, %v429
      %v467 = vpack.c.bf16 %v432, %v431
      %v468 = vpack.c.bf16 %v434, %v433
      %v469 = vpack.c.bf16 %v436, %v435
      %v470 = vpack.c.bf16 %v438, %v437
      %v471 = vpack.c.bf16 %v440, %v439
      %v472 = vpack.c.bf16 %v442, %v441
      %v473 = vld [vmem:[%s2] sm:$0xf]
      %v474 = vld [vmem:[%s2 + $0x4] sm:$0xf]
      %v475 = vld [vmem:[%s2 + $0x8] sm:$0xf]
      %v476 = vld [vmem:[%s2 + $0xc] sm:$0xf]
      %v477 = vld [vmem:[%s2 + $0x10] sm:$0xf]
      %v478 = vld [vmem:[%s2 + $0x14] sm:$0xf]
      %v479 = vld [vmem:[%s2 + $0x18] sm:$0xf]
      %v480 = vld [vmem:[%s2 + $0x1c] sm:$0xf]
      %v481 = vld [vmem:[%s2 + $0x20] sm:$0xf]
      %v482 = vld [vmem:[%s2 + $0x24] sm:$0xf]
      %v483 = vld [vmem:[%s2 + $0x28] sm:$0xf]
      %v484 = vld [vmem:[%s2 + $0x2c] sm:$0xf]
      %v485 = vld [vmem:[%s2 + $0x30] sm:$0xf]
      %v486 = vld [vmem:[%s2 + $0x34] sm:$0xf]
      %v487 = vld [vmem:[%s2 + $0x38] sm:$0xf]
      %v488 = vld [vmem:[%s2 + $0x3c] sm:$0xf]
      %v489 = vld [vmem:[%s365 + $0x18] sm:$0xff]
      %v490 = vld [vmem:[%s365 + $0x20] sm:$0xff]
      %v491 = vld [vmem:[%s365 + $0x28] sm:$0xff]
      %v492 = vld [vmem:[%s365 + $0x30] sm:$0xff]
      %v493 = vld [vmem:[%s365 + $0x38] sm:$0xff]
      %v494 = vld [vmem:[%s365 + $0x40] sm:$0xff]
      %v495 = vld [vmem:[%s365 + $0x48] sm:$0xff]
      %v496 = vld [vmem:[%s365 + $0x50] sm:$0xff]
      %v497 = vld [vmem:[%s365 + $0x58] sm:$0xff]
      %v498 = vld [vmem:[%s365 + $0x60] sm:$0xff]
      %v499 = vld [vmem:[%s365 + $0x68] sm:$0xff]
      %v500 = vld [vmem:[%s365 + $0x70] sm:$0xff]
      %v501 = vld [vmem:[%s365 + $0x78] sm:$0xff]
      %v502 = vld [vmem:[%s365 + $0x80] sm:$0xff]
      %v503 = vld [vmem:[%s365 + $0x88] sm:$0xff]
      %v504 = vld [vmem:[%s365 + $0x90] sm:$0xff]
      %v505 = vld [vmem:[%s365 + $0x98] sm:$0xff]
      %v506 = vld [vmem:[%s365 + $0xa0] sm:$0xff]
      %v507 = vld [vmem:[%s365 + $0xa8] sm:$0xff]
      %v508 = vld [vmem:[%s365 + $0xb0] sm:$0xff]
      %v509 = vld [vmem:[%s365 + $0xb8] sm:$0xff]
      %v510 = vld [vmem:[%s365 + $0xc0] sm:$0xff]
      %v511 = vld [vmem:[%s365 + $0xc8] sm:$0xff]
      %v512 = vld [vmem:[%s365 + $0xd0] sm:$0xff]
      %v513 = vld [vmem:[%s365 + $0xd8] sm:$0xff]
      %v514 = vld [vmem:[%s365 + $0xe0] sm:$0xff]
      %v515 = vld [vmem:[%s365 + $0xe8] sm:$0xff]
      %v516 = vld [vmem:[%s365 + $0xf0] sm:$0xff]
      %v517 = vld [vmem:[%s365 + $0xf8] sm:$0xff]
      %v518 = vld [vmem:[%s365 + $0x100] sm:$0xff]
      %v519 = vld [vmem:[%s365 + $0x108] sm:$0xff]
      %v520 = vld [vmem:[%s365 + $0x110] sm:$0xff]
      %v521 = vld [vmem:[%s365 + $0x118] sm:$0xff]
      %v522 = vld [vmem:[%s365 + $0x120] sm:$0xff]
      %v523 = vld [vmem:[%s365 + $0x128] sm:$0xff]
      %v524 = vld [vmem:[%s365 + $0x130] sm:$0xff]
      %v525 = vld [vmem:[%s365 + $0x138] sm:$0xff]
      %v526 = vld [vmem:[%s365 + $0x140] sm:$0xff]
      %v527 = vld [vmem:[%s365 + $0x148] sm:$0xff]
      %v528 = vld [vmem:[%s365 + $0x150] sm:$0xff]
      %v529 = vld [vmem:[%s365 + $0x158] sm:$0xff]
      %v530 = vld [vmem:[%s365 + $0x160] sm:$0xff]
      %v531 = vld [vmem:[%s365 + $0x168] sm:$0xff]
      %v532 = vld [vmem:[%s365 + $0x170] sm:$0xff]
      %v533 = vld [vmem:[%s365 + $0x178] sm:$0xff]
      %v534 = vld [vmem:[%s365 + $0x180] sm:$0xff]
      %v535 = vld [vmem:[%s365 + $0x188] sm:$0xff]
      %v536 = vld [vmem:[%s365 + $0x190] sm:$0xff]
      %v537 = vld [vmem:[%s365 + $0x198] sm:$0xff]
      %v538 = vld [vmem:[%s365 + $0x1a0] sm:$0xff]
      %v539 = vld [vmem:[%s365 + $0x1a8] sm:$0xff]
      %v540 = vld [vmem:[%s365 + $0x1b0] sm:$0xff]
      %v541 = vld [vmem:[%s365 + $0x1b8] sm:$0xff]
      %v542 = vld [vmem:[%s365 + $0x1c0] sm:$0xff]
      %v543 = vld [vmem:[%s365 + $0x1c8] sm:$0xff]
      %v544 = vld [vmem:[%s365 + $0x1d0] sm:$0xff]
      %v545 = vld [vmem:[%s365 + $0x1d8] sm:$0xff]
      %v546 = vld [vmem:[%s365 + $0x1e0] sm:$0xff]
      %v547 = vld [vmem:[%s365 + $0x1e8] sm:$0xff]
      %v548 = vld [vmem:[%s365 + $0x1f0] sm:$0xff]
      %v549 = vpack.c.bf16 %v490, %v489
      %v550 = vpack.c.bf16 %v492, %v491
      %v551 = vpack.c.bf16 %v494, %v493
      %v552 = vpack.c.bf16 %v496, %v495
      %v553 = vpack.c.bf16 %v498, %v497
      %v554 = vpack.c.bf16 %v500, %v499
      %v555 = vpack.c.bf16 %v502, %v501
      %v556 = vpack.c.bf16 %v504, %v503
      %v557 = vpack.c.bf16 %v506, %v505
      %v558 = vpack.c.bf16 %v508, %v507
      %v559 = vpack.c.bf16 %v510, %v509
      %v560 = vpack.c.bf16 %v512, %v511
      %v561 = vpack.c.bf16 %v514, %v513
      %v562 = vpack.c.bf16 %v516, %v515
      %v563 = vpack.c.bf16 %v518, %v517
      %v564 = vpack.c.bf16 %v520, %v519
      %v565 = vpack.c.bf16 %v522, %v521
      %v566 = vpack.c.bf16 %v524, %v523
      %v567 = vpack.c.bf16 %v526, %v525
      %v568 = vpack.c.bf16 %v528, %v527
      %v569 = vpack.c.bf16 %v530, %v529
      %v570 = vpack.c.bf16 %v532, %v531
      %v571 = vpack.c.bf16 %v534, %v533
      %v572 = vpack.c.bf16 %v536, %v535
      %v573 = vpack.c.bf16 %v538, %v537
      %v574 = vpack.c.bf16 %v540, %v539
      %v575 = vpack.c.bf16 %v542, %v541
      %v576 = vpack.c.bf16 %v544, %v543
      %v577 = vpack.c.bf16 %v546, %v545
      %v578 = vpack.c.bf16 %v548, %v547
      %s579 = scalar_lea.vmem %s2, 64
      %v580 = vld [vmem:[%s579] sm:$0xf]
      %v581 = vld [vmem:[%s579 + $0x4] sm:$0xf]
      %v582 = vld [vmem:[%s579 + $0x8] sm:$0xf]
      %v583 = vld [vmem:[%s579 + $0xc] sm:$0xf]
      %v584 = vld [vmem:[%s579 + $0x10] sm:$0xf]
      %v585 = vld [vmem:[%s579 + $0x14] sm:$0xf]
      %v586 = vld [vmem:[%s579 + $0x18] sm:$0xf]
      %v587 = vld [vmem:[%s579 + $0x1c] sm:$0xf]
      %v588 = vld [vmem:[%s579 + $0x20] sm:$0xf]
      %v589 = vld [vmem:[%s579 + $0x24] sm:$0xf]
      %v590 = vld [vmem:[%s579 + $0x28] sm:$0xf]
      %v591 = vld [vmem:[%s579 + $0x2c] sm:$0xf]
      %v592 = vld [vmem:[%s579 + $0x30] sm:$0xf]
      %v593 = vld [vmem:[%s579 + $0x34] sm:$0xf]
      %v594 = vld [vmem:[%s579 + $0x38] sm:$0xf]
      %v595 = vld [vmem:[%s579 + $0x3c] sm:$0xf]
      %v612 = vunpack.c.l.b16 %v580
      %v613 = vunpack.c.l.b16 %v581
      %v614 = vunpack.c.l.b16 %v582
      %v615 = vunpack.c.l.b16 %v583
      %v616 = vunpack.c.l.b16 %v584
      %v617 = vunpack.c.l.b16 %v585
      %v618 = vunpack.c.l.b16 %v586
      %v619 = vunpack.c.l.b16 %v587
      %v620 = vunpack.c.l.b16 %v588
      %v621 = vunpack.c.l.b16 %v589
      %v622 = vunpack.c.l.b16 %v590
      %v623 = vunpack.c.l.b16 %v591
      %v624 = vunpack.c.l.b16 %v592
      %v625 = vunpack.c.l.b16 %v593
      %v626 = vunpack.c.l.b16 %v594
      %v627 = vunpack.c.l.b16 %v595
      %v628 = vpack.c.b16 %v613, %v612
      %v629 = vpack.c.b16 %v615, %v614
      %v630 = vpack.c.b16 %v617, %v616
      %v631 = vpack.c.b16 %v619, %v618
      %v632 = vpack.c.b16 %v621, %v620
      %v633 = vpack.c.b16 %v623, %v622
      %v634 = vpack.c.b16 %v625, %v624
      %v635 = vpack.c.b16 %v627, %v626
      %644 = vmatprep.subr.bf16.mxu0 0
      %645 = vmatpush1.bf16.msra.mxu0 %v628
      %646 = vmatprep.subr.bf16.mxu0 0
      %647 = vmatpush1.bf16.msra.mxu0 %v629
      %648 = vmatprep.subr.bf16.mxu0 0
      %649 = vmatpush1.bf16.msra.mxu0 %v630
      %650 = vmatprep.subr.bf16.mxu0 0
      %651 = vmatpush1.bf16.msra.mxu0 %v631
      %652 = vmatprep.subr.bf16.mxu0 0
      %653 = vmatpush1.bf16.msra.mxu0 %v632
      %654 = vmatprep.subr.bf16.mxu0 0
      %655 = vmatpush1.bf16.msra.mxu0 %v633
      %656 = vmatprep.subr.bf16.mxu0 0
      %657 = vmatpush1.bf16.msra.mxu0 %v634
      %658 = vmatprep.subr.bf16.mxu0 0
      %659 = vmatpush1.bf16.msra.mxu0 %v635
      %660 = vmatprep.subr.bf16.mxu0 0
      %661 = vmatpush1.bf16.msra.mxu0 0
      %662 = vmatprep.subr.bf16.mxu0 0
      %663 = vmatpush1.bf16.msra.mxu0 0
      %664 = vmatprep.subr.bf16.mxu0 0
      %665 = vmatpush1.bf16.msra.mxu0 0
      %666 = vmatprep.subr.bf16.mxu0 0
      %667 = vmatpush1.bf16.msra.mxu0 0
      %668 = vmatprep.subr.bf16.mxu0 0
      %669 = vmatpush1.bf16.msra.mxu0 0
      %670 = vmatprep.subr.bf16.mxu0 0
      %671 = vmatpush1.bf16.msra.mxu0 0
      %672 = vmatprep.subr.bf16.mxu0 0
      %673 = vmatpush1.bf16.msra.mxu0 0
      %674 = vmatprep.subr.bf16.mxu0 0
      %675 = vmatpush1.bf16.msra.mxu0 0
      %676 = vmatprep.mubr.bf16.mxu0 0
      %677 = vmatmul.mubr.bf16.gmra.mrb[0].mxu0 %v549
      %v678 = vpop.f32.mrb[0].mxu0
      %v679 = vadd.f32 0.0, %v678
      %v680 = vpop.f32.mrb[0].mxu0
      %v681 = vpop.f32.mrb[0].mxu0
      %v682 = vadd.f32 0.0, %v681
      %v683 = vpop.f32.mrb[0].mxu0
      %684 = vmatprep.mubr.bf16.mxu0 0
      %685 = vmatmul.mubr.bf16.gmra.mrb[0].mxu0 %v550
      %v686 = vpop.f32.mrb[0].mxu0
      %v687 = vadd.f32 0.0, %v686
      %v688 = vpop.f32.mrb[0].mxu0
      %v689 = vpop.f32.mrb[0].mxu0
      %v690 = vadd.f32 0.0, %v689
      %v691 = vpop.f32.mrb[0].mxu0
      %692 = vmatprep.mubr.bf16.mxu0 0
      %693 = vmatmul.mubr.bf16.gmra.mrb[0].mxu0 %v551
      %v694 = vpop.f32.mrb[0].mxu0
      %v695 = vadd.f32 0.0, %v694
      %v696 = vpop.f32.mrb[0].mxu0
      %v697 = vpop.f32.mrb[0].mxu0
      %v698 = vadd.f32 0.0, %v697
      %v699 = vpop.f32.mrb[0].mxu0
      %700 = vmatprep.mubr.bf16.mxu0 0
      %701 = vmatmul.mubr.bf16.gmra.mrb[0].mxu0 %v552
      %v702 = vpop.f32.mrb[0].mxu0
      %v703 = vadd.f32 0.0, %v702
      %v704 = vpop.f32.mrb[0].mxu0
      %v705 = vpop.f32.mrb[0].mxu0
      %v706 = vadd.f32 0.0, %v705
      %v707 = vpop.f32.mrb[0].mxu0
      %708 = vmatprep.mubr.bf16.mxu0 0
      %709 = vmatmul.mubr.bf16.gmra.mrb[0].mxu0 %v553
      %v710 = vpop.f32.mrb[0].mxu0
      %v711 = vadd.f32 0.0, %v710
      %v712 = vpop.f32.mrb[0].mxu0
      %v713 = vpop.f32.mrb[0].mxu0
      %v714 = vadd.f32 0.0, %v713
      %v715 = vpop.f32.mrb[0].mxu0
      %716 = vmatprep.mubr.bf16.mxu0 0
      %717 = vmatmul.mubr.bf16.gmra.mrb[0].mxu0 %v554
      %v718 = vpop.f32.mrb[0].mxu0
      %v719 = vadd.f32 0.0, %v718
      %v720 = vpop.f32.mrb[0].mxu0
      %v721 = vpop.f32.mrb[0].mxu0
      %v722 = vadd.f32 0.0, %v721
      %v723 = vpop.f32.mrb[0].mxu0
      %724 = vmatprep.mubr.bf16.mxu0 0
      %725 = vmatmul.mubr.bf16.gmra.mrb[0].mxu0 %v555
      %v726 = vpop.f32.mrb[0].mxu0
      %v727 = vadd.f32 0.0, %v726
      %v728 = vpop.f32.mrb[0].mxu0
      %v729 = vpop.f32.mrb[0].mxu0
      %v730 = vadd.f32 0.0, %v729
      %v731 = vpop.f32.mrb[0].mxu0
      %732 = vmatprep.mubr.bf16.mxu0 0
      %733 = vmatmul.mubr.bf16.gmra.mrb[0].mxu0 %v556
      %v734 = vpop.f32.mrb[0].mxu0
      %v735 = vadd.f32 0.0, %v734
      %v736 = vpop.f32.mrb[0].mxu0
      %v737 = vpop.f32.mrb[0].mxu0
      %v738 = vadd.f32 0.0, %v737
      %v739 = vpop.f32.mrb[0].mxu0
      %740 = vmatprep.mubr.bf16.mxu0 0
      %741 = vmatmul.mubr.bf16.gmra.mrb[0].mxu0 %v557
      %v742 = vpop.f32.mrb[0].mxu0
      %v743 = vadd.f32 0.0, %v742
      %v744 = vpop.f32.mrb[0].mxu0
      %v745 = vpop.f32.mrb[0].mxu0
      %v746 = vadd.f32 0.0, %v745
      %v747 = vpop.f32.mrb[0].mxu0
      %748 = vmatprep.mubr.bf16.mxu0 0
      %749 = vmatmul.mubr.bf16.gmra.mrb[0].mxu0 %v558
      %v750 = vpop.f32.mrb[0].mxu0
      %v751 = vadd.f32 0.0, %v750
      %v752 = vpop.f32.mrb[0].mxu0
      %v753 = vpop.f32.mrb[0].mxu0
      %v754 = vadd.f32 0.0, %v753
      %v755 = vpop.f32.mrb[0].mxu0
      %756 = vmatprep.mubr.bf16.mxu0 0
      %757 = vmatmul.mubr.bf16.gmra.mrb[0].mxu0 %v559
      %v758 = vpop.f32.mrb[0].mxu0
      %v759 = vadd.f32 0.0, %v758
      %v760 = vpop.f32.mrb[0].mxu0
      %v761 = vpop.f32.mrb[0].mxu0
      %v762 = vadd.f32 0.0, %v761
      %v763 = vpop.f32.mrb[0].mxu0
      %764 = vmatprep.mubr.bf16.mxu0 0
      %765 = vmatmul.mubr.bf16.gmra.mrb[0].mxu0 %v560
      %v766 = vpop.f32.mrb[0].mxu0
      %v767 = vadd.f32 0.0, %v766
      %v768 = vpop.f32.mrb[0].mxu0
      %v769 = vpop.f32.mrb[0].mxu0
      %v770 = vadd.f32 0.0, %v769
      %v771 = vpop.f32.mrb[0].mxu0
      %772 = vmatprep.mubr.bf16.mxu0 0
      %773 = vmatmul.mubr.bf16.gmra.mrb[0].mxu0 %v561
      %v774 = vpop.f32.mrb[0].mxu0
      %v775 = vadd.f32 0.0, %v774
      %v776 = vpop.f32.mrb[0].mxu0
      %v777 = vpop.f32.mrb[0].mxu0
      %v778 = vadd.f32 0.0, %v777
      %v779 = vpop.f32.mrb[0].mxu0
      %780 = vmatprep.mubr.bf16.mxu0 0
      %781 = vmatmul.mubr.bf16.gmra.mrb[0].mxu0 %v562
      %v782 = vpop.f32.mrb[0].mxu0
      %v783 = vadd.f32 0.0, %v782
      %v784 = vpop.f32.mrb[0].mxu0
      %v785 = vpop.f32.mrb[0].mxu0
      %v786 = vadd.f32 0.0, %v785
      %v787 = vpop.f32.mrb[0].mxu0
      %788 = vmatprep.mubr.bf16.mxu0 0
      %789 = vmatmul.mubr.bf16.gmra.mrb[0].mxu0 %v563
      %v790 = vpop.f32.mrb[0].mxu0
      %v791 = vadd.f32 0.0, %v790
      %v792 = vpop.f32.mrb[0].mxu0
      %v793 = vpop.f32.mrb[0].mxu0
      %v794 = vadd.f32 0.0, %v793
      %v795 = vpop.f32.mrb[0].mxu0
      %796 = vmatprep.mubr.bf16.mxu0 0
      %797 = vmatmul.mubr.bf16.gmra.mrb[0].mxu0 %v564
      %v798 = vpop.f32.mrb[0].mxu0
      %v799 = vadd.f32 0.0, %v798
      %v800 = vpop.f32.mrb[0].mxu0
      %v801 = vpop.f32.mrb[0].mxu0
      %v802 = vadd.f32 0.0, %v801
      %v803 = vpop.f32.mrb[0].mxu0
      %804 = vmatprep.mubr.bf16.mxu0 0
      %805 = vmatmul.mubr.bf16.gmra.mrb[0].mxu0 %v565
      %v806 = vpop.f32.mrb[0].mxu0
      %v807 = vadd.f32 0.0, %v806
      %v808 = vpop.f32.mrb[0].mxu0
      %v809 = vpop.f32.mrb[0].mxu0
      %v810 = vadd.f32 0.0, %v809
      %v811 = vpop.f32.mrb[0].mxu0
      %812 = vmatprep.mubr.bf16.mxu0 0
      %813 = vmatmul.mubr.bf16.gmra.mrb[0].mxu0 %v566
      %v814 = vpop.f32.mrb[0].mxu0
      %v815 = vadd.f32 0.0, %v814
      %v816 = vpop.f32.mrb[0].mxu0
      %v817 = vpop.f32.mrb[0].mxu0
      %v818 = vadd.f32 0.0, %v817
      %v819 = vpop.f32.mrb[0].mxu0
      %820 = vmatprep.mubr.bf16.mxu0 0
      %821 = vmatmul.mubr.bf16.gmra.mrb[0].mxu0 %v567
      %v822 = vpop.f32.mrb[0].mxu0
      %v823 = vadd.f32 0.0, %v822
      %v824 = vpop.f32.mrb[0].mxu0
      %v825 = vpop.f32.mrb[0].mxu0
      %v826 = vadd.f32 0.0, %v825
      %v827 = vpop.f32.mrb[0].mxu0
      %828 = vmatprep.mubr.bf16.mxu0 0
      %829 = vmatmul.mubr.bf16.gmra.mrb[0].mxu0 %v568
      %v830 = vpop.f32.mrb[0].mxu0
      %v831 = vadd.f32 0.0, %v830
      %v832 = vpop.f32.mrb[0].mxu0
      %v833 = vpop.f32.mrb[0].mxu0
      %v834 = vadd.f32 0.0, %v833
      %v835 = vpop.f32.mrb[0].mxu0
      %836 = vmatprep.mubr.bf16.mxu0 0
      %837 = vmatmul.mubr.bf16.gmra.mrb[0].mxu0 %v569
      %v838 = vpop.f32.mrb[0].mxu0
      %v839 = vadd.f32 0.0, %v838
      %v840 = vpop.f32.mrb[0].mxu0
      %v841 = vpop.f32.mrb[0].mxu0
      %v842 = vadd.f32 0.0, %v841
      %v843 = vpop.f32.mrb[0].mxu0
      %844 = vmatprep.mubr.bf16.mxu0 0
      %845 = vmatmul.mubr.bf16.gmra.mrb[0].mxu0 %v570
      %v846 = vpop.f32.mrb[0].mxu0
      %v847 = vadd.f32 0.0, %v846
      %v848 = vpop.f32.mrb[0].mxu0
      %v849 = vpop.f32.mrb[0].mxu0
      %v850 = vadd.f32 0.0, %v849
      %v851 = vpop.f32.mrb[0].mxu0
      %852 = vmatprep.mubr.bf16.mxu0 0
      %853 = vmatmul.mubr.bf16.gmra.mrb[0].mxu0 %v571
      %v854 = vpop.f32.mrb[0].mxu0
      %v855 = vadd.f32 0.0, %v854
      %v856 = vpop.f32.mrb[0].mxu0
      %v857 = vpop.f32.mrb[0].mxu0
      %v858 = vadd.f32 0.0, %v857
      %v859 = vpop.f32.mrb[0].mxu0
      %860 = vmatprep.mubr.bf16.mxu0 0
      %861 = vmatmul.mubr.bf16.gmra.mrb[0].mxu0 %v572
      %v862 = vpop.f32.mrb[0].mxu0
      %v863 = vadd.f32 0.0, %v862
      %v864 = vpop.f32.mrb[0].mxu0
      %v865 = vpop.f32.mrb[0].mxu0
      %v866 = vadd.f32 0.0, %v865
      %v867 = vpop.f32.mrb[0].mxu0
      %868 = vmatprep.mubr.bf16.mxu0 0
      %869 = vmatmul.mubr.bf16.gmra.mrb[0].mxu0 %v573
      %v870 = vpop.f32.mrb[0].mxu0
      %v871 = vadd.f32 0.0, %v870
      %v872 = vpop.f32.mrb[0].mxu0
      %v873 = vpop.f32.mrb[0].mxu0
      %v874 = vadd.f32 0.0, %v873
      %v875 = vpop.f32.mrb[0].mxu0
      %876 = vmatprep.mubr.bf16.mxu0 0
      %877 = vmatmul.mubr.bf16.gmra.mrb[0].mxu0 %v574
      %v878 = vpop.f32.mrb[0].mxu0
      %v879 = vadd.f32 0.0, %v878
      %v880 = vpop.f32.mrb[0].mxu0
      %v881 = vpop.f32.mrb[0].mxu0
      %v882 = vadd.f32 0.0, %v881
      %v883 = vpop.f32.mrb[0].mxu0
      %884 = vmatprep.mubr.bf16.mxu0 0
      %885 = vmatmul.mubr.bf16.gmra.mrb[0].mxu0 %v575
      %v886 = vpop.f32.mrb[0].mxu0
      %v887 = vadd.f32 0.0, %v886
      %v888 = vpop.f32.mrb[0].mxu0
      %v889 = vpop.f32.mrb[0].mxu0
      %v890 = vadd.f32 0.0, %v889
      %v891 = vpop.f32.mrb[0].mxu0
      %892 = vmatprep.mubr.bf16.mxu0 0
      %893 = vmatmul.mubr.bf16.gmra.mrb[0].mxu0 %v576
      %v894 = vpop.f32.mrb[0].mxu0
      %v895 = vadd.f32 0.0, %v894
      %v896 = vpop.f32.mrb[0].mxu0
      %v897 = vpop.f32.mrb[0].mxu0
      %v898 = vadd.f32 0.0, %v897
      %v899 = vpop.f32.mrb[0].mxu0
      %900 = vmatprep.mubr.bf16.mxu0 0
      %901 = vmatmul.mubr.bf16.gmra.mrb[0].mxu0 %v577
      %v902 = vpop.f32.mrb[0].mxu0
      %v903 = vadd.f32 0.0, %v902
      %v904 = vpop.f32.mrb[0].mxu0
      %v905 = vpop.f32.mrb[0].mxu0
      %v906 = vadd.f32 0.0, %v905
      %v907 = vpop.f32.mrb[0].mxu0
      %908 = vmatprep.mubr.bf16.mxu0 0
      %909 = vmatmul.mubr.bf16.gmra.mrb[0].mxu0 %v578
      %v910 = vpop.f32.mrb[0].mxu0
      %v911 = vadd.f32 0.0, %v910
      %v912 = vpop.f32.mrb[0].mxu0
      %v913 = vpop.f32.mrb[0].mxu0
      %v914 = vadd.f32 0.0, %v913
      %v915 = vpop.f32.mrb[0].mxu0
      %916 = vdwg.mxu0
      %v933 = vunpack.c.l.b16 %v473
      %v934 = vunpack.c.l.b16 %v474
      %v935 = vunpack.c.l.b16 %v475
      %v936 = vunpack.c.l.b16 %v476
      %v937 = vunpack.c.l.b16 %v477
      %v938 = vunpack.c.l.b16 %v478
      %v939 = vunpack.c.l.b16 %v479
      %v940 = vunpack.c.l.b16 %v480
      %v941 = vunpack.c.l.b16 %v481
      %v942 = vunpack.c.l.b16 %v482
      %v943 = vunpack.c.l.b16 %v483
      %v944 = vunpack.c.l.b16 %v484
      %v945 = vunpack.c.l.b16 %v485
      %v946 = vunpack.c.l.b16 %v486
      %v947 = vunpack.c.l.b16 %v487
      %v948 = vunpack.c.l.b16 %v488
      %v949 = vpack.c.b16 %v934, %v933
      %v950 = vpack.c.b16 %v936, %v935
      %v951 = vpack.c.b16 %v938, %v937
      %v952 = vpack.c.b16 %v940, %v939
      %v953 = vpack.c.b16 %v942, %v941
      %v954 = vpack.c.b16 %v944, %v943
      %v955 = vpack.c.b16 %v946, %v945
      %v956 = vpack.c.b16 %v948, %v947
      %965 = vmatprep.subr.bf16.mxu0 0
      %966 = vmatpush1.bf16.msra.mxu0 %v949
      %967 = vmatprep.subr.bf16.mxu0 0
      %968 = vmatpush1.bf16.msra.mxu0 %v950
      %969 = vmatprep.subr.bf16.mxu0 0
      %970 = vmatpush1.bf16.msra.mxu0 %v951
      %971 = vmatprep.subr.bf16.mxu0 0
      %972 = vmatpush1.bf16.msra.mxu0 %v952
      %973 = vmatprep.subr.bf16.mxu0 0
      %974 = vmatpush1.bf16.msra.mxu0 %v953
      %975 = vmatprep.subr.bf16.mxu0 0
      %976 = vmatpush1.bf16.msra.mxu0 %v954
      %977 = vmatprep.subr.bf16.mxu0 0
      %978 = vmatpush1.bf16.msra.mxu0 %v955
      %979 = vmatprep.subr.bf16.mxu0 0
      %980 = vmatpush1.bf16.msra.mxu0 %v956
      %981 = vmatprep.subr.bf16.mxu0 0
      %982 = vmatpush1.bf16.msra.mxu0 0
      %983 = vmatprep.subr.bf16.mxu0 0
      %984 = vmatpush1.bf16.msra.mxu0 0
      %985 = vmatprep.subr.bf16.mxu0 0
      %986 = vmatpush1.bf16.msra.mxu0 0
      %987 = vmatprep.subr.bf16.mxu0 0
      %988 = vmatpush1.bf16.msra.mxu0 0
      %989 = vmatprep.subr.bf16.mxu0 0
      %990 = vmatpush1.bf16.msra.mxu0 0
      %991 = vmatprep.subr.bf16.mxu0 0
      %992 = vmatpush1.bf16.msra.mxu0 0
      %993 = vmatprep.subr.bf16.mxu0 0
      %994 = vmatpush1.bf16.msra.mxu0 0
      %995 = vmatprep.subr.bf16.mxu0 0
      %996 = vmatpush1.bf16.msra.mxu0 0
      %997 = vmatprep.mubr.bf16.mxu0 0
      %998 = vmatmul.mubr.bf16.gmra.mrb[0].mxu0 %v443
      %v999 = vpop.f32.mrb[0].mxu0
      %v1000 = vadd.f32 %v679, %v999
      %v1001 = vpop.f32.mrb[0].mxu0
      %v1002 = vpop.f32.mrb[0].mxu0
      %v1003 = vadd.f32 %v682, %v1002
      %v1004 = vpop.f32.mrb[0].mxu0
      %1005 = vmatprep.mubr.bf16.mxu0 0
      %1006 = vmatmul.mubr.bf16.gmra.mrb[0].mxu0 %v444
      %v1007 = vpop.f32.mrb[0].mxu0
      %v1008 = vadd.f32 %v687, %v1007
      %v1009 = vpop.f32.mrb[0].mxu0
      %v1010 = vpop.f32.mrb[0].mxu0
      %v1011 = vadd.f32 %v690, %v1010
      %v1012 = vpop.f32.mrb[0].mxu0
      %1013 = vmatprep.mubr.bf16.mxu0 0
      %1014 = vmatmul.mubr.bf16.gmra.mrb[0].mxu0 %v445
      %v1015 = vpop.f32.mrb[0].mxu0
      %v1016 = vadd.f32 %v695, %v1015
      %v1017 = vpop.f32.mrb[0].mxu0
      %v1018 = vpop.f32.mrb[0].mxu0
      %v1019 = vadd.f32 %v698, %v1018
      %v1020 = vpop.f32.mrb[0].mxu0
      %1021 = vmatprep.mubr.bf16.mxu0 0
      %1022 = vmatmul.mubr.bf16.gmra.mrb[0].mxu0 %v446
      %v1023 = vpop.f32.mrb[0].mxu0
      %v1024 = vadd.f32 %v703, %v1023
      %v1025 = vpop.f32.mrb[0].mxu0
      %v1026 = vpop.f32.mrb[0].mxu0
      %v1027 = vadd.f32 %v706, %v1026
      %v1028 = vpop.f32.mrb[0].mxu0
      %1029 = vmatprep.mubr.bf16.mxu0 0
      %1030 = vmatmul.mubr.bf16.gmra.mrb[0].mxu0 %v447
      %v1031 = vpop.f32.mrb[0].mxu0
      %v1032 = vadd.f32 %v711, %v1031
      %v1033 = vpop.f32.mrb[0].mxu0
      %v1034 = vpop.f32.mrb[0].mxu0
      %v1035 = vadd.f32 %v714, %v1034
      %v1036 = vpop.f32.mrb[0].mxu0
      %1037 = vmatprep.mubr.bf16.mxu0 0
      %1038 = vmatmul.mubr.bf16.gmra.mrb[0].mxu0 %v448
      %v1039 = vpop.f32.mrb[0].mxu0
      %v1040 = vadd.f32 %v719, %v1039
      %v1041 = vpop.f32.mrb[0].mxu0
      %v1042 = vpop.f32.mrb[0].mxu0
      %v1043 = vadd.f32 %v722, %v1042
      %v1044 = vpop.f32.mrb[0].mxu0
      %1045 = vmatprep.mubr.bf16.mxu0 0
      %1046 = vmatmul.mubr.bf16.gmra.mrb[0].mxu0 %v449
      %v1047 = vpop.f32.mrb[0].mxu0
      %v1048 = vadd.f32 %v727, %v1047
      %v1049 = vpop.f32.mrb[0].mxu0
      %v1050 = vpop.f32.mrb[0].mxu0
      %v1051 = vadd.f32 %v730, %v1050
      %v1052 = vpop.f32.mrb[0].mxu0
      %1053 = vmatprep.mubr.bf16.mxu0 0
      %1054 = vmatmul.mubr.bf16.gmra.mrb[0].mxu0 %v450
      %v1055 = vpop.f32.mrb[0].mxu0
      %v1056 = vadd.f32 %v735, %v1055
      %v1057 = vpop.f32.mrb[0].mxu0
      %v1058 = vpop.f32.mrb[0].mxu0
      %v1059 = vadd.f32 %v738, %v1058
      %v1060 = vpop.f32.mrb[0].mxu0
      %1061 = vmatprep.mubr.bf16.mxu0 0
      %1062 = vmatmul.mubr.bf16.gmra.mrb[0].mxu0 %v451
      %v1063 = vpop.f32.mrb[0].mxu0
      %v1064 = vadd.f32 %v743, %v1063
      %v1065 = vpop.f32.mrb[0].mxu0
      %v1066 = vpop.f32.mrb[0].mxu0
      %v1067 = vadd.f32 %v746, %v1066
      %v1068 = vpop.f32.mrb[0].mxu0
      %1069 = vmatprep.mubr.bf16.mxu0 0
      %1070 = vmatmul.mubr.bf16.gmra.mrb[0].mxu0 %v452
      %v1071 = vpop.f32.mrb[0].mxu0
      %v1072 = vadd.f32 %v751, %v1071
      %v1073 = vpop.f32.mrb[0].mxu0
      %v1074 = vpop.f32.mrb[0].mxu0
      %v1075 = vadd.f32 %v754, %v1074
      %v1076 = vpop.f32.mrb[0].mxu0
      %1077 = vmatprep.mubr.bf16.mxu0 0
      %1078 = vmatmul.mubr.bf16.gmra.mrb[0].mxu0 %v453
      %v1079 = vpop.f32.mrb[0].mxu0
      %v1080 = vadd.f32 %v759, %v1079
      %v1081 = vpop.f32.mrb[0].mxu0
      %v1082 = vpop.f32.mrb[0].mxu0
      %v1083 = vadd.f32 %v762, %v1082
      %v1084 = vpop.f32.mrb[0].mxu0
      %1085 = vmatprep.mubr.bf16.mxu0 0
      %1086 = vmatmul.mubr.bf16.gmra.mrb[0].mxu0 %v454
      %v1087 = vpop.f32.mrb[0].mxu0
      %v1088 = vadd.f32 %v767, %v1087
      %v1089 = vpop.f32.mrb[0].mxu0
      %v1090 = vpop.f32.mrb[0].mxu0
      %v1091 = vadd.f32 %v770, %v1090
      %v1092 = vpop.f32.mrb[0].mxu0
      %1093 = vmatprep.mubr.bf16.mxu0 0
      %1094 = vmatmul.mubr.bf16.gmra.mrb[0].mxu0 %v455
      %v1095 = vpop.f32.mrb[0].mxu0
      %v1096 = vadd.f32 %v775, %v1095
      %v1097 = vpop.f32.mrb[0].mxu0
      %v1098 = vpop.f32.mrb[0].mxu0
      %v1099 = vadd.f32 %v778, %v1098
      %v1100 = vpop.f32.mrb[0].mxu0
      %1101 = vmatprep.mubr.bf16.mxu0 0
      %1102 = vmatmul.mubr.bf16.gmra.mrb[0].mxu0 %v456
      %v1103 = vpop.f32.mrb[0].mxu0
      %v1104 = vadd.f32 %v783, %v1103
      %v1105 = vpop.f32.mrb[0].mxu0
      %v1106 = vpop.f32.mrb[0].mxu0
      %v1107 = vadd.f32 %v786, %v1106
      %v1108 = vpop.f32.mrb[0].mxu0
      %1109 = vmatprep.mubr.bf16.mxu0 0
      %1110 = vmatmul.mubr.bf16.gmra.mrb[0].mxu0 %v457
      %v1111 = vpop.f32.mrb[0].mxu0
      %v1112 = vadd.f32 %v791, %v1111
      %v1113 = vpop.f32.mrb[0].mxu0
      %v1114 = vpop.f32.mrb[0].mxu0
      %v1115 = vadd.f32 %v794, %v1114
      %v1116 = vpop.f32.mrb[0].mxu0
      %1117 = vmatprep.mubr.bf16.mxu0 0
      %1118 = vmatmul.mubr.bf16.gmra.mrb[0].mxu0 %v458
      %v1119 = vpop.f32.mrb[0].mxu0
      %v1120 = vadd.f32 %v799, %v1119
      %v1121 = vpop.f32.mrb[0].mxu0
      %v1122 = vpop.f32.mrb[0].mxu0
      %v1123 = vadd.f32 %v802, %v1122
      %v1124 = vpop.f32.mrb[0].mxu0
      %1125 = vmatprep.mubr.bf16.mxu0 0
      %1126 = vmatmul.mubr.bf16.gmra.mrb[0].mxu0 %v459
      %v1127 = vpop.f32.mrb[0].mxu0
      %v1128 = vadd.f32 %v807, %v1127
      %v1129 = vpop.f32.mrb[0].mxu0
      %v1130 = vpop.f32.mrb[0].mxu0
      %v1131 = vadd.f32 %v810, %v1130
      %v1132 = vpop.f32.mrb[0].mxu0
      %1133 = vmatprep.mubr.bf16.mxu0 0
      %1134 = vmatmul.mubr.bf16.gmra.mrb[0].mxu0 %v460
      %v1135 = vpop.f32.mrb[0].mxu0
      %v1136 = vadd.f32 %v815, %v1135
      %v1137 = vpop.f32.mrb[0].mxu0
      %v1138 = vpop.f32.mrb[0].mxu0
      %v1139 = vadd.f32 %v818, %v1138
      %v1140 = vpop.f32.mrb[0].mxu0
      %1141 = vmatprep.mubr.bf16.mxu0 0
      %1142 = vmatmul.mubr.bf16.gmra.mrb[0].mxu0 %v461
      %v1143 = vpop.f32.mrb[0].mxu0
      %v1144 = vadd.f32 %v823, %v1143
      %v1145 = vpop.f32.mrb[0].mxu0
      %v1146 = vpop.f32.mrb[0].mxu0
      %v1147 = vadd.f32 %v826, %v1146
      %v1148 = vpop.f32.mrb[0].mxu0
      %1149 = vmatprep.mubr.bf16.mxu0 0
      %1150 = vmatmul.mubr.bf16.gmra.mrb[0].mxu0 %v462
      %v1151 = vpop.f32.mrb[0].mxu0
      %v1152 = vadd.f32 %v831, %v1151
      %v1153 = vpop.f32.mrb[0].mxu0
      %v1154 = vpop.f32.mrb[0].mxu0
      %v1155 = vadd.f32 %v834, %v1154
      %v1156 = vpop.f32.mrb[0].mxu0
      %1157 = vmatprep.mubr.bf16.mxu0 0
      %1158 = vmatmul.mubr.bf16.gmra.mrb[0].mxu0 %v463
      %v1159 = vpop.f32.mrb[0].mxu0
      %v1160 = vadd.f32 %v839, %v1159
      %v1161 = vpop.f32.mrb[0].mxu0
      %v1162 = vpop.f32.mrb[0].mxu0
      %v1163 = vadd.f32 %v842, %v1162
      %v1164 = vpop.f32.mrb[0].mxu0
      %1165 = vmatprep.mubr.bf16.mxu0 0
      %1166 = vmatmul.mubr.bf16.gmra.mrb[0].mxu0 %v464
      %v1167 = vpop.f32.mrb[0].mxu0
      %v1168 = vadd.f32 %v847, %v1167
      %v1169 = vpop.f32.mrb[0].mxu0
      %v1170 = vpop.f32.mrb[0].mxu0
      %v1171 = vadd.f32 %v850, %v1170
      %v1172 = vpop.f32.mrb[0].mxu0
      %1173 = vmatprep.mubr.bf16.mxu0 0
      %1174 = vmatmul.mubr.bf16.gmra.mrb[0].mxu0 %v465
      %v1175 = vpop.f32.mrb[0].mxu0
      %v1176 = vadd.f32 %v855, %v1175
      %v1177 = vpop.f32.mrb[0].mxu0
      %v1178 = vpop.f32.mrb[0].mxu0
      %v1179 = vadd.f32 %v858, %v1178
      %v1180 = vpop.f32.mrb[0].mxu0
      %1181 = vmatprep.mubr.bf16.mxu0 0
      %1182 = vmatmul.mubr.bf16.gmra.mrb[0].mxu0 %v466
      %v1183 = vpop.f32.mrb[0].mxu0
      %v1184 = vadd.f32 %v863, %v1183
      %v1185 = vpop.f32.mrb[0].mxu0
      %v1186 = vpop.f32.mrb[0].mxu0
      %v1187 = vadd.f32 %v866, %v1186
      %v1188 = vpop.f32.mrb[0].mxu0
      %1189 = vmatprep.mubr.bf16.mxu0 0
      %1190 = vmatmul.mubr.bf16.gmra.mrb[0].mxu0 %v467
      %v1191 = vpop.f32.mrb[0].mxu0
      %v1192 = vadd.f32 %v871, %v1191
      %v1193 = vpop.f32.mrb[0].mxu0
      %v1194 = vpop.f32.mrb[0].mxu0
      %v1195 = vadd.f32 %v874, %v1194
      %v1196 = vpop.f32.mrb[0].mxu0
      %1197 = vmatprep.mubr.bf16.mxu0 0
      %1198 = vmatmul.mubr.bf16.gmra.mrb[0].mxu0 %v468
      %v1199 = vpop.f32.mrb[0].mxu0
      %v1200 = vadd.f32 %v879, %v1199
      %v1201 = vpop.f32.mrb[0].mxu0
      %v1202 = vpop.f32.mrb[0].mxu0
      %v1203 = vadd.f32 %v882, %v1202
      %v1204 = vpop.f32.mrb[0].mxu0
      %1205 = vmatprep.mubr.bf16.mxu0 0
      %1206 = vmatmul.mubr.bf16.gmra.mrb[0].mxu0 %v469
      %v1207 = vpop.f32.mrb[0].mxu0
      %v1208 = vadd.f32 %v887, %v1207
      %v1209 = vpop.f32.mrb[0].mxu0
      %v1210 = vpop.f32.mrb[0].mxu0
      %v1211 = vadd.f32 %v890, %v1210
      %v1212 = vpop.f32.mrb[0].mxu0
      %1213 = vmatprep.mubr.bf16.mxu0 0
      %1214 = vmatmul.mubr.bf16.gmra.mrb[0].mxu0 %v470
      %v1215 = vpop.f32.mrb[0].mxu0
      %v1216 = vadd.f32 %v895, %v1215
      %v1217 = vpop.f32.mrb[0].mxu0
      %v1218 = vpop.f32.mrb[0].mxu0
      %v1219 = vadd.f32 %v898, %v1218
      %v1220 = vpop.f32.mrb[0].mxu0
      %1221 = vmatprep.mubr.bf16.mxu0 0
      %1222 = vmatmul.mubr.bf16.gmra.mrb[0].mxu0 %v471
      %v1223 = vpop.f32.mrb[0].mxu0
      %v1224 = vadd.f32 %v903, %v1223
      %v1225 = vpop.f32.mrb[0].mxu0
      %v1226 = vpop.f32.mrb[0].mxu0
      %v1227 = vadd.f32 %v906, %v1226
      %v1228 = vpop.f32.mrb[0].mxu0
      %1229 = vmatprep.mubr.bf16.mxu0 0
      %1230 = vmatmul.mubr.bf16.gmra.mrb[0].mxu0 %v472
      %v1231 = vpop.f32.mrb[0].mxu0
      %v1232 = vadd.f32 %v911, %v1231
      %v1233 = vpop.f32.mrb[0].mxu0
      %v1234 = vpop.f32.mrb[0].mxu0
      %v1235 = vadd.f32 %v914, %v1234
      %v1236 = vpop.f32.mrb[0].mxu0
      %1237 = vdwg.mxu0
      %v1238 = vld [vmem:[%s365 + $0x19] sm:$0xff]
      %v1239 = vld [vmem:[%s365 + $0x21] sm:$0xff]
      %v1240 = vld [vmem:[%s365 + $0x29] sm:$0xff]
      %v1241 = vld [vmem:[%s365 + $0x31] sm:$0xff]
      %v1242 = vld [vmem:[%s365 + $0x39] sm:$0xff]
      %v1243 = vld [vmem:[%s365 + $0x41] sm:$0xff]
      %v1244 = vld [vmem:[%s365 + $0x49] sm:$0xff]
      %v1245 = vld [vmem:[%s365 + $0x51] sm:$0xff]
      %v1246 = vld [vmem:[%s365 + $0x59] sm:$0xff]
      %v1247 = vld [vmem:[%s365 + $0x61] sm:$0xff]
      %v1248 = vld [vmem:[%s365 + $0x69] sm:$0xff]
      %v1249 = vld [vmem:[%s365 + $0x71] sm:$0xff]
      %v1250 = vld [vmem:[%s365 + $0x79] sm:$0xff]
      %v1251 = vld [vmem:[%s365 + $0x81] sm:$0xff]
      %v1252 = vld [vmem:[%s365 + $0x89] sm:$0xff]
      %v1253 = vld [vmem:[%s365 + $0x91] sm:$0xff]
      %v1254 = vld [vmem:[%s365 + $0x99] sm:$0xff]
      %v1255 = vld [vmem:[%s365 + $0xa1] sm:$0xff]
      %v1256 = vld [vmem:[%s365 + $0xa9] sm:$0xff]
      %v1257 = vld [vmem:[%s365 + $0xb1] sm:$0xff]
      %v1258 = vld [vmem:[%s365 + $0xb9] sm:$0xff]
      %v1259 = vld [vmem:[%s365 + $0xc1] sm:$0xff]
      %v1260 = vld [vmem:[%s365 + $0xc9] sm:$0xff]
      %v1261 = vld [vmem:[%s365 + $0xd1] sm:$0xff]
      %v1262 = vld [vmem:[%s365 + $0xd9] sm:$0xff]
      %v1263 = vld [vmem:[%s365 + $0xe1] sm:$0xff]
      %v1264 = vld [vmem:[%s365 + $0xe9] sm:$0xff]
      %v1265 = vld [vmem:[%s365 + $0xf1] sm:$0xff]
      %v1266 = vld [vmem:[%s365 + $0xf9] sm:$0xff]
      %v1267 = vld [vmem:[%s365 + $0x101] sm:$0xff]
      %v1268 = vld [vmem:[%s365 + $0x109] sm:$0xff]
      %v1269 = vld [vmem:[%s365 + $0x111] sm:$0xff]
      %v1270 = vld [vmem:[%s365 + $0x119] sm:$0xff]
      %v1271 = vld [vmem:[%s365 + $0x121] sm:$0xff]
      %v1272 = vld [vmem:[%s365 + $0x129] sm:$0xff]
      %v1273 = vld [vmem:[%s365 + $0x131] sm:$0xff]
      %v1274 = vld [vmem:[%s365 + $0x139] sm:$0xff]
      %v1275 = vld [vmem:[%s365 + $0x141] sm:$0xff]
      %v1276 = vld [vmem:[%s365 + $0x149] sm:$0xff]
      %v1277 = vld [vmem:[%s365 + $0x151] sm:$0xff]
      %v1278 = vld [vmem:[%s365 + $0x159] sm:$0xff]
      %v1279 = vld [vmem:[%s365 + $0x161] sm:$0xff]
      %v1280 = vld [vmem:[%s365 + $0x169] sm:$0xff]
      %v1281 = vld [vmem:[%s365 + $0x171] sm:$0xff]
      %v1282 = vld [vmem:[%s365 + $0x179] sm:$0xff]
      %v1283 = vld [vmem:[%s365 + $0x181] sm:$0xff]
      %v1284 = vld [vmem:[%s365 + $0x189] sm:$0xff]
      %v1285 = vld [vmem:[%s365 + $0x191] sm:$0xff]
      %v1286 = vld [vmem:[%s365 + $0x199] sm:$0xff]
      %v1287 = vld [vmem:[%s365 + $0x1a1] sm:$0xff]
      %v1288 = vld [vmem:[%s365 + $0x1a9] sm:$0xff]
      %v1289 = vld [vmem:[%s365 + $0x1b1] sm:$0xff]
      %v1290 = vld [vmem:[%s365 + $0x1b9] sm:$0xff]
      %v1291 = vld [vmem:[%s365 + $0x1c1] sm:$0xff]
      %v1292 = vld [vmem:[%s365 + $0x1c9] sm:$0xff]
      %v1293 = vld [vmem:[%s365 + $0x1d1] sm:$0xff]
      %v1294 = vld [vmem:[%s365 + $0x1d9] sm:$0xff]
      %v1295 = vld [vmem:[%s365 + $0x1e1] sm:$0xff]
      %v1296 = vld [vmem:[%s365 + $0x1e9] sm:$0xff]
      %v1297 = vld [vmem:[%s365 + $0x1f1] sm:$0xff]
      %v1298 = vpack.c.bf16 %v1239, %v1238
      %v1299 = vpack.c.bf16 %v1241, %v1240
      %v1300 = vpack.c.bf16 %v1243, %v1242
      %v1301 = vpack.c.bf16 %v1245, %v1244
      %v1302 = vpack.c.bf16 %v1247, %v1246
      %v1303 = vpack.c.bf16 %v1249, %v1248
      %v1304 = vpack.c.bf16 %v1251, %v1250
      %v1305 = vpack.c.bf16 %v1253, %v1252
      %v1306 = vpack.c.bf16 %v1255, %v1254
      %v1307 = vpack.c.bf16 %v1257, %v1256
      %v1308 = vpack.c.bf16 %v1259, %v1258
      %v1309 = vpack.c.bf16 %v1261, %v1260
      %v1310 = vpack.c.bf16 %v1263, %v1262
      %v1311 = vpack.c.bf16 %v1265, %v1264
      %v1312 = vpack.c.bf16 %v1267, %v1266
      %v1313 = vpack.c.bf16 %v1269, %v1268
      %v1314 = vpack.c.bf16 %v1271, %v1270
      %v1315 = vpack.c.bf16 %v1273, %v1272
      %v1316 = vpack.c.bf16 %v1275, %v1274
      %v1317 = vpack.c.bf16 %v1277, %v1276
      %v1318 = vpack.c.bf16 %v1279, %v1278
      %v1319 = vpack.c.bf16 %v1281, %v1280
      %v1320 = vpack.c.bf16 %v1283, %v1282
      %v1321 = vpack.c.bf16 %v1285, %v1284
      %v1322 = vpack.c.bf16 %v1287, %v1286
      %v1323 = vpack.c.bf16 %v1289, %v1288
      %v1324 = vpack.c.bf16 %v1291, %v1290
      %v1325 = vpack.c.bf16 %v1293, %v1292
      %v1326 = vpack.c.bf16 %v1295, %v1294
      %v1327 = vpack.c.bf16 %v1297, %v1296
      %s1328 = scalar_lea.vmem %s2, 128
      %v1329 = vld [vmem:[%s1328] sm:$0xf]
      %v1330 = vld [vmem:[%s1328 + $0x4] sm:$0xf]
      %v1331 = vld [vmem:[%s1328 + $0x8] sm:$0xf]
      %v1332 = vld [vmem:[%s1328 + $0xc] sm:$0xf]
      %v1333 = vld [vmem:[%s1328 + $0x10] sm:$0xf]
      %v1334 = vld [vmem:[%s1328 + $0x14] sm:$0xf]
      %v1335 = vld [vmem:[%s1328 + $0x18] sm:$0xf]
      %v1336 = vld [vmem:[%s1328 + $0x1c] sm:$0xf]
      %v1337 = vld [vmem:[%s1328 + $0x20] sm:$0xf]
      %v1338 = vld [vmem:[%s1328 + $0x24] sm:$0xf]
      %v1339 = vld [vmem:[%s1328 + $0x28] sm:$0xf]
      %v1340 = vld [vmem:[%s1328 + $0x2c] sm:$0xf]
      %v1341 = vld [vmem:[%s1328 + $0x30] sm:$0xf]
      %v1342 = vld [vmem:[%s1328 + $0x34] sm:$0xf]
      %v1343 = vld [vmem:[%s1328 + $0x38] sm:$0xf]
      %v1344 = vld [vmem:[%s1328 + $0x3c] sm:$0xf]
      %v1361 = vunpack.c.l.b16 %v1329
      %v1362 = vunpack.c.l.b16 %v1330
      %v1363 = vunpack.c.l.b16 %v1331
      %v1364 = vunpack.c.l.b16 %v1332
      %v1365 = vunpack.c.l.b16 %v1333
      %v1366 = vunpack.c.l.b16 %v1334
      %v1367 = vunpack.c.l.b16 %v1335
      %v1368 = vunpack.c.l.b16 %v1336
      %v1369 = vunpack.c.l.b16 %v1337
      %v1370 = vunpack.c.l.b16 %v1338
      %v1371 = vunpack.c.l.b16 %v1339
      %v1372 = vunpack.c.l.b16 %v1340
      %v1373 = vunpack.c.l.b16 %v1341
      %v1374 = vunpack.c.l.b16 %v1342
      %v1375 = vunpack.c.l.b16 %v1343
      %v1376 = vunpack.c.l.b16 %v1344
      %v1377 = vpack.c.b16 %v1362, %v1361
      %v1378 = vpack.c.b16 %v1364, %v1363
      %v1379 = vpack.c.b16 %v1366, %v1365
      %v1380 = vpack.c.b16 %v1368, %v1367
      %v1381 = vpack.c.b16 %v1370, %v1369
      %v1382 = vpack.c.b16 %v1372, %v1371
      %v1383 = vpack.c.b16 %v1374, %v1373
      %v1384 = vpack.c.b16 %v1376, %v1375
      %1393 = vmatprep.subr.bf16.mxu0 0
      %1394 = vmatpush1.bf16.msra.mxu0 %v1377
      %1395 = vmatprep.subr.bf16.mxu0 0
      %1396 = vmatpush1.bf16.msra.mxu0 %v1378
      %1397 = vmatprep.subr.bf16.mxu0 0
      %1398 = vmatpush1.bf16.msra.mxu0 %v1379
      %1399 = vmatprep.subr.bf16.mxu0 0
      %1400 = vmatpush1.bf16.msra.mxu0 %v1380
      %1401 = vmatprep.subr.bf16.mxu0 0
      %1402 = vmatpush1.bf16.msra.mxu0 %v1381
      %1403 = vmatprep.subr.bf16.mxu0 0
      %1404 = vmatpush1.bf16.msra.mxu0 %v1382
      %1405 = vmatprep.subr.bf16.mxu0 0
      %1406 = vmatpush1.bf16.msra.mxu0 %v1383
      %1407 = vmatprep.subr.bf16.mxu0 0
      %1408 = vmatpush1.bf16.msra.mxu0 %v1384
      %1409 = vmatprep.subr.bf16.mxu0 0
      %1410 = vmatpush1.bf16.msra.mxu0 0
      %1411 = vmatprep.subr.bf16.mxu0 0
      %1412 = vmatpush1.bf16.msra.mxu0 0
      %1413 = vmatprep.subr.bf16.mxu0 0
      %1414 = vmatpush1.bf16.msra.mxu0 0
      %1415 = vmatprep.subr.bf16.mxu0 0
      %1416 = vmatpush1.bf16.msra.mxu0 0
      %1417 = vmatprep.subr.bf16.mxu0 0
      %1418 = vmatpush1.bf16.msra.mxu0 0
      %1419 = vmatprep.subr.bf16.mxu0 0
      %1420 = vmatpush1.bf16.msra.mxu0 0
      %1421 = vmatprep.subr.bf16.mxu0 0
      %1422 = vmatpush1.bf16.msra.mxu0 0
      %1423 = vmatprep.subr.bf16.mxu0 0
      %1424 = vmatpush1.bf16.msra.mxu0 0
      %1425 = vmatprep.mubr.bf16.mxu0 0
      %1426 = vmatmul.mubr.bf16.gmra.mrb[0].mxu0 %v1298
      %v1427 = vpop.f32.mrb[0].mxu0
      %v1428 = vadd.f32 0.0, %v1427
      %v1429 = vpop.f32.mrb[0].mxu0
      %v1430 = vpop.f32.mrb[0].mxu0
      %v1431 = vadd.f32 0.0, %v1430
      %v1432 = vpop.f32.mrb[0].mxu0
      %1433 = vmatprep.mubr.bf16.mxu0 0
      %1434 = vmatmul.mubr.bf16.gmra.mrb[0].mxu0 %v1299
      %v1435 = vpop.f32.mrb[0].mxu0
      %v1436 = vadd.f32 0.0, %v1435
      %v1437 = vpop.f32.mrb[0].mxu0
      %v1438 = vpop.f32.mrb[0].mxu0
      %v1439 = vadd.f32 0.0, %v1438
      %v1440 = vpop.f32.mrb[0].mxu0
      %1441 = vmatprep.mubr.bf16.mxu0 0
      %1442 = vmatmul.mubr.bf16.gmra.mrb[0].mxu0 %v1300
      %v1443 = vpop.f32.mrb[0].mxu0
      %v1444 = vadd.f32 0.0, %v1443
      %v1445 = vpop.f32.mrb[0].mxu0
      %v1446 = vpop.f32.mrb[0].mxu0
      %v1447 = vadd.f32 0.0, %v1446
      %v1448 = vpop.f32.mrb[0].mxu0
      %1449 = vmatprep.mubr.bf16.mxu0 0
      %1450 = vmatmul.mubr.bf16.gmra.mrb[0].mxu0 %v1301
      %v1451 = vpop.f32.mrb[0].mxu0
      %v1452 = vadd.f32 0.0, %v1451
      %v1453 = vpop.f32.mrb[0].mxu0
      %v1454 = vpop.f32.mrb[0].mxu0
      %v1455 = vadd.f32 0.0, %v1454
      %v1456 = vpop.f32.mrb[0].mxu0
      %1457 = vmatprep.mubr.bf16.mxu0 0
      %1458 = vmatmul.mubr.bf16.gmra.mrb[0].mxu0 %v1302
      %v1459 = vpop.f32.mrb[0].mxu0
      %v1460 = vadd.f32 0.0, %v1459
      %v1461 = vpop.f32.mrb[0].mxu0
      %v1462 = vpop.f32.mrb[0].mxu0
      %v1463 = vadd.f32 0.0, %v1462
      %v1464 = vpop.f32.mrb[0].mxu0
      %1465 = vmatprep.mubr.bf16.mxu0 0
      %1466 = vmatmul.mubr.bf16.gmra.mrb[0].mxu0 %v1303
      %v1467 = vpop.f32.mrb[0].mxu0
      %v1468 = vadd.f32 0.0, %v1467
      %v1469 = vpop.f32.mrb[0].mxu0
      %v1470 = vpop.f32.mrb[0].mxu0
      %v1471 = vadd.f32 0.0, %v1470
      %v1472 = vpop.f32.mrb[0].mxu0
      %1473 = vmatprep.mubr.bf16.mxu0 0
      %1474 = vmatmul.mubr.bf16.gmra.mrb[0].mxu0 %v1304
      %v1475 = vpop.f32.mrb[0].mxu0
      %v1476 = vadd.f32 0.0, %v1475
      %v1477 = vpop.f32.mrb[0].mxu0
      %v1478 = vpop.f32.mrb[0].mxu0
      %v1479 = vadd.f32 0.0, %v1478
      %v1480 = vpop.f32.mrb[0].mxu0
      %1481 = vmatprep.mubr.bf16.mxu0 0
      %1482 = vmatmul.mubr.bf16.gmra.mrb[0].mxu0 %v1305
      %v1483 = vpop.f32.mrb[0].mxu0
      %v1484 = vadd.f32 0.0, %v1483
      %v1485 = vpop.f32.mrb[0].mxu0
      %v1486 = vpop.f32.mrb[0].mxu0
      %v1487 = vadd.f32 0.0, %v1486
      %v1488 = vpop.f32.mrb[0].mxu0
      %1489 = vmatprep.mubr.bf16.mxu0 0
      %1490 = vmatmul.mubr.bf16.gmra.mrb[0].mxu0 %v1306
      %v1491 = vpop.f32.mrb[0].mxu0
      %v1492 = vadd.f32 0.0, %v1491
      %v1493 = vpop.f32.mrb[0].mxu0
      %v1494 = vpop.f32.mrb[0].mxu0
      %v1495 = vadd.f32 0.0, %v1494
      %v1496 = vpop.f32.mrb[0].mxu0
      %1497 = vmatprep.mubr.bf16.mxu0 0
      %1498 = vmatmul.mubr.bf16.gmra.mrb[0].mxu0 %v1307
      %v1499 = vpop.f32.mrb[0].mxu0
      %v1500 = vadd.f32 0.0, %v1499
      %v1501 = vpop.f32.mrb[0].mxu0
      %v1502 = vpop.f32.mrb[0].mxu0
      %v1503 = vadd.f32 0.0, %v1502
      %v1504 = vpop.f32.mrb[0].mxu0
      %1505 = vmatprep.mubr.bf16.mxu0 0
      %1506 = vmatmul.mubr.bf16.gmra.mrb[0].mxu0 %v1308
      %v1507 = vpop.f32.mrb[0].mxu0
      %v1508 = vadd.f32 0.0, %v1507
      %v1509 = vpop.f32.mrb[0].mxu0
      %v1510 = vpop.f32.mrb[0].mxu0
      %v1511 = vadd.f32 0.0, %v1510
      %v1512 = vpop.f32.mrb[0].mxu0
      %1513 = vmatprep.mubr.bf16.mxu0 0
      %1514 = vmatmul.mubr.bf16.gmra.mrb[0].mxu0 %v1309
      %v1515 = vpop.f32.mrb[0].mxu0
      %v1516 = vadd.f32 0.0, %v1515
      %v1517 = vpop.f32.mrb[0].mxu0
      %v1518 = vpop.f32.mrb[0].mxu0
      %v1519 = vadd.f32 0.0, %v1518
      %v1520 = vpop.f32.mrb[0].mxu0
      %1521 = vmatprep.mubr.bf16.mxu0 0
      %1522 = vmatmul.mubr.bf16.gmra.mrb[0].mxu0 %v1310
      %v1523 = vpop.f32.mrb[0].mxu0
      %v1524 = vadd.f32 0.0, %v1523
      %v1525 = vpop.f32.mrb[0].mxu0
      %v1526 = vpop.f32.mrb[0].mxu0
      %v1527 = vadd.f32 0.0, %v1526
      %v1528 = vpop.f32.mrb[0].mxu0
      %1529 = vmatprep.mubr.bf16.mxu0 0
      %1530 = vmatmul.mubr.bf16.gmra.mrb[0].mxu0 %v1311
      %v1531 = vpop.f32.mrb[0].mxu0
      %v1532 = vadd.f32 0.0, %v1531
      %v1533 = vpop.f32.mrb[0].mxu0
      %v1534 = vpop.f32.mrb[0].mxu0
      %v1535 = vadd.f32 0.0, %v1534
      %v1536 = vpop.f32.mrb[0].mxu0
      %1537 = vmatprep.mubr.bf16.mxu0 0
      %1538 = vmatmul.mubr.bf16.gmra.mrb[0].mxu0 %v1312
      %v1539 = vpop.f32.mrb[0].mxu0
      %v1540 = vadd.f32 0.0, %v1539
      %v1541 = vpop.f32.mrb[0].mxu0
      %v1542 = vpop.f32.mrb[0].mxu0
      %v1543 = vadd.f32 0.0, %v1542
      %v1544 = vpop.f32.mrb[0].mxu0
      %1545 = vmatprep.mubr.bf16.mxu0 0
      %1546 = vmatmul.mubr.bf16.gmra.mrb[0].mxu0 %v1313
      %v1547 = vpop.f32.mrb[0].mxu0
      %v1548 = vadd.f32 0.0, %v1547
      %v1549 = vpop.f32.mrb[0].mxu0
      %v1550 = vpop.f32.mrb[0].mxu0
      %v1551 = vadd.f32 0.0, %v1550
      %v1552 = vpop.f32.mrb[0].mxu0
      %1553 = vmatprep.mubr.bf16.mxu0 0
      %1554 = vmatmul.mubr.bf16.gmra.mrb[0].mxu0 %v1314
      %v1555 = vpop.f32.mrb[0].mxu0
      %v1556 = vadd.f32 0.0, %v1555
      %v1557 = vpop.f32.mrb[0].mxu0
      %v1558 = vpop.f32.mrb[0].mxu0
      %v1559 = vadd.f32 0.0, %v1558
      %v1560 = vpop.f32.mrb[0].mxu0
      %1561 = vmatprep.mubr.bf16.mxu0 0
      %1562 = vmatmul.mubr.bf16.gmra.mrb[0].mxu0 %v1315
      %v1563 = vpop.f32.mrb[0].mxu0
      %v1564 = vadd.f32 0.0, %v1563
      %v1565 = vpop.f32.mrb[0].mxu0
      %v1566 = vpop.f32.mrb[0].mxu0
      %v1567 = vadd.f32 0.0, %v1566
      %v1568 = vpop.f32.mrb[0].mxu0
      %1569 = vmatprep.mubr.bf16.mxu0 0
      %1570 = vmatmul.mubr.bf16.gmra.mrb[0].mxu0 %v1316
      %v1571 = vpop.f32.mrb[0].mxu0
      %v1572 = vadd.f32 0.0, %v1571
      %v1573 = vpop.f32.mrb[0].mxu0
      %v1574 = vpop.f32.mrb[0].mxu0
      %v1575 = vadd.f32 0.0, %v1574
      %v1576 = vpop.f32.mrb[0].mxu0
      %1577 = vmatprep.mubr.bf16.mxu0 0
      %1578 = vmatmul.mubr.bf16.gmra.mrb[0].mxu0 %v1317
      %v1579 = vpop.f32.mrb[0].mxu0
      %v1580 = vadd.f32 0.0, %v1579
      %v1581 = vpop.f32.mrb[0].mxu0
      %v1582 = vpop.f32.mrb[0].mxu0
      %v1583 = vadd.f32 0.0, %v1582
      %v1584 = vpop.f32.mrb[0].mxu0
      %1585 = vmatprep.mubr.bf16.mxu0 0
      %1586 = vmatmul.mubr.bf16.gmra.mrb[0].mxu0 %v1318
      %v1587 = vpop.f32.mrb[0].mxu0
      %v1588 = vadd.f32 0.0, %v1587
      %v1589 = vpop.f32.mrb[0].mxu0
      %v1590 = vpop.f32.mrb[0].mxu0
      %v1591 = vadd.f32 0.0, %v1590
      %v1592 = vpop.f32.mrb[0].mxu0
      %1593 = vmatprep.mubr.bf16.mxu0 0
      %1594 = vmatmul.mubr.bf16.gmra.mrb[0].mxu0 %v1319
      %v1595 = vpop.f32.mrb[0].mxu0
      %v1596 = vadd.f32 0.0, %v1595
      %v1597 = vpop.f32.mrb[0].mxu0
      %v1598 = vpop.f32.mrb[0].mxu0
      %v1599 = vadd.f32 0.0, %v1598
      %v1600 = vpop.f32.mrb[0].mxu0
      %1601 = vmatprep.mubr.bf16.mxu0 0
      %1602 = vmatmul.mubr.bf16.gmra.mrb[0].mxu0 %v1320
      %v1603 = vpop.f32.mrb[0].mxu0
      %v1604 = vadd.f32 0.0, %v1603
      %v1605 = vpop.f32.mrb[0].mxu0
      %v1606 = vpop.f32.mrb[0].mxu0
      %v1607 = vadd.f32 0.0, %v1606
      %v1608 = vpop.f32.mrb[0].mxu0
      %1609 = vmatprep.mubr.bf16.mxu0 0
      %1610 = vmatmul.mubr.bf16.gmra.mrb[0].mxu0 %v1321
      %v1611 = vpop.f32.mrb[0].mxu0
      %v1612 = vadd.f32 0.0, %v1611
      %v1613 = vpop.f32.mrb[0].mxu0
      %v1614 = vpop.f32.mrb[0].mxu0
      %v1615 = vadd.f32 0.0, %v1614
      %v1616 = vpop.f32.mrb[0].mxu0
      %1617 = vmatprep.mubr.bf16.mxu0 0
      %1618 = vmatmul.mubr.bf16.gmra.mrb[0].mxu0 %v1322
      %v1619 = vpop.f32.mrb[0].mxu0
      %v1620 = vadd.f32 0.0, %v1619
      %v1621 = vpop.f32.mrb[0].mxu0
      %v1622 = vpop.f32.mrb[0].mxu0
      %v1623 = vadd.f32 0.0, %v1622
      %v1624 = vpop.f32.mrb[0].mxu0
      %1625 = vmatprep.mubr.bf16.mxu0 0
      %1626 = vmatmul.mubr.bf16.gmra.mrb[0].mxu0 %v1323
      %v1627 = vpop.f32.mrb[0].mxu0
      %v1628 = vadd.f32 0.0, %v1627
      %v1629 = vpop.f32.mrb[0].mxu0
      %v1630 = vpop.f32.mrb[0].mxu0
      %v1631 = vadd.f32 0.0, %v1630
      %v1632 = vpop.f32.mrb[0].mxu0
      %1633 = vmatprep.mubr.bf16.mxu0 0
      %1634 = vmatmul.mubr.bf16.gmra.mrb[0].mxu0 %v1324
      %v1635 = vpop.f32.mrb[0].mxu0
      %v1636 = vadd.f32 0.0, %v1635
      %v1637 = vpop.f32.mrb[0].mxu0
      %v1638 = vpop.f32.mrb[0].mxu0
      %v1639 = vadd.f32 0.0, %v1638
      %v1640 = vpop.f32.mrb[0].mxu0
      %1641 = vmatprep.mubr.bf16.mxu0 0
      %1642 = vmatmul.mubr.bf16.gmra.mrb[0].mxu0 %v1325
      %v1643 = vpop.f32.mrb[0].mxu0
      %v1644 = vadd.f32 0.0, %v1643
      %v1645 = vpop.f32.mrb[0].mxu0
      %v1646 = vpop.f32.mrb[0].mxu0
      %v1647 = vadd.f32 0.0, %v1646
      %v1648 = vpop.f32.mrb[0].mxu0
      %1649 = vmatprep.mubr.bf16.mxu0 0
      %1650 = vmatmul.mubr.bf16.gmra.mrb[0].mxu0 %v1326
      %v1651 = vpop.f32.mrb[0].mxu0
      %v1652 = vadd.f32 0.0, %v1651
      %v1653 = vpop.f32.mrb[0].mxu0
      %v1654 = vpop.f32.mrb[0].mxu0
      %v1655 = vadd.f32 0.0, %v1654
      %v1656 = vpop.f32.mrb[0].mxu0
      %1657 = vmatprep.mubr.bf16.mxu0 0
      %1658 = vmatmul.mubr.bf16.gmra.mrb[0].mxu0 %v1327
      %v1659 = vpop.f32.mrb[0].mxu0
      %v1660 = vadd.f32 0.0, %v1659
      %v1661 = vpop.f32.mrb[0].mxu0
      %v1662 = vpop.f32.mrb[0].mxu0
      %v1663 = vadd.f32 0.0, %v1662
      %v1664 = vpop.f32.mrb[0].mxu0
      %1665 = vdwg.mxu0
      %v1666 = vadd.f32 %v1000, %v1428
      %v1667 = vadd.f32 %v1003, %v1431
      %v1668 = vadd.f32 %v1008, %v1436
      %v1669 = vadd.f32 %v1011, %v1439
      %v1670 = vadd.f32 %v1016, %v1444
      %v1671 = vadd.f32 %v1019, %v1447
      %v1672 = vadd.f32 %v1024, %v1452
      %v1673 = vadd.f32 %v1027, %v1455
      %v1674 = vadd.f32 %v1032, %v1460
      %v1675 = vadd.f32 %v1035, %v1463
      %v1676 = vadd.f32 %v1040, %v1468
      %v1677 = vadd.f32 %v1043, %v1471
      %v1678 = vadd.f32 %v1048, %v1476
      %v1679 = vadd.f32 %v1051, %v1479
      %v1680 = vadd.f32 %v1056, %v1484
      %v1681 = vadd.f32 %v1059, %v1487
      %v1682 = vadd.f32 %v1064, %v1492
      %v1683 = vadd.f32 %v1067, %v1495
      %v1684 = vadd.f32 %v1072, %v1500
      %v1685 = vadd.f32 %v1075, %v1503
      %v1686 = vadd.f32 %v1080, %v1508
      %v1687 = vadd.f32 %v1083, %v1511
      %v1688 = vadd.f32 %v1088, %v1516
      %v1689 = vadd.f32 %v1091, %v1519
      %v1690 = vadd.f32 %v1096, %v1524
      %v1691 = vadd.f32 %v1099, %v1527
      %v1692 = vadd.f32 %v1104, %v1532
      %v1693 = vadd.f32 %v1107, %v1535
      %v1694 = vadd.f32 %v1112, %v1540
      %v1695 = vadd.f32 %v1115, %v1543
      %v1696 = vadd.f32 %v1120, %v1548
      %v1697 = vadd.f32 %v1123, %v1551
      %v1698 = vadd.f32 %v1128, %v1556
      %v1699 = vadd.f32 %v1131, %v1559
      %v1700 = vadd.f32 %v1136, %v1564
      %v1701 = vadd.f32 %v1139, %v1567
      %v1702 = vadd.f32 %v1144, %v1572
      %v1703 = vadd.f32 %v1147, %v1575
      %v1704 = vadd.f32 %v1152, %v1580
      %v1705 = vadd.f32 %v1155, %v1583
      %v1706 = vadd.f32 %v1160, %v1588
      %v1707 = vadd.f32 %v1163, %v1591
      %v1708 = vadd.f32 %v1168, %v1596
      %v1709 = vadd.f32 %v1171, %v1599
      %v1710 = vadd.f32 %v1176, %v1604
      %v1711 = vadd.f32 %v1179, %v1607
      %v1712 = vadd.f32 %v1184, %v1612
      %v1713 = vadd.f32 %v1187, %v1615
      %v1714 = vadd.f32 %v1192, %v1620
      %v1715 = vadd.f32 %v1195, %v1623
      %v1716 = vadd.f32 %v1200, %v1628
      %v1717 = vadd.f32 %v1203, %v1631
      %v1718 = vadd.f32 %v1208, %v1636
      %v1719 = vadd.f32 %v1211, %v1639
      %v1720 = vadd.f32 %v1216, %v1644
      %v1721 = vadd.f32 %v1219, %v1647
      %v1722 = vadd.f32 %v1224, %v1652
      %v1723 = vadd.f32 %v1227, %v1655
      %v1724 = vadd.f32 %v1232, %v1660
      %v1725 = vadd.f32 %v1235, %v1663
      %v1726 = vld [vmem:[%s365 + $0x2f] sm:$0xff]
      %v1727 = vld [vmem:[%s365 + $0x37] sm:$0xff]
      %v1728 = vld [vmem:[%s365 + $0x3f] sm:$0xff]
      %v1729 = vld [vmem:[%s365 + $0x47] sm:$0xff]
      %v1730 = vld [vmem:[%s365 + $0x4f] sm:$0xff]
      %v1731 = vld [vmem:[%s365 + $0x57] sm:$0xff]
      %v1732 = vld [vmem:[%s365 + $0x5f] sm:$0xff]
      %v1733 = vld [vmem:[%s365 + $0x67] sm:$0xff]
      %v1734 = vld [vmem:[%s365 + $0x6f] sm:$0xff]
      %v1735 = vld [vmem:[%s365 + $0x77] sm:$0xff]
      %v1736 = vld [vmem:[%s365 + $0x7f] sm:$0xff]
      %v1737 = vld [vmem:[%s365 + $0x87] sm:$0xff]
      %v1738 = vld [vmem:[%s365 + $0x8f] sm:$0xff]
      %v1739 = vld [vmem:[%s365 + $0x97] sm:$0xff]
      %v1740 = vld [vmem:[%s365 + $0x9f] sm:$0xff]
      %v1741 = vld [vmem:[%s365 + $0xa7] sm:$0xff]
      %v1742 = vld [vmem:[%s365 + $0xaf] sm:$0xff]
      %v1743 = vld [vmem:[%s365 + $0xb7] sm:$0xff]
      %v1744 = vld [vmem:[%s365 + $0xbf] sm:$0xff]
      %v1745 = vld [vmem:[%s365 + $0xc7] sm:$0xff]
      %v1746 = vld [vmem:[%s365 + $0xcf] sm:$0xff]
      %v1747 = vld [vmem:[%s365 + $0xd7] sm:$0xff]
      %v1748 = vld [vmem:[%s365 + $0xdf] sm:$0xff]
      %v1749 = vld [vmem:[%s365 + $0xe7] sm:$0xff]
      %v1750 = vld [vmem:[%s365 + $0xef] sm:$0xff]
      %v1751 = vld [vmem:[%s365 + $0xf7] sm:$0xff]
      %v1752 = vld [vmem:[%s365 + $0xff] sm:$0xff]
      %v1753 = vld [vmem:[%s365 + $0x107] sm:$0xff]
      %v1754 = vld [vmem:[%s365 + $0x10f] sm:$0xff]
      %v1755 = vld [vmem:[%s365 + $0x117] sm:$0xff]
      %v1756 = vld [vmem:[%s365 + $0x11f] sm:$0xff]
      %v1757 = vld [vmem:[%s365 + $0x127] sm:$0xff]
      %v1758 = vld [vmem:[%s365 + $0x12f] sm:$0xff]
      %v1759 = vld [vmem:[%s365 + $0x137] sm:$0xff]
      %v1760 = vld [vmem:[%s365 + $0x13f] sm:$0xff]
      %v1761 = vld [vmem:[%s365 + $0x147] sm:$0xff]
      %v1762 = vld [vmem:[%s365 + $0x14f] sm:$0xff]
      %v1763 = vld [vmem:[%s365 + $0x157] sm:$0xff]
      %v1764 = vld [vmem:[%s365 + $0x15f] sm:$0xff]
      %v1765 = vld [vmem:[%s365 + $0x167] sm:$0xff]
      %v1766 = vld [vmem:[%s365 + $0x16f] sm:$0xff]
      %v1767 = vld [vmem:[%s365 + $0x177] sm:$0xff]
      %v1768 = vld [vmem:[%s365 + $0x17f] sm:$0xff]
      %v1769 = vld [vmem:[%s365 + $0x187] sm:$0xff]
      %v1770 = vld [vmem:[%s365 + $0x18f] sm:$0xff]
      %v1771 = vld [vmem:[%s365 + $0x197] sm:$0xff]
      %v1772 = vld [vmem:[%s365 + $0x19f] sm:$0xff]
      %v1773 = vld [vmem:[%s365 + $0x1a7] sm:$0xff]
      %v1774 = vld [vmem:[%s365 + $0x1af] sm:$0xff]
      %v1775 = vld [vmem:[%s365 + $0x1b7] sm:$0xff]
      %v1776 = vld [vmem:[%s365 + $0x1bf] sm:$0xff]
      %v1777 = vld [vmem:[%s365 + $0x1c7] sm:$0xff]
      %v1778 = vld [vmem:[%s365 + $0x1cf] sm:$0xff]
      %v1779 = vld [vmem:[%s365 + $0x1d7] sm:$0xff]
      %v1780 = vld [vmem:[%s365 + $0x1df] sm:$0xff]
      %v1781 = vld [vmem:[%s365 + $0x1e7] sm:$0xff]
      %v1782 = vld [vmem:[%s365 + $0x1ef] sm:$0xff]
      %v1783 = vld [vmem:[%s365 + $0x1f7] sm:$0xff]
      %v1784 = vld [vmem:[%s365 + $0x1ff] sm:$0xff]
      %v1785 = vld [vmem:[%s365 + $0x207] sm:$0xff]
      %v1786 = vpack.c.bf16 %v1727, %v1726
      %v1787 = vpack.c.bf16 %v1729, %v1728
      %v1788 = vpack.c.bf16 %v1731, %v1730
      %v1789 = vpack.c.bf16 %v1733, %v1732
      %v1790 = vpack.c.bf16 %v1735, %v1734
      %v1791 = vpack.c.bf16 %v1737, %v1736
      %v1792 = vpack.c.bf16 %v1739, %v1738
      %v1793 = vpack.c.bf16 %v1741, %v1740
      %v1794 = vpack.c.bf16 %v1743, %v1742
      %v1795 = vpack.c.bf16 %v1745, %v1744
      %v1796 = vpack.c.bf16 %v1747, %v1746
      %v1797 = vpack.c.bf16 %v1749, %v1748
      %v1798 = vpack.c.bf16 %v1751, %v1750
      %v1799 = vpack.c.bf16 %v1753, %v1752
      %v1800 = vpack.c.bf16 %v1755, %v1754
      %v1801 = vpack.c.bf16 %v1757, %v1756
      %v1802 = vpack.c.bf16 %v1759, %v1758
      %v1803 = vpack.c.bf16 %v1761, %v1760
      %v1804 = vpack.c.bf16 %v1763, %v1762
      %v1805 = vpack.c.bf16 %v1765, %v1764
      %v1806 = vpack.c.bf16 %v1767, %v1766
      %v1807 = vpack.c.bf16 %v1769, %v1768
      %v1808 = vpack.c.bf16 %v1771, %v1770
      %v1809 = vpack.c.bf16 %v1773, %v1772
      %v1810 = vpack.c.bf16 %v1775, %v1774
      %v1811 = vpack.c.bf16 %v1777, %v1776
      %v1812 = vpack.c.bf16 %v1779, %v1778
      %v1813 = vpack.c.bf16 %v1781, %v1780
      %v1814 = vpack.c.bf16 %v1783, %v1782
      %v1815 = vpack.c.bf16 %v1785, %v1784
      %s1816 = scalar_lea.vmem %s2, 192
      %v1817 = vld [vmem:[%s1816] sm:$0xf]
      %v1818 = vld [vmem:[%s1816 + $0x4] sm:$0xf]
      %v1819 = vld [vmem:[%s1816 + $0x8] sm:$0xf]
      %v1820 = vld [vmem:[%s1816 + $0xc] sm:$0xf]
      %v1821 = vld [vmem:[%s1816 + $0x10] sm:$0xf]
      %v1822 = vld [vmem:[%s1816 + $0x14] sm:$0xf]
      %v1823 = vld [vmem:[%s1816 + $0x18] sm:$0xf]
      %v1824 = vld [vmem:[%s1816 + $0x1c] sm:$0xf]
      %v1825 = vld [vmem:[%s1816 + $0x20] sm:$0xf]
      %v1826 = vld [vmem:[%s1816 + $0x24] sm:$0xf]
      %v1827 = vld [vmem:[%s1816 + $0x28] sm:$0xf]
      %v1828 = vld [vmem:[%s1816 + $0x2c] sm:$0xf]
      %v1829 = vld [vmem:[%s1816 + $0x30] sm:$0xf]
      %v1830 = vld [vmem:[%s1816 + $0x34] sm:$0xf]
      %v1831 = vld [vmem:[%s1816 + $0x38] sm:$0xf]
      %v1832 = vld [vmem:[%s1816 + $0x3c] sm:$0xf]
      %v1849 = vunpack.c.l.b16 %v1817
      %v1850 = vunpack.c.l.b16 %v1818
      %v1851 = vunpack.c.l.b16 %v1819
      %v1852 = vunpack.c.l.b16 %v1820
      %v1853 = vunpack.c.l.b16 %v1821
      %v1854 = vunpack.c.l.b16 %v1822
      %v1855 = vunpack.c.l.b16 %v1823
      %v1856 = vunpack.c.l.b16 %v1824
      %v1857 = vunpack.c.l.b16 %v1825
      %v1858 = vunpack.c.l.b16 %v1826
      %v1859 = vunpack.c.l.b16 %v1827
      %v1860 = vunpack.c.l.b16 %v1828
      %v1861 = vunpack.c.l.b16 %v1829
      %v1862 = vunpack.c.l.b16 %v1830
      %v1863 = vunpack.c.l.b16 %v1831
      %v1864 = vunpack.c.l.b16 %v1832
      %v1865 = vpack.c.b16 %v1850, %v1849
      %v1866 = vpack.c.b16 %v1852, %v1851
      %v1867 = vpack.c.b16 %v1854, %v1853
      %v1868 = vpack.c.b16 %v1856, %v1855
      %v1869 = vpack.c.b16 %v1858, %v1857
      %v1870 = vpack.c.b16 %v1860, %v1859
      %v1871 = vpack.c.b16 %v1862, %v1861
      %v1872 = vpack.c.b16 %v1864, %v1863
      %1881 = vmatprep.subr.bf16.mxu0 0
      %1882 = vmatpush1.bf16.msra.mxu0 %v1865
      %1883 = vmatprep.subr.bf16.mxu0 0
      %1884 = vmatpush1.bf16.msra.mxu0 %v1866
      %1885 = vmatprep.subr.bf16.mxu0 0
      %1886 = vmatpush1.bf16.msra.mxu0 %v1867
      %1887 = vmatprep.subr.bf16.mxu0 0
      %1888 = vmatpush1.bf16.msra.mxu0 %v1868
      %1889 = vmatprep.subr.bf16.mxu0 0
      %1890 = vmatpush1.bf16.msra.mxu0 %v1869
      %1891 = vmatprep.subr.bf16.mxu0 0
      %1892 = vmatpush1.bf16.msra.mxu0 %v1870
      %1893 = vmatprep.subr.bf16.mxu0 0
      %1894 = vmatpush1.bf16.msra.mxu0 %v1871
      %1895 = vmatprep.subr.bf16.mxu0 0
      %1896 = vmatpush1.bf16.msra.mxu0 %v1872
      %1897 = vmatprep.subr.bf16.mxu0 0
      %1898 = vmatpush1.bf16.msra.mxu0 0
      %1899 = vmatprep.subr.bf16.mxu0 0
      %1900 = vmatpush1.bf16.msra.mxu0 0
      %1901 = vmatprep.subr.bf16.mxu0 0
      %1902 = vmatpush1.bf16.msra.mxu0 0
      %1903 = vmatprep.subr.bf16.mxu0 0
      %1904 = vmatpush1.bf16.msra.mxu0 0
      %1905 = vmatprep.subr.bf16.mxu0 0
      %1906 = vmatpush1.bf16.msra.mxu0 0
      %1907 = vmatprep.subr.bf16.mxu0 0
      %1908 = vmatpush1.bf16.msra.mxu0 0
      %1909 = vmatprep.subr.bf16.mxu0 0
      %1910 = vmatpush1.bf16.msra.mxu0 0
      %1911 = vmatprep.subr.bf16.mxu0 0
      %1912 = vmatpush1.bf16.msra.mxu0 0
      %1913 = vmatprep.mubr.bf16.mxu0 0
      %1914 = vmatmul.mubr.bf16.gmra.mrb[0].mxu0 %v1786
      %v1915 = vpop.f32.mrb[0].mxu0
      %v1916 = vadd.f32 0.0, %v1915
      %v1917 = vpop.f32.mrb[0].mxu0
      %v1918 = vpop.f32.mrb[0].mxu0
      %v1919 = vadd.f32 0.0, %v1918
      %v1920 = vpop.f32.mrb[0].mxu0
      %1921 = vmatprep.mubr.bf16.mxu0 0
      %1922 = vmatmul.mubr.bf16.gmra.mrb[0].mxu0 %v1787
      %v1923 = vpop.f32.mrb[0].mxu0
      %v1924 = vadd.f32 0.0, %v1923
      %v1925 = vpop.f32.mrb[0].mxu0
      %v1926 = vpop.f32.mrb[0].mxu0
      %v1927 = vadd.f32 0.0, %v1926
      %v1928 = vpop.f32.mrb[0].mxu0
      %1929 = vmatprep.mubr.bf16.mxu0 0
      %1930 = vmatmul.mubr.bf16.gmra.mrb[0].mxu0 %v1788
      %v1931 = vpop.f32.mrb[0].mxu0
      %v1932 = vadd.f32 0.0, %v1931
      %v1933 = vpop.f32.mrb[0].mxu0
      %v1934 = vpop.f32.mrb[0].mxu0
      %v1935 = vadd.f32 0.0, %v1934
      %v1936 = vpop.f32.mrb[0].mxu0
      %1937 = vmatprep.mubr.bf16.mxu0 0
      %1938 = vmatmul.mubr.bf16.gmra.mrb[0].mxu0 %v1789
      %v1939 = vpop.f32.mrb[0].mxu0
      %v1940 = vadd.f32 0.0, %v1939
      %v1941 = vpop.f32.mrb[0].mxu0
      %v1942 = vpop.f32.mrb[0].mxu0
      %v1943 = vadd.f32 0.0, %v1942
      %v1944 = vpop.f32.mrb[0].mxu0
      %1945 = vmatprep.mubr.bf16.mxu0 0
      %1946 = vmatmul.mubr.bf16.gmra.mrb[0].mxu0 %v1790
      %v1947 = vpop.f32.mrb[0].mxu0
      %v1948 = vadd.f32 0.0, %v1947
      %v1949 = vpop.f32.mrb[0].mxu0
      %v1950 = vpop.f32.mrb[0].mxu0
      %v1951 = vadd.f32 0.0, %v1950
      %v1952 = vpop.f32.mrb[0].mxu0
      %1953 = vmatprep.mubr.bf16.mxu0 0
      %1954 = vmatmul.mubr.bf16.gmra.mrb[0].mxu0 %v1791
      %v1955 = vpop.f32.mrb[0].mxu0
      %v1956 = vadd.f32 0.0, %v1955
      %v1957 = vpop.f32.mrb[0].mxu0
      %v1958 = vpop.f32.mrb[0].mxu0
      %v1959 = vadd.f32 0.0, %v1958
      %v1960 = vpop.f32.mrb[0].mxu0
      %1961 = vmatprep.mubr.bf16.mxu0 0
      %1962 = vmatmul.mubr.bf16.gmra.mrb[0].mxu0 %v1792
      %v1963 = vpop.f32.mrb[0].mxu0
      %v1964 = vadd.f32 0.0, %v1963
      %v1965 = vpop.f32.mrb[0].mxu0
      %v1966 = vpop.f32.mrb[0].mxu0
      %v1967 = vadd.f32 0.0, %v1966
      %v1968 = vpop.f32.mrb[0].mxu0
      %1969 = vmatprep.mubr.bf16.mxu0 0
      %1970 = vmatmul.mubr.bf16.gmra.mrb[0].mxu0 %v1793
      %v1971 = vpop.f32.mrb[0].mxu0
      %v1972 = vadd.f32 0.0, %v1971
      %v1973 = vpop.f32.mrb[0].mxu0
      %v1974 = vpop.f32.mrb[0].mxu0
      %v1975 = vadd.f32 0.0, %v1974
      %v1976 = vpop.f32.mrb[0].mxu0
      %1977 = vmatprep.mubr.bf16.mxu0 0
      %1978 = vmatmul.mubr.bf16.gmra.mrb[0].mxu0 %v1794
      %v1979 = vpop.f32.mrb[0].mxu0
      %v1980 = vadd.f32 0.0, %v1979
      %v1981 = vpop.f32.mrb[0].mxu0
      %v1982 = vpop.f32.mrb[0].mxu0
      %v1983 = vadd.f32 0.0, %v1982
      %v1984 = vpop.f32.mrb[0].mxu0
      %1985 = vmatprep.mubr.bf16.mxu0 0
      %1986 = vmatmul.mubr.bf16.gmra.mrb[0].mxu0 %v1795
      %v1987 = vpop.f32.mrb[0].mxu0
      %v1988 = vadd.f32 0.0, %v1987
      %v1989 = vpop.f32.mrb[0].mxu0
      %v1990 = vpop.f32.mrb[0].mxu0
      %v1991 = vadd.f32 0.0, %v1990
      %v1992 = vpop.f32.mrb[0].mxu0
      %1993 = vmatprep.mubr.bf16.mxu0 0
      %1994 = vmatmul.mubr.bf16.gmra.mrb[0].mxu0 %v1796
      %v1995 = vpop.f32.mrb[0].mxu0
      %v1996 = vadd.f32 0.0, %v1995
      %v1997 = vpop.f32.mrb[0].mxu0
      %v1998 = vpop.f32.mrb[0].mxu0
      %v1999 = vadd.f32 0.0, %v1998
      %v2000 = vpop.f32.mrb[0].mxu0
      %2001 = vmatprep.mubr.bf16.mxu0 0
      %2002 = vmatmul.mubr.bf16.gmra.mrb[0].mxu0 %v1797
      %v2003 = vpop.f32.mrb[0].mxu0
      %v2004 = vadd.f32 0.0, %v2003
      %v2005 = vpop.f32.mrb[0].mxu0
      %v2006 = vpop.f32.mrb[0].mxu0
      %v2007 = vadd.f32 0.0, %v2006
      %v2008 = vpop.f32.mrb[0].mxu0
      %2009 = vmatprep.mubr.bf16.mxu0 0
      %2010 = vmatmul.mubr.bf16.gmra.mrb[0].mxu0 %v1798
      %v2011 = vpop.f32.mrb[0].mxu0
      %v2012 = vadd.f32 0.0, %v2011
      %v2013 = vpop.f32.mrb[0].mxu0
      %v2014 = vpop.f32.mrb[0].mxu0
      %v2015 = vadd.f32 0.0, %v2014
      %v2016 = vpop.f32.mrb[0].mxu0
      %2017 = vmatprep.mubr.bf16.mxu0 0
      %2018 = vmatmul.mubr.bf16.gmra.mrb[0].mxu0 %v1799
      %v2019 = vpop.f32.mrb[0].mxu0
      %v2020 = vadd.f32 0.0, %v2019
      %v2021 = vpop.f32.mrb[0].mxu0
      %v2022 = vpop.f32.mrb[0].mxu0
      %v2023 = vadd.f32 0.0, %v2022
      %v2024 = vpop.f32.mrb[0].mxu0
      %2025 = vmatprep.mubr.bf16.mxu0 0
      %2026 = vmatmul.mubr.bf16.gmra.mrb[0].mxu0 %v1800
      %v2027 = vpop.f32.mrb[0].mxu0
      %v2028 = vadd.f32 0.0, %v2027
      %v2029 = vpop.f32.mrb[0].mxu0
      %v2030 = vpop.f32.mrb[0].mxu0
      %v2031 = vadd.f32 0.0, %v2030
      %v2032 = vpop.f32.mrb[0].mxu0
      %2033 = vmatprep.mubr.bf16.mxu0 0
      %2034 = vmatmul.mubr.bf16.gmra.mrb[0].mxu0 %v1801
      %v2035 = vpop.f32.mrb[0].mxu0
      %v2036 = vadd.f32 0.0, %v2035
      %v2037 = vpop.f32.mrb[0].mxu0
      %v2038 = vpop.f32.mrb[0].mxu0
      %v2039 = vadd.f32 0.0, %v2038
      %v2040 = vpop.f32.mrb[0].mxu0
      %2041 = vmatprep.mubr.bf16.mxu0 0
      %2042 = vmatmul.mubr.bf16.gmra.mrb[0].mxu0 %v1802
      %v2043 = vpop.f32.mrb[0].mxu0
      %v2044 = vadd.f32 0.0, %v2043
      %v2045 = vpop.f32.mrb[0].mxu0
      %v2046 = vpop.f32.mrb[0].mxu0
      %v2047 = vadd.f32 0.0, %v2046
      %v2048 = vpop.f32.mrb[0].mxu0
      %2049 = vmatprep.mubr.bf16.mxu0 0
      %2050 = vmatmul.mubr.bf16.gmra.mrb[0].mxu0 %v1803
      %v2051 = vpop.f32.mrb[0].mxu0
      %v2052 = vadd.f32 0.0, %v2051
      %v2053 = vpop.f32.mrb[0].mxu0
      %v2054 = vpop.f32.mrb[0].mxu0
      %v2055 = vadd.f32 0.0, %v2054
      %v2056 = vpop.f32.mrb[0].mxu0
      %2057 = vmatprep.mubr.bf16.mxu0 0
      %2058 = vmatmul.mubr.bf16.gmra.mrb[0].mxu0 %v1804
      %v2059 = vpop.f32.mrb[0].mxu0
      %v2060 = vadd.f32 0.0, %v2059
      %v2061 = vpop.f32.mrb[0].mxu0
      %v2062 = vpop.f32.mrb[0].mxu0
      %v2063 = vadd.f32 0.0, %v2062
      %v2064 = vpop.f32.mrb[0].mxu0
      %2065 = vmatprep.mubr.bf16.mxu0 0
      %2066 = vmatmul.mubr.bf16.gmra.mrb[0].mxu0 %v1805
      %v2067 = vpop.f32.mrb[0].mxu0
      %v2068 = vadd.f32 0.0, %v2067
      %v2069 = vpop.f32.mrb[0].mxu0
      %v2070 = vpop.f32.mrb[0].mxu0
      %v2071 = vadd.f32 0.0, %v2070
      %v2072 = vpop.f32.mrb[0].mxu0
      %2073 = vmatprep.mubr.bf16.mxu0 0
      %2074 = vmatmul.mubr.bf16.gmra.mrb[0].mxu0 %v1806
      %v2075 = vpop.f32.mrb[0].mxu0
      %v2076 = vadd.f32 0.0, %v2075
      %v2077 = vpop.f32.mrb[0].mxu0
      %v2078 = vpop.f32.mrb[0].mxu0
      %v2079 = vadd.f32 0.0, %v2078
      %v2080 = vpop.f32.mrb[0].mxu0
      %2081 = vmatprep.mubr.bf16.mxu0 0
      %2082 = vmatmul.mubr.bf16.gmra.mrb[0].mxu0 %v1807
      %v2083 = vpop.f32.mrb[0].mxu0
      %v2084 = vadd.f32 0.0, %v2083
      %v2085 = vpop.f32.mrb[0].mxu0
      %v2086 = vpop.f32.mrb[0].mxu0
      %v2087 = vadd.f32 0.0, %v2086
      %v2088 = vpop.f32.mrb[0].mxu0
      %2089 = vmatprep.mubr.bf16.mxu0 0
      %2090 = vmatmul.mubr.bf16.gmra.mrb[0].mxu0 %v1808
      %v2091 = vpop.f32.mrb[0].mxu0
      %v2092 = vadd.f32 0.0, %v2091
      %v2093 = vpop.f32.mrb[0].mxu0
      %v2094 = vpop.f32.mrb[0].mxu0
      %v2095 = vadd.f32 0.0, %v2094
      %v2096 = vpop.f32.mrb[0].mxu0
      %2097 = vmatprep.mubr.bf16.mxu0 0
      %2098 = vmatmul.mubr.bf16.gmra.mrb[0].mxu0 %v1809
      %v2099 = vpop.f32.mrb[0].mxu0
      %v2100 = vadd.f32 0.0, %v2099
      %v2101 = vpop.f32.mrb[0].mxu0
      %v2102 = vpop.f32.mrb[0].mxu0
      %v2103 = vadd.f32 0.0, %v2102
      %v2104 = vpop.f32.mrb[0].mxu0
      %2105 = vmatprep.mubr.bf16.mxu0 0
      %2106 = vmatmul.mubr.bf16.gmra.mrb[0].mxu0 %v1810
      %v2107 = vpop.f32.mrb[0].mxu0
      %v2108 = vadd.f32 0.0, %v2107
      %v2109 = vpop.f32.mrb[0].mxu0
      %v2110 = vpop.f32.mrb[0].mxu0
      %v2111 = vadd.f32 0.0, %v2110
      %v2112 = vpop.f32.mrb[0].mxu0
      %2113 = vmatprep.mubr.bf16.mxu0 0
      %2114 = vmatmul.mubr.bf16.gmra.mrb[0].mxu0 %v1811
      %v2115 = vpop.f32.mrb[0].mxu0
      %v2116 = vadd.f32 0.0, %v2115
      %v2117 = vpop.f32.mrb[0].mxu0
      %v2118 = vpop.f32.mrb[0].mxu0
      %v2119 = vadd.f32 0.0, %v2118
      %v2120 = vpop.f32.mrb[0].mxu0
      %2121 = vmatprep.mubr.bf16.mxu0 0
      %2122 = vmatmul.mubr.bf16.gmra.mrb[0].mxu0 %v1812
      %v2123 = vpop.f32.mrb[0].mxu0
      %v2124 = vadd.f32 0.0, %v2123
      %v2125 = vpop.f32.mrb[0].mxu0
      %v2126 = vpop.f32.mrb[0].mxu0
      %v2127 = vadd.f32 0.0, %v2126
      %v2128 = vpop.f32.mrb[0].mxu0
      %2129 = vmatprep.mubr.bf16.mxu0 0
      %2130 = vmatmul.mubr.bf16.gmra.mrb[0].mxu0 %v1813
      %v2131 = vpop.f32.mrb[0].mxu0
      %v2132 = vadd.f32 0.0, %v2131
      %v2133 = vpop.f32.mrb[0].mxu0
      %v2134 = vpop.f32.mrb[0].mxu0
      %v2135 = vadd.f32 0.0, %v2134
      %v2136 = vpop.f32.mrb[0].mxu0
      %2137 = vmatprep.mubr.bf16.mxu0 0
      %2138 = vmatmul.mubr.bf16.gmra.mrb[0].mxu0 %v1814
      %v2139 = vpop.f32.mrb[0].mxu0
      %v2140 = vadd.f32 0.0, %v2139
      %v2141 = vpop.f32.mrb[0].mxu0
      %v2142 = vpop.f32.mrb[0].mxu0
      %v2143 = vadd.f32 0.0, %v2142
      %v2144 = vpop.f32.mrb[0].mxu0
      %2145 = vmatprep.mubr.bf16.mxu0 0
      %2146 = vmatmul.mubr.bf16.gmra.mrb[0].mxu0 %v1815
      %v2147 = vpop.f32.mrb[0].mxu0
      %v2148 = vadd.f32 0.0, %v2147
      %v2149 = vpop.f32.mrb[0].mxu0
      %v2150 = vpop.f32.mrb[0].mxu0
      %v2151 = vadd.f32 0.0, %v2150
      %v2152 = vpop.f32.mrb[0].mxu0
      %2153 = vdwg.mxu0
      %v2154 = vadd.f32 %v1666, %v1916
      %v2155 = vadd.f32 %v1667, %v1919
      %v2156 = vadd.f32 %v1668, %v1924
      %v2157 = vadd.f32 %v1669, %v1927
      %v2158 = vadd.f32 %v1670, %v1932
      %v2159 = vadd.f32 %v1671, %v1935
      %v2160 = vadd.f32 %v1672, %v1940
      %v2161 = vadd.f32 %v1673, %v1943
      %v2162 = vadd.f32 %v1674, %v1948
      %v2163 = vadd.f32 %v1675, %v1951
      %v2164 = vadd.f32 %v1676, %v1956
      %v2165 = vadd.f32 %v1677, %v1959
      %v2166 = vadd.f32 %v1678, %v1964
      %v2167 = vadd.f32 %v1679, %v1967
      %v2168 = vadd.f32 %v1680, %v1972
      %v2169 = vadd.f32 %v1681, %v1975
      %v2170 = vadd.f32 %v1682, %v1980
      %v2171 = vadd.f32 %v1683, %v1983
      %v2172 = vadd.f32 %v1684, %v1988
      %v2173 = vadd.f32 %v1685, %v1991
      %v2174 = vadd.f32 %v1686, %v1996
      %v2175 = vadd.f32 %v1687, %v1999
      %v2176 = vadd.f32 %v1688, %v2004
      %v2177 = vadd.f32 %v1689, %v2007
      %v2178 = vadd.f32 %v1690, %v2012
      %v2179 = vadd.f32 %v1691, %v2015
      %v2180 = vadd.f32 %v1692, %v2020
      %v2181 = vadd.f32 %v1693, %v2023
      %v2182 = vadd.f32 %v1694, %v2028
      %v2183 = vadd.f32 %v1695, %v2031
      %v2184 = vadd.f32 %v1696, %v2036
      %v2185 = vadd.f32 %v1697, %v2039
      %v2186 = vadd.f32 %v1698, %v2044
      %v2187 = vadd.f32 %v1699, %v2047
      %v2188 = vadd.f32 %v1700, %v2052
      %v2189 = vadd.f32 %v1701, %v2055
      %v2190 = vadd.f32 %v1702, %v2060
      %v2191 = vadd.f32 %v1703, %v2063
      %v2192 = vadd.f32 %v1704, %v2068
      %v2193 = vadd.f32 %v1705, %v2071
      %v2194 = vadd.f32 %v1706, %v2076
      %v2195 = vadd.f32 %v1707, %v2079
      %v2196 = vadd.f32 %v1708, %v2084
      %v2197 = vadd.f32 %v1709, %v2087
      %v2198 = vadd.f32 %v1710, %v2092
      %v2199 = vadd.f32 %v1711, %v2095
      %v2200 = vadd.f32 %v1712, %v2100
      %v2201 = vadd.f32 %v1713, %v2103
      %v2202 = vadd.f32 %v1714, %v2108
      %v2203 = vadd.f32 %v1715, %v2111
      %v2204 = vadd.f32 %v1716, %v2116
      %v2205 = vadd.f32 %v1717, %v2119
      %v2206 = vadd.f32 %v1718, %v2124
      %v2207 = vadd.f32 %v1719, %v2127
      %v2208 = vadd.f32 %v1720, %v2132
      %v2209 = vadd.f32 %v1721, %v2135
      %v2210 = vadd.f32 %v1722, %v2140
      %v2211 = vadd.f32 %v1723, %v2143
      %v2212 = vadd.f32 %v1724, %v2148
      %v2213 = vadd.f32 %v1725, %v2151
      %v2214 = vld [vmem:[%s365 + $0x30] sm:$0xff]
      %v2215 = vld [vmem:[%s365 + $0x38] sm:$0xff]
      %v2216 = vld [vmem:[%s365 + $0x40] sm:$0xff]
      %v2217 = vld [vmem:[%s365 + $0x48] sm:$0xff]
      %v2218 = vld [vmem:[%s365 + $0x50] sm:$0xff]
      %v2219 = vld [vmem:[%s365 + $0x58] sm:$0xff]
      %v2220 = vld [vmem:[%s365 + $0x60] sm:$0xff]
      %v2221 = vld [vmem:[%s365 + $0x68] sm:$0xff]
      %v2222 = vld [vmem:[%s365 + $0x70] sm:$0xff]
      %v2223 = vld [vmem:[%s365 + $0x78] sm:$0xff]
      %v2224 = vld [vmem:[%s365 + $0x80] sm:$0xff]
      %v2225 = vld [vmem:[%s365 + $0x88] sm:$0xff]
      %v2226 = vld [vmem:[%s365 + $0x90] sm:$0xff]
      %v2227 = vld [vmem:[%s365 + $0x98] sm:$0xff]
      %v2228 = vld [vmem:[%s365 + $0xa0] sm:$0xff]
      %v2229 = vld [vmem:[%s365 + $0xa8] sm:$0xff]
      %v2230 = vld [vmem:[%s365 + $0xb0] sm:$0xff]
      %v2231 = vld [vmem:[%s365 + $0xb8] sm:$0xff]
      %v2232 = vld [vmem:[%s365 + $0xc0] sm:$0xff]
      %v2233 = vld [vmem:[%s365 + $0xc8] sm:$0xff]
      %v2234 = vld [vmem:[%s365 + $0xd0] sm:$0xff]
      %v2235 = vld [vmem:[%s365 + $0xd8] sm:$0xff]
      %v2236 = vld [vmem:[%s365 + $0xe0] sm:$0xff]
      %v2237 = vld [vmem:[%s365 + $0xe8] sm:$0xff]
      %v2238 = vld [vmem:[%s365 + $0xf0] sm:$0xff]
      %v2239 = vld [vmem:[%s365 + $0xf8] sm:$0xff]
      %v2240 = vld [vmem:[%s365 + $0x100] sm:$0xff]
      %v2241 = vld [vmem:[%s365 + $0x108] sm:$0xff]
      %v2242 = vld [vmem:[%s365 + $0x110] sm:$0xff]
      %v2243 = vld [vmem:[%s365 + $0x118] sm:$0xff]
      %v2244 = vld [vmem:[%s365 + $0x120] sm:$0xff]
      %v2245 = vld [vmem:[%s365 + $0x128] sm:$0xff]
      %v2246 = vld [vmem:[%s365 + $0x130] sm:$0xff]
      %v2247 = vld [vmem:[%s365 + $0x138] sm:$0xff]
      %v2248 = vld [vmem:[%s365 + $0x140] sm:$0xff]
      %v2249 = vld [vmem:[%s365 + $0x148] sm:$0xff]
      %v2250 = vld [vmem:[%s365 + $0x150] sm:$0xff]
      %v2251 = vld [vmem:[%s365 + $0x158] sm:$0xff]
      %v2252 = vld [vmem:[%s365 + $0x160] sm:$0xff]
      %v2253 = vld [vmem:[%s365 + $0x168] sm:$0xff]
      %v2254 = vld [vmem:[%s365 + $0x170] sm:$0xff]
      %v2255 = vld [vmem:[%s365 + $0x178] sm:$0xff]
      %v2256 = vld [vmem:[%s365 + $0x180] sm:$0xff]
      %v2257 = vld [vmem:[%s365 + $0x188] sm:$0xff]
      %v2258 = vld [vmem:[%s365 + $0x190] sm:$0xff]
      %v2259 = vld [vmem:[%s365 + $0x198] sm:$0xff]
      %v2260 = vld [vmem:[%s365 + $0x1a0] sm:$0xff]
      %v2261 = vld [vmem:[%s365 + $0x1a8] sm:$0xff]
      %v2262 = vld [vmem:[%s365 + $0x1b0] sm:$0xff]
      %v2263 = vld [vmem:[%s365 + $0x1b8] sm:$0xff]
      %v2264 = vld [vmem:[%s365 + $0x1c0] sm:$0xff]
      %v2265 = vld [vmem:[%s365 + $0x1c8] sm:$0xff]
      %v2266 = vld [vmem:[%s365 + $0x1d0] sm:$0xff]
      %v2267 = vld [vmem:[%s365 + $0x1d8] sm:$0xff]
      %v2268 = vld [vmem:[%s365 + $0x1e0] sm:$0xff]
      %v2269 = vld [vmem:[%s365 + $0x1e8] sm:$0xff]
      %v2270 = vld [vmem:[%s365 + $0x1f0] sm:$0xff]
      %v2271 = vld [vmem:[%s365 + $0x1f8] sm:$0xff]
      %v2272 = vld [vmem:[%s365 + $0x200] sm:$0xff]
      %v2273 = vld [vmem:[%s365 + $0x208] sm:$0xff]
      %v2274 = vpack.c.bf16 %v2215, %v2214
      %v2275 = vpack.c.bf16 %v2217, %v2216
      %v2276 = vpack.c.bf16 %v2219, %v2218
      %v2277 = vpack.c.bf16 %v2221, %v2220
      %v2278 = vpack.c.bf16 %v2223, %v2222
      %v2279 = vpack.c.bf16 %v2225, %v2224
      %v2280 = vpack.c.bf16 %v2227, %v2226
      %v2281 = vpack.c.bf16 %v2229, %v2228
      %v2282 = vpack.c.bf16 %v2231, %v2230
      %v2283 = vpack.c.bf16 %v2233, %v2232
      %v2284 = vpack.c.bf16 %v2235, %v2234
      %v2285 = vpack.c.bf16 %v2237, %v2236
      %v2286 = vpack.c.bf16 %v2239, %v2238
      %v2287 = vpack.c.bf16 %v2241, %v2240
      %v2288 = vpack.c.bf16 %v2243, %v2242
      %v2289 = vpack.c.bf16 %v2245, %v2244
      %v2290 = vpack.c.bf16 %v2247, %v2246
      %v2291 = vpack.c.bf16 %v2249, %v2248
      %v2292 = vpack.c.bf16 %v2251, %v2250
      %v2293 = vpack.c.bf16 %v2253, %v2252
      %v2294 = vpack.c.bf16 %v2255, %v2254
      %v2295 = vpack.c.bf16 %v2257, %v2256
      %v2296 = vpack.c.bf16 %v2259, %v2258
      %v2297 = vpack.c.bf16 %v2261, %v2260
      %v2298 = vpack.c.bf16 %v2263, %v2262
      %v2299 = vpack.c.bf16 %v2265, %v2264
      %v2300 = vpack.c.bf16 %v2267, %v2266
      %v2301 = vpack.c.bf16 %v2269, %v2268
      %v2302 = vpack.c.bf16 %v2271, %v2270
      %v2303 = vpack.c.bf16 %v2273, %v2272
      %s2304 = scalar_lea.vmem %s2, 256
      %v2305 = vld [vmem:[%s2304] sm:$0xf]
      %v2306 = vld [vmem:[%s2304 + $0x4] sm:$0xf]
      %v2307 = vld [vmem:[%s2304 + $0x8] sm:$0xf]
      %v2308 = vld [vmem:[%s2304 + $0xc] sm:$0xf]
      %v2309 = vld [vmem:[%s2304 + $0x10] sm:$0xf]
      %v2310 = vld [vmem:[%s2304 + $0x14] sm:$0xf]
      %v2311 = vld [vmem:[%s2304 + $0x18] sm:$0xf]
      %v2312 = vld [vmem:[%s2304 + $0x1c] sm:$0xf]
      %v2313 = vld [vmem:[%s2304 + $0x20] sm:$0xf]
      %v2314 = vld [vmem:[%s2304 + $0x24] sm:$0xf]
      %v2315 = vld [vmem:[%s2304 + $0x28] sm:$0xf]
      %v2316 = vld [vmem:[%s2304 + $0x2c] sm:$0xf]
      %v2317 = vld [vmem:[%s2304 + $0x30] sm:$0xf]
      %v2318 = vld [vmem:[%s2304 + $0x34] sm:$0xf]
      %v2319 = vld [vmem:[%s2304 + $0x38] sm:$0xf]
      %v2320 = vld [vmem:[%s2304 + $0x3c] sm:$0xf]
      %v2337 = vunpack.c.l.b16 %v2305
      %v2338 = vunpack.c.l.b16 %v2306
      %v2339 = vunpack.c.l.b16 %v2307
      %v2340 = vunpack.c.l.b16 %v2308
      %v2341 = vunpack.c.l.b16 %v2309
      %v2342 = vunpack.c.l.b16 %v2310
      %v2343 = vunpack.c.l.b16 %v2311
      %v2344 = vunpack.c.l.b16 %v2312
      %v2345 = vunpack.c.l.b16 %v2313
      %v2346 = vunpack.c.l.b16 %v2314
      %v2347 = vunpack.c.l.b16 %v2315
      %v2348 = vunpack.c.l.b16 %v2316
      %v2349 = vunpack.c.l.b16 %v2317
      %v2350 = vunpack.c.l.b16 %v2318
      %v2351 = vunpack.c.l.b16 %v2319
      %v2352 = vunpack.c.l.b16 %v2320
      %v2353 = vpack.c.b16 %v2338, %v2337
      %v2354 = vpack.c.b16 %v2340, %v2339
      %v2355 = vpack.c.b16 %v2342, %v2341
      %v2356 = vpack.c.b16 %v2344, %v2343
      %v2357 = vpack.c.b16 %v2346, %v2345
      %v2358 = vpack.c.b16 %v2348, %v2347
      %v2359 = vpack.c.b16 %v2350, %v2349
      %v2360 = vpack.c.b16 %v2352, %v2351
      %2369 = vmatprep.subr.bf16.mxu0 0
      %2370 = vmatpush1.bf16.msra.mxu0 %v2353
      %2371 = vmatprep.subr.bf16.mxu0 0
      %2372 = vmatpush1.bf16.msra.mxu0 %v2354
      %2373 = vmatprep.subr.bf16.mxu0 0
      %2374 = vmatpush1.bf16.msra.mxu0 %v2355
      %2375 = vmatprep.subr.bf16.mxu0 0
      %2376 = vmatpush1.bf16.msra.mxu0 %v2356
      %2377 = vmatprep.subr.bf16.mxu0 0
      %2378 = vmatpush1.bf16.msra.mxu0 %v2357
      %2379 = vmatprep.subr.bf16.mxu0 0
      %2380 = vmatpush1.bf16.msra.mxu0 %v2358
      %2381 = vmatprep.subr.bf16.mxu0 0
      %2382 = vmatpush1.bf16.msra.mxu0 %v2359
      %2383 = vmatprep.subr.bf16.mxu0 0
      %2384 = vmatpush1.bf16.msra.mxu0 %v2360
      %2385 = vmatprep.subr.bf16.mxu0 0
      %2386 = vmatpush1.bf16.msra.mxu0 0
      %2387 = vmatprep.subr.bf16.mxu0 0
      %2388 = vmatpush1.bf16.msra.mxu0 0
      %2389 = vmatprep.subr.bf16.mxu0 0
      %2390 = vmatpush1.bf16.msra.mxu0 0
      %2391 = vmatprep.subr.bf16.mxu0 0
      %2392 = vmatpush1.bf16.msra.mxu0 0
      %2393 = vmatprep.subr.bf16.mxu0 0
      %2394 = vmatpush1.bf16.msra.mxu0 0
      %2395 = vmatprep.subr.bf16.mxu0 0
      %2396 = vmatpush1.bf16.msra.mxu0 0
      %2397 = vmatprep.subr.bf16.mxu0 0
      %2398 = vmatpush1.bf16.msra.mxu0 0
      %2399 = vmatprep.subr.bf16.mxu0 0
      %2400 = vmatpush1.bf16.msra.mxu0 0
      %2401 = vmatprep.mubr.bf16.mxu0 0
      %2402 = vmatmul.mubr.bf16.gmra.mrb[0].mxu0 %v2274
      %v2403 = vpop.f32.mrb[0].mxu0
      %v2404 = vadd.f32 0.0, %v2403
      %v2405 = vpop.f32.mrb[0].mxu0
      %v2406 = vpop.f32.mrb[0].mxu0
      %v2407 = vadd.f32 0.0, %v2406
      %v2408 = vpop.f32.mrb[0].mxu0
      %2409 = vmatprep.mubr.bf16.mxu0 0
      %2410 = vmatmul.mubr.bf16.gmra.mrb[0].mxu0 %v2275
      %v2411 = vpop.f32.mrb[0].mxu0
      %v2412 = vadd.f32 0.0, %v2411
      %v2413 = vpop.f32.mrb[0].mxu0
      %v2414 = vpop.f32.mrb[0].mxu0
      %v2415 = vadd.f32 0.0, %v2414
      %v2416 = vpop.f32.mrb[0].mxu0
      %2417 = vmatprep.mubr.bf16.mxu0 0
      %2418 = vmatmul.mubr.bf16.gmra.mrb[0].mxu0 %v2276
      %v2419 = vpop.f32.mrb[0].mxu0
      %v2420 = vadd.f32 0.0, %v2419
      %v2421 = vpop.f32.mrb[0].mxu0
      %v2422 = vpop.f32.mrb[0].mxu0
      %v2423 = vadd.f32 0.0, %v2422
      %v2424 = vpop.f32.mrb[0].mxu0
      %2425 = vmatprep.mubr.bf16.mxu0 0
      %2426 = vmatmul.mubr.bf16.gmra.mrb[0].mxu0 %v2277
      %v2427 = vpop.f32.mrb[0].mxu0
      %v2428 = vadd.f32 0.0, %v2427
      %v2429 = vpop.f32.mrb[0].mxu0
      %v2430 = vpop.f32.mrb[0].mxu0
      %v2431 = vadd.f32 0.0, %v2430
      %v2432 = vpop.f32.mrb[0].mxu0
      %2433 = vmatprep.mubr.bf16.mxu0 0
      %2434 = vmatmul.mubr.bf16.gmra.mrb[0].mxu0 %v2278
      %v2435 = vpop.f32.mrb[0].mxu0
      %v2436 = vadd.f32 0.0, %v2435
      %v2437 = vpop.f32.mrb[0].mxu0
      %v2438 = vpop.f32.mrb[0].mxu0
      %v2439 = vadd.f32 0.0, %v2438
      %v2440 = vpop.f32.mrb[0].mxu0
      %2441 = vmatprep.mubr.bf16.mxu0 0
      %2442 = vmatmul.mubr.bf16.gmra.mrb[0].mxu0 %v2279
      %v2443 = vpop.f32.mrb[0].mxu0
      %v2444 = vadd.f32 0.0, %v2443
      %v2445 = vpop.f32.mrb[0].mxu0
      %v2446 = vpop.f32.mrb[0].mxu0
      %v2447 = vadd.f32 0.0, %v2446
      %v2448 = vpop.f32.mrb[0].mxu0
      %2449 = vmatprep.mubr.bf16.mxu0 0
      %2450 = vmatmul.mubr.bf16.gmra.mrb[0].mxu0 %v2280
      %v2451 = vpop.f32.mrb[0].mxu0
      %v2452 = vadd.f32 0.0, %v2451
      %v2453 = vpop.f32.mrb[0].mxu0
      %v2454 = vpop.f32.mrb[0].mxu0
      %v2455 = vadd.f32 0.0, %v2454
      %v2456 = vpop.f32.mrb[0].mxu0
      %2457 = vmatprep.mubr.bf16.mxu0 0
      %2458 = vmatmul.mubr.bf16.gmra.mrb[0].mxu0 %v2281
      %v2459 = vpop.f32.mrb[0].mxu0
      %v2460 = vadd.f32 0.0, %v2459
      %v2461 = vpop.f32.mrb[0].mxu0
      %v2462 = vpop.f32.mrb[0].mxu0
      %v2463 = vadd.f32 0.0, %v2462
      %v2464 = vpop.f32.mrb[0].mxu0
      %2465 = vmatprep.mubr.bf16.mxu0 0
      %2466 = vmatmul.mubr.bf16.gmra.mrb[0].mxu0 %v2282
      %v2467 = vpop.f32.mrb[0].mxu0
      %v2468 = vadd.f32 0.0, %v2467
      %v2469 = vpop.f32.mrb[0].mxu0
      %v2470 = vpop.f32.mrb[0].mxu0
      %v2471 = vadd.f32 0.0, %v2470
      %v2472 = vpop.f32.mrb[0].mxu0
      %2473 = vmatprep.mubr.bf16.mxu0 0
      %2474 = vmatmul.mubr.bf16.gmra.mrb[0].mxu0 %v2283
      %v2475 = vpop.f32.mrb[0].mxu0
      %v2476 = vadd.f32 0.0, %v2475
      %v2477 = vpop.f32.mrb[0].mxu0
      %v2478 = vpop.f32.mrb[0].mxu0
      %v2479 = vadd.f32 0.0, %v2478
      %v2480 = vpop.f32.mrb[0].mxu0
      %2481 = vmatprep.mubr.bf16.mxu0 0
      %2482 = vmatmul.mubr.bf16.gmra.mrb[0].mxu0 %v2284
      %v2483 = vpop.f32.mrb[0].mxu0
      %v2484 = vadd.f32 0.0, %v2483
      %v2485 = vpop.f32.mrb[0].mxu0
      %v2486 = vpop.f32.mrb[0].mxu0
      %v2487 = vadd.f32 0.0, %v2486
      %v2488 = vpop.f32.mrb[0].mxu0
      %2489 = vmatprep.mubr.bf16.mxu0 0
      %2490 = vmatmul.mubr.bf16.gmra.mrb[0].mxu0 %v2285
      %v2491 = vpop.f32.mrb[0].mxu0
      %v2492 = vadd.f32 0.0, %v2491
      %v2493 = vpop.f32.mrb[0].mxu0
      %v2494 = vpop.f32.mrb[0].mxu0
      %v2495 = vadd.f32 0.0, %v2494
      %v2496 = vpop.f32.mrb[0].mxu0
      %2497 = vmatprep.mubr.bf16.mxu0 0
      %2498 = vmatmul.mubr.bf16.gmra.mrb[0].mxu0 %v2286
      %v2499 = vpop.f32.mrb[0].mxu0
      %v2500 = vadd.f32 0.0, %v2499
      %v2501 = vpop.f32.mrb[0].mxu0
      %v2502 = vpop.f32.mrb[0].mxu0
      %v2503 = vadd.f32 0.0, %v2502
      %v2504 = vpop.f32.mrb[0].mxu0
      %2505 = vmatprep.mubr.bf16.mxu0 0
      %2506 = vmatmul.mubr.bf16.gmra.mrb[0].mxu0 %v2287
      %v2507 = vpop.f32.mrb[0].mxu0
      %v2508 = vadd.f32 0.0, %v2507
      %v2509 = vpop.f32.mrb[0].mxu0
      %v2510 = vpop.f32.mrb[0].mxu0
      %v2511 = vadd.f32 0.0, %v2510
      %v2512 = vpop.f32.mrb[0].mxu0
      %2513 = vmatprep.mubr.bf16.mxu0 0
      %2514 = vmatmul.mubr.bf16.gmra.mrb[0].mxu0 %v2288
      %v2515 = vpop.f32.mrb[0].mxu0
      %v2516 = vadd.f32 0.0, %v2515
      %v2517 = vpop.f32.mrb[0].mxu0
      %v2518 = vpop.f32.mrb[0].mxu0
      %v2519 = vadd.f32 0.0, %v2518
      %v2520 = vpop.f32.mrb[0].mxu0
      %2521 = vmatprep.mubr.bf16.mxu0 0
      %2522 = vmatmul.mubr.bf16.gmra.mrb[0].mxu0 %v2289
      %v2523 = vpop.f32.mrb[0].mxu0
      %v2524 = vadd.f32 0.0, %v2523
      %v2525 = vpop.f32.mrb[0].mxu0
      %v2526 = vpop.f32.mrb[0].mxu0
      %v2527 = vadd.f32 0.0, %v2526
      %v2528 = vpop.f32.mrb[0].mxu0
      %2529 = vmatprep.mubr.bf16.mxu0 0
      %2530 = vmatmul.mubr.bf16.gmra.mrb[0].mxu0 %v2290
      %v2531 = vpop.f32.mrb[0].mxu0
      %v2532 = vadd.f32 0.0, %v2531
      %v2533 = vpop.f32.mrb[0].mxu0
      %v2534 = vpop.f32.mrb[0].mxu0
      %v2535 = vadd.f32 0.0, %v2534
      %v2536 = vpop.f32.mrb[0].mxu0
      %2537 = vmatprep.mubr.bf16.mxu0 0
      %2538 = vmatmul.mubr.bf16.gmra.mrb[0].mxu0 %v2291
      %v2539 = vpop.f32.mrb[0].mxu0
      %v2540 = vadd.f32 0.0, %v2539
      %v2541 = vpop.f32.mrb[0].mxu0
      %v2542 = vpop.f32.mrb[0].mxu0
      %v2543 = vadd.f32 0.0, %v2542
      %v2544 = vpop.f32.mrb[0].mxu0
      %2545 = vmatprep.mubr.bf16.mxu0 0
      %2546 = vmatmul.mubr.bf16.gmra.mrb[0].mxu0 %v2292
      %v2547 = vpop.f32.mrb[0].mxu0
      %v2548 = vadd.f32 0.0, %v2547
      %v2549 = vpop.f32.mrb[0].mxu0
      %v2550 = vpop.f32.mrb[0].mxu0
      %v2551 = vadd.f32 0.0, %v2550
      %v2552 = vpop.f32.mrb[0].mxu0
      %2553 = vmatprep.mubr.bf16.mxu0 0
      %2554 = vmatmul.mubr.bf16.gmra.mrb[0].mxu0 %v2293
      %v2555 = vpop.f32.mrb[0].mxu0
      %v2556 = vadd.f32 0.0, %v2555
      %v2557 = vpop.f32.mrb[0].mxu0
      %v2558 = vpop.f32.mrb[0].mxu0
      %v2559 = vadd.f32 0.0, %v2558
      %v2560 = vpop.f32.mrb[0].mxu0
      %2561 = vmatprep.mubr.bf16.mxu0 0
      %2562 = vmatmul.mubr.bf16.gmra.mrb[0].mxu0 %v2294
      %v2563 = vpop.f32.mrb[0].mxu0
      %v2564 = vadd.f32 0.0, %v2563
      %v2565 = vpop.f32.mrb[0].mxu0
      %v2566 = vpop.f32.mrb[0].mxu0
      %v2567 = vadd.f32 0.0, %v2566
      %v2568 = vpop.f32.mrb[0].mxu0
      %2569 = vmatprep.mubr.bf16.mxu0 0
      %2570 = vmatmul.mubr.bf16.gmra.mrb[0].mxu0 %v2295
      %v2571 = vpop.f32.mrb[0].mxu0
      %v2572 = vadd.f32 0.0, %v2571
      %v2573 = vpop.f32.mrb[0].mxu0
      %v2574 = vpop.f32.mrb[0].mxu0
      %v2575 = vadd.f32 0.0, %v2574
      %v2576 = vpop.f32.mrb[0].mxu0
      %2577 = vmatprep.mubr.bf16.mxu0 0
      %2578 = vmatmul.mubr.bf16.gmra.mrb[0].mxu0 %v2296
      %v2579 = vpop.f32.mrb[0].mxu0
      %v2580 = vadd.f32 0.0, %v2579
      %v2581 = vpop.f32.mrb[0].mxu0
      %v2582 = vpop.f32.mrb[0].mxu0
      %v2583 = vadd.f32 0.0, %v2582
      %v2584 = vpop.f32.mrb[0].mxu0
      %2585 = vmatprep.mubr.bf16.mxu0 0
      %2586 = vmatmul.mubr.bf16.gmra.mrb[0].mxu0 %v2297
      %v2587 = vpop.f32.mrb[0].mxu0
      %v2588 = vadd.f32 0.0, %v2587
      %v2589 = vpop.f32.mrb[0].mxu0
      %v2590 = vpop.f32.mrb[0].mxu0
      %v2591 = vadd.f32 0.0, %v2590
      %v2592 = vpop.f32.mrb[0].mxu0
      %2593 = vmatprep.mubr.bf16.mxu0 0
      %2594 = vmatmul.mubr.bf16.gmra.mrb[0].mxu0 %v2298
      %v2595 = vpop.f32.mrb[0].mxu0
      %v2596 = vadd.f32 0.0, %v2595
      %v2597 = vpop.f32.mrb[0].mxu0
      %v2598 = vpop.f32.mrb[0].mxu0
      %v2599 = vadd.f32 0.0, %v2598
      %v2600 = vpop.f32.mrb[0].mxu0
      %2601 = vmatprep.mubr.bf16.mxu0 0
      %2602 = vmatmul.mubr.bf16.gmra.mrb[0].mxu0 %v2299
      %v2603 = vpop.f32.mrb[0].mxu0
      %v2604 = vadd.f32 0.0, %v2603
      %v2605 = vpop.f32.mrb[0].mxu0
      %v2606 = vpop.f32.mrb[0].mxu0
      %v2607 = vadd.f32 0.0, %v2606
      %v2608 = vpop.f32.mrb[0].mxu0
      %2609 = vmatprep.mubr.bf16.mxu0 0
      %2610 = vmatmul.mubr.bf16.gmra.mrb[0].mxu0 %v2300
      %v2611 = vpop.f32.mrb[0].mxu0
      %v2612 = vadd.f32 0.0, %v2611
      %v2613 = vpop.f32.mrb[0].mxu0
      %v2614 = vpop.f32.mrb[0].mxu0
      %v2615 = vadd.f32 0.0, %v2614
      %v2616 = vpop.f32.mrb[0].mxu0
      %2617 = vmatprep.mubr.bf16.mxu0 0
      %2618 = vmatmul.mubr.bf16.gmra.mrb[0].mxu0 %v2301
      %v2619 = vpop.f32.mrb[0].mxu0
      %v2620 = vadd.f32 0.0, %v2619
      %v2621 = vpop.f32.mrb[0].mxu0
      %v2622 = vpop.f32.mrb[0].mxu0
      %v2623 = vadd.f32 0.0, %v2622
      %v2624 = vpop.f32.mrb[0].mxu0
      %2625 = vmatprep.mubr.bf16.mxu0 0
      %2626 = vmatmul.mubr.bf16.gmra.mrb[0].mxu0 %v2302
      %v2627 = vpop.f32.mrb[0].mxu0
      %v2628 = vadd.f32 0.0, %v2627
      %v2629 = vpop.f32.mrb[0].mxu0
      %v2630 = vpop.f32.mrb[0].mxu0
      %v2631 = vadd.f32 0.0, %v2630
      %v2632 = vpop.f32.mrb[0].mxu0
      %2633 = vmatprep.mubr.bf16.mxu0 0
      %2634 = vmatmul.mubr.bf16.gmra.mrb[0].mxu0 %v2303
      %v2635 = vpop.f32.mrb[0].mxu0
      %v2636 = vadd.f32 0.0, %v2635
      %v2637 = vpop.f32.mrb[0].mxu0
      %v2638 = vpop.f32.mrb[0].mxu0
      %v2639 = vadd.f32 0.0, %v2638
      %v2640 = vpop.f32.mrb[0].mxu0
      %2641 = vdwg.mxu0
      %v2642 = vadd.f32 %v2154, %v2404
      %v2643 = vadd.f32 %v2155, %v2407
      %v2644 = vadd.f32 %v2156, %v2412
      %v2645 = vadd.f32 %v2157, %v2415
      %v2646 = vadd.f32 %v2158, %v2420
      %v2647 = vadd.f32 %v2159, %v2423
      %v2648 = vadd.f32 %v2160, %v2428
      %v2649 = vadd.f32 %v2161, %v2431
      %v2650 = vadd.f32 %v2162, %v2436
      %v2651 = vadd.f32 %v2163, %v2439
      %v2652 = vadd.f32 %v2164, %v2444
      %v2653 = vadd.f32 %v2165, %v2447
      %v2654 = vadd.f32 %v2166, %v2452
      %v2655 = vadd.f32 %v2167, %v2455
      %v2656 = vadd.f32 %v2168, %v2460
      %v2657 = vadd.f32 %v2169, %v2463
      %v2658 = vadd.f32 %v2170, %v2468
      %v2659 = vadd.f32 %v2171, %v2471
      %v2660 = vadd.f32 %v2172, %v2476
      %v2661 = vadd.f32 %v2173, %v2479
      %v2662 = vadd.f32 %v2174, %v2484
      %v2663 = vadd.f32 %v2175, %v2487
      %v2664 = vadd.f32 %v2176, %v2492
      %v2665 = vadd.f32 %v2177, %v2495
      %v2666 = vadd.f32 %v2178, %v2500
      %v2667 = vadd.f32 %v2179, %v2503
      %v2668 = vadd.f32 %v2180, %v2508
      %v2669 = vadd.f32 %v2181, %v2511
      %v2670 = vadd.f32 %v2182, %v2516
      %v2671 = vadd.f32 %v2183, %v2519
      %v2672 = vadd.f32 %v2184, %v2524
      %v2673 = vadd.f32 %v2185, %v2527
      %v2674 = vadd.f32 %v2186, %v2532
      %v2675 = vadd.f32 %v2187, %v2535
      %v2676 = vadd.f32 %v2188, %v2540
      %v2677 = vadd.f32 %v2189, %v2543
      %v2678 = vadd.f32 %v2190, %v2548
      %v2679 = vadd.f32 %v2191, %v2551
      %v2680 = vadd.f32 %v2192, %v2556
      %v2681 = vadd.f32 %v2193, %v2559
      %v2682 = vadd.f32 %v2194, %v2564
      %v2683 = vadd.f32 %v2195, %v2567
      %v2684 = vadd.f32 %v2196, %v2572
      %v2685 = vadd.f32 %v2197, %v2575
      %v2686 = vadd.f32 %v2198, %v2580
      %v2687 = vadd.f32 %v2199, %v2583
      %v2688 = vadd.f32 %v2200, %v2588
      %v2689 = vadd.f32 %v2201, %v2591
      %v2690 = vadd.f32 %v2202, %v2596
      %v2691 = vadd.f32 %v2203, %v2599
      %v2692 = vadd.f32 %v2204, %v2604
      %v2693 = vadd.f32 %v2205, %v2607
      %v2694 = vadd.f32 %v2206, %v2612
      %v2695 = vadd.f32 %v2207, %v2615
      %v2696 = vadd.f32 %v2208, %v2620
      %v2697 = vadd.f32 %v2209, %v2623
      %v2698 = vadd.f32 %v2210, %v2628
      %v2699 = vadd.f32 %v2211, %v2631
      %v2700 = vadd.f32 %v2212, %v2636
      %v2701 = vadd.f32 %v2213, %v2639
      %v2702 = vld [vmem:[%s365 + $0x31] sm:$0xff]
      %v2703 = vld [vmem:[%s365 + $0x39] sm:$0xff]
      %v2704 = vld [vmem:[%s365 + $0x41] sm:$0xff]
      %v2705 = vld [vmem:[%s365 + $0x49] sm:$0xff]
      %v2706 = vld [vmem:[%s365 + $0x51] sm:$0xff]
      %v2707 = vld [vmem:[%s365 + $0x59] sm:$0xff]
      %v2708 = vld [vmem:[%s365 + $0x61] sm:$0xff]
      %v2709 = vld [vmem:[%s365 + $0x69] sm:$0xff]
      %v2710 = vld [vmem:[%s365 + $0x71] sm:$0xff]
      %v2711 = vld [vmem:[%s365 + $0x79] sm:$0xff]
      %v2712 = vld [vmem:[%s365 + $0x81] sm:$0xff]
      %v2713 = vld [vmem:[%s365 + $0x89] sm:$0xff]
      %v2714 = vld [vmem:[%s365 + $0x91] sm:$0xff]
      %v2715 = vld [vmem:[%s365 + $0x99] sm:$0xff]
      %v2716 = vld [vmem:[%s365 + $0xa1] sm:$0xff]
      %v2717 = vld [vmem:[%s365 + $0xa9] sm:$0xff]
      %v2718 = vld [vmem:[%s365 + $0xb1] sm:$0xff]
      %v2719 = vld [vmem:[%s365 + $0xb9] sm:$0xff]
      %v2720 = vld [vmem:[%s365 + $0xc1] sm:$0xff]
      %v2721 = vld [vmem:[%s365 + $0xc9] sm:$0xff]
      %v2722 = vld [vmem:[%s365 + $0xd1] sm:$0xff]
      %v2723 = vld [vmem:[%s365 + $0xd9] sm:$0xff]
      %v2724 = vld [vmem:[%s365 + $0xe1] sm:$0xff]
      %v2725 = vld [vmem:[%s365 + $0xe9] sm:$0xff]
      %v2726 = vld [vmem:[%s365 + $0xf1] sm:$0xff]
      %v2727 = vld [vmem:[%s365 + $0xf9] sm:$0xff]
      %v2728 = vld [vmem:[%s365 + $0x101] sm:$0xff]
      %v2729 = vld [vmem:[%s365 + $0x109] sm:$0xff]
      %v2730 = vld [vmem:[%s365 + $0x111] sm:$0xff]
      %v2731 = vld [vmem:[%s365 + $0x119] sm:$0xff]
      %v2732 = vld [vmem:[%s365 + $0x121] sm:$0xff]
      %v2733 = vld [vmem:[%s365 + $0x129] sm:$0xff]
      %v2734 = vld [vmem:[%s365 + $0x131] sm:$0xff]
      %v2735 = vld [vmem:[%s365 + $0x139] sm:$0xff]
      %v2736 = vld [vmem:[%s365 + $0x141] sm:$0xff]
      %v2737 = vld [vmem:[%s365 + $0x149] sm:$0xff]
      %v2738 = vld [vmem:[%s365 + $0x151] sm:$0xff]
      %v2739 = vld [vmem:[%s365 + $0x159] sm:$0xff]
      %v2740 = vld [vmem:[%s365 + $0x161] sm:$0xff]
      %v2741 = vld [vmem:[%s365 + $0x169] sm:$0xff]
      %v2742 = vld [vmem:[%s365 + $0x171] sm:$0xff]
      %v2743 = vld [vmem:[%s365 + $0x179] sm:$0xff]
      %v2744 = vld [vmem:[%s365 + $0x181] sm:$0xff]
      %v2745 = vld [vmem:[%s365 + $0x189] sm:$0xff]
      %v2746 = vld [vmem:[%s365 + $0x191] sm:$0xff]
      %v2747 = vld [vmem:[%s365 + $0x199] sm:$0xff]
      %v2748 = vld [vmem:[%s365 + $0x1a1] sm:$0xff]
      %v2749 = vld [vmem:[%s365 + $0x1a9] sm:$0xff]
      %v2750 = vld [vmem:[%s365 + $0x1b1] sm:$0xff]
      %v2751 = vld [vmem:[%s365 + $0x1b9] sm:$0xff]
      %v2752 = vld [vmem:[%s365 + $0x1c1] sm:$0xff]
      %v2753 = vld [vmem:[%s365 + $0x1c9] sm:$0xff]
      %v2754 = vld [vmem:[%s365 + $0x1d1] sm:$0xff]
      %v2755 = vld [vmem:[%s365 + $0x1d9] sm:$0xff]
      %v2756 = vld [vmem:[%s365 + $0x1e1] sm:$0xff]
      %v2757 = vld [vmem:[%s365 + $0x1e9] sm:$0xff]
      %v2758 = vld [vmem:[%s365 + $0x1f1] sm:$0xff]
      %v2759 = vld [vmem:[%s365 + $0x1f9] sm:$0xff]
      %v2760 = vld [vmem:[%s365 + $0x201] sm:$0xff]
      %v2761 = vld [vmem:[%s365 + $0x209] sm:$0xff]
      %v2762 = vpack.c.bf16 %v2703, %v2702
      %v2763 = vpack.c.bf16 %v2705, %v2704
      %v2764 = vpack.c.bf16 %v2707, %v2706
      %v2765 = vpack.c.bf16 %v2709, %v2708
      %v2766 = vpack.c.bf16 %v2711, %v2710
      %v2767 = vpack.c.bf16 %v2713, %v2712
      %v2768 = vpack.c.bf16 %v2715, %v2714
      %v2769 = vpack.c.bf16 %v2717, %v2716
      %v2770 = vpack.c.bf16 %v2719, %v2718
      %v2771 = vpack.c.bf16 %v2721, %v2720
      %v2772 = vpack.c.bf16 %v2723, %v2722
      %v2773 = vpack.c.bf16 %v2725, %v2724
      %v2774 = vpack.c.bf16 %v2727, %v2726
      %v2775 = vpack.c.bf16 %v2729, %v2728
      %v2776 = vpack.c.bf16 %v2731, %v2730
      %v2777 = vpack.c.bf16 %v2733, %v2732
      %v2778 = vpack.c.bf16 %v2735, %v2734
      %v2779 = vpack.c.bf16 %v2737, %v2736
      %v2780 = vpack.c.bf16 %v2739, %v2738
      %v2781 = vpack.c.bf16 %v2741, %v2740
      %v2782 = vpack.c.bf16 %v2743, %v2742
      %v2783 = vpack.c.bf16 %v2745, %v2744
      %v2784 = vpack.c.bf16 %v2747, %v2746
      %v2785 = vpack.c.bf16 %v2749, %v2748
      %v2786 = vpack.c.bf16 %v2751, %v2750
      %v2787 = vpack.c.bf16 %v2753, %v2752
      %v2788 = vpack.c.bf16 %v2755, %v2754
      %v2789 = vpack.c.bf16 %v2757, %v2756
      %v2790 = vpack.c.bf16 %v2759, %v2758
      %v2791 = vpack.c.bf16 %v2761, %v2760
      %s2792 = scalar_lea.vmem %s2, 320
      %v2793 = vld [vmem:[%s2792] sm:$0xf]
      %v2794 = vld [vmem:[%s2792 + $0x4] sm:$0xf]
      %v2795 = vld [vmem:[%s2792 + $0x8] sm:$0xf]
      %v2796 = vld [vmem:[%s2792 + $0xc] sm:$0xf]
      %v2797 = vld [vmem:[%s2792 + $0x10] sm:$0xf]
      %v2798 = vld [vmem:[%s2792 + $0x14] sm:$0xf]
      %v2799 = vld [vmem:[%s2792 + $0x18] sm:$0xf]
      %v2800 = vld [vmem:[%s2792 + $0x1c] sm:$0xf]
      %v2801 = vld [vmem:[%s2792 + $0x20] sm:$0xf]
      %v2802 = vld [vmem:[%s2792 + $0x24] sm:$0xf]
      %v2803 = vld [vmem:[%s2792 + $0x28] sm:$0xf]
      %v2804 = vld [vmem:[%s2792 + $0x2c] sm:$0xf]
      %v2805 = vld [vmem:[%s2792 + $0x30] sm:$0xf]
      %v2806 = vld [vmem:[%s2792 + $0x34] sm:$0xf]
      %v2807 = vld [vmem:[%s2792 + $0x38] sm:$0xf]
      %v2808 = vld [vmem:[%s2792 + $0x3c] sm:$0xf]
      %v2825 = vunpack.c.l.b16 %v2793
      %v2826 = vunpack.c.l.b16 %v2794
      %v2827 = vunpack.c.l.b16 %v2795
      %v2828 = vunpack.c.l.b16 %v2796
      %v2829 = vunpack.c.l.b16 %v2797
      %v2830 = vunpack.c.l.b16 %v2798
      %v2831 = vunpack.c.l.b16 %v2799
      %v2832 = vunpack.c.l.b16 %v2800
      %v2833 = vunpack.c.l.b16 %v2801
      %v2834 = vunpack.c.l.b16 %v2802
      %v2835 = vunpack.c.l.b16 %v2803
      %v2836 = vunpack.c.l.b16 %v2804
      %v2837 = vunpack.c.l.b16 %v2805
      %v2838 = vunpack.c.l.b16 %v2806
      %v2839 = vunpack.c.l.b16 %v2807
      %v2840 = vunpack.c.l.b16 %v2808
      %v2841 = vpack.c.b16 %v2826, %v2825
      %v2842 = vpack.c.b16 %v2828, %v2827
      %v2843 = vpack.c.b16 %v2830, %v2829
      %v2844 = vpack.c.b16 %v2832, %v2831
      %v2845 = vpack.c.b16 %v2834, %v2833
      %v2846 = vpack.c.b16 %v2836, %v2835
      %v2847 = vpack.c.b16 %v2838, %v2837
      %v2848 = vpack.c.b16 %v2840, %v2839
      %2857 = vmatprep.subr.bf16.mxu0 0
      %2858 = vmatpush1.bf16.msra.mxu0 %v2841
      %2859 = vmatprep.subr.bf16.mxu0 0
      %2860 = vmatpush1.bf16.msra.mxu0 %v2842
      %2861 = vmatprep.subr.bf16.mxu0 0
      %2862 = vmatpush1.bf16.msra.mxu0 %v2843
      %2863 = vmatprep.subr.bf16.mxu0 0
      %2864 = vmatpush1.bf16.msra.mxu0 %v2844
      %2865 = vmatprep.subr.bf16.mxu0 0
      %2866 = vmatpush1.bf16.msra.mxu0 %v2845
      %2867 = vmatprep.subr.bf16.mxu0 0
      %2868 = vmatpush1.bf16.msra.mxu0 %v2846
      %2869 = vmatprep.subr.bf16.mxu0 0
      %2870 = vmatpush1.bf16.msra.mxu0 %v2847
      %2871 = vmatprep.subr.bf16.mxu0 0
      %2872 = vmatpush1.bf16.msra.mxu0 %v2848
      %2873 = vmatprep.subr.bf16.mxu0 0
      %2874 = vmatpush1.bf16.msra.mxu0 0
      %2875 = vmatprep.subr.bf16.mxu0 0
      %2876 = vmatpush1.bf16.msra.mxu0 0
      %2877 = vmatprep.subr.bf16.mxu0 0
      %2878 = vmatpush1.bf16.msra.mxu0 0
      %2879 = vmatprep.subr.bf16.mxu0 0
      %2880 = vmatpush1.bf16.msra.mxu0 0
      %2881 = vmatprep.subr.bf16.mxu0 0
      %2882 = vmatpush1.bf16.msra.mxu0 0
      %2883 = vmatprep.subr.bf16.mxu0 0
      %2884 = vmatpush1.bf16.msra.mxu0 0
      %2885 = vmatprep.subr.bf16.mxu0 0
      %2886 = vmatpush1.bf16.msra.mxu0 0
      %2887 = vmatprep.subr.bf16.mxu0 0
      %2888 = vmatpush1.bf16.msra.mxu0 0
      %2889 = vmatprep.mubr.bf16.mxu0 0
      %2890 = vmatmul.mubr.bf16.gmra.mrb[0].mxu0 %v2762
      %v2891 = vpop.f32.mrb[0].mxu0
      %v2892 = vadd.f32 0.0, %v2891
      %v2893 = vpop.f32.mrb[0].mxu0
      %v2894 = vpop.f32.mrb[0].mxu0
      %v2895 = vadd.f32 0.0, %v2894
      %v2896 = vpop.f32.mrb[0].mxu0
      %2897 = vmatprep.mubr.bf16.mxu0 0
      %2898 = vmatmul.mubr.bf16.gmra.mrb[0].mxu0 %v2763
      %v2899 = vpop.f32.mrb[0].mxu0
      %v2900 = vadd.f32 0.0, %v2899
      %v2901 = vpop.f32.mrb[0].mxu0
      %v2902 = vpop.f32.mrb[0].mxu0
      %v2903 = vadd.f32 0.0, %v2902
      %v2904 = vpop.f32.mrb[0].mxu0
      %2905 = vmatprep.mubr.bf16.mxu0 0
      %2906 = vmatmul.mubr.bf16.gmra.mrb[0].mxu0 %v2764
      %v2907 = vpop.f32.mrb[0].mxu0
      %v2908 = vadd.f32 0.0, %v2907
      %v2909 = vpop.f32.mrb[0].mxu0
      %v2910 = vpop.f32.mrb[0].mxu0
      %v2911 = vadd.f32 0.0, %v2910
      %v2912 = vpop.f32.mrb[0].mxu0
      %2913 = vmatprep.mubr.bf16.mxu0 0
      %2914 = vmatmul.mubr.bf16.gmra.mrb[0].mxu0 %v2765
      %v2915 = vpop.f32.mrb[0].mxu0
      %v2916 = vadd.f32 0.0, %v2915
      %v2917 = vpop.f32.mrb[0].mxu0
      %v2918 = vpop.f32.mrb[0].mxu0
      %v2919 = vadd.f32 0.0, %v2918
      %v2920 = vpop.f32.mrb[0].mxu0
      %2921 = vmatprep.mubr.bf16.mxu0 0
      %2922 = vmatmul.mubr.bf16.gmra.mrb[0].mxu0 %v2766
      %v2923 = vpop.f32.mrb[0].mxu0
      %v2924 = vadd.f32 0.0, %v2923
      %v2925 = vpop.f32.mrb[0].mxu0
      %v2926 = vpop.f32.mrb[0].mxu0
      %v2927 = vadd.f32 0.0, %v2926
      %v2928 = vpop.f32.mrb[0].mxu0
      %2929 = vmatprep.mubr.bf16.mxu0 0
      %2930 = vmatmul.mubr.bf16.gmra.mrb[0].mxu0 %v2767
      %v2931 = vpop.f32.mrb[0].mxu0
      %v2932 = vadd.f32 0.0, %v2931
      %v2933 = vpop.f32.mrb[0].mxu0
      %v2934 = vpop.f32.mrb[0].mxu0
      %v2935 = vadd.f32 0.0, %v2934
      %v2936 = vpop.f32.mrb[0].mxu0
      %2937 = vmatprep.mubr.bf16.mxu0 0
      %2938 = vmatmul.mubr.bf16.gmra.mrb[0].mxu0 %v2768
      %v2939 = vpop.f32.mrb[0].mxu0
      %v2940 = vadd.f32 0.0, %v2939
      %v2941 = vpop.f32.mrb[0].mxu0
      %v2942 = vpop.f32.mrb[0].mxu0
      %v2943 = vadd.f32 0.0, %v2942
      %v2944 = vpop.f32.mrb[0].mxu0
      %2945 = vmatprep.mubr.bf16.mxu0 0
      %2946 = vmatmul.mubr.bf16.gmra.mrb[0].mxu0 %v2769
      %v2947 = vpop.f32.mrb[0].mxu0
      %v2948 = vadd.f32 0.0, %v2947
      %v2949 = vpop.f32.mrb[0].mxu0
      %v2950 = vpop.f32.mrb[0].mxu0
      %v2951 = vadd.f32 0.0, %v2950
      %v2952 = vpop.f32.mrb[0].mxu0
      %2953 = vmatprep.mubr.bf16.mxu0 0
      %2954 = vmatmul.mubr.bf16.gmra.mrb[0].mxu0 %v2770
      %v2955 = vpop.f32.mrb[0].mxu0
      %v2956 = vadd.f32 0.0, %v2955
      %v2957 = vpop.f32.mrb[0].mxu0
      %v2958 = vpop.f32.mrb[0].mxu0
      %v2959 = vadd.f32 0.0, %v2958
      %v2960 = vpop.f32.mrb[0].mxu0
      %2961 = vmatprep.mubr.bf16.mxu0 0
      %2962 = vmatmul.mubr.bf16.gmra.mrb[0].mxu0 %v2771
      %v2963 = vpop.f32.mrb[0].mxu0
      %v2964 = vadd.f32 0.0, %v2963
      %v2965 = vpop.f32.mrb[0].mxu0
      %v2966 = vpop.f32.mrb[0].mxu0
      %v2967 = vadd.f32 0.0, %v2966
      %v2968 = vpop.f32.mrb[0].mxu0
      %2969 = vmatprep.mubr.bf16.mxu0 0
      %2970 = vmatmul.mubr.bf16.gmra.mrb[0].mxu0 %v2772
      %v2971 = vpop.f32.mrb[0].mxu0
      %v2972 = vadd.f32 0.0, %v2971
      %v2973 = vpop.f32.mrb[0].mxu0
      %v2974 = vpop.f32.mrb[0].mxu0
      %v2975 = vadd.f32 0.0, %v2974
      %v2976 = vpop.f32.mrb[0].mxu0
      %2977 = vmatprep.mubr.bf16.mxu0 0
      %2978 = vmatmul.mubr.bf16.gmra.mrb[0].mxu0 %v2773
      %v2979 = vpop.f32.mrb[0].mxu0
      %v2980 = vadd.f32 0.0, %v2979
      %v2981 = vpop.f32.mrb[0].mxu0
      %v2982 = vpop.f32.mrb[0].mxu0
      %v2983 = vadd.f32 0.0, %v2982
      %v2984 = vpop.f32.mrb[0].mxu0
      %2985 = vmatprep.mubr.bf16.mxu0 0
      %2986 = vmatmul.mubr.bf16.gmra.mrb[0].mxu0 %v2774
      %v2987 = vpop.f32.mrb[0].mxu0
      %v2988 = vadd.f32 0.0, %v2987
      %v2989 = vpop.f32.mrb[0].mxu0
      %v2990 = vpop.f32.mrb[0].mxu0
      %v2991 = vadd.f32 0.0, %v2990
      %v2992 = vpop.f32.mrb[0].mxu0
      %2993 = vmatprep.mubr.bf16.mxu0 0
      %2994 = vmatmul.mubr.bf16.gmra.mrb[0].mxu0 %v2775
      %v2995 = vpop.f32.mrb[0].mxu0
      %v2996 = vadd.f32 0.0, %v2995
      %v2997 = vpop.f32.mrb[0].mxu0
      %v2998 = vpop.f32.mrb[0].mxu0
      %v2999 = vadd.f32 0.0, %v2998
      %v3000 = vpop.f32.mrb[0].mxu0
      %3001 = vmatprep.mubr.bf16.mxu0 0
      %3002 = vmatmul.mubr.bf16.gmra.mrb[0].mxu0 %v2776
      %v3003 = vpop.f32.mrb[0].mxu0
      %v3004 = vadd.f32 0.0, %v3003
      %v3005 = vpop.f32.mrb[0].mxu0
      %v3006 = vpop.f32.mrb[0].mxu0
      %v3007 = vadd.f32 0.0, %v3006
      %v3008 = vpop.f32.mrb[0].mxu0
      %3009 = vmatprep.mubr.bf16.mxu0 0
      %3010 = vmatmul.mubr.bf16.gmra.mrb[0].mxu0 %v2777
      %v3011 = vpop.f32.mrb[0].mxu0
      %v3012 = vadd.f32 0.0, %v3011
      %v3013 = vpop.f32.mrb[0].mxu0
      %v3014 = vpop.f32.mrb[0].mxu0
      %v3015 = vadd.f32 0.0, %v3014
      %v3016 = vpop.f32.mrb[0].mxu0
      %3017 = vmatprep.mubr.bf16.mxu0 0
      %3018 = vmatmul.mubr.bf16.gmra.mrb[0].mxu0 %v2778
      %v3019 = vpop.f32.mrb[0].mxu0
      %v3020 = vadd.f32 0.0, %v3019
      %v3021 = vpop.f32.mrb[0].mxu0
      %v3022 = vpop.f32.mrb[0].mxu0
      %v3023 = vadd.f32 0.0, %v3022
      %v3024 = vpop.f32.mrb[0].mxu0
      %3025 = vmatprep.mubr.bf16.mxu0 0
      %3026 = vmatmul.mubr.bf16.gmra.mrb[0].mxu0 %v2779
      %v3027 = vpop.f32.mrb[0].mxu0
      %v3028 = vadd.f32 0.0, %v3027
      %v3029 = vpop.f32.mrb[0].mxu0
      %v3030 = vpop.f32.mrb[0].mxu0
      %v3031 = vadd.f32 0.0, %v3030
      %v3032 = vpop.f32.mrb[0].mxu0
      %3033 = vmatprep.mubr.bf16.mxu0 0
      %3034 = vmatmul.mubr.bf16.gmra.mrb[0].mxu0 %v2780
      %v3035 = vpop.f32.mrb[0].mxu0
      %v3036 = vadd.f32 0.0, %v3035
      %v3037 = vpop.f32.mrb[0].mxu0
      %v3038 = vpop.f32.mrb[0].mxu0
      %v3039 = vadd.f32 0.0, %v3038
      %v3040 = vpop.f32.mrb[0].mxu0
      %3041 = vmatprep.mubr.bf16.mxu0 0
      %3042 = vmatmul.mubr.bf16.gmra.mrb[0].mxu0 %v2781
      %v3043 = vpop.f32.mrb[0].mxu0
      %v3044 = vadd.f32 0.0, %v3043
      %v3045 = vpop.f32.mrb[0].mxu0
      %v3046 = vpop.f32.mrb[0].mxu0
      %v3047 = vadd.f32 0.0, %v3046
      %v3048 = vpop.f32.mrb[0].mxu0
      %3049 = vmatprep.mubr.bf16.mxu0 0
      %3050 = vmatmul.mubr.bf16.gmra.mrb[0].mxu0 %v2782
      %v3051 = vpop.f32.mrb[0].mxu0
      %v3052 = vadd.f32 0.0, %v3051
      %v3053 = vpop.f32.mrb[0].mxu0
      %v3054 = vpop.f32.mrb[0].mxu0
      %v3055 = vadd.f32 0.0, %v3054
      %v3056 = vpop.f32.mrb[0].mxu0
      %3057 = vmatprep.mubr.bf16.mxu0 0
      %3058 = vmatmul.mubr.bf16.gmra.mrb[0].mxu0 %v2783
      %v3059 = vpop.f32.mrb[0].mxu0
      %v3060 = vadd.f32 0.0, %v3059
      %v3061 = vpop.f32.mrb[0].mxu0
      %v3062 = vpop.f32.mrb[0].mxu0
      %v3063 = vadd.f32 0.0, %v3062
      %v3064 = vpop.f32.mrb[0].mxu0
      %3065 = vmatprep.mubr.bf16.mxu0 0
      %3066 = vmatmul.mubr.bf16.gmra.mrb[0].mxu0 %v2784
      %v3067 = vpop.f32.mrb[0].mxu0
      %v3068 = vadd.f32 0.0, %v3067
      %v3069 = vpop.f32.mrb[0].mxu0
      %v3070 = vpop.f32.mrb[0].mxu0
      %v3071 = vadd.f32 0.0, %v3070
      %v3072 = vpop.f32.mrb[0].mxu0
      %3073 = vmatprep.mubr.bf16.mxu0 0
      %3074 = vmatmul.mubr.bf16.gmra.mrb[0].mxu0 %v2785
      %v3075 = vpop.f32.mrb[0].mxu0
      %v3076 = vadd.f32 0.0, %v3075
      %v3077 = vpop.f32.mrb[0].mxu0
      %v3078 = vpop.f32.mrb[0].mxu0
      %v3079 = vadd.f32 0.0, %v3078
      %v3080 = vpop.f32.mrb[0].mxu0
      %3081 = vmatprep.mubr.bf16.mxu0 0
      %3082 = vmatmul.mubr.bf16.gmra.mrb[0].mxu0 %v2786
      %v3083 = vpop.f32.mrb[0].mxu0
      %v3084 = vadd.f32 0.0, %v3083
      %v3085 = vpop.f32.mrb[0].mxu0
      %v3086 = vpop.f32.mrb[0].mxu0
      %v3087 = vadd.f32 0.0, %v3086
      %v3088 = vpop.f32.mrb[0].mxu0
      %3089 = vmatprep.mubr.bf16.mxu0 0
      %3090 = vmatmul.mubr.bf16.gmra.mrb[0].mxu0 %v2787
      %v3091 = vpop.f32.mrb[0].mxu0
      %v3092 = vadd.f32 0.0, %v3091
      %v3093 = vpop.f32.mrb[0].mxu0
      %v3094 = vpop.f32.mrb[0].mxu0
      %v3095 = vadd.f32 0.0, %v3094
      %v3096 = vpop.f32.mrb[0].mxu0
      %3097 = vmatprep.mubr.bf16.mxu0 0
      %3098 = vmatmul.mubr.bf16.gmra.mrb[0].mxu0 %v2788
      %v3099 = vpop.f32.mrb[0].mxu0
      %v3100 = vadd.f32 0.0, %v3099
      %v3101 = vpop.f32.mrb[0].mxu0
      %v3102 = vpop.f32.mrb[0].mxu0
      %v3103 = vadd.f32 0.0, %v3102
      %v3104 = vpop.f32.mrb[0].mxu0
      %3105 = vmatprep.mubr.bf16.mxu0 0
      %3106 = vmatmul.mubr.bf16.gmra.mrb[0].mxu0 %v2789
      %v3107 = vpop.f32.mrb[0].mxu0
      %v3108 = vadd.f32 0.0, %v3107
      %v3109 = vpop.f32.mrb[0].mxu0
      %v3110 = vpop.f32.mrb[0].mxu0
      %v3111 = vadd.f32 0.0, %v3110
      %v3112 = vpop.f32.mrb[0].mxu0
      %3113 = vmatprep.mubr.bf16.mxu0 0
      %3114 = vmatmul.mubr.bf16.gmra.mrb[0].mxu0 %v2790
      %v3115 = vpop.f32.mrb[0].mxu0
      %v3116 = vadd.f32 0.0, %v3115
      %v3117 = vpop.f32.mrb[0].mxu0
      %v3118 = vpop.f32.mrb[0].mxu0
      %v3119 = vadd.f32 0.0, %v3118
      %v3120 = vpop.f32.mrb[0].mxu0
      %3121 = vmatprep.mubr.bf16.mxu0 0
      %3122 = vmatmul.mubr.bf16.gmra.mrb[0].mxu0 %v2791
      %v3123 = vpop.f32.mrb[0].mxu0
      %v3124 = vadd.f32 0.0, %v3123
      %v3125 = vpop.f32.mrb[0].mxu0
      %v3126 = vpop.f32.mrb[0].mxu0
      %v3127 = vadd.f32 0.0, %v3126
      %v3128 = vpop.f32.mrb[0].mxu0
      %3129 = vdwg.mxu0
      %v3130 = vadd.f32 %v2642, %v2892
      %v3131 = vadd.f32 %v2643, %v2895
      %v3132 = vadd.f32 %v2644, %v2900
      %v3133 = vadd.f32 %v2645, %v2903
      %v3134 = vadd.f32 %v2646, %v2908
      %v3135 = vadd.f32 %v2647, %v2911
      %v3136 = vadd.f32 %v2648, %v2916
      %v3137 = vadd.f32 %v2649, %v2919
      %v3138 = vadd.f32 %v2650, %v2924
      %v3139 = vadd.f32 %v2651, %v2927
      %v3140 = vadd.f32 %v2652, %v2932
      %v3141 = vadd.f32 %v2653, %v2935
      %v3142 = vadd.f32 %v2654, %v2940
      %v3143 = vadd.f32 %v2655, %v2943
      %v3144 = vadd.f32 %v2656, %v2948
      %v3145 = vadd.f32 %v2657, %v2951
      %v3146 = vadd.f32 %v2658, %v2956
      %v3147 = vadd.f32 %v2659, %v2959
      %v3148 = vadd.f32 %v2660, %v2964
      %v3149 = vadd.f32 %v2661, %v2967
      %v3150 = vadd.f32 %v2662, %v2972
      %v3151 = vadd.f32 %v2663, %v2975
      %v3152 = vadd.f32 %v2664, %v2980
      %v3153 = vadd.f32 %v2665, %v2983
      %v3154 = vadd.f32 %v2666, %v2988
      %v3155 = vadd.f32 %v2667, %v2991
      %v3156 = vadd.f32 %v2668, %v2996
      %v3157 = vadd.f32 %v2669, %v2999
      %v3158 = vadd.f32 %v2670, %v3004
      %v3159 = vadd.f32 %v2671, %v3007
      %v3160 = vadd.f32 %v2672, %v3012
      %v3161 = vadd.f32 %v2673, %v3015
      %v3162 = vadd.f32 %v2674, %v3020
      %v3163 = vadd.f32 %v2675, %v3023
      %v3164 = vadd.f32 %v2676, %v3028
      %v3165 = vadd.f32 %v2677, %v3031
      %v3166 = vadd.f32 %v2678, %v3036
      %v3167 = vadd.f32 %v2679, %v3039
      %v3168 = vadd.f32 %v2680, %v3044
      %v3169 = vadd.f32 %v2681, %v3047
      %v3170 = vadd.f32 %v2682, %v3052
      %v3171 = vadd.f32 %v2683, %v3055
      %v3172 = vadd.f32 %v2684, %v3060
      %v3173 = vadd.f32 %v2685, %v3063
      %v3174 = vadd.f32 %v2686, %v3068
      %v3175 = vadd.f32 %v2687, %v3071
      %v3176 = vadd.f32 %v2688, %v3076
      %v3177 = vadd.f32 %v2689, %v3079
      %v3178 = vadd.f32 %v2690, %v3084
      %v3179 = vadd.f32 %v2691, %v3087
      %v3180 = vadd.f32 %v2692, %v3092
      %v3181 = vadd.f32 %v2693, %v3095
      %v3182 = vadd.f32 %v2694, %v3100
      %v3183 = vadd.f32 %v2695, %v3103
      %v3184 = vadd.f32 %v2696, %v3108
      %v3185 = vadd.f32 %v2697, %v3111
      %v3186 = vadd.f32 %v2698, %v3116
      %v3187 = vadd.f32 %v2699, %v3119
      %v3188 = vadd.f32 %v2700, %v3124
      %v3189 = vadd.f32 %v2701, %v3127
      %v3190 = vld [vmem:[%s365 + $0x47] sm:$0xff]
      %v3191 = vld [vmem:[%s365 + $0x4f] sm:$0xff]
      %v3192 = vld [vmem:[%s365 + $0x57] sm:$0xff]
      %v3193 = vld [vmem:[%s365 + $0x5f] sm:$0xff]
      %v3194 = vld [vmem:[%s365 + $0x67] sm:$0xff]
      %v3195 = vld [vmem:[%s365 + $0x6f] sm:$0xff]
      %v3196 = vld [vmem:[%s365 + $0x77] sm:$0xff]
      %v3197 = vld [vmem:[%s365 + $0x7f] sm:$0xff]
      %v3198 = vld [vmem:[%s365 + $0x87] sm:$0xff]
      %v3199 = vld [vmem:[%s365 + $0x8f] sm:$0xff]
      %v3200 = vld [vmem:[%s365 + $0x97] sm:$0xff]
      %v3201 = vld [vmem:[%s365 + $0x9f] sm:$0xff]
      %v3202 = vld [vmem:[%s365 + $0xa7] sm:$0xff]
      %v3203 = vld [vmem:[%s365 + $0xaf] sm:$0xff]
      %v3204 = vld [vmem:[%s365 + $0xb7] sm:$0xff]
      %v3205 = vld [vmem:[%s365 + $0xbf] sm:$0xff]
      %v3206 = vld [vmem:[%s365 + $0xc7] sm:$0xff]
      %v3207 = vld [vmem:[%s365 + $0xcf] sm:$0xff]
      %v3208 = vld [vmem:[%s365 + $0xd7] sm:$0xff]
      %v3209 = vld [vmem:[%s365 + $0xdf] sm:$0xff]
      %v3210 = vld [vmem:[%s365 + $0xe7] sm:$0xff]
      %v3211 = vld [vmem:[%s365 + $0xef] sm:$0xff]
      %v3212 = vld [vmem:[%s365 + $0xf7] sm:$0xff]
      %v3213 = vld [vmem:[%s365 + $0xff] sm:$0xff]
      %v3214 = vld [vmem:[%s365 + $0x107] sm:$0xff]
      %v3215 = vld [vmem:[%s365 + $0x10f] sm:$0xff]
      %v3216 = vld [vmem:[%s365 + $0x117] sm:$0xff]
      %v3217 = vld [vmem:[%s365 + $0x11f] sm:$0xff]
      %v3218 = vld [vmem:[%s365 + $0x127] sm:$0xff]
      %v3219 = vld [vmem:[%s365 + $0x12f] sm:$0xff]
      %v3220 = vld [vmem:[%s365 + $0x137] sm:$0xff]
      %v3221 = vld [vmem:[%s365 + $0x13f] sm:$0xff]
      %v3222 = vld [vmem:[%s365 + $0x147] sm:$0xff]
      %v3223 = vld [vmem:[%s365 + $0x14f] sm:$0xff]
      %v3224 = vld [vmem:[%s365 + $0x157] sm:$0xff]
      %v3225 = vld [vmem:[%s365 + $0x15f] sm:$0xff]
      %v3226 = vld [vmem:[%s365 + $0x167] sm:$0xff]
      %v3227 = vld [vmem:[%s365 + $0x16f] sm:$0xff]
      %v3228 = vld [vmem:[%s365 + $0x177] sm:$0xff]
      %v3229 = vld [vmem:[%s365 + $0x17f] sm:$0xff]
      %v3230 = vld [vmem:[%s365 + $0x187] sm:$0xff]
      %v3231 = vld [vmem:[%s365 + $0x18f] sm:$0xff]
      %v3232 = vld [vmem:[%s365 + $0x197] sm:$0xff]
      %v3233 = vld [vmem:[%s365 + $0x19f] sm:$0xff]
      %v3234 = vld [vmem:[%s365 + $0x1a7] sm:$0xff]
      %v3235 = vld [vmem:[%s365 + $0x1af] sm:$0xff]
      %v3236 = vld [vmem:[%s365 + $0x1b7] sm:$0xff]
      %v3237 = vld [vmem:[%s365 + $0x1bf] sm:$0xff]
      %v3238 = vld [vmem:[%s365 + $0x1c7] sm:$0xff]
      %v3239 = vld [vmem:[%s365 + $0x1cf] sm:$0xff]
      %v3240 = vld [vmem:[%s365 + $0x1d7] sm:$0xff]
      %v3241 = vld [vmem:[%s365 + $0x1df] sm:$0xff]
      %v3242 = vld [vmem:[%s365 + $0x1e7] sm:$0xff]
      %v3243 = vld [vmem:[%s365 + $0x1ef] sm:$0xff]
      %v3244 = vld [vmem:[%s365 + $0x1f7] sm:$0xff]
      %v3245 = vld [vmem:[%s365 + $0x1ff] sm:$0xff]
      %v3246 = vld [vmem:[%s365 + $0x207] sm:$0xff]
      %v3247 = vld [vmem:[%s365 + $0x20f] sm:$0xff]
      %v3248 = vld [vmem:[%s365 + $0x217] sm:$0xff]
      %v3249 = vld [vmem:[%s365 + $0x21f] sm:$0xff]
      %v3250 = vpack.c.bf16 %v3191, %v3190
      %v3251 = vpack.c.bf16 %v3193, %v3192
      %v3252 = vpack.c.bf16 %v3195, %v3194
      %v3253 = vpack.c.bf16 %v3197, %v3196
      %v3254 = vpack.c.bf16 %v3199, %v3198
      %v3255 = vpack.c.bf16 %v3201, %v3200
      %v3256 = vpack.c.bf16 %v3203, %v3202
      %v3257 = vpack.c.bf16 %v3205, %v3204
      %v3258 = vpack.c.bf16 %v3207, %v3206
      %v3259 = vpack.c.bf16 %v3209, %v3208
      %v3260 = vpack.c.bf16 %v3211, %v3210
      %v3261 = vpack.c.bf16 %v3213, %v3212
      %v3262 = vpack.c.bf16 %v3215, %v3214
      %v3263 = vpack.c.bf16 %v3217, %v3216
      %v3264 = vpack.c.bf16 %v3219, %v3218
      %v3265 = vpack.c.bf16 %v3221, %v3220
      %v3266 = vpack.c.bf16 %v3223, %v3222
      %v3267 = vpack.c.bf16 %v3225, %v3224
      %v3268 = vpack.c.bf16 %v3227, %v3226
      %v3269 = vpack.c.bf16 %v3229, %v3228
      %v3270 = vpack.c.bf16 %v3231, %v3230
      %v3271 = vpack.c.bf16 %v3233, %v3232
      %v3272 = vpack.c.bf16 %v3235, %v3234
      %v3273 = vpack.c.bf16 %v3237, %v3236
      %v3274 = vpack.c.bf16 %v3239, %v3238
      %v3275 = vpack.c.bf16 %v3241, %v3240
      %v3276 = vpack.c.bf16 %v3243, %v3242
      %v3277 = vpack.c.bf16 %v3245, %v3244
      %v3278 = vpack.c.bf16 %v3247, %v3246
      %v3279 = vpack.c.bf16 %v3249, %v3248
      %s3280 = scalar_lea.vmem %s2, 384
      %v3281 = vld [vmem:[%s3280] sm:$0xf]
      %v3282 = vld [vmem:[%s3280 + $0x4] sm:$0xf]
      %v3283 = vld [vmem:[%s3280 + $0x8] sm:$0xf]
      %v3284 = vld [vmem:[%s3280 + $0xc] sm:$0xf]
      %v3285 = vld [vmem:[%s3280 + $0x10] sm:$0xf]
      %v3286 = vld [vmem:[%s3280 + $0x14] sm:$0xf]
      %v3287 = vld [vmem:[%s3280 + $0x18] sm:$0xf]
      %v3288 = vld [vmem:[%s3280 + $0x1c] sm:$0xf]
      %v3289 = vld [vmem:[%s3280 + $0x20] sm:$0xf]
      %v3290 = vld [vmem:[%s3280 + $0x24] sm:$0xf]
      %v3291 = vld [vmem:[%s3280 + $0x28] sm:$0xf]
      %v3292 = vld [vmem:[%s3280 + $0x2c] sm:$0xf]
      %v3293 = vld [vmem:[%s3280 + $0x30] sm:$0xf]
      %v3294 = vld [vmem:[%s3280 + $0x34] sm:$0xf]
      %v3295 = vld [vmem:[%s3280 + $0x38] sm:$0xf]
      %v3296 = vld [vmem:[%s3280 + $0x3c] sm:$0xf]
      %v3313 = vunpack.c.l.b16 %v3281
      %v3314 = vunpack.c.l.b16 %v3282
      %v3315 = vunpack.c.l.b16 %v3283
      %v3316 = vunpack.c.l.b16 %v3284
      %v3317 = vunpack.c.l.b16 %v3285
      %v3318 = vunpack.c.l.b16 %v3286
      %v3319 = vunpack.c.l.b16 %v3287
      %v3320 = vunpack.c.l.b16 %v3288
      %v3321 = vunpack.c.l.b16 %v3289
      %v3322 = vunpack.c.l.b16 %v3290
      %v3323 = vunpack.c.l.b16 %v3291
      %v3324 = vunpack.c.l.b16 %v3292
      %v3325 = vunpack.c.l.b16 %v3293
      %v3326 = vunpack.c.l.b16 %v3294
      %v3327 = vunpack.c.l.b16 %v3295
      %v3328 = vunpack.c.l.b16 %v3296
      %v3329 = vpack.c.b16 %v3314, %v3313
      %v3330 = vpack.c.b16 %v3316, %v3315
      %v3331 = vpack.c.b16 %v3318, %v3317
      %v3332 = vpack.c.b16 %v3320, %v3319
      %v3333 = vpack.c.b16 %v3322, %v3321
      %v3334 = vpack.c.b16 %v3324, %v3323
      %v3335 = vpack.c.b16 %v3326, %v3325
      %v3336 = vpack.c.b16 %v3328, %v3327
      %3345 = vmatprep.subr.bf16.mxu0 0
      %3346 = vmatpush1.bf16.msra.mxu0 %v3329
      %3347 = vmatprep.subr.bf16.mxu0 0
      %3348 = vmatpush1.bf16.msra.mxu0 %v3330
      %3349 = vmatprep.subr.bf16.mxu0 0
      %3350 = vmatpush1.bf16.msra.mxu0 %v3331
      %3351 = vmatprep.subr.bf16.mxu0 0
      %3352 = vmatpush1.bf16.msra.mxu0 %v3332
      %3353 = vmatprep.subr.bf16.mxu0 0
      %3354 = vmatpush1.bf16.msra.mxu0 %v3333
      %3355 = vmatprep.subr.bf16.mxu0 0
      %3356 = vmatpush1.bf16.msra.mxu0 %v3334
      %3357 = vmatprep.subr.bf16.mxu0 0
      %3358 = vmatpush1.bf16.msra.mxu0 %v3335
      %3359 = vmatprep.subr.bf16.mxu0 0
      %3360 = vmatpush1.bf16.msra.mxu0 %v3336
      %3361 = vmatprep.subr.bf16.mxu0 0
      %3362 = vmatpush1.bf16.msra.mxu0 0
      %3363 = vmatprep.subr.bf16.mxu0 0
      %3364 = vmatpush1.bf16.msra.mxu0 0
      %3365 = vmatprep.subr.bf16.mxu0 0
      %3366 = vmatpush1.bf16.msra.mxu0 0
      %3367 = vmatprep.subr.bf16.mxu0 0
      %3368 = vmatpush1.bf16.msra.mxu0 0
      %3369 = vmatprep.subr.bf16.mxu0 0
      %3370 = vmatpush1.bf16.msra.mxu0 0
      %3371 = vmatprep.subr.bf16.mxu0 0
      %3372 = vmatpush1.bf16.msra.mxu0 0
      %3373 = vmatprep.subr.bf16.mxu0 0
      %3374 = vmatpush1.bf16.msra.mxu0 0
      %3375 = vmatprep.subr.bf16.mxu0 0
      %3376 = vmatpush1.bf16.msra.mxu0 0
      %3377 = vmatprep.mubr.bf16.mxu0 0
      %3378 = vmatmul.mubr.bf16.gmra.mrb[0].mxu0 %v3250
      %v3379 = vpop.f32.mrb[0].mxu0
      %v3380 = vadd.f32 0.0, %v3379
      %v3381 = vpop.f32.mrb[0].mxu0
      %v3382 = vpop.f32.mrb[0].mxu0
      %v3383 = vadd.f32 0.0, %v3382
      %v3384 = vpop.f32.mrb[0].mxu0
      %3385 = vmatprep.mubr.bf16.mxu0 0
      %3386 = vmatmul.mubr.bf16.gmra.mrb[0].mxu0 %v3251
      %v3387 = vpop.f32.mrb[0].mxu0
      %v3388 = vadd.f32 0.0, %v3387
      %v3389 = vpop.f32.mrb[0].mxu0
      %v3390 = vpop.f32.mrb[0].mxu0
      %v3391 = vadd.f32 0.0, %v3390
      %v3392 = vpop.f32.mrb[0].mxu0
      %3393 = vmatprep.mubr.bf16.mxu0 0
      %3394 = vmatmul.mubr.bf16.gmra.mrb[0].mxu0 %v3252
      %v3395 = vpop.f32.mrb[0].mxu0
      %v3396 = vadd.f32 0.0, %v3395
      %v3397 = vpop.f32.mrb[0].mxu0
      %v3398 = vpop.f32.mrb[0].mxu0
      %v3399 = vadd.f32 0.0, %v3398
      %v3400 = vpop.f32.mrb[0].mxu0
      %3401 = vmatprep.mubr.bf16.mxu0 0
      %3402 = vmatmul.mubr.bf16.gmra.mrb[0].mxu0 %v3253
      %v3403 = vpop.f32.mrb[0].mxu0
      %v3404 = vadd.f32 0.0, %v3403
      %v3405 = vpop.f32.mrb[0].mxu0
      %v3406 = vpop.f32.mrb[0].mxu0
      %v3407 = vadd.f32 0.0, %v3406
      %v3408 = vpop.f32.mrb[0].mxu0
      %3409 = vmatprep.mubr.bf16.mxu0 0
      %3410 = vmatmul.mubr.bf16.gmra.mrb[0].mxu0 %v3254
      %v3411 = vpop.f32.mrb[0].mxu0
      %v3412 = vadd.f32 0.0, %v3411
      %v3413 = vpop.f32.mrb[0].mxu0
      %v3414 = vpop.f32.mrb[0].mxu0
      %v3415 = vadd.f32 0.0, %v3414
      %v3416 = vpop.f32.mrb[0].mxu0
      %3417 = vmatprep.mubr.bf16.mxu0 0
      %3418 = vmatmul.mubr.bf16.gmra.mrb[0].mxu0 %v3255
      %v3419 = vpop.f32.mrb[0].mxu0
      %v3420 = vadd.f32 0.0, %v3419
      %v3421 = vpop.f32.mrb[0].mxu0
      %v3422 = vpop.f32.mrb[0].mxu0
      %v3423 = vadd.f32 0.0, %v3422
      %v3424 = vpop.f32.mrb[0].mxu0
      %3425 = vmatprep.mubr.bf16.mxu0 0
      %3426 = vmatmul.mubr.bf16.gmra.mrb[0].mxu0 %v3256
      %v3427 = vpop.f32.mrb[0].mxu0
      %v3428 = vadd.f32 0.0, %v3427
      %v3429 = vpop.f32.mrb[0].mxu0
      %v3430 = vpop.f32.mrb[0].mxu0
      %v3431 = vadd.f32 0.0, %v3430
      %v3432 = vpop.f32.mrb[0].mxu0
      %3433 = vmatprep.mubr.bf16.mxu0 0
      %3434 = vmatmul.mubr.bf16.gmra.mrb[0].mxu0 %v3257
      %v3435 = vpop.f32.mrb[0].mxu0
      %v3436 = vadd.f32 0.0, %v3435
      %v3437 = vpop.f32.mrb[0].mxu0
      %v3438 = vpop.f32.mrb[0].mxu0
      %v3439 = vadd.f32 0.0, %v3438
      %v3440 = vpop.f32.mrb[0].mxu0
      %3441 = vmatprep.mubr.bf16.mxu0 0
      %3442 = vmatmul.mubr.bf16.gmra.mrb[0].mxu0 %v3258
      %v3443 = vpop.f32.mrb[0].mxu0
      %v3444 = vadd.f32 0.0, %v3443
      %v3445 = vpop.f32.mrb[0].mxu0
      %v3446 = vpop.f32.mrb[0].mxu0
      %v3447 = vadd.f32 0.0, %v3446
      %v3448 = vpop.f32.mrb[0].mxu0
      %3449 = vmatprep.mubr.bf16.mxu0 0
      %3450 = vmatmul.mubr.bf16.gmra.mrb[0].mxu0 %v3259
      %v3451 = vpop.f32.mrb[0].mxu0
      %v3452 = vadd.f32 0.0, %v3451
      %v3453 = vpop.f32.mrb[0].mxu0
      %v3454 = vpop.f32.mrb[0].mxu0
      %v3455 = vadd.f32 0.0, %v3454
      %v3456 = vpop.f32.mrb[0].mxu0
      %3457 = vmatprep.mubr.bf16.mxu0 0
      %3458 = vmatmul.mubr.bf16.gmra.mrb[0].mxu0 %v3260
      %v3459 = vpop.f32.mrb[0].mxu0
      %v3460 = vadd.f32 0.0, %v3459
      %v3461 = vpop.f32.mrb[0].mxu0
      %v3462 = vpop.f32.mrb[0].mxu0
      %v3463 = vadd.f32 0.0, %v3462
      %v3464 = vpop.f32.mrb[0].mxu0
      %3465 = vmatprep.mubr.bf16.mxu0 0
      %3466 = vmatmul.mubr.bf16.gmra.mrb[0].mxu0 %v3261
      %v3467 = vpop.f32.mrb[0].mxu0
      %v3468 = vadd.f32 0.0, %v3467
      %v3469 = vpop.f32.mrb[0].mxu0
      %v3470 = vpop.f32.mrb[0].mxu0
      %v3471 = vadd.f32 0.0, %v3470
      %v3472 = vpop.f32.mrb[0].mxu0
      %3473 = vmatprep.mubr.bf16.mxu0 0
      %3474 = vmatmul.mubr.bf16.gmra.mrb[0].mxu0 %v3262
      %v3475 = vpop.f32.mrb[0].mxu0
      %v3476 = vadd.f32 0.0, %v3475
      %v3477 = vpop.f32.mrb[0].mxu0
      %v3478 = vpop.f32.mrb[0].mxu0
      %v3479 = vadd.f32 0.0, %v3478
      %v3480 = vpop.f32.mrb[0].mxu0
      %3481 = vmatprep.mubr.bf16.mxu0 0
      %3482 = vmatmul.mubr.bf16.gmra.mrb[0].mxu0 %v3263
      %v3483 = vpop.f32.mrb[0].mxu0
      %v3484 = vadd.f32 0.0, %v3483
      %v3485 = vpop.f32.mrb[0].mxu0
      %v3486 = vpop.f32.mrb[0].mxu0
      %v3487 = vadd.f32 0.0, %v3486
      %v3488 = vpop.f32.mrb[0].mxu0
      %3489 = vmatprep.mubr.bf16.mxu0 0
      %3490 = vmatmul.mubr.bf16.gmra.mrb[0].mxu0 %v3264
      %v3491 = vpop.f32.mrb[0].mxu0
      %v3492 = vadd.f32 0.0, %v3491
      %v3493 = vpop.f32.mrb[0].mxu0
      %v3494 = vpop.f32.mrb[0].mxu0
      %v3495 = vadd.f32 0.0, %v3494
      %v3496 = vpop.f32.mrb[0].mxu0
      %3497 = vmatprep.mubr.bf16.mxu0 0
      %3498 = vmatmul.mubr.bf16.gmra.mrb[0].mxu0 %v3265
      %v3499 = vpop.f32.mrb[0].mxu0
      %v3500 = vadd.f32 0.0, %v3499
      %v3501 = vpop.f32.mrb[0].mxu0
      %v3502 = vpop.f32.mrb[0].mxu0
      %v3503 = vadd.f32 0.0, %v3502
      %v3504 = vpop.f32.mrb[0].mxu0
      %3505 = vmatprep.mubr.bf16.mxu0 0
      %3506 = vmatmul.mubr.bf16.gmra.mrb[0].mxu0 %v3266
      %v3507 = vpop.f32.mrb[0].mxu0
      %v3508 = vadd.f32 0.0, %v3507
      %v3509 = vpop.f32.mrb[0].mxu0
      %v3510 = vpop.f32.mrb[0].mxu0
      %v3511 = vadd.f32 0.0, %v3510
      %v3512 = vpop.f32.mrb[0].mxu0
      %3513 = vmatprep.mubr.bf16.mxu0 0
      %3514 = vmatmul.mubr.bf16.gmra.mrb[0].mxu0 %v3267
      %v3515 = vpop.f32.mrb[0].mxu0
      %v3516 = vadd.f32 0.0, %v3515
      %v3517 = vpop.f32.mrb[0].mxu0
      %v3518 = vpop.f32.mrb[0].mxu0
      %v3519 = vadd.f32 0.0, %v3518
      %v3520 = vpop.f32.mrb[0].mxu0
      %3521 = vmatprep.mubr.bf16.mxu0 0
      %3522 = vmatmul.mubr.bf16.gmra.mrb[0].mxu0 %v3268
      %v3523 = vpop.f32.mrb[0].mxu0
      %v3524 = vadd.f32 0.0, %v3523
      %v3525 = vpop.f32.mrb[0].mxu0
      %v3526 = vpop.f32.mrb[0].mxu0
      %v3527 = vadd.f32 0.0, %v3526
      %v3528 = vpop.f32.mrb[0].mxu0
      %3529 = vmatprep.mubr.bf16.mxu0 0
      %3530 = vmatmul.mubr.bf16.gmra.mrb[0].mxu0 %v3269
      %v3531 = vpop.f32.mrb[0].mxu0
      %v3532 = vadd.f32 0.0, %v3531
      %v3533 = vpop.f32.mrb[0].mxu0
      %v3534 = vpop.f32.mrb[0].mxu0
      %v3535 = vadd.f32 0.0, %v3534
      %v3536 = vpop.f32.mrb[0].mxu0
      %3537 = vmatprep.mubr.bf16.mxu0 0
      %3538 = vmatmul.mubr.bf16.gmra.mrb[0].mxu0 %v3270
      %v3539 = vpop.f32.mrb[0].mxu0
      %v3540 = vadd.f32 0.0, %v3539
      %v3541 = vpop.f32.mrb[0].mxu0
      %v3542 = vpop.f32.mrb[0].mxu0
      %v3543 = vadd.f32 0.0, %v3542
      %v3544 = vpop.f32.mrb[0].mxu0
      %3545 = vmatprep.mubr.bf16.mxu0 0
      %3546 = vmatmul.mubr.bf16.gmra.mrb[0].mxu0 %v3271
      %v3547 = vpop.f32.mrb[0].mxu0
      %v3548 = vadd.f32 0.0, %v3547
      %v3549 = vpop.f32.mrb[0].mxu0
      %v3550 = vpop.f32.mrb[0].mxu0
      %v3551 = vadd.f32 0.0, %v3550
      %v3552 = vpop.f32.mrb[0].mxu0
      %3553 = vmatprep.mubr.bf16.mxu0 0
      %3554 = vmatmul.mubr.bf16.gmra.mrb[0].mxu0 %v3272
      %v3555 = vpop.f32.mrb[0].mxu0
      %v3556 = vadd.f32 0.0, %v3555
      %v3557 = vpop.f32.mrb[0].mxu0
      %v3558 = vpop.f32.mrb[0].mxu0
      %v3559 = vadd.f32 0.0, %v3558
      %v3560 = vpop.f32.mrb[0].mxu0
      %3561 = vmatprep.mubr.bf16.mxu0 0
      %3562 = vmatmul.mubr.bf16.gmra.mrb[0].mxu0 %v3273
      %v3563 = vpop.f32.mrb[0].mxu0
      %v3564 = vadd.f32 0.0, %v3563
      %v3565 = vpop.f32.mrb[0].mxu0
      %v3566 = vpop.f32.mrb[0].mxu0
      %v3567 = vadd.f32 0.0, %v3566
      %v3568 = vpop.f32.mrb[0].mxu0
      %3569 = vmatprep.mubr.bf16.mxu0 0
      %3570 = vmatmul.mubr.bf16.gmra.mrb[0].mxu0 %v3274
      %v3571 = vpop.f32.mrb[0].mxu0
      %v3572 = vadd.f32 0.0, %v3571
      %v3573 = vpop.f32.mrb[0].mxu0
      %v3574 = vpop.f32.mrb[0].mxu0
      %v3575 = vadd.f32 0.0, %v3574
      %v3576 = vpop.f32.mrb[0].mxu0
      %3577 = vmatprep.mubr.bf16.mxu0 0
      %3578 = vmatmul.mubr.bf16.gmra.mrb[0].mxu0 %v3275
      %v3579 = vpop.f32.mrb[0].mxu0
      %v3580 = vadd.f32 0.0, %v3579
      %v3581 = vpop.f32.mrb[0].mxu0
      %v3582 = vpop.f32.mrb[0].mxu0
      %v3583 = vadd.f32 0.0, %v3582
      %v3584 = vpop.f32.mrb[0].mxu0
      %3585 = vmatprep.mubr.bf16.mxu0 0
      %3586 = vmatmul.mubr.bf16.gmra.mrb[0].mxu0 %v3276
      %v3587 = vpop.f32.mrb[0].mxu0
      %v3588 = vadd.f32 0.0, %v3587
      %v3589 = vpop.f32.mrb[0].mxu0
      %v3590 = vpop.f32.mrb[0].mxu0
      %v3591 = vadd.f32 0.0, %v3590
      %v3592 = vpop.f32.mrb[0].mxu0
      %3593 = vmatprep.mubr.bf16.mxu0 0
      %3594 = vmatmul.mubr.bf16.gmra.mrb[0].mxu0 %v3277
      %v3595 = vpop.f32.mrb[0].mxu0
      %v3596 = vadd.f32 0.0, %v3595
      %v3597 = vpop.f32.mrb[0].mxu0
      %v3598 = vpop.f32.mrb[0].mxu0
      %v3599 = vadd.f32 0.0, %v3598
      %v3600 = vpop.f32.mrb[0].mxu0
      %3601 = vmatprep.mubr.bf16.mxu0 0
      %3602 = vmatmul.mubr.bf16.gmra.mrb[0].mxu0 %v3278
      %v3603 = vpop.f32.mrb[0].mxu0
      %v3604 = vadd.f32 0.0, %v3603
      %v3605 = vpop.f32.mrb[0].mxu0
      %v3606 = vpop.f32.mrb[0].mxu0
      %v3607 = vadd.f32 0.0, %v3606
      %v3608 = vpop.f32.mrb[0].mxu0
      %3609 = vmatprep.mubr.bf16.mxu0 0
      %3610 = vmatmul.mubr.bf16.gmra.mrb[0].mxu0 %v3279
      %v3611 = vpop.f32.mrb[0].mxu0
      %v3612 = vadd.f32 0.0, %v3611
      %v3613 = vpop.f32.mrb[0].mxu0
      %v3614 = vpop.f32.mrb[0].mxu0
      %v3615 = vadd.f32 0.0, %v3614
      %v3616 = vpop.f32.mrb[0].mxu0
      %3617 = vdwg.mxu0
      %v3618 = vadd.f32 %v3130, %v3380
      %v3619 = vadd.f32 %v3131, %v3383
      %v3620 = vadd.f32 %v3132, %v3388
      %v3621 = vadd.f32 %v3133, %v3391
      %v3622 = vadd.f32 %v3134, %v3396
      %v3623 = vadd.f32 %v3135, %v3399
      %v3624 = vadd.f32 %v3136, %v3404
      %v3625 = vadd.f32 %v3137, %v3407
      %v3626 = vadd.f32 %v3138, %v3412
      %v3627 = vadd.f32 %v3139, %v3415
      %v3628 = vadd.f32 %v3140, %v3420
      %v3629 = vadd.f32 %v3141, %v3423
      %v3630 = vadd.f32 %v3142, %v3428
      %v3631 = vadd.f32 %v3143, %v3431
      %v3632 = vadd.f32 %v3144, %v3436
      %v3633 = vadd.f32 %v3145, %v3439
      %v3634 = vadd.f32 %v3146, %v3444
      %v3635 = vadd.f32 %v3147, %v3447
      %v3636 = vadd.f32 %v3148, %v3452
      %v3637 = vadd.f32 %v3149, %v3455
      %v3638 = vadd.f32 %v3150, %v3460
      %v3639 = vadd.f32 %v3151, %v3463
      %v3640 = vadd.f32 %v3152, %v3468
      %v3641 = vadd.f32 %v3153, %v3471
      %v3642 = vadd.f32 %v3154, %v3476
      %v3643 = vadd.f32 %v3155, %v3479
      %v3644 = vadd.f32 %v3156, %v3484
      %v3645 = vadd.f32 %v3157, %v3487
      %v3646 = vadd.f32 %v3158, %v3492
      %v3647 = vadd.f32 %v3159, %v3495
      %v3648 = vadd.f32 %v3160, %v3500
      %v3649 = vadd.f32 %v3161, %v3503
      %v3650 = vadd.f32 %v3162, %v3508
      %v3651 = vadd.f32 %v3163, %v3511
      %v3652 = vadd.f32 %v3164, %v3516
      %v3653 = vadd.f32 %v3165, %v3519
      %v3654 = vadd.f32 %v3166, %v3524
      %v3655 = vadd.f32 %v3167, %v3527
      %v3656 = vadd.f32 %v3168, %v3532
      %v3657 = vadd.f32 %v3169, %v3535
      %v3658 = vadd.f32 %v3170, %v3540
      %v3659 = vadd.f32 %v3171, %v3543
      %v3660 = vadd.f32 %v3172, %v3548
      %v3661 = vadd.f32 %v3173, %v3551
      %v3662 = vadd.f32 %v3174, %v3556
      %v3663 = vadd.f32 %v3175, %v3559
      %v3664 = vadd.f32 %v3176, %v3564
      %v3665 = vadd.f32 %v3177, %v3567
      %v3666 = vadd.f32 %v3178, %v3572
      %v3667 = vadd.f32 %v3179, %v3575
      %v3668 = vadd.f32 %v3180, %v3580
      %v3669 = vadd.f32 %v3181, %v3583
      %v3670 = vadd.f32 %v3182, %v3588
      %v3671 = vadd.f32 %v3183, %v3591
      %v3672 = vadd.f32 %v3184, %v3596
      %v3673 = vadd.f32 %v3185, %v3599
      %v3674 = vadd.f32 %v3186, %v3604
      %v3675 = vadd.f32 %v3187, %v3607
      %v3676 = vadd.f32 %v3188, %v3612
      %v3677 = vadd.f32 %v3189, %v3615
      %v3678 = vld [vmem:[%s365 + $0x48] sm:$0xff]
      %v3679 = vld [vmem:[%s365 + $0x50] sm:$0xff]
      %v3680 = vld [vmem:[%s365 + $0x58] sm:$0xff]
      %v3681 = vld [vmem:[%s365 + $0x60] sm:$0xff]
      %v3682 = vld [vmem:[%s365 + $0x68] sm:$0xff]
      %v3683 = vld [vmem:[%s365 + $0x70] sm:$0xff]
      %v3684 = vld [vmem:[%s365 + $0x78] sm:$0xff]
      %v3685 = vld [vmem:[%s365 + $0x80] sm:$0xff]
      %v3686 = vld [vmem:[%s365 + $0x88] sm:$0xff]
      %v3687 = vld [vmem:[%s365 + $0x90] sm:$0xff]
      %v3688 = vld [vmem:[%s365 + $0x98] sm:$0xff]
      %v3689 = vld [vmem:[%s365 + $0xa0] sm:$0xff]
      %v3690 = vld [vmem:[%s365 + $0xa8] sm:$0xff]
      %v3691 = vld [vmem:[%s365 + $0xb0] sm:$0xff]
      %v3692 = vld [vmem:[%s365 + $0xb8] sm:$0xff]
      %v3693 = vld [vmem:[%s365 + $0xc0] sm:$0xff]
      %v3694 = vld [vmem:[%s365 + $0xc8] sm:$0xff]
      %v3695 = vld [vmem:[%s365 + $0xd0] sm:$0xff]
      %v3696 = vld [vmem:[%s365 + $0xd8] sm:$0xff]
      %v3697 = vld [vmem:[%s365 + $0xe0] sm:$0xff]
      %v3698 = vld [vmem:[%s365 + $0xe8] sm:$0xff]
      %v3699 = vld [vmem:[%s365 + $0xf0] sm:$0xff]
      %v3700 = vld [vmem:[%s365 + $0xf8] sm:$0xff]
      %v3701 = vld [vmem:[%s365 + $0x100] sm:$0xff]
      %v3702 = vld [vmem:[%s365 + $0x108] sm:$0xff]
      %v3703 = vld [vmem:[%s365 + $0x110] sm:$0xff]
      %v3704 = vld [vmem:[%s365 + $0x118] sm:$0xff]
      %v3705 = vld [vmem:[%s365 + $0x120] sm:$0xff]
      %v3706 = vld [vmem:[%s365 + $0x128] sm:$0xff]
      %v3707 = vld [vmem:[%s365 + $0x130] sm:$0xff]
      %v3708 = vld [vmem:[%s365 + $0x138] sm:$0xff]
      %v3709 = vld [vmem:[%s365 + $0x140] sm:$0xff]
      %v3710 = vld [vmem:[%s365 + $0x148] sm:$0xff]
      %v3711 = vld [vmem:[%s365 + $0x150] sm:$0xff]
      %v3712 = vld [vmem:[%s365 + $0x158] sm:$0xff]
      %v3713 = vld [vmem:[%s365 + $0x160] sm:$0xff]
      %v3714 = vld [vmem:[%s365 + $0x168] sm:$0xff]
      %v3715 = vld [vmem:[%s365 + $0x170] sm:$0xff]
      %v3716 = vld [vmem:[%s365 + $0x178] sm:$0xff]
      %v3717 = vld [vmem:[%s365 + $0x180] sm:$0xff]
      %v3718 = vld [vmem:[%s365 + $0x188] sm:$0xff]
      %v3719 = vld [vmem:[%s365 + $0x190] sm:$0xff]
      %v3720 = vld [vmem:[%s365 + $0x198] sm:$0xff]
      %v3721 = vld [vmem:[%s365 + $0x1a0] sm:$0xff]
      %v3722 = vld [vmem:[%s365 + $0x1a8] sm:$0xff]
      %v3723 = vld [vmem:[%s365 + $0x1b0] sm:$0xff]
      %v3724 = vld [vmem:[%s365 + $0x1b8] sm:$0xff]
      %v3725 = vld [vmem:[%s365 + $0x1c0] sm:$0xff]
      %v3726 = vld [vmem:[%s365 + $0x1c8] sm:$0xff]
      %v3727 = vld [vmem:[%s365 + $0x1d0] sm:$0xff]
      %v3728 = vld [vmem:[%s365 + $0x1d8] sm:$0xff]
      %v3729 = vld [vmem:[%s365 + $0x1e0] sm:$0xff]
      %v3730 = vld [vmem:[%s365 + $0x1e8] sm:$0xff]
      %v3731 = vld [vmem:[%s365 + $0x1f0] sm:$0xff]
      %v3732 = vld [vmem:[%s365 + $0x1f8] sm:$0xff]
      %v3733 = vld [vmem:[%s365 + $0x200] sm:$0xff]
      %v3734 = vld [vmem:[%s365 + $0x208] sm:$0xff]
      %v3735 = vld [vmem:[%s365 + $0x210] sm:$0xff]
      %v3736 = vld [vmem:[%s365 + $0x218] sm:$0xff]
      %v3737 = vld [vmem:[%s365 + $0x220] sm:$0xff]
      %v3738 = vpack.c.bf16 %v3679, %v3678
      %v3739 = vpack.c.bf16 %v3681, %v3680
      %v3740 = vpack.c.bf16 %v3683, %v3682
      %v3741 = vpack.c.bf16 %v3685, %v3684
      %v3742 = vpack.c.bf16 %v3687, %v3686
      %v3743 = vpack.c.bf16 %v3689, %v3688
      %v3744 = vpack.c.bf16 %v3691, %v3690
      %v3745 = vpack.c.bf16 %v3693, %v3692
      %v3746 = vpack.c.bf16 %v3695, %v3694
      %v3747 = vpack.c.bf16 %v3697, %v3696
      %v3748 = vpack.c.bf16 %v3699, %v3698
      %v3749 = vpack.c.bf16 %v3701, %v3700
      %v3750 = vpack.c.bf16 %v3703, %v3702
      %v3751 = vpack.c.bf16 %v3705, %v3704
      %v3752 = vpack.c.bf16 %v3707, %v3706
      %v3753 = vpack.c.bf16 %v3709, %v3708
      %v3754 = vpack.c.bf16 %v3711, %v3710
      %v3755 = vpack.c.bf16 %v3713, %v3712
      %v3756 = vpack.c.bf16 %v3715, %v3714
      %v3757 = vpack.c.bf16 %v3717, %v3716
      %v3758 = vpack.c.bf16 %v3719, %v3718
      %v3759 = vpack.c.bf16 %v3721, %v3720
      %v3760 = vpack.c.bf16 %v3723, %v3722
      %v3761 = vpack.c.bf16 %v3725, %v3724
      %v3762 = vpack.c.bf16 %v3727, %v3726
      %v3763 = vpack.c.bf16 %v3729, %v3728
      %v3764 = vpack.c.bf16 %v3731, %v3730
      %v3765 = vpack.c.bf16 %v3733, %v3732
      %v3766 = vpack.c.bf16 %v3735, %v3734
      %v3767 = vpack.c.bf16 %v3737, %v3736
      %s3768 = scalar_lea.vmem %s2, 448
      %v3769 = vld [vmem:[%s3768] sm:$0xf]
      %v3770 = vld [vmem:[%s3768 + $0x4] sm:$0xf]
      %v3771 = vld [vmem:[%s3768 + $0x8] sm:$0xf]
      %v3772 = vld [vmem:[%s3768 + $0xc] sm:$0xf]
      %v3773 = vld [vmem:[%s3768 + $0x10] sm:$0xf]
      %v3774 = vld [vmem:[%s3768 + $0x14] sm:$0xf]
      %v3775 = vld [vmem:[%s3768 + $0x18] sm:$0xf]
      %v3776 = vld [vmem:[%s3768 + $0x1c] sm:$0xf]
      %v3777 = vld [vmem:[%s3768 + $0x20] sm:$0xf]
      %v3778 = vld [vmem:[%s3768 + $0x24] sm:$0xf]
      %v3779 = vld [vmem:[%s3768 + $0x28] sm:$0xf]
      %v3780 = vld [vmem:[%s3768 + $0x2c] sm:$0xf]
      %v3781 = vld [vmem:[%s3768 + $0x30] sm:$0xf]
      %v3782 = vld [vmem:[%s3768 + $0x34] sm:$0xf]
      %v3783 = vld [vmem:[%s3768 + $0x38] sm:$0xf]
      %v3784 = vld [vmem:[%s3768 + $0x3c] sm:$0xf]
      %v3801 = vunpack.c.l.b16 %v3769
      %v3802 = vunpack.c.l.b16 %v3770
      %v3803 = vunpack.c.l.b16 %v3771
      %v3804 = vunpack.c.l.b16 %v3772
      %v3805 = vunpack.c.l.b16 %v3773
      %v3806 = vunpack.c.l.b16 %v3774
      %v3807 = vunpack.c.l.b16 %v3775
      %v3808 = vunpack.c.l.b16 %v3776
      %v3809 = vunpack.c.l.b16 %v3777
      %v3810 = vunpack.c.l.b16 %v3778
      %v3811 = vunpack.c.l.b16 %v3779
      %v3812 = vunpack.c.l.b16 %v3780
      %v3813 = vunpack.c.l.b16 %v3781
      %v3814 = vunpack.c.l.b16 %v3782
      %v3815 = vunpack.c.l.b16 %v3783
      %v3816 = vunpack.c.l.b16 %v3784
      %v3817 = vpack.c.b16 %v3802, %v3801
      %v3818 = vpack.c.b16 %v3804, %v3803
      %v3819 = vpack.c.b16 %v3806, %v3805
      %v3820 = vpack.c.b16 %v3808, %v3807
      %v3821 = vpack.c.b16 %v3810, %v3809
      %v3822 = vpack.c.b16 %v3812, %v3811
      %v3823 = vpack.c.b16 %v3814, %v3813
      %v3824 = vpack.c.b16 %v3816, %v3815
      %3833 = vmatprep.subr.bf16.mxu0 0
      %3834 = vmatpush1.bf16.msra.mxu0 %v3817
      %3835 = vmatprep.subr.bf16.mxu0 0
      %3836 = vmatpush1.bf16.msra.mxu0 %v3818
      %3837 = vmatprep.subr.bf16.mxu0 0
      %3838 = vmatpush1.bf16.msra.mxu0 %v3819
      %3839 = vmatprep.subr.bf16.mxu0 0
      %3840 = vmatpush1.bf16.msra.mxu0 %v3820
      %3841 = vmatprep.subr.bf16.mxu0 0
      %3842 = vmatpush1.bf16.msra.mxu0 %v3821
      %3843 = vmatprep.subr.bf16.mxu0 0
      %3844 = vmatpush1.bf16.msra.mxu0 %v3822
      %3845 = vmatprep.subr.bf16.mxu0 0
      %3846 = vmatpush1.bf16.msra.mxu0 %v3823
      %3847 = vmatprep.subr.bf16.mxu0 0
      %3848 = vmatpush1.bf16.msra.mxu0 %v3824
      %3849 = vmatprep.subr.bf16.mxu0 0
      %3850 = vmatpush1.bf16.msra.mxu0 0
      %3851 = vmatprep.subr.bf16.mxu0 0
      %3852 = vmatpush1.bf16.msra.mxu0 0
      %3853 = vmatprep.subr.bf16.mxu0 0
      %3854 = vmatpush1.bf16.msra.mxu0 0
      %3855 = vmatprep.subr.bf16.mxu0 0
      %3856 = vmatpush1.bf16.msra.mxu0 0
      %3857 = vmatprep.subr.bf16.mxu0 0
      %3858 = vmatpush1.bf16.msra.mxu0 0
      %3859 = vmatprep.subr.bf16.mxu0 0
      %3860 = vmatpush1.bf16.msra.mxu0 0
      %3861 = vmatprep.subr.bf16.mxu0 0
      %3862 = vmatpush1.bf16.msra.mxu0 0
      %3863 = vmatprep.subr.bf16.mxu0 0
      %3864 = vmatpush1.bf16.msra.mxu0 0
      %3865 = vmatprep.mubr.bf16.mxu0 0
      %3866 = vmatmul.mubr.bf16.gmra.mrb[0].mxu0 %v3738
      %v3867 = vpop.f32.mrb[0].mxu0
      %v3868 = vadd.f32 0.0, %v3867
      %v3869 = vpop.f32.mrb[0].mxu0
      %v3870 = vpop.f32.mrb[0].mxu0
      %v3871 = vadd.f32 0.0, %v3870
      %v3872 = vpop.f32.mrb[0].mxu0
      %3873 = vmatprep.mubr.bf16.mxu0 0
      %3874 = vmatmul.mubr.bf16.gmra.mrb[0].mxu0 %v3739
      %v3875 = vpop.f32.mrb[0].mxu0
      %v3876 = vadd.f32 0.0, %v3875
      %v3877 = vpop.f32.mrb[0].mxu0
      %v3878 = vpop.f32.mrb[0].mxu0
      %v3879 = vadd.f32 0.0, %v3878
      %v3880 = vpop.f32.mrb[0].mxu0
      %3881 = vmatprep.mubr.bf16.mxu0 0
      %3882 = vmatmul.mubr.bf16.gmra.mrb[0].mxu0 %v3740
      %v3883 = vpop.f32.mrb[0].mxu0
      %v3884 = vadd.f32 0.0, %v3883
      %v3885 = vpop.f32.mrb[0].mxu0
      %v3886 = vpop.f32.mrb[0].mxu0
      %v3887 = vadd.f32 0.0, %v3886
      %v3888 = vpop.f32.mrb[0].mxu0
      %3889 = vmatprep.mubr.bf16.mxu0 0
      %3890 = vmatmul.mubr.bf16.gmra.mrb[0].mxu0 %v3741
      %v3891 = vpop.f32.mrb[0].mxu0
      %v3892 = vadd.f32 0.0, %v3891
      %v3893 = vpop.f32.mrb[0].mxu0
      %v3894 = vpop.f32.mrb[0].mxu0
      %v3895 = vadd.f32 0.0, %v3894
      %v3896 = vpop.f32.mrb[0].mxu0
      %3897 = vmatprep.mubr.bf16.mxu0 0
      %3898 = vmatmul.mubr.bf16.gmra.mrb[0].mxu0 %v3742
      %v3899 = vpop.f32.mrb[0].mxu0
      %v3900 = vadd.f32 0.0, %v3899
      %v3901 = vpop.f32.mrb[0].mxu0
      %v3902 = vpop.f32.mrb[0].mxu0
      %v3903 = vadd.f32 0.0, %v3902
      %v3904 = vpop.f32.mrb[0].mxu0
      %3905 = vmatprep.mubr.bf16.mxu0 0
      %3906 = vmatmul.mubr.bf16.gmra.mrb[0].mxu0 %v3743
      %v3907 = vpop.f32.mrb[0].mxu0
      %v3908 = vadd.f32 0.0, %v3907
      %v3909 = vpop.f32.mrb[0].mxu0
      %v3910 = vpop.f32.mrb[0].mxu0
      %v3911 = vadd.f32 0.0, %v3910
      %v3912 = vpop.f32.mrb[0].mxu0
      %3913 = vmatprep.mubr.bf16.mxu0 0
      %3914 = vmatmul.mubr.bf16.gmra.mrb[0].mxu0 %v3744
      %v3915 = vpop.f32.mrb[0].mxu0
      %v3916 = vadd.f32 0.0, %v3915
      %v3917 = vpop.f32.mrb[0].mxu0
      %v3918 = vpop.f32.mrb[0].mxu0
      %v3919 = vadd.f32 0.0, %v3918
      %v3920 = vpop.f32.mrb[0].mxu0
      %3921 = vmatprep.mubr.bf16.mxu0 0
      %3922 = vmatmul.mubr.bf16.gmra.mrb[0].mxu0 %v3745
      %v3923 = vpop.f32.mrb[0].mxu0
      %v3924 = vadd.f32 0.0, %v3923
      %v3925 = vpop.f32.mrb[0].mxu0
      %v3926 = vpop.f32.mrb[0].mxu0
      %v3927 = vadd.f32 0.0, %v3926
      %v3928 = vpop.f32.mrb[0].mxu0
      %3929 = vmatprep.mubr.bf16.mxu0 0
      %3930 = vmatmul.mubr.bf16.gmra.mrb[0].mxu0 %v3746
      %v3931 = vpop.f32.mrb[0].mxu0
      %v3932 = vadd.f32 0.0, %v3931
      %v3933 = vpop.f32.mrb[0].mxu0
      %v3934 = vpop.f32.mrb[0].mxu0
      %v3935 = vadd.f32 0.0, %v3934
      %v3936 = vpop.f32.mrb[0].mxu0
      %3937 = vmatprep.mubr.bf16.mxu0 0
      %3938 = vmatmul.mubr.bf16.gmra.mrb[0].mxu0 %v3747
      %v3939 = vpop.f32.mrb[0].mxu0
      %v3940 = vadd.f32 0.0, %v3939
      %v3941 = vpop.f32.mrb[0].mxu0
      %v3942 = vpop.f32.mrb[0].mxu0
      %v3943 = vadd.f32 0.0, %v3942
      %v3944 = vpop.f32.mrb[0].mxu0
      %3945 = vmatprep.mubr.bf16.mxu0 0
      %3946 = vmatmul.mubr.bf16.gmra.mrb[0].mxu0 %v3748
      %v3947 = vpop.f32.mrb[0].mxu0
      %v3948 = vadd.f32 0.0, %v3947
      %v3949 = vpop.f32.mrb[0].mxu0
      %v3950 = vpop.f32.mrb[0].mxu0
      %v3951 = vadd.f32 0.0, %v3950
      %v3952 = vpop.f32.mrb[0].mxu0
      %3953 = vmatprep.mubr.bf16.mxu0 0
      %3954 = vmatmul.mubr.bf16.gmra.mrb[0].mxu0 %v3749
      %v3955 = vpop.f32.mrb[0].mxu0
      %v3956 = vadd.f32 0.0, %v3955
      %v3957 = vpop.f32.mrb[0].mxu0
      %v3958 = vpop.f32.mrb[0].mxu0
      %v3959 = vadd.f32 0.0, %v3958
      %v3960 = vpop.f32.mrb[0].mxu0
      %3961 = vmatprep.mubr.bf16.mxu0 0
      %3962 = vmatmul.mubr.bf16.gmra.mrb[0].mxu0 %v3750
      %v3963 = vpop.f32.mrb[0].mxu0
      %v3964 = vadd.f32 0.0, %v3963
      %v3965 = vpop.f32.mrb[0].mxu0
      %v3966 = vpop.f32.mrb[0].mxu0
      %v3967 = vadd.f32 0.0, %v3966
      %v3968 = vpop.f32.mrb[0].mxu0
      %3969 = vmatprep.mubr.bf16.mxu0 0
      %3970 = vmatmul.mubr.bf16.gmra.mrb[0].mxu0 %v3751
      %v3971 = vpop.f32.mrb[0].mxu0
      %v3972 = vadd.f32 0.0, %v3971
      %v3973 = vpop.f32.mrb[0].mxu0
      %v3974 = vpop.f32.mrb[0].mxu0
      %v3975 = vadd.f32 0.0, %v3974
      %v3976 = vpop.f32.mrb[0].mxu0
      %3977 = vmatprep.mubr.bf16.mxu0 0
      %3978 = vmatmul.mubr.bf16.gmra.mrb[0].mxu0 %v3752
      %v3979 = vpop.f32.mrb[0].mxu0
      %v3980 = vadd.f32 0.0, %v3979
      %v3981 = vpop.f32.mrb[0].mxu0
      %v3982 = vpop.f32.mrb[0].mxu0
      %v3983 = vadd.f32 0.0, %v3982
      %v3984 = vpop.f32.mrb[0].mxu0
      %3985 = vmatprep.mubr.bf16.mxu0 0
      %3986 = vmatmul.mubr.bf16.gmra.mrb[0].mxu0 %v3753
      %v3987 = vpop.f32.mrb[0].mxu0
      %v3988 = vadd.f32 0.0, %v3987
      %v3989 = vpop.f32.mrb[0].mxu0
      %v3990 = vpop.f32.mrb[0].mxu0
      %v3991 = vadd.f32 0.0, %v3990
      %v3992 = vpop.f32.mrb[0].mxu0
      %3993 = vmatprep.mubr.bf16.mxu0 0
      %3994 = vmatmul.mubr.bf16.gmra.mrb[0].mxu0 %v3754
      %v3995 = vpop.f32.mrb[0].mxu0
      %v3996 = vadd.f32 0.0, %v3995
      %v3997 = vpop.f32.mrb[0].mxu0
      %v3998 = vpop.f32.mrb[0].mxu0
      %v3999 = vadd.f32 0.0, %v3998
      %v4000 = vpop.f32.mrb[0].mxu0
      %4001 = vmatprep.mubr.bf16.mxu0 0
      %4002 = vmatmul.mubr.bf16.gmra.mrb[0].mxu0 %v3755
      %v4003 = vpop.f32.mrb[0].mxu0
      %v4004 = vadd.f32 0.0, %v4003
      %v4005 = vpop.f32.mrb[0].mxu0
      %v4006 = vpop.f32.mrb[0].mxu0
      %v4007 = vadd.f32 0.0, %v4006
      %v4008 = vpop.f32.mrb[0].mxu0
      %4009 = vmatprep.mubr.bf16.mxu0 0
      %4010 = vmatmul.mubr.bf16.gmra.mrb[0].mxu0 %v3756
      %v4011 = vpop.f32.mrb[0].mxu0
      %v4012 = vadd.f32 0.0, %v4011
      %v4013 = vpop.f32.mrb[0].mxu0
      %v4014 = vpop.f32.mrb[0].mxu0
      %v4015 = vadd.f32 0.0, %v4014
      %v4016 = vpop.f32.mrb[0].mxu0
      %4017 = vmatprep.mubr.bf16.mxu0 0
      %4018 = vmatmul.mubr.bf16.gmra.mrb[0].mxu0 %v3757
      %v4019 = vpop.f32.mrb[0].mxu0
      %v4020 = vadd.f32 0.0, %v4019
      %v4021 = vpop.f32.mrb[0].mxu0
      %v4022 = vpop.f32.mrb[0].mxu0
      %v4023 = vadd.f32 0.0, %v4022
      %v4024 = vpop.f32.mrb[0].mxu0
      %4025 = vmatprep.mubr.bf16.mxu0 0
      %4026 = vmatmul.mubr.bf16.gmra.mrb[0].mxu0 %v3758
      %v4027 = vpop.f32.mrb[0].mxu0
      %v4028 = vadd.f32 0.0, %v4027
      %v4029 = vpop.f32.mrb[0].mxu0
      %v4030 = vpop.f32.mrb[0].mxu0
      %v4031 = vadd.f32 0.0, %v4030
      %v4032 = vpop.f32.mrb[0].mxu0
      %4033 = vmatprep.mubr.bf16.mxu0 0
      %4034 = vmatmul.mubr.bf16.gmra.mrb[0].mxu0 %v3759
      %v4035 = vpop.f32.mrb[0].mxu0
      %v4036 = vadd.f32 0.0, %v4035
      %v4037 = vpop.f32.mrb[0].mxu0
      %v4038 = vpop.f32.mrb[0].mxu0
      %v4039 = vadd.f32 0.0, %v4038
      %v4040 = vpop.f32.mrb[0].mxu0
      %4041 = vmatprep.mubr.bf16.mxu0 0
      %4042 = vmatmul.mubr.bf16.gmra.mrb[0].mxu0 %v3760
      %v4043 = vpop.f32.mrb[0].mxu0
      %v4044 = vadd.f32 0.0, %v4043
      %v4045 = vpop.f32.mrb[0].mxu0
      %v4046 = vpop.f32.mrb[0].mxu0
      %v4047 = vadd.f32 0.0, %v4046
      %v4048 = vpop.f32.mrb[0].mxu0
      %4049 = vmatprep.mubr.bf16.mxu0 0
      %4050 = vmatmul.mubr.bf16.gmra.mrb[0].mxu0 %v3761
      %v4051 = vpop.f32.mrb[0].mxu0
      %v4052 = vadd.f32 0.0, %v4051
      %v4053 = vpop.f32.mrb[0].mxu0
      %v4054 = vpop.f32.mrb[0].mxu0
      %v4055 = vadd.f32 0.0, %v4054
      %v4056 = vpop.f32.mrb[0].mxu0
      %4057 = vmatprep.mubr.bf16.mxu0 0
      %4058 = vmatmul.mubr.bf16.gmra.mrb[0].mxu0 %v3762
      %v4059 = vpop.f32.mrb[0].mxu0
      %v4060 = vadd.f32 0.0, %v4059
      %v4061 = vpop.f32.mrb[0].mxu0
      %v4062 = vpop.f32.mrb[0].mxu0
      %v4063 = vadd.f32 0.0, %v4062
      %v4064 = vpop.f32.mrb[0].mxu0
      %4065 = vmatprep.mubr.bf16.mxu0 0
      %4066 = vmatmul.mubr.bf16.gmra.mrb[0].mxu0 %v3763
      %v4067 = vpop.f32.mrb[0].mxu0
      %v4068 = vadd.f32 0.0, %v4067
      %v4069 = vpop.f32.mrb[0].mxu0
      %v4070 = vpop.f32.mrb[0].mxu0
      %v4071 = vadd.f32 0.0, %v4070
      %v4072 = vpop.f32.mrb[0].mxu0
      %4073 = vmatprep.mubr.bf16.mxu0 0
      %4074 = vmatmul.mubr.bf16.gmra.mrb[0].mxu0 %v3764
      %v4075 = vpop.f32.mrb[0].mxu0
      %v4076 = vadd.f32 0.0, %v4075
      %v4077 = vpop.f32.mrb[0].mxu0
      %v4078 = vpop.f32.mrb[0].mxu0
      %v4079 = vadd.f32 0.0, %v4078
      %v4080 = vpop.f32.mrb[0].mxu0
      %4081 = vmatprep.mubr.bf16.mxu0 0
      %4082 = vmatmul.mubr.bf16.gmra.mrb[0].mxu0 %v3765
      %v4083 = vpop.f32.mrb[0].mxu0
      %v4084 = vadd.f32 0.0, %v4083
      %v4085 = vpop.f32.mrb[0].mxu0
      %v4086 = vpop.f32.mrb[0].mxu0
      %v4087 = vadd.f32 0.0, %v4086
      %v4088 = vpop.f32.mrb[0].mxu0
      %4089 = vmatprep.mubr.bf16.mxu0 0
      %4090 = vmatmul.mubr.bf16.gmra.mrb[0].mxu0 %v3766
      %v4091 = vpop.f32.mrb[0].mxu0
      %v4092 = vadd.f32 0.0, %v4091
      %v4093 = vpop.f32.mrb[0].mxu0
      %v4094 = vpop.f32.mrb[0].mxu0
      %v4095 = vadd.f32 0.0, %v4094
      %v4096 = vpop.f32.mrb[0].mxu0
      %4097 = vmatprep.mubr.bf16.mxu0 0
      %4098 = vmatmul.mubr.bf16.gmra.mrb[0].mxu0 %v3767
      %v4099 = vpop.f32.mrb[0].mxu0
      %v4100 = vadd.f32 0.0, %v4099
      %v4101 = vpop.f32.mrb[0].mxu0
      %v4102 = vpop.f32.mrb[0].mxu0
      %v4103 = vadd.f32 0.0, %v4102
      %v4104 = vpop.f32.mrb[0].mxu0
      %4105 = vdwg.mxu0
      %v4106 = vadd.f32 %v3618, %v3868
      %v4107 = vadd.f32 %v3619, %v3871
      %v4108 = vadd.f32 %v3620, %v3876
      %v4109 = vadd.f32 %v3621, %v3879
      %v4110 = vadd.f32 %v3622, %v3884
      %v4111 = vadd.f32 %v3623, %v3887
      %v4112 = vadd.f32 %v3624, %v3892
      %v4113 = vadd.f32 %v3625, %v3895
      %v4114 = vadd.f32 %v3626, %v3900
      %v4115 = vadd.f32 %v3627, %v3903
      %v4116 = vadd.f32 %v3628, %v3908
      %v4117 = vadd.f32 %v3629, %v3911
      %v4118 = vadd.f32 %v3630, %v3916
      %v4119 = vadd.f32 %v3631, %v3919
      %v4120 = vadd.f32 %v3632, %v3924
      %v4121 = vadd.f32 %v3633, %v3927
      %v4122 = vadd.f32 %v3634, %v3932
      %v4123 = vadd.f32 %v3635, %v3935
      %v4124 = vadd.f32 %v3636, %v3940
      %v4125 = vadd.f32 %v3637, %v3943
      %v4126 = vadd.f32 %v3638, %v3948
      %v4127 = vadd.f32 %v3639, %v3951
      %v4128 = vadd.f32 %v3640, %v3956
      %v4129 = vadd.f32 %v3641, %v3959
      %v4130 = vadd.f32 %v3642, %v3964
      %v4131 = vadd.f32 %v3643, %v3967
      %v4132 = vadd.f32 %v3644, %v3972
      %v4133 = vadd.f32 %v3645, %v3975
      %v4134 = vadd.f32 %v3646, %v3980
      %v4135 = vadd.f32 %v3647, %v3983
      %v4136 = vadd.f32 %v3648, %v3988
      %v4137 = vadd.f32 %v3649, %v3991
      %v4138 = vadd.f32 %v3650, %v3996
      %v4139 = vadd.f32 %v3651, %v3999
      %v4140 = vadd.f32 %v3652, %v4004
      %v4141 = vadd.f32 %v3653, %v4007
      %v4142 = vadd.f32 %v3654, %v4012
      %v4143 = vadd.f32 %v3655, %v4015
      %v4144 = vadd.f32 %v3656, %v4020
      %v4145 = vadd.f32 %v3657, %v4023
      %v4146 = vadd.f32 %v3658, %v4028
      %v4147 = vadd.f32 %v3659, %v4031
      %v4148 = vadd.f32 %v3660, %v4036
      %v4149 = vadd.f32 %v3661, %v4039
      %v4150 = vadd.f32 %v3662, %v4044
      %v4151 = vadd.f32 %v3663, %v4047
      %v4152 = vadd.f32 %v3664, %v4052
      %v4153 = vadd.f32 %v3665, %v4055
      %v4154 = vadd.f32 %v3666, %v4060
      %v4155 = vadd.f32 %v3667, %v4063
      %v4156 = vadd.f32 %v3668, %v4068
      %v4157 = vadd.f32 %v3669, %v4071
      %v4158 = vadd.f32 %v3670, %v4076
      %v4159 = vadd.f32 %v3671, %v4079
      %v4160 = vadd.f32 %v3672, %v4084
      %v4161 = vadd.f32 %v3673, %v4087
      %v4162 = vadd.f32 %v3674, %v4092
      %v4163 = vadd.f32 %v3675, %v4095
      %v4164 = vadd.f32 %v3676, %v4100
      %v4165 = vadd.f32 %v3677, %v4103
      %v4166 = vld [vmem:[%s365 + $0x49] sm:$0xff]
      %v4167 = vld [vmem:[%s365 + $0x51] sm:$0xff]
      %v4168 = vld [vmem:[%s365 + $0x59] sm:$0xff]
      %v4169 = vld [vmem:[%s365 + $0x61] sm:$0xff]
      %v4170 = vld [vmem:[%s365 + $0x69] sm:$0xff]
      %v4171 = vld [vmem:[%s365 + $0x71] sm:$0xff]
      %v4172 = vld [vmem:[%s365 + $0x79] sm:$0xff]
      %v4173 = vld [vmem:[%s365 + $0x81] sm:$0xff]
      %v4174 = vld [vmem:[%s365 + $0x89] sm:$0xff]
      %v4175 = vld [vmem:[%s365 + $0x91] sm:$0xff]
      %v4176 = vld [vmem:[%s365 + $0x99] sm:$0xff]
      %v4177 = vld [vmem:[%s365 + $0xa1] sm:$0xff]
      %v4178 = vld [vmem:[%s365 + $0xa9] sm:$0xff]
      %v4179 = vld [vmem:[%s365 + $0xb1] sm:$0xff]
      %v4180 = vld [vmem:[%s365 + $0xb9] sm:$0xff]
      %v4181 = vld [vmem:[%s365 + $0xc1] sm:$0xff]
      %v4182 = vld [vmem:[%s365 + $0xc9] sm:$0xff]
      %v4183 = vld [vmem:[%s365 + $0xd1] sm:$0xff]
      %v4184 = vld [vmem:[%s365 + $0xd9] sm:$0xff]
      %v4185 = vld [vmem:[%s365 + $0xe1] sm:$0xff]
      %v4186 = vld [vmem:[%s365 + $0xe9] sm:$0xff]
      %v4187 = vld [vmem:[%s365 + $0xf1] sm:$0xff]
      %v4188 = vld [vmem:[%s365 + $0xf9] sm:$0xff]
      %v4189 = vld [vmem:[%s365 + $0x101] sm:$0xff]
      %v4190 = vld [vmem:[%s365 + $0x109] sm:$0xff]
      %v4191 = vld [vmem:[%s365 + $0x111] sm:$0xff]
      %v4192 = vld [vmem:[%s365 + $0x119] sm:$0xff]
      %v4193 = vld [vmem:[%s365 + $0x121] sm:$0xff]
      %v4194 = vld [vmem:[%s365 + $0x129] sm:$0xff]
      %v4195 = vld [vmem:[%s365 + $0x131] sm:$0xff]
      %v4196 = vld [vmem:[%s365 + $0x139] sm:$0xff]
      %v4197 = vld [vmem:[%s365 + $0x141] sm:$0xff]
      %v4198 = vld [vmem:[%s365 + $0x149] sm:$0xff]
      %v4199 = vld [vmem:[%s365 + $0x151] sm:$0xff]
      %v4200 = vld [vmem:[%s365 + $0x159] sm:$0xff]
      %v4201 = vld [vmem:[%s365 + $0x161] sm:$0xff]
      %v4202 = vld [vmem:[%s365 + $0x169] sm:$0xff]
      %v4203 = vld [vmem:[%s365 + $0x171] sm:$0xff]
      %v4204 = vld [vmem:[%s365 + $0x179] sm:$0xff]
      %v4205 = vld [vmem:[%s365 + $0x181] sm:$0xff]
      %v4206 = vld [vmem:[%s365 + $0x189] sm:$0xff]
      %v4207 = vld [vmem:[%s365 + $0x191] sm:$0xff]
      %v4208 = vld [vmem:[%s365 + $0x199] sm:$0xff]
      %v4209 = vld [vmem:[%s365 + $0x1a1] sm:$0xff]
      %v4210 = vld [vmem:[%s365 + $0x1a9] sm:$0xff]
      %v4211 = vld [vmem:[%s365 + $0x1b1] sm:$0xff]
      %v4212 = vld [vmem:[%s365 + $0x1b9] sm:$0xff]
      %v4213 = vld [vmem:[%s365 + $0x1c1] sm:$0xff]
      %v4214 = vld [vmem:[%s365 + $0x1c9] sm:$0xff]
      %v4215 = vld [vmem:[%s365 + $0x1d1] sm:$0xff]
      %v4216 = vld [vmem:[%s365 + $0x1d9] sm:$0xff]
      %v4217 = vld [vmem:[%s365 + $0x1e1] sm:$0xff]
      %v4218 = vld [vmem:[%s365 + $0x1e9] sm:$0xff]
      %v4219 = vld [vmem:[%s365 + $0x1f1] sm:$0xff]
      %v4220 = vld [vmem:[%s365 + $0x1f9] sm:$0xff]
      %v4221 = vld [vmem:[%s365 + $0x201] sm:$0xff]
      %v4222 = vld [vmem:[%s365 + $0x209] sm:$0xff]
      %v4223 = vld [vmem:[%s365 + $0x211] sm:$0xff]
      %v4224 = vld [vmem:[%s365 + $0x219] sm:$0xff]
      %v4225 = vld [vmem:[%s365 + $0x221] sm:$0xff]
      %v4226 = vpack.c.bf16 %v4167, %v4166
      %v4227 = vpack.c.bf16 %v4169, %v4168
      %v4228 = vpack.c.bf16 %v4171, %v4170
      %v4229 = vpack.c.bf16 %v4173, %v4172
      %v4230 = vpack.c.bf16 %v4175, %v4174
      %v4231 = vpack.c.bf16 %v4177, %v4176
      %v4232 = vpack.c.bf16 %v4179, %v4178
      %v4233 = vpack.c.bf16 %v4181, %v4180
      %v4234 = vpack.c.bf16 %v4183, %v4182
      %v4235 = vpack.c.bf16 %v4185, %v4184
      %v4236 = vpack.c.bf16 %v4187, %v4186
      %v4237 = vpack.c.bf16 %v4189, %v4188
      %v4238 = vpack.c.bf16 %v4191, %v4190
      %v4239 = vpack.c.bf16 %v4193, %v4192
      %v4240 = vpack.c.bf16 %v4195, %v4194
      %v4241 = vpack.c.bf16 %v4197, %v4196
      %v4242 = vpack.c.bf16 %v4199, %v4198
      %v4243 = vpack.c.bf16 %v4201, %v4200
      %v4244 = vpack.c.bf16 %v4203, %v4202
      %v4245 = vpack.c.bf16 %v4205, %v4204
      %v4246 = vpack.c.bf16 %v4207, %v4206
      %v4247 = vpack.c.bf16 %v4209, %v4208
      %v4248 = vpack.c.bf16 %v4211, %v4210
      %v4249 = vpack.c.bf16 %v4213, %v4212
      %v4250 = vpack.c.bf16 %v4215, %v4214
      %v4251 = vpack.c.bf16 %v4217, %v4216
      %v4252 = vpack.c.bf16 %v4219, %v4218
      %v4253 = vpack.c.bf16 %v4221, %v4220
      %v4254 = vpack.c.bf16 %v4223, %v4222
      %v4255 = vpack.c.bf16 %v4225, %v4224
      %s4256 = scalar_lea.vmem %s2, 512
      %v4257 = vld [vmem:[%s4256] sm:$0xf]
      %v4258 = vld [vmem:[%s4256 + $0x4] sm:$0xf]
      %v4259 = vld [vmem:[%s4256 + $0x8] sm:$0xf]
      %v4260 = vld [vmem:[%s4256 + $0xc] sm:$0xf]
      %v4261 = vld [vmem:[%s4256 + $0x10] sm:$0xf]
      %v4262 = vld [vmem:[%s4256 + $0x14] sm:$0xf]
      %v4263 = vld [vmem:[%s4256 + $0x18] sm:$0xf]
      %v4264 = vld [vmem:[%s4256 + $0x1c] sm:$0xf]
      %v4265 = vld [vmem:[%s4256 + $0x20] sm:$0xf]
      %v4266 = vld [vmem:[%s4256 + $0x24] sm:$0xf]
      %v4267 = vld [vmem:[%s4256 + $0x28] sm:$0xf]
      %v4268 = vld [vmem:[%s4256 + $0x2c] sm:$0xf]
      %v4269 = vld [vmem:[%s4256 + $0x30] sm:$0xf]
      %v4270 = vld [vmem:[%s4256 + $0x34] sm:$0xf]
      %v4271 = vld [vmem:[%s4256 + $0x38] sm:$0xf]
      %v4272 = vld [vmem:[%s4256 + $0x3c] sm:$0xf]
      %v4289 = vunpack.c.l.b16 %v4257
      %v4290 = vunpack.c.l.b16 %v4258
      %v4291 = vunpack.c.l.b16 %v4259
      %v4292 = vunpack.c.l.b16 %v4260
      %v4293 = vunpack.c.l.b16 %v4261
      %v4294 = vunpack.c.l.b16 %v4262
      %v4295 = vunpack.c.l.b16 %v4263
      %v4296 = vunpack.c.l.b16 %v4264
      %v4297 = vunpack.c.l.b16 %v4265
      %v4298 = vunpack.c.l.b16 %v4266
      %v4299 = vunpack.c.l.b16 %v4267
      %v4300 = vunpack.c.l.b16 %v4268
      %v4301 = vunpack.c.l.b16 %v4269
      %v4302 = vunpack.c.l.b16 %v4270
      %v4303 = vunpack.c.l.b16 %v4271
      %v4304 = vunpack.c.l.b16 %v4272
      %v4305 = vpack.c.b16 %v4290, %v4289
      %v4306 = vpack.c.b16 %v4292, %v4291
      %v4307 = vpack.c.b16 %v4294, %v4293
      %v4308 = vpack.c.b16 %v4296, %v4295
      %v4309 = vpack.c.b16 %v4298, %v4297
      %v4310 = vpack.c.b16 %v4300, %v4299
      %v4311 = vpack.c.b16 %v4302, %v4301
      %v4312 = vpack.c.b16 %v4304, %v4303
      %4321 = vmatprep.subr.bf16.mxu0 0
      %4322 = vmatpush1.bf16.msra.mxu0 %v4305
      %4323 = vmatprep.subr.bf16.mxu0 0
      %4324 = vmatpush1.bf16.msra.mxu0 %v4306
      %4325 = vmatprep.subr.bf16.mxu0 0
      %4326 = vmatpush1.bf16.msra.mxu0 %v4307
      %4327 = vmatprep.subr.bf16.mxu0 0
      %4328 = vmatpush1.bf16.msra.mxu0 %v4308
      %4329 = vmatprep.subr.bf16.mxu0 0
      %4330 = vmatpush1.bf16.msra.mxu0 %v4309
      %4331 = vmatprep.subr.bf16.mxu0 0
      %4332 = vmatpush1.bf16.msra.mxu0 %v4310
      %4333 = vmatprep.subr.bf16.mxu0 0
      %4334 = vmatpush1.bf16.msra.mxu0 %v4311
      %4335 = vmatprep.subr.bf16.mxu0 0
      %4336 = vmatpush1.bf16.msra.mxu0 %v4312
      %4337 = vmatprep.subr.bf16.mxu0 0
      %4338 = vmatpush1.bf16.msra.mxu0 0
      %4339 = vmatprep.subr.bf16.mxu0 0
      %4340 = vmatpush1.bf16.msra.mxu0 0
      %4341 = vmatprep.subr.bf16.mxu0 0
      %4342 = vmatpush1.bf16.msra.mxu0 0
      %4343 = vmatprep.subr.bf16.mxu0 0
      %4344 = vmatpush1.bf16.msra.mxu0 0
      %4345 = vmatprep.subr.bf16.mxu0 0
      %4346 = vmatpush1.bf16.msra.mxu0 0
      %4347 = vmatprep.subr.bf16.mxu0 0
      %4348 = vmatpush1.bf16.msra.mxu0 0
      %4349 = vmatprep.subr.bf16.mxu0 0
      %4350 = vmatpush1.bf16.msra.mxu0 0
      %4351 = vmatprep.subr.bf16.mxu0 0
      %4352 = vmatpush1.bf16.msra.mxu0 0
      %4353 = vmatprep.mubr.bf16.mxu0 0
      %4354 = vmatmul.mubr.bf16.gmra.mrb[0].mxu0 %v4226
      %v4355 = vpop.f32.mrb[0].mxu0
      %v4356 = vadd.f32 0.0, %v4355
      %v4357 = vpop.f32.mrb[0].mxu0
      %v4358 = vpop.f32.mrb[0].mxu0
      %v4359 = vadd.f32 0.0, %v4358
      %v4360 = vpop.f32.mrb[0].mxu0
      %4361 = vmatprep.mubr.bf16.mxu0 0
      %4362 = vmatmul.mubr.bf16.gmra.mrb[0].mxu0 %v4227
      %v4363 = vpop.f32.mrb[0].mxu0
      %v4364 = vadd.f32 0.0, %v4363
      %v4365 = vpop.f32.mrb[0].mxu0
      %v4366 = vpop.f32.mrb[0].mxu0
      %v4367 = vadd.f32 0.0, %v4366
      %v4368 = vpop.f32.mrb[0].mxu0
      %4369 = vmatprep.mubr.bf16.mxu0 0
      %4370 = vmatmul.mubr.bf16.gmra.mrb[0].mxu0 %v4228
      %v4371 = vpop.f32.mrb[0].mxu0
      %v4372 = vadd.f32 0.0, %v4371
      %v4373 = vpop.f32.mrb[0].mxu0
      %v4374 = vpop.f32.mrb[0].mxu0
      %v4375 = vadd.f32 0.0, %v4374
      %v4376 = vpop.f32.mrb[0].mxu0
      %4377 = vmatprep.mubr.bf16.mxu0 0
      %4378 = vmatmul.mubr.bf16.gmra.mrb[0].mxu0 %v4229
      %v4379 = vpop.f32.mrb[0].mxu0
      %v4380 = vadd.f32 0.0, %v4379
      %v4381 = vpop.f32.mrb[0].mxu0
      %v4382 = vpop.f32.mrb[0].mxu0
      %v4383 = vadd.f32 0.0, %v4382
      %v4384 = vpop.f32.mrb[0].mxu0
      %4385 = vmatprep.mubr.bf16.mxu0 0
      %4386 = vmatmul.mubr.bf16.gmra.mrb[0].mxu0 %v4230
      %v4387 = vpop.f32.mrb[0].mxu0
      %v4388 = vadd.f32 0.0, %v4387
      %v4389 = vpop.f32.mrb[0].mxu0
      %v4390 = vpop.f32.mrb[0].mxu0
      %v4391 = vadd.f32 0.0, %v4390
      %v4392 = vpop.f32.mrb[0].mxu0
      %4393 = vmatprep.mubr.bf16.mxu0 0
      %4394 = vmatmul.mubr.bf16.gmra.mrb[0].mxu0 %v4231
      %v4395 = vpop.f32.mrb[0].mxu0
      %v4396 = vadd.f32 0.0, %v4395
      %v4397 = vpop.f32.mrb[0].mxu0
      %v4398 = vpop.f32.mrb[0].mxu0
      %v4399 = vadd.f32 0.0, %v4398
      %v4400 = vpop.f32.mrb[0].mxu0
      %4401 = vmatprep.mubr.bf16.mxu0 0
      %4402 = vmatmul.mubr.bf16.gmra.mrb[0].mxu0 %v4232
      %v4403 = vpop.f32.mrb[0].mxu0
      %v4404 = vadd.f32 0.0, %v4403
      %v4405 = vpop.f32.mrb[0].mxu0
      %v4406 = vpop.f32.mrb[0].mxu0
      %v4407 = vadd.f32 0.0, %v4406
      %v4408 = vpop.f32.mrb[0].mxu0
      %4409 = vmatprep.mubr.bf16.mxu0 0
      %4410 = vmatmul.mubr.bf16.gmra.mrb[0].mxu0 %v4233
      %v4411 = vpop.f32.mrb[0].mxu0
      %v4412 = vadd.f32 0.0, %v4411
      %v4413 = vpop.f32.mrb[0].mxu0
      %v4414 = vpop.f32.mrb[0].mxu0
      %v4415 = vadd.f32 0.0, %v4414
      %v4416 = vpop.f32.mrb[0].mxu0
      %4417 = vmatprep.mubr.bf16.mxu0 0
      %4418 = vmatmul.mubr.bf16.gmra.mrb[0].mxu0 %v4234
      %v4419 = vpop.f32.mrb[0].mxu0
      %v4420 = vadd.f32 0.0, %v4419
      %v4421 = vpop.f32.mrb[0].mxu0
      %v4422 = vpop.f32.mrb[0].mxu0
      %v4423 = vadd.f32 0.0, %v4422
      %v4424 = vpop.f32.mrb[0].mxu0
      %4425 = vmatprep.mubr.bf16.mxu0 0
      %4426 = vmatmul.mubr.bf16.gmra.mrb[0].mxu0 %v4235
      %v4427 = vpop.f32.mrb[0].mxu0
      %v4428 = vadd.f32 0.0, %v4427
      %v4429 = vpop.f32.mrb[0].mxu0
      %v4430 = vpop.f32.mrb[0].mxu0
      %v4431 = vadd.f32 0.0, %v4430
      %v4432 = vpop.f32.mrb[0].mxu0
      %4433 = vmatprep.mubr.bf16.mxu0 0
      %4434 = vmatmul.mubr.bf16.gmra.mrb[0].mxu0 %v4236
      %v4435 = vpop.f32.mrb[0].mxu0
      %v4436 = vadd.f32 0.0, %v4435
      %v4437 = vpop.f32.mrb[0].mxu0
      %v4438 = vpop.f32.mrb[0].mxu0
      %v4439 = vadd.f32 0.0, %v4438
      %v4440 = vpop.f32.mrb[0].mxu0
      %4441 = vmatprep.mubr.bf16.mxu0 0
      %4442 = vmatmul.mubr.bf16.gmra.mrb[0].mxu0 %v4237
      %v4443 = vpop.f32.mrb[0].mxu0
      %v4444 = vadd.f32 0.0, %v4443
      %v4445 = vpop.f32.mrb[0].mxu0
      %v4446 = vpop.f32.mrb[0].mxu0
      %v4447 = vadd.f32 0.0, %v4446
      %v4448 = vpop.f32.mrb[0].mxu0
      %4449 = vmatprep.mubr.bf16.mxu0 0
      %4450 = vmatmul.mubr.bf16.gmra.mrb[0].mxu0 %v4238
      %v4451 = vpop.f32.mrb[0].mxu0
      %v4452 = vadd.f32 0.0, %v4451
      %v4453 = vpop.f32.mrb[0].mxu0
      %v4454 = vpop.f32.mrb[0].mxu0
      %v4455 = vadd.f32 0.0, %v4454
      %v4456 = vpop.f32.mrb[0].mxu0
      %4457 = vmatprep.mubr.bf16.mxu0 0
      %4458 = vmatmul.mubr.bf16.gmra.mrb[0].mxu0 %v4239
      %v4459 = vpop.f32.mrb[0].mxu0
      %v4460 = vadd.f32 0.0, %v4459
      %v4461 = vpop.f32.mrb[0].mxu0
      %v4462 = vpop.f32.mrb[0].mxu0
      %v4463 = vadd.f32 0.0, %v4462
      %v4464 = vpop.f32.mrb[0].mxu0
      %4465 = vmatprep.mubr.bf16.mxu0 0
      %4466 = vmatmul.mubr.bf16.gmra.mrb[0].mxu0 %v4240
      %v4467 = vpop.f32.mrb[0].mxu0
      %v4468 = vadd.f32 0.0, %v4467
      %v4469 = vpop.f32.mrb[0].mxu0
      %v4470 = vpop.f32.mrb[0].mxu0
      %v4471 = vadd.f32 0.0, %v4470
      %v4472 = vpop.f32.mrb[0].mxu0
      %4473 = vmatprep.mubr.bf16.mxu0 0
      %4474 = vmatmul.mubr.bf16.gmra.mrb[0].mxu0 %v4241
      %v4475 = vpop.f32.mrb[0].mxu0
      %v4476 = vadd.f32 0.0, %v4475
      %v4477 = vpop.f32.mrb[0].mxu0
      %v4478 = vpop.f32.mrb[0].mxu0
      %v4479 = vadd.f32 0.0, %v4478
      %v4480 = vpop.f32.mrb[0].mxu0
      %4481 = vmatprep.mubr.bf16.mxu0 0
      %4482 = vmatmul.mubr.bf16.gmra.mrb[0].mxu0 %v4242
      %v4483 = vpop.f32.mrb[0].mxu0
      %v4484 = vadd.f32 0.0, %v4483
      %v4485 = vpop.f32.mrb[0].mxu0
      %v4486 = vpop.f32.mrb[0].mxu0
      %v4487 = vadd.f32 0.0, %v4486
      %v4488 = vpop.f32.mrb[0].mxu0
      %4489 = vmatprep.mubr.bf16.mxu0 0
      %4490 = vmatmul.mubr.bf16.gmra.mrb[0].mxu0 %v4243
      %v4491 = vpop.f32.mrb[0].mxu0
      %v4492 = vadd.f32 0.0, %v4491
      %v4493 = vpop.f32.mrb[0].mxu0
      %v4494 = vpop.f32.mrb[0].mxu0
      %v4495 = vadd.f32 0.0, %v4494
      %v4496 = vpop.f32.mrb[0].mxu0
      %4497 = vmatprep.mubr.bf16.mxu0 0
      %4498 = vmatmul.mubr.bf16.gmra.mrb[0].mxu0 %v4244
      %v4499 = vpop.f32.mrb[0].mxu0
      %v4500 = vadd.f32 0.0, %v4499
      %v4501 = vpop.f32.mrb[0].mxu0
      %v4502 = vpop.f32.mrb[0].mxu0
      %v4503 = vadd.f32 0.0, %v4502
      %v4504 = vpop.f32.mrb[0].mxu0
      %4505 = vmatprep.mubr.bf16.mxu0 0
      %4506 = vmatmul.mubr.bf16.gmra.mrb[0].mxu0 %v4245
      %v4507 = vpop.f32.mrb[0].mxu0
      %v4508 = vadd.f32 0.0, %v4507
      %v4509 = vpop.f32.mrb[0].mxu0
      %v4510 = vpop.f32.mrb[0].mxu0
      %v4511 = vadd.f32 0.0, %v4510
      %v4512 = vpop.f32.mrb[0].mxu0
      %4513 = vmatprep.mubr.bf16.mxu0 0
      %4514 = vmatmul.mubr.bf16.gmra.mrb[0].mxu0 %v4246
      %v4515 = vpop.f32.mrb[0].mxu0
      %v4516 = vadd.f32 0.0, %v4515
      %v4517 = vpop.f32.mrb[0].mxu0
      %v4518 = vpop.f32.mrb[0].mxu0
      %v4519 = vadd.f32 0.0, %v4518
      %v4520 = vpop.f32.mrb[0].mxu0
      %4521 = vmatprep.mubr.bf16.mxu0 0
      %4522 = vmatmul.mubr.bf16.gmra.mrb[0].mxu0 %v4247
      %v4523 = vpop.f32.mrb[0].mxu0
      %v4524 = vadd.f32 0.0, %v4523
      %v4525 = vpop.f32.mrb[0].mxu0
      %v4526 = vpop.f32.mrb[0].mxu0
      %v4527 = vadd.f32 0.0, %v4526
      %v4528 = vpop.f32.mrb[0].mxu0
      %4529 = vmatprep.mubr.bf16.mxu0 0
      %4530 = vmatmul.mubr.bf16.gmra.mrb[0].mxu0 %v4248
      %v4531 = vpop.f32.mrb[0].mxu0
      %v4532 = vadd.f32 0.0, %v4531
      %v4533 = vpop.f32.mrb[0].mxu0
      %v4534 = vpop.f32.mrb[0].mxu0
      %v4535 = vadd.f32 0.0, %v4534
      %v4536 = vpop.f32.mrb[0].mxu0
      %4537 = vmatprep.mubr.bf16.mxu0 0
      %4538 = vmatmul.mubr.bf16.gmra.mrb[0].mxu0 %v4249
      %v4539 = vpop.f32.mrb[0].mxu0
      %v4540 = vadd.f32 0.0, %v4539
      %v4541 = vpop.f32.mrb[0].mxu0
      %v4542 = vpop.f32.mrb[0].mxu0
      %v4543 = vadd.f32 0.0, %v4542
      %v4544 = vpop.f32.mrb[0].mxu0
      %4545 = vmatprep.mubr.bf16.mxu0 0
      %4546 = vmatmul.mubr.bf16.gmra.mrb[0].mxu0 %v4250
      %v4547 = vpop.f32.mrb[0].mxu0
      %v4548 = vadd.f32 0.0, %v4547
      %v4549 = vpop.f32.mrb[0].mxu0
      %v4550 = vpop.f32.mrb[0].mxu0
      %v4551 = vadd.f32 0.0, %v4550
      %v4552 = vpop.f32.mrb[0].mxu0
      %4553 = vmatprep.mubr.bf16.mxu0 0
      %4554 = vmatmul.mubr.bf16.gmra.mrb[0].mxu0 %v4251
      %v4555 = vpop.f32.mrb[0].mxu0
      %v4556 = vadd.f32 0.0, %v4555
      %v4557 = vpop.f32.mrb[0].mxu0
      %v4558 = vpop.f32.mrb[0].mxu0
      %v4559 = vadd.f32 0.0, %v4558
      %v4560 = vpop.f32.mrb[0].mxu0
      %4561 = vmatprep.mubr.bf16.mxu0 0
      %4562 = vmatmul.mubr.bf16.gmra.mrb[0].mxu0 %v4252
      %v4563 = vpop.f32.mrb[0].mxu0
      %v4564 = vadd.f32 0.0, %v4563
      %v4565 = vpop.f32.mrb[0].mxu0
      %v4566 = vpop.f32.mrb[0].mxu0
      %v4567 = vadd.f32 0.0, %v4566
      %v4568 = vpop.f32.mrb[0].mxu0
      %4569 = vmatprep.mubr.bf16.mxu0 0
      %4570 = vmatmul.mubr.bf16.gmra.mrb[0].mxu0 %v4253
      %v4571 = vpop.f32.mrb[0].mxu0
      %v4572 = vadd.f32 0.0, %v4571
      %v4573 = vpop.f32.mrb[0].mxu0
      %v4574 = vpop.f32.mrb[0].mxu0
      %v4575 = vadd.f32 0.0, %v4574
      %v4576 = vpop.f32.mrb[0].mxu0
      %4577 = vmatprep.mubr.bf16.mxu0 0
      %4578 = vmatmul.mubr.bf16.gmra.mrb[0].mxu0 %v4254
      %v4579 = vpop.f32.mrb[0].mxu0
      %v4580 = vadd.f32 0.0, %v4579
      %v4581 = vpop.f32.mrb[0].mxu0
      %v4582 = vpop.f32.mrb[0].mxu0
      %v4583 = vadd.f32 0.0, %v4582
      %v4584 = vpop.f32.mrb[0].mxu0
      %4585 = vmatprep.mubr.bf16.mxu0 0
      %4586 = vmatmul.mubr.bf16.gmra.mrb[0].mxu0 %v4255
      %v4587 = vpop.f32.mrb[0].mxu0
      %v4588 = vadd.f32 0.0, %v4587
      %v4589 = vpop.f32.mrb[0].mxu0
      %v4590 = vpop.f32.mrb[0].mxu0
      %v4591 = vadd.f32 0.0, %v4590
      %v4592 = vpop.f32.mrb[0].mxu0
      %4593 = vdwg.mxu0
      %v4594 = vadd.f32 %v4106, %v4356
      %v4595 = vadd.f32 %v4107, %v4359
      %v4596 = vadd.f32 %v4108, %v4364
      %v4597 = vadd.f32 %v4109, %v4367
      %v4598 = vadd.f32 %v4110, %v4372
      %v4599 = vadd.f32 %v4111, %v4375
      %v4600 = vadd.f32 %v4112, %v4380
      %v4601 = vadd.f32 %v4113, %v4383
      %v4602 = vadd.f32 %v4114, %v4388
      %v4603 = vadd.f32 %v4115, %v4391
      %v4604 = vadd.f32 %v4116, %v4396
      %v4605 = vadd.f32 %v4117, %v4399
      %v4606 = vadd.f32 %v4118, %v4404
      %v4607 = vadd.f32 %v4119, %v4407
      %v4608 = vadd.f32 %v4120, %v4412
      %v4609 = vadd.f32 %v4121, %v4415
      %v4610 = vadd.f32 %v4122, %v4420
      %v4611 = vadd.f32 %v4123, %v4423
      %v4612 = vadd.f32 %v4124, %v4428
      %v4613 = vadd.f32 %v4125, %v4431
      %v4614 = vadd.f32 %v4126, %v4436
      %v4615 = vadd.f32 %v4127, %v4439
      %v4616 = vadd.f32 %v4128, %v4444
      %v4617 = vadd.f32 %v4129, %v4447
      %v4618 = vadd.f32 %v4130, %v4452
      %v4619 = vadd.f32 %v4131, %v4455
      %v4620 = vadd.f32 %v4132, %v4460
      %v4621 = vadd.f32 %v4133, %v4463
      %v4622 = vadd.f32 %v4134, %v4468
      %v4623 = vadd.f32 %v4135, %v4471
      %v4624 = vadd.f32 %v4136, %v4476
      %v4625 = vadd.f32 %v4137, %v4479
      %v4626 = vadd.f32 %v4138, %v4484
      %v4627 = vadd.f32 %v4139, %v4487
      %v4628 = vadd.f32 %v4140, %v4492
      %v4629 = vadd.f32 %v4141, %v4495
      %v4630 = vadd.f32 %v4142, %v4500
      %v4631 = vadd.f32 %v4143, %v4503
      %v4632 = vadd.f32 %v4144, %v4508
      %v4633 = vadd.f32 %v4145, %v4511
      %v4634 = vadd.f32 %v4146, %v4516
      %v4635 = vadd.f32 %v4147, %v4519
      %v4636 = vadd.f32 %v4148, %v4524
      %v4637 = vadd.f32 %v4149, %v4527
      %v4638 = vadd.f32 %v4150, %v4532
      %v4639 = vadd.f32 %v4151, %v4535
      %v4640 = vadd.f32 %v4152, %v4540
      %v4641 = vadd.f32 %v4153, %v4543
      %v4642 = vadd.f32 %v4154, %v4548
      %v4643 = vadd.f32 %v4155, %v4551
      %v4644 = vadd.f32 %v4156, %v4556
      %v4645 = vadd.f32 %v4157, %v4559
      %v4646 = vadd.f32 %v4158, %v4564
      %v4647 = vadd.f32 %v4159, %v4567
      %v4648 = vadd.f32 %v4160, %v4572
      %v4649 = vadd.f32 %v4161, %v4575
      %v4650 = vadd.f32 %v4162, %v4580
      %v4651 = vadd.f32 %v4163, %v4583
      %v4652 = vadd.f32 %v4164, %v4588
      %v4653 = vadd.f32 %v4165, %v4591
      %v4654 = vld [vmem:[%s5] sm:$0x1]
      %v4656 = vlaneseq
      %v4657 = vshrl.u32 %v4656, 7
      %v4658 = vsub.s32 0, %v4657
      %v4659 = vrot.slane %v4654, %v4658
      %v4661 = vmul.f32 %v4594, %v4659
      %v4662 = vmul.f32 %v4595, %v4659
      %v4663 = vmul.f32 %v4596, %v4659
      %v4664 = vmul.f32 %v4597, %v4659
      %v4665 = vmul.f32 %v4598, %v4659
      %v4666 = vmul.f32 %v4599, %v4659
      %v4667 = vmul.f32 %v4600, %v4659
      %v4668 = vmul.f32 %v4601, %v4659
      %v4669 = vmul.f32 %v4602, %v4659
      %v4670 = vmul.f32 %v4603, %v4659
      %v4671 = vmul.f32 %v4604, %v4659
      %v4672 = vmul.f32 %v4605, %v4659
      %v4673 = vmul.f32 %v4606, %v4659
      %v4674 = vmul.f32 %v4607, %v4659
      %v4675 = vmul.f32 %v4608, %v4659
      %v4676 = vmul.f32 %v4609, %v4659
      %v4677 = vmul.f32 %v4610, %v4659
      %v4678 = vmul.f32 %v4611, %v4659
      %v4679 = vmul.f32 %v4612, %v4659
      %v4680 = vmul.f32 %v4613, %v4659
      %v4681 = vmul.f32 %v4614, %v4659
      %v4682 = vmul.f32 %v4615, %v4659
      %v4683 = vmul.f32 %v4616, %v4659
      %v4684 = vmul.f32 %v4617, %v4659
      %v4685 = vmul.f32 %v4618, %v4659
      %v4686 = vmul.f32 %v4619, %v4659
      %v4687 = vmul.f32 %v4620, %v4659
      %v4688 = vmul.f32 %v4621, %v4659
      %v4689 = vmul.f32 %v4622, %v4659
      %v4690 = vmul.f32 %v4623, %v4659
      %v4691 = vmul.f32 %v4624, %v4659
      %v4692 = vmul.f32 %v4625, %v4659
      %v4693 = vmul.f32 %v4626, %v4659
      %v4694 = vmul.f32 %v4627, %v4659
      %v4695 = vmul.f32 %v4628, %v4659
      %v4696 = vmul.f32 %v4629, %v4659
      %v4697 = vmul.f32 %v4630, %v4659
      %v4698 = vmul.f32 %v4631, %v4659
      %v4699 = vmul.f32 %v4632, %v4659
      %v4700 = vmul.f32 %v4633, %v4659
      %v4701 = vmul.f32 %v4634, %v4659
      %v4702 = vmul.f32 %v4635, %v4659
      %v4703 = vmul.f32 %v4636, %v4659
      %v4704 = vmul.f32 %v4637, %v4659
      %v4705 = vmul.f32 %v4638, %v4659
      %v4706 = vmul.f32 %v4639, %v4659
      %v4707 = vmul.f32 %v4640, %v4659
      %v4708 = vmul.f32 %v4641, %v4659
      %v4709 = vmul.f32 %v4642, %v4659
      %v4710 = vmul.f32 %v4643, %v4659
      %v4711 = vmul.f32 %v4644, %v4659
      %v4712 = vmul.f32 %v4645, %v4659
      %v4713 = vmul.f32 %v4646, %v4659
      %v4714 = vmul.f32 %v4647, %v4659
      %v4715 = vmul.f32 %v4648, %v4659
      %v4716 = vmul.f32 %v4649, %v4659
      %v4717 = vmul.f32 %v4650, %v4659
      %v4718 = vmul.f32 %v4651, %v4659
      %v4719 = vmul.f32 %v4652, %v4659
      %v4720 = vmul.f32 %v4653, %v4659
      %v4721 = vld [vmem:[%s6] sm:$0x1]
      %v4723 = vlaneseq
      %v4724 = vshrl.u32 %v4723, 7
      %v4725 = vsub.s32 0, %v4724
      %v4726 = vrot.slane %v4721, %v4725
      %v4728 = vadd.f32 %v4661, %v4726
      %v4729 = vadd.f32 %v4662, %v4726
      %v4730 = vadd.f32 %v4663, %v4726
      %v4731 = vadd.f32 %v4664, %v4726
      %v4732 = vadd.f32 %v4665, %v4726
      %v4733 = vadd.f32 %v4666, %v4726
      %v4734 = vadd.f32 %v4667, %v4726
      %v4735 = vadd.f32 %v4668, %v4726
      %v4736 = vadd.f32 %v4669, %v4726
      %v4737 = vadd.f32 %v4670, %v4726
      %v4738 = vadd.f32 %v4671, %v4726
      %v4739 = vadd.f32 %v4672, %v4726
      %v4740 = vadd.f32 %v4673, %v4726
      %v4741 = vadd.f32 %v4674, %v4726
      %v4742 = vadd.f32 %v4675, %v4726
      %v4743 = vadd.f32 %v4676, %v4726
      %v4744 = vadd.f32 %v4677, %v4726
      %v4745 = vadd.f32 %v4678, %v4726
      %v4746 = vadd.f32 %v4679, %v4726
      %v4747 = vadd.f32 %v4680, %v4726
      %v4748 = vadd.f32 %v4681, %v4726
      %v4749 = vadd.f32 %v4682, %v4726
      %v4750 = vadd.f32 %v4683, %v4726
      %v4751 = vadd.f32 %v4684, %v4726
      %v4752 = vadd.f32 %v4685, %v4726
      %v4753 = vadd.f32 %v4686, %v4726
      %v4754 = vadd.f32 %v4687, %v4726
      %v4755 = vadd.f32 %v4688, %v4726
      %v4756 = vadd.f32 %v4689, %v4726
      %v4757 = vadd.f32 %v4690, %v4726
      %v4758 = vadd.f32 %v4691, %v4726
      %v4759 = vadd.f32 %v4692, %v4726
      %v4760 = vadd.f32 %v4693, %v4726
      %v4761 = vadd.f32 %v4694, %v4726
      %v4762 = vadd.f32 %v4695, %v4726
      %v4763 = vadd.f32 %v4696, %v4726
      %v4764 = vadd.f32 %v4697, %v4726
      %v4765 = vadd.f32 %v4698, %v4726
      %v4766 = vadd.f32 %v4699, %v4726
      %v4767 = vadd.f32 %v4700, %v4726
      %v4768 = vadd.f32 %v4701, %v4726
      %v4769 = vadd.f32 %v4702, %v4726
      %v4770 = vadd.f32 %v4703, %v4726
      %v4771 = vadd.f32 %v4704, %v4726
      %v4772 = vadd.f32 %v4705, %v4726
      %v4773 = vadd.f32 %v4706, %v4726
      %v4774 = vadd.f32 %v4707, %v4726
      %v4775 = vadd.f32 %v4708, %v4726
      %v4776 = vadd.f32 %v4709, %v4726
      %v4777 = vadd.f32 %v4710, %v4726
      %v4778 = vadd.f32 %v4711, %v4726
      %v4779 = vadd.f32 %v4712, %v4726
      %v4780 = vadd.f32 %v4713, %v4726
      %v4781 = vadd.f32 %v4714, %v4726
      %v4782 = vadd.f32 %v4715, %v4726
      %v4783 = vadd.f32 %v4716, %v4726
      %v4784 = vadd.f32 %v4717, %v4726
      %v4785 = vadd.f32 %v4718, %v4726
      %v4786 = vadd.f32 %v4719, %v4726
      %v4787 = vadd.f32 %v4720, %v4726
      %v4788 = vmax.f32 %v4728, 0.0
      %v4789 = vmax.f32 %v4729, 0.0
      %v4790 = vmax.f32 %v4730, 0.0
      %v4791 = vmax.f32 %v4731, 0.0
      %v4792 = vmax.f32 %v4732, 0.0
      %v4793 = vmax.f32 %v4733, 0.0
      %v4794 = vmax.f32 %v4734, 0.0
      %v4795 = vmax.f32 %v4735, 0.0
      %v4796 = vmax.f32 %v4736, 0.0
      %v4797 = vmax.f32 %v4737, 0.0
      %v4798 = vmax.f32 %v4738, 0.0
      %v4799 = vmax.f32 %v4739, 0.0
      %v4800 = vmax.f32 %v4740, 0.0
      %v4801 = vmax.f32 %v4741, 0.0
      %v4802 = vmax.f32 %v4742, 0.0
      %v4803 = vmax.f32 %v4743, 0.0
      %v4804 = vmax.f32 %v4744, 0.0
      %v4805 = vmax.f32 %v4745, 0.0
      %v4806 = vmax.f32 %v4746, 0.0
      %v4807 = vmax.f32 %v4747, 0.0
      %v4808 = vmax.f32 %v4748, 0.0
      %v4809 = vmax.f32 %v4749, 0.0
      %v4810 = vmax.f32 %v4750, 0.0
      %v4811 = vmax.f32 %v4751, 0.0
      %v4812 = vmax.f32 %v4752, 0.0
      %v4813 = vmax.f32 %v4753, 0.0
      %v4814 = vmax.f32 %v4754, 0.0
      %v4815 = vmax.f32 %v4755, 0.0
      %v4816 = vmax.f32 %v4756, 0.0
      %v4817 = vmax.f32 %v4757, 0.0
      %v4818 = vmax.f32 %v4758, 0.0
      %v4819 = vmax.f32 %v4759, 0.0
      %v4820 = vmax.f32 %v4760, 0.0
      %v4821 = vmax.f32 %v4761, 0.0
      %v4822 = vmax.f32 %v4762, 0.0
      %v4823 = vmax.f32 %v4763, 0.0
      %v4824 = vmax.f32 %v4764, 0.0
      %v4825 = vmax.f32 %v4765, 0.0
      %v4826 = vmax.f32 %v4766, 0.0
      %v4827 = vmax.f32 %v4767, 0.0
      %v4828 = vmax.f32 %v4768, 0.0
      %v4829 = vmax.f32 %v4769, 0.0
      %v4830 = vmax.f32 %v4770, 0.0
      %v4831 = vmax.f32 %v4771, 0.0
      %v4832 = vmax.f32 %v4772, 0.0
      %v4833 = vmax.f32 %v4773, 0.0
      %v4834 = vmax.f32 %v4774, 0.0
      %v4835 = vmax.f32 %v4775, 0.0
      %v4836 = vmax.f32 %v4776, 0.0
      %v4837 = vmax.f32 %v4777, 0.0
      %v4838 = vmax.f32 %v4778, 0.0
      %v4839 = vmax.f32 %v4779, 0.0
      %v4840 = vmax.f32 %v4780, 0.0
      %v4841 = vmax.f32 %v4781, 0.0
      %v4842 = vmax.f32 %v4782, 0.0
      %v4843 = vmax.f32 %v4783, 0.0
      %v4844 = vmax.f32 %v4784, 0.0
      %v4845 = vmax.f32 %v4785, 0.0
      %v4846 = vmax.f32 %v4786, 0.0
      %v4847 = vmax.f32 %v4787, 0.0
      %v4848 = vld [vmem:[%s372] sm:$0xff]
      %v4849 = vld [vmem:[%s372 + $0x8] sm:$0xff]
      %v4850 = vld [vmem:[%s372 + $0x10] sm:$0xff]
      %v4851 = vld [vmem:[%s372 + $0x18] sm:$0xff]
      %v4852 = vld [vmem:[%s372 + $0x20] sm:$0xff]
      %v4853 = vld [vmem:[%s372 + $0x28] sm:$0xff]
      %v4854 = vld [vmem:[%s372 + $0x30] sm:$0xff]
      %v4855 = vld [vmem:[%s372 + $0x38] sm:$0xff]
      %v4856 = vld [vmem:[%s372 + $0x40] sm:$0xff]
      %v4857 = vld [vmem:[%s372 + $0x48] sm:$0xff]
      %v4858 = vld [vmem:[%s372 + $0x50] sm:$0xff]
      %v4859 = vld [vmem:[%s372 + $0x58] sm:$0xff]
      %v4860 = vld [vmem:[%s372 + $0x60] sm:$0xff]
      %v4861 = vld [vmem:[%s372 + $0x68] sm:$0xff]
      %v4862 = vld [vmem:[%s372 + $0x70] sm:$0xff]
      %v4863 = vld [vmem:[%s372 + $0x78] sm:$0xff]
      %v4864 = vld [vmem:[%s372 + $0x80] sm:$0xff]
      %v4865 = vld [vmem:[%s372 + $0x88] sm:$0xff]
      %v4866 = vld [vmem:[%s372 + $0x90] sm:$0xff]
      %v4867 = vld [vmem:[%s372 + $0x98] sm:$0xff]
      %v4868 = vld [vmem:[%s372 + $0xa0] sm:$0xff]
      %v4869 = vld [vmem:[%s372 + $0xa8] sm:$0xff]
      %v4870 = vld [vmem:[%s372 + $0xb0] sm:$0xff]
      %v4871 = vld [vmem:[%s372 + $0xb8] sm:$0xff]
      %v4872 = vld [vmem:[%s372 + $0xc0] sm:$0xff]
      %v4873 = vld [vmem:[%s372 + $0xc8] sm:$0xff]
      %v4874 = vld [vmem:[%s372 + $0xd0] sm:$0xff]
      %v4875 = vld [vmem:[%s372 + $0xd8] sm:$0xff]
      %v4876 = vld [vmem:[%s372 + $0xe0] sm:$0xff]
      %v4877 = vld [vmem:[%s372 + $0xe8] sm:$0xff]
      %v4878 = vld [vmem:[%s372 + $0xf0] sm:$0xff]
      %v4879 = vld [vmem:[%s372 + $0xf8] sm:$0xff]
      %v4880 = vld [vmem:[%s372 + $0x100] sm:$0xff]
      %v4881 = vld [vmem:[%s372 + $0x108] sm:$0xff]
      %v4882 = vld [vmem:[%s372 + $0x110] sm:$0xff]
      %v4883 = vld [vmem:[%s372 + $0x118] sm:$0xff]
      %v4884 = vld [vmem:[%s372 + $0x120] sm:$0xff]
      %v4885 = vld [vmem:[%s372 + $0x128] sm:$0xff]
      %v4886 = vld [vmem:[%s372 + $0x130] sm:$0xff]
      %v4887 = vld [vmem:[%s372 + $0x138] sm:$0xff]
      %v4888 = vld [vmem:[%s372 + $0x140] sm:$0xff]
      %v4889 = vld [vmem:[%s372 + $0x148] sm:$0xff]
      %v4890 = vld [vmem:[%s372 + $0x150] sm:$0xff]
      %v4891 = vld [vmem:[%s372 + $0x158] sm:$0xff]
      %v4892 = vld [vmem:[%s372 + $0x160] sm:$0xff]
      %v4893 = vld [vmem:[%s372 + $0x168] sm:$0xff]
      %v4894 = vld [vmem:[%s372 + $0x170] sm:$0xff]
      %v4895 = vld [vmem:[%s372 + $0x178] sm:$0xff]
      %v4896 = vld [vmem:[%s372 + $0x180] sm:$0xff]
      %v4897 = vld [vmem:[%s372 + $0x188] sm:$0xff]
      %v4898 = vld [vmem:[%s372 + $0x190] sm:$0xff]
      %v4899 = vld [vmem:[%s372 + $0x198] sm:$0xff]
      %v4900 = vld [vmem:[%s372 + $0x1a0] sm:$0xff]
      %v4901 = vld [vmem:[%s372 + $0x1a8] sm:$0xff]
      %v4902 = vld [vmem:[%s372 + $0x1b0] sm:$0xff]
      %v4903 = vld [vmem:[%s372 + $0x1b8] sm:$0xff]
      %v4904 = vld [vmem:[%s372 + $0x1c0] sm:$0xff]
      %v4905 = vld [vmem:[%s372 + $0x1c8] sm:$0xff]
      %v4906 = vld [vmem:[%s372 + $0x1d0] sm:$0xff]
      %v4907 = vld [vmem:[%s372 + $0x1d8] sm:$0xff]
      %4909 = vset.pattern.permute.xlu0 0
      %4910 = vperm.xlu0 %4909, %v4848
      %v4911 = vpop.permute.xlu0 %4910
      %4914 = vset.pattern.permute.xlu0 0
      %4915 = vperm.xlu0 %4914, %v4849
      %v4916 = vpop.permute.xlu0 %4915
      %4919 = vset.pattern.permute.xlu0 0
      %4920 = vperm.xlu0 %4919, %v4850
      %v4921 = vpop.permute.xlu0 %4920
      %4924 = vset.pattern.permute.xlu0 0
      %4925 = vperm.xlu0 %4924, %v4851
      %v4926 = vpop.permute.xlu0 %4925
      %4929 = vset.pattern.permute.xlu0 0
      %4930 = vperm.xlu0 %4929, %v4852
      %v4931 = vpop.permute.xlu0 %4930
      %4934 = vset.pattern.permute.xlu0 0
      %4935 = vperm.xlu0 %4934, %v4853
      %v4936 = vpop.permute.xlu0 %4935
      %4939 = vset.pattern.permute.xlu0 0
      %4940 = vperm.xlu0 %4939, %v4854
      %v4941 = vpop.permute.xlu0 %4940
      %4944 = vset.pattern.permute.xlu0 0
      %4945 = vperm.xlu0 %4944, %v4855
      %v4946 = vpop.permute.xlu0 %4945
      %4949 = vset.pattern.permute.xlu0 0
      %4950 = vperm.xlu0 %4949, %v4856
      %v4951 = vpop.permute.xlu0 %4950
      %4954 = vset.pattern.permute.xlu0 0
      %4955 = vperm.xlu0 %4954, %v4857
      %v4956 = vpop.permute.xlu0 %4955
      %4959 = vset.pattern.permute.xlu0 0
      %4960 = vperm.xlu0 %4959, %v4858
      %v4961 = vpop.permute.xlu0 %4960
      %4964 = vset.pattern.permute.xlu0 0
      %4965 = vperm.xlu0 %4964, %v4859
      %v4966 = vpop.permute.xlu0 %4965
      %4969 = vset.pattern.permute.xlu0 0
      %4970 = vperm.xlu0 %4969, %v4860
      %v4971 = vpop.permute.xlu0 %4970
      %4974 = vset.pattern.permute.xlu0 0
      %4975 = vperm.xlu0 %4974, %v4861
      %v4976 = vpop.permute.xlu0 %4975
      %4979 = vset.pattern.permute.xlu0 0
      %4980 = vperm.xlu0 %4979, %v4862
      %v4981 = vpop.permute.xlu0 %4980
      %4984 = vset.pattern.permute.xlu0 0
      %4985 = vperm.xlu0 %4984, %v4863
      %v4986 = vpop.permute.xlu0 %4985
      %4989 = vset.pattern.permute.xlu0 0
      %4990 = vperm.xlu0 %4989, %v4864
      %v4991 = vpop.permute.xlu0 %4990
      %4994 = vset.pattern.permute.xlu0 0
      %4995 = vperm.xlu0 %4994, %v4865
      %v4996 = vpop.permute.xlu0 %4995
      %4999 = vset.pattern.permute.xlu0 0
      %5000 = vperm.xlu0 %4999, %v4866
      %v5001 = vpop.permute.xlu0 %5000
      %5004 = vset.pattern.permute.xlu0 0
      %5005 = vperm.xlu0 %5004, %v4867
      %v5006 = vpop.permute.xlu0 %5005
      %5009 = vset.pattern.permute.xlu0 0
      %5010 = vperm.xlu0 %5009, %v4868
      %v5011 = vpop.permute.xlu0 %5010
      %5014 = vset.pattern.permute.xlu0 0
      %5015 = vperm.xlu0 %5014, %v4869
      %v5016 = vpop.permute.xlu0 %5015
      %5019 = vset.pattern.permute.xlu0 0
      %5020 = vperm.xlu0 %5019, %v4870
      %v5021 = vpop.permute.xlu0 %5020
      %5024 = vset.pattern.permute.xlu0 0
      %5025 = vperm.xlu0 %5024, %v4871
      %v5026 = vpop.permute.xlu0 %5025
      %5029 = vset.pattern.permute.xlu0 0
      %5030 = vperm.xlu0 %5029, %v4872
      %v5031 = vpop.permute.xlu0 %5030
      %5034 = vset.pattern.permute.xlu0 0
      %5035 = vperm.xlu0 %5034, %v4873
      %v5036 = vpop.permute.xlu0 %5035
      %5039 = vset.pattern.permute.xlu0 0
      %5040 = vperm.xlu0 %5039, %v4874
      %v5041 = vpop.permute.xlu0 %5040
      %5044 = vset.pattern.permute.xlu0 0
      %5045 = vperm.xlu0 %5044, %v4875
      %v5046 = vpop.permute.xlu0 %5045
      %5049 = vset.pattern.permute.xlu0 0
      %5050 = vperm.xlu0 %5049, %v4876
      %v5051 = vpop.permute.xlu0 %5050
      %5054 = vset.pattern.permute.xlu0 0
      %5055 = vperm.xlu0 %5054, %v4877
      %v5056 = vpop.permute.xlu0 %5055
      %5059 = vset.pattern.permute.xlu0 0
      %5060 = vperm.xlu0 %5059, %v4878
      %v5061 = vpop.permute.xlu0 %5060
      %5064 = vset.pattern.permute.xlu0 0
      %5065 = vperm.xlu0 %5064, %v4879
      %v5066 = vpop.permute.xlu0 %5065
      %5069 = vset.pattern.permute.xlu0 0
      %5070 = vperm.xlu0 %5069, %v4880
      %v5071 = vpop.permute.xlu0 %5070
      %5074 = vset.pattern.permute.xlu0 0
      %5075 = vperm.xlu0 %5074, %v4881
      %v5076 = vpop.permute.xlu0 %5075
      %5079 = vset.pattern.permute.xlu0 0
      %5080 = vperm.xlu0 %5079, %v4882
      %v5081 = vpop.permute.xlu0 %5080
      %5084 = vset.pattern.permute.xlu0 0
      %5085 = vperm.xlu0 %5084, %v4883
      %v5086 = vpop.permute.xlu0 %5085
      %5089 = vset.pattern.permute.xlu0 0
      %5090 = vperm.xlu0 %5089, %v4884
      %v5091 = vpop.permute.xlu0 %5090
      %5094 = vset.pattern.permute.xlu0 0
      %5095 = vperm.xlu0 %5094, %v4885
      %v5096 = vpop.permute.xlu0 %5095
      %5099 = vset.pattern.permute.xlu0 0
      %5100 = vperm.xlu0 %5099, %v4886
      %v5101 = vpop.permute.xlu0 %5100
      %5104 = vset.pattern.permute.xlu0 0
      %5105 = vperm.xlu0 %5104, %v4887
      %v5106 = vpop.permute.xlu0 %5105
      %5109 = vset.pattern.permute.xlu0 0
      %5110 = vperm.xlu0 %5109, %v4888
      %v5111 = vpop.permute.xlu0 %5110
      %5114 = vset.pattern.permute.xlu0 0
      %5115 = vperm.xlu0 %5114, %v4889
      %v5116 = vpop.permute.xlu0 %5115
      %5119 = vset.pattern.permute.xlu0 0
      %5120 = vperm.xlu0 %5119, %v4890
      %v5121 = vpop.permute.xlu0 %5120
      %5124 = vset.pattern.permute.xlu0 0
      %5125 = vperm.xlu0 %5124, %v4891
      %v5126 = vpop.permute.xlu0 %5125
      %5129 = vset.pattern.permute.xlu0 0
      %5130 = vperm.xlu0 %5129, %v4892
      %v5131 = vpop.permute.xlu0 %5130
      %5134 = vset.pattern.permute.xlu0 0
      %5135 = vperm.xlu0 %5134, %v4893
      %v5136 = vpop.permute.xlu0 %5135
      %5139 = vset.pattern.permute.xlu0 0
      %5140 = vperm.xlu0 %5139, %v4894
      %v5141 = vpop.permute.xlu0 %5140
      %5144 = vset.pattern.permute.xlu0 0
      %5145 = vperm.xlu0 %5144, %v4895
      %v5146 = vpop.permute.xlu0 %5145
      %5149 = vset.pattern.permute.xlu0 0
      %5150 = vperm.xlu0 %5149, %v4896
      %v5151 = vpop.permute.xlu0 %5150
      %5154 = vset.pattern.permute.xlu0 0
      %5155 = vperm.xlu0 %5154, %v4897
      %v5156 = vpop.permute.xlu0 %5155
      %5159 = vset.pattern.permute.xlu0 0
      %5160 = vperm.xlu0 %5159, %v4898
      %v5161 = vpop.permute.xlu0 %5160
      %5164 = vset.pattern.permute.xlu0 0
      %5165 = vperm.xlu0 %5164, %v4899
      %v5166 = vpop.permute.xlu0 %5165
      %5169 = vset.pattern.permute.xlu0 0
      %5170 = vperm.xlu0 %5169, %v4900
      %v5171 = vpop.permute.xlu0 %5170
      %5174 = vset.pattern.permute.xlu0 0
      %5175 = vperm.xlu0 %5174, %v4901
      %v5176 = vpop.permute.xlu0 %5175
      %5179 = vset.pattern.permute.xlu0 0
      %5180 = vperm.xlu0 %5179, %v4902
      %v5181 = vpop.permute.xlu0 %5180
      %5184 = vset.pattern.permute.xlu0 0
      %5185 = vperm.xlu0 %5184, %v4903
      %v5186 = vpop.permute.xlu0 %5185
      %5189 = vset.pattern.permute.xlu0 0
      %5190 = vperm.xlu0 %5189, %v4904
      %v5191 = vpop.permute.xlu0 %5190
      %5194 = vset.pattern.permute.xlu0 0
      %5195 = vperm.xlu0 %5194, %v4905
      %v5196 = vpop.permute.xlu0 %5195
      %5199 = vset.pattern.permute.xlu0 0
      %5200 = vperm.xlu0 %5199, %v4906
      %v5201 = vpop.permute.xlu0 %5200
      %5204 = vset.pattern.permute.xlu0 0
      %5205 = vperm.xlu0 %5204, %v4907
      %v5206 = vpop.permute.xlu0 %5205
      %v5208 = vmul.f32 %v4788, %v4911
      %v5209 = vmul.f32 %v4789, %v4916
      %v5210 = vmul.f32 %v4790, %v4921
      %v5211 = vmul.f32 %v4791, %v4926
      %v5212 = vmul.f32 %v4792, %v4931
      %v5213 = vmul.f32 %v4793, %v4936
      %v5214 = vmul.f32 %v4794, %v4941
      %v5215 = vmul.f32 %v4795, %v4946
      %v5216 = vmul.f32 %v4796, %v4951
      %v5217 = vmul.f32 %v4797, %v4956
      %v5218 = vmul.f32 %v4798, %v4961
      %v5219 = vmul.f32 %v4799, %v4966
      %v5220 = vmul.f32 %v4800, %v4971
      %v5221 = vmul.f32 %v4801, %v4976
      %v5222 = vmul.f32 %v4802, %v4981
      %v5223 = vmul.f32 %v4803, %v4986
      %v5224 = vmul.f32 %v4804, %v4991
      %v5225 = vmul.f32 %v4805, %v4996
      %v5226 = vmul.f32 %v4806, %v5001
      %v5227 = vmul.f32 %v4807, %v5006
      %v5228 = vmul.f32 %v4808, %v5011
      %v5229 = vmul.f32 %v4809, %v5016
      %v5230 = vmul.f32 %v4810, %v5021
      %v5231 = vmul.f32 %v4811, %v5026
      %v5232 = vmul.f32 %v4812, %v5031
      %v5233 = vmul.f32 %v4813, %v5036
      %v5234 = vmul.f32 %v4814, %v5041
      %v5235 = vmul.f32 %v4815, %v5046
      %v5236 = vmul.f32 %v4816, %v5051
      %v5237 = vmul.f32 %v4817, %v5056
      %v5238 = vmul.f32 %v4818, %v5061
      %v5239 = vmul.f32 %v4819, %v5066
      %v5240 = vmul.f32 %v4820, %v5071
      %v5241 = vmul.f32 %v4821, %v5076
      %v5242 = vmul.f32 %v4822, %v5081
      %v5243 = vmul.f32 %v4823, %v5086
      %v5244 = vmul.f32 %v4824, %v5091
      %v5245 = vmul.f32 %v4825, %v5096
      %v5246 = vmul.f32 %v4826, %v5101
      %v5247 = vmul.f32 %v4827, %v5106
      %v5248 = vmul.f32 %v4828, %v5111
      %v5249 = vmul.f32 %v4829, %v5116
      %v5250 = vmul.f32 %v4830, %v5121
      %v5251 = vmul.f32 %v4831, %v5126
      %v5252 = vmul.f32 %v4832, %v5131
      %v5253 = vmul.f32 %v4833, %v5136
      %v5254 = vmul.f32 %v4834, %v5141
      %v5255 = vmul.f32 %v4835, %v5146
      %v5256 = vmul.f32 %v4836, %v5151
      %v5257 = vmul.f32 %v4837, %v5156
      %v5258 = vmul.f32 %v4838, %v5161
      %v5259 = vmul.f32 %v4839, %v5166
      %v5260 = vmul.f32 %v4840, %v5171
      %v5261 = vmul.f32 %v4841, %v5176
      %v5262 = vmul.f32 %v4842, %v5181
      %v5263 = vmul.f32 %v4843, %v5186
      %v5264 = vmul.f32 %v4844, %v5191
      %v5265 = vmul.f32 %v4845, %v5196
      %v5266 = vmul.f32 %v4846, %v5201
      %v5267 = vmul.f32 %v4847, %v5206
      %5268 = vst [vmem:[#allocation2] sm:$0xff] %v5208
      %5269 = vst [vmem:[#allocation2 + $0x8] sm:$0xff] %v5209
      %5270 = vst [vmem:[#allocation2 + $0x10] sm:$0xff] %v5210
      %5271 = vst [vmem:[#allocation2 + $0x18] sm:$0xff] %v5211
      %5272 = vst [vmem:[#allocation2 + $0x20] sm:$0xff] %v5212
      %5273 = vst [vmem:[#allocation2 + $0x28] sm:$0xff] %v5213
      %5274 = vst [vmem:[#allocation2 + $0x30] sm:$0xff] %v5214
      %5275 = vst [vmem:[#allocation2 + $0x38] sm:$0xff] %v5215
      %5276 = vst [vmem:[#allocation2 + $0x40] sm:$0xff] %v5216
      %5277 = vst [vmem:[#allocation2 + $0x48] sm:$0xff] %v5217
      %5278 = vst [vmem:[#allocation2 + $0x50] sm:$0xff] %v5218
      %5279 = vst [vmem:[#allocation2 + $0x58] sm:$0xff] %v5219
      %5280 = vst [vmem:[#allocation2 + $0x60] sm:$0xff] %v5220
      %5281 = vst [vmem:[#allocation2 + $0x68] sm:$0xff] %v5221
      %5282 = vst [vmem:[#allocation2 + $0x70] sm:$0xff] %v5222
      %5283 = vst [vmem:[#allocation2 + $0x78] sm:$0xff] %v5223
      %5284 = vst [vmem:[#allocation2 + $0x80] sm:$0xff] %v5224
      %5285 = vst [vmem:[#allocation2 + $0x88] sm:$0xff] %v5225
      %5286 = vst [vmem:[#allocation2 + $0x90] sm:$0xff] %v5226
      %5287 = vst [vmem:[#allocation2 + $0x98] sm:$0xff] %v5227
      %5288 = vst [vmem:[#allocation2 + $0xa0] sm:$0xff] %v5228
      %5289 = vst [vmem:[#allocation2 + $0xa8] sm:$0xff] %v5229
      %5290 = vst [vmem:[#allocation2 + $0xb0] sm:$0xff] %v5230
      %5291 = vst [vmem:[#allocation2 + $0xb8] sm:$0xff] %v5231
      %5292 = vst [vmem:[#allocation2 + $0xc0] sm:$0xff] %v5232
      %5293 = vst [vmem:[#allocation2 + $0xc8] sm:$0xff] %v5233
      %5294 = vst [vmem:[#allocation2 + $0xd0] sm:$0xff] %v5234
      %5295 = vst [vmem:[#allocation2 + $0xd8] sm:$0xff] %v5235
      %5296 = vst [vmem:[#allocation2 + $0xe0] sm:$0xff] %v5236
      %5297 = vst [vmem:[#allocation2 + $0xe8] sm:$0xff] %v5237
      %5298 = vst [vmem:[#allocation2 + $0xf0] sm:$0xff] %v5238
      %5299 = vst [vmem:[#allocation2 + $0xf8] sm:$0xff] %v5239
      %5300 = vst [vmem:[#allocation2 + $0x100] sm:$0xff] %v5240
      %5301 = vst [vmem:[#allocation2 + $0x108] sm:$0xff] %v5241
      %5302 = vst [vmem:[#allocation2 + $0x110] sm:$0xff] %v5242
      %5303 = vst [vmem:[#allocation2 + $0x118] sm:$0xff] %v5243
      %5304 = vst [vmem:[#allocation2 + $0x120] sm:$0xff] %v5244
      %5305 = vst [vmem:[#allocation2 + $0x128] sm:$0xff] %v5245
      %5306 = vst [vmem:[#allocation2 + $0x130] sm:$0xff] %v5246
      %5307 = vst [vmem:[#allocation2 + $0x138] sm:$0xff] %v5247
      %5308 = vst [vmem:[#allocation2 + $0x140] sm:$0xff] %v5248
      %5309 = vst [vmem:[#allocation2 + $0x148] sm:$0xff] %v5249
      %5310 = vst [vmem:[#allocation2 + $0x150] sm:$0xff] %v5250
      %5311 = vst [vmem:[#allocation2 + $0x158] sm:$0xff] %v5251
      %5312 = vst [vmem:[#allocation2 + $0x160] sm:$0xff] %v5252
      %5313 = vst [vmem:[#allocation2 + $0x168] sm:$0xff] %v5253
      %5314 = vst [vmem:[#allocation2 + $0x170] sm:$0xff] %v5254
      %5315 = vst [vmem:[#allocation2 + $0x178] sm:$0xff] %v5255
      %5316 = vst [vmem:[#allocation2 + $0x180] sm:$0xff] %v5256
      %5317 = vst [vmem:[#allocation2 + $0x188] sm:$0xff] %v5257
      %5318 = vst [vmem:[#allocation2 + $0x190] sm:$0xff] %v5258
      %5319 = vst [vmem:[#allocation2 + $0x198] sm:$0xff] %v5259
      %5320 = vst [vmem:[#allocation2 + $0x1a0] sm:$0xff] %v5260
      %5321 = vst [vmem:[#allocation2 + $0x1a8] sm:$0xff] %v5261
      %5322 = vst [vmem:[#allocation2 + $0x1b0] sm:$0xff] %v5262
      %5323 = vst [vmem:[#allocation2 + $0x1b8] sm:$0xff] %v5263
      %5324 = vst [vmem:[#allocation2 + $0x1c0] sm:$0xff] %v5264
      %5325 = vst [vmem:[#allocation2 + $0x1c8] sm:$0xff] %v5265
      %5326 = vst [vmem:[#allocation2 + $0x1d0] sm:$0xff] %v5266
      %5327 = vst [vmem:[#allocation2 + $0x1d8] sm:$0xff] %v5267
      %v5328 = vld [vmem:[#allocation2 + $0x17] sm:$0xff]
      %v5329 = vld [vmem:[#allocation2 + $0x1f] sm:$0xff]
      %v5330 = vld [vmem:[#allocation2 + $0x27] sm:$0xff]
      %v5331 = vld [vmem:[#allocation2 + $0x2f] sm:$0xff]
      %v5332 = vld [vmem:[#allocation2 + $0x37] sm:$0xff]
      %v5333 = vld [vmem:[#allocation2 + $0x3f] sm:$0xff]
      %v5334 = vld [vmem:[#allocation2 + $0x47] sm:$0xff]
      %v5335 = vld [vmem:[#allocation2 + $0x4f] sm:$0xff]
      %v5336 = vld [vmem:[#allocation2 + $0x57] sm:$0xff]
      %v5337 = vld [vmem:[#allocation2 + $0x5f] sm:$0xff]
      %v5338 = vld [vmem:[#allocation2 + $0x67] sm:$0xff]
      %v5339 = vld [vmem:[#allocation2 + $0x6f] sm:$0xff]
      %v5340 = vld [vmem:[#allocation2 + $0x77] sm:$0xff]
      %v5341 = vld [vmem:[#allocation2 + $0x7f] sm:$0xff]
      %v5342 = vld [vmem:[#allocation2 + $0x87] sm:$0xff]
      %v5343 = vld [vmem:[#allocation2 + $0x8f] sm:$0xff]
      %v5344 = vld [vmem:[#allocation2 + $0x97] sm:$0xff]
      %v5345 = vld [vmem:[#allocation2 + $0x9f] sm:$0xff]
      %v5346 = vld [vmem:[#allocation2 + $0xa7] sm:$0xff]
      %v5347 = vld [vmem:[#allocation2 + $0xaf] sm:$0xff]
      %v5348 = vld [vmem:[#allocation2 + $0xb7] sm:$0xff]
      %v5349 = vld [vmem:[#allocation2 + $0xbf] sm:$0xff]
      %v5350 = vld [vmem:[#allocation2 + $0xc7] sm:$0xff]
      %v5351 = vld [vmem:[#allocation2 + $0xcf] sm:$0xff]
      %v5352 = vld [vmem:[#allocation2 + $0xd7] sm:$0xff]
      %v5353 = vld [vmem:[#allocation2 + $0xdf] sm:$0xff]
      %v5354 = vld [vmem:[#allocation2 + $0xe7] sm:$0xff]
      %v5355 = vld [vmem:[#allocation2 + $0xef] sm:$0xff]
      %v5356 = vld [vmem:[#allocation2 + $0xf7] sm:$0xff]
      %v5357 = vld [vmem:[#allocation2 + $0xff] sm:$0xff]
      %v5358 = vld [vmem:[#allocation2 + $0x107] sm:$0xff]
      %v5359 = vld [vmem:[#allocation2 + $0x10f] sm:$0xff]
      %v5360 = vld [vmem:[#allocation2 + $0x117] sm:$0xff]
      %v5361 = vld [vmem:[#allocation2 + $0x11f] sm:$0xff]
      %v5362 = vld [vmem:[#allocation2 + $0x127] sm:$0xff]
      %v5363 = vld [vmem:[#allocation2 + $0x12f] sm:$0xff]
      %v5364 = vld [vmem:[#allocation2 + $0x137] sm:$0xff]
      %v5365 = vld [vmem:[#allocation2 + $0x13f] sm:$0xff]
      %v5366 = vld [vmem:[#allocation2 + $0x147] sm:$0xff]
      %v5367 = vld [vmem:[#allocation2 + $0x14f] sm:$0xff]
      %v5368 = vld [vmem:[#allocation2 + $0x157] sm:$0xff]
      %v5369 = vld [vmem:[#allocation2 + $0x15f] sm:$0xff]
      %v5370 = vld [vmem:[#allocation2 + $0x167] sm:$0xff]
      %v5371 = vld [vmem:[#allocation2 + $0x16f] sm:$0xff]
      %v5372 = vld [vmem:[#allocation2 + $0x177] sm:$0xff]
      %v5373 = vld [vmem:[#allocation2 + $0x17f] sm:$0xff]
      %v5374 = vld [vmem:[#allocation2 + $0x187] sm:$0xff]
      %v5375 = vld [vmem:[#allocation2 + $0x18f] sm:$0xff]
      %v5376 = vpack.c.bf16 %v5329, %v5328
      %v5377 = vpack.c.bf16 %v5331, %v5330
      %v5378 = vpack.c.bf16 %v5333, %v5332
      %v5379 = vpack.c.bf16 %v5335, %v5334
      %v5380 = vpack.c.bf16 %v5337, %v5336
      %v5381 = vpack.c.bf16 %v5339, %v5338
      %v5382 = vpack.c.bf16 %v5341, %v5340
      %v5383 = vpack.c.bf16 %v5343, %v5342
      %v5384 = vpack.c.bf16 %v5345, %v5344
      %v5385 = vpack.c.bf16 %v5347, %v5346
      %v5386 = vpack.c.bf16 %v5349, %v5348
      %v5387 = vpack.c.bf16 %v5351, %v5350
      %v5388 = vpack.c.bf16 %v5353, %v5352
      %v5389 = vpack.c.bf16 %v5355, %v5354
      %v5390 = vpack.c.bf16 %v5357, %v5356
      %v5391 = vpack.c.bf16 %v5359, %v5358
      %v5392 = vpack.c.bf16 %v5361, %v5360
      %v5393 = vpack.c.bf16 %v5363, %v5362
      %v5394 = vpack.c.bf16 %v5365, %v5364
      %v5395 = vpack.c.bf16 %v5367, %v5366
      %v5396 = vpack.c.bf16 %v5369, %v5368
      %v5397 = vpack.c.bf16 %v5371, %v5370
      %v5398 = vpack.c.bf16 %v5373, %v5372
      %v5399 = vpack.c.bf16 %v5375, %v5374
      %v5400 = vld [vmem:[%s3] sm:$0xf]
      %v5401 = vld [vmem:[%s3 + $0x4] sm:$0xf]
      %v5402 = vld [vmem:[%s3 + $0x8] sm:$0xf]
      %v5403 = vld [vmem:[%s3 + $0xc] sm:$0xf]
      %v5404 = vld [vmem:[%s3 + $0x10] sm:$0xf]
      %v5405 = vld [vmem:[%s3 + $0x14] sm:$0xf]
      %v5406 = vld [vmem:[%s3 + $0x18] sm:$0xf]
      %v5407 = vld [vmem:[%s3 + $0x1c] sm:$0xf]
      %v5408 = vld [vmem:[%s3 + $0x20] sm:$0xf]
      %v5409 = vld [vmem:[%s3 + $0x24] sm:$0xf]
      %v5410 = vld [vmem:[%s3 + $0x28] sm:$0xf]
      %v5411 = vld [vmem:[%s3 + $0x2c] sm:$0xf]
      %v5412 = vld [vmem:[%s3 + $0x30] sm:$0xf]
      %v5413 = vld [vmem:[%s3 + $0x34] sm:$0xf]
      %v5414 = vld [vmem:[%s3 + $0x38] sm:$0xf]
      %v5415 = vld [vmem:[%s3 + $0x3c] sm:$0xf]
      %v5416 = vld [vmem:[#allocation2 + $0x18] sm:$0xff]
      %v5417 = vld [vmem:[#allocation2 + $0x20] sm:$0xff]
      %v5418 = vld [vmem:[#allocation2 + $0x28] sm:$0xff]
      %v5419 = vld [vmem:[#allocation2 + $0x30] sm:$0xff]
      %v5420 = vld [vmem:[#allocation2 + $0x38] sm:$0xff]
      %v5421 = vld [vmem:[#allocation2 + $0x40] sm:$0xff]
      %v5422 = vld [vmem:[#allocation2 + $0x48] sm:$0xff]
      %v5423 = vld [vmem:[#allocation2 + $0x50] sm:$0xff]
      %v5424 = vld [vmem:[#allocation2 + $0x58] sm:$0xff]
      %v5425 = vld [vmem:[#allocation2 + $0x60] sm:$0xff]
      %v5426 = vld [vmem:[#allocation2 + $0x68] sm:$0xff]
      %v5427 = vld [vmem:[#allocation2 + $0x70] sm:$0xff]
      %v5428 = vld [vmem:[#allocation2 + $0x78] sm:$0xff]
      %v5429 = vld [vmem:[#allocation2 + $0x80] sm:$0xff]
      %v5430 = vld [vmem:[#allocation2 + $0x88] sm:$0xff]
      %v5431 = vld [vmem:[#allocation2 + $0x90] sm:$0xff]
      %v5432 = vld [vmem:[#allocation2 + $0x98] sm:$0xff]
      %v5433 = vld [vmem:[#allocation2 + $0xa0] sm:$0xff]
      %v5434 = vld [vmem:[#allocation2 + $0xa8] sm:$0xff]
      %v5435 = vld [vmem:[#allocation2 + $0xb0] sm:$0xff]
      %v5436 = vld [vmem:[#allocation2 + $0xb8] sm:$0xff]
      %v5437 = vld [vmem:[#allocation2 + $0xc0] sm:$0xff]
      %v5438 = vld [vmem:[#allocation2 + $0xc8] sm:$0xff]
      %v5439 = vld [vmem:[#allocation2 + $0xd0] sm:$0xff]
      %v5440 = vld [vmem:[#allocation2 + $0xd8] sm:$0xff]
      %v5441 = vld [vmem:[#allocation2 + $0xe0] sm:$0xff]
      %v5442 = vld [vmem:[#allocation2 + $0xe8] sm:$0xff]
      %v5443 = vld [vmem:[#allocation2 + $0xf0] sm:$0xff]
      %v5444 = vld [vmem:[#allocation2 + $0xf8] sm:$0xff]
      %v5445 = vld [vmem:[#allocation2 + $0x100] sm:$0xff]
      %v5446 = vld [vmem:[#allocation2 + $0x108] sm:$0xff]
      %v5447 = vld [vmem:[#allocation2 + $0x110] sm:$0xff]
      %v5448 = vld [vmem:[#allocation2 + $0x118] sm:$0xff]
      %v5449 = vld [vmem:[#allocation2 + $0x120] sm:$0xff]
      %v5450 = vld [vmem:[#allocation2 + $0x128] sm:$0xff]
      %v5451 = vld [vmem:[#allocation2 + $0x130] sm:$0xff]
      %v5452 = vld [vmem:[#allocation2 + $0x138] sm:$0xff]
      %v5453 = vld [vmem:[#allocation2 + $0x140] sm:$0xff]
      %v5454 = vld [vmem:[#allocation2 + $0x148] sm:$0xff]
      %v5455 = vld [vmem:[#allocation2 + $0x150] sm:$0xff]
      %v5456 = vld [vmem:[#allocation2 + $0x158] sm:$0xff]
      %v5457 = vld [vmem:[#allocation2 + $0x160] sm:$0xff]
      %v5458 = vld [vmem:[#allocation2 + $0x168] sm:$0xff]
      %v5459 = vld [vmem:[#allocation2 + $0x170] sm:$0xff]
      %v5460 = vld [vmem:[#allocation2 + $0x178] sm:$0xff]
      %v5461 = vld [vmem:[#allocation2 + $0x180] sm:$0xff]
      %v5462 = vld [vmem:[#allocation2 + $0x188] sm:$0xff]
      %v5463 = vld [vmem:[#allocation2 + $0x190] sm:$0xff]
      %v5464 = vpack.c.bf16 %v5417, %v5416
      %v5465 = vpack.c.bf16 %v5419, %v5418
      %v5466 = vpack.c.bf16 %v5421, %v5420
      %v5467 = vpack.c.bf16 %v5423, %v5422
      %v5468 = vpack.c.bf16 %v5425, %v5424
      %v5469 = vpack.c.bf16 %v5427, %v5426
      %v5470 = vpack.c.bf16 %v5429, %v5428
      %v5471 = vpack.c.bf16 %v5431, %v5430
      %v5472 = vpack.c.bf16 %v5433, %v5432
      %v5473 = vpack.c.bf16 %v5435, %v5434
      %v5474 = vpack.c.bf16 %v5437, %v5436
      %v5475 = vpack.c.bf16 %v5439, %v5438
      %v5476 = vpack.c.bf16 %v5441, %v5440
      %v5477 = vpack.c.bf16 %v5443, %v5442
      %v5478 = vpack.c.bf16 %v5445, %v5444
      %v5479 = vpack.c.bf16 %v5447, %v5446
      %v5480 = vpack.c.bf16 %v5449, %v5448
      %v5481 = vpack.c.bf16 %v5451, %v5450
      %v5482 = vpack.c.bf16 %v5453, %v5452
      %v5483 = vpack.c.bf16 %v5455, %v5454
      %v5484 = vpack.c.bf16 %v5457, %v5456
      %v5485 = vpack.c.bf16 %v5459, %v5458
      %v5486 = vpack.c.bf16 %v5461, %v5460
      %v5487 = vpack.c.bf16 %v5463, %v5462
      %s5488 = scalar_lea.vmem %s3, 64
      %v5489 = vld [vmem:[%s5488] sm:$0xf]
      %v5490 = vld [vmem:[%s5488 + $0x4] sm:$0xf]
      %v5491 = vld [vmem:[%s5488 + $0x8] sm:$0xf]
      %v5492 = vld [vmem:[%s5488 + $0xc] sm:$0xf]
      %v5493 = vld [vmem:[%s5488 + $0x10] sm:$0xf]
      %v5494 = vld [vmem:[%s5488 + $0x14] sm:$0xf]
      %v5495 = vld [vmem:[%s5488 + $0x18] sm:$0xf]
      %v5496 = vld [vmem:[%s5488 + $0x1c] sm:$0xf]
      %v5497 = vld [vmem:[%s5488 + $0x20] sm:$0xf]
      %v5498 = vld [vmem:[%s5488 + $0x24] sm:$0xf]
      %v5499 = vld [vmem:[%s5488 + $0x28] sm:$0xf]
      %v5500 = vld [vmem:[%s5488 + $0x2c] sm:$0xf]
      %v5501 = vld [vmem:[%s5488 + $0x30] sm:$0xf]
      %v5502 = vld [vmem:[%s5488 + $0x34] sm:$0xf]
      %v5503 = vld [vmem:[%s5488 + $0x38] sm:$0xf]
      %v5504 = vld [vmem:[%s5488 + $0x3c] sm:$0xf]
      %v5521 = vunpack.c.l.b16 %v5489
      %v5522 = vunpack.c.l.b16 %v5490
      %v5523 = vunpack.c.l.b16 %v5491
      %v5524 = vunpack.c.l.b16 %v5492
      %v5525 = vunpack.c.l.b16 %v5493
      %v5526 = vunpack.c.l.b16 %v5494
      %v5527 = vunpack.c.l.b16 %v5495
      %v5528 = vunpack.c.l.b16 %v5496
      %v5529 = vunpack.c.l.b16 %v5497
      %v5530 = vunpack.c.l.b16 %v5498
      %v5531 = vunpack.c.l.b16 %v5499
      %v5532 = vunpack.c.l.b16 %v5500
      %v5533 = vunpack.c.l.b16 %v5501
      %v5534 = vunpack.c.l.b16 %v5502
      %v5535 = vunpack.c.l.b16 %v5503
      %v5536 = vunpack.c.l.b16 %v5504
      %v5537 = vpack.c.b16 %v5522, %v5521
      %v5538 = vpack.c.b16 %v5524, %v5523
      %v5539 = vpack.c.b16 %v5526, %v5525
      %v5540 = vpack.c.b16 %v5528, %v5527
      %v5541 = vpack.c.b16 %v5530, %v5529
      %v5542 = vpack.c.b16 %v5532, %v5531
      %v5543 = vpack.c.b16 %v5534, %v5533
      %v5544 = vpack.c.b16 %v5536, %v5535
      %5553 = vmatprep.subr.bf16.mxu0 0
      %5554 = vmatpush1.bf16.msra.mxu0 %v5537
      %5555 = vmatprep.subr.bf16.mxu0 0
      %5556 = vmatpush1.bf16.msra.mxu0 %v5538
      %5557 = vmatprep.subr.bf16.mxu0 0
      %5558 = vmatpush1.bf16.msra.mxu0 %v5539
      %5559 = vmatprep.subr.bf16.mxu0 0
      %5560 = vmatpush1.bf16.msra.mxu0 %v5540
      %5561 = vmatprep.subr.bf16.mxu0 0
      %5562 = vmatpush1.bf16.msra.mxu0 %v5541
      %5563 = vmatprep.subr.bf16.mxu0 0
      %5564 = vmatpush1.bf16.msra.mxu0 %v5542
      %5565 = vmatprep.subr.bf16.mxu0 0
      %5566 = vmatpush1.bf16.msra.mxu0 %v5543
      %5567 = vmatprep.subr.bf16.mxu0 0
      %5568 = vmatpush1.bf16.msra.mxu0 %v5544
      %5569 = vmatprep.subr.bf16.mxu0 0
      %5570 = vmatpush1.bf16.msra.mxu0 0
      %5571 = vmatprep.subr.bf16.mxu0 0
      %5572 = vmatpush1.bf16.msra.mxu0 0
      %5573 = vmatprep.subr.bf16.mxu0 0
      %5574 = vmatpush1.bf16.msra.mxu0 0
      %5575 = vmatprep.subr.bf16.mxu0 0
      %5576 = vmatpush1.bf16.msra.mxu0 0
      %5577 = vmatprep.subr.bf16.mxu0 0
      %5578 = vmatpush1.bf16.msra.mxu0 0
      %5579 = vmatprep.subr.bf16.mxu0 0
      %5580 = vmatpush1.bf16.msra.mxu0 0
      %5581 = vmatprep.subr.bf16.mxu0 0
      %5582 = vmatpush1.bf16.msra.mxu0 0
      %5583 = vmatprep.subr.bf16.mxu0 0
      %5584 = vmatpush1.bf16.msra.mxu0 0
      %5585 = vmatprep.mubr.bf16.mxu0 0
      %5586 = vmatmul.mubr.bf16.gmra.mrb[0].mxu0 %v5464
      %v5587 = vpop.f32.mrb[0].mxu0
      %v5588 = vadd.f32 0.0, %v5587
      %v5589 = vpop.f32.mrb[0].mxu0
      %v5590 = vpop.f32.mrb[0].mxu0
      %v5591 = vadd.f32 0.0, %v5590
      %v5592 = vpop.f32.mrb[0].mxu0
      %5593 = vmatprep.mubr.bf16.mxu0 0
      %5594 = vmatmul.mubr.bf16.gmra.mrb[0].mxu0 %v5465
      %v5595 = vpop.f32.mrb[0].mxu0
      %v5596 = vadd.f32 0.0, %v5595
      %v5597 = vpop.f32.mrb[0].mxu0
      %v5598 = vpop.f32.mrb[0].mxu0
      %v5599 = vadd.f32 0.0, %v5598
      %v5600 = vpop.f32.mrb[0].mxu0
      %5601 = vmatprep.mubr.bf16.mxu0 0
      %5602 = vmatmul.mubr.bf16.gmra.mrb[0].mxu0 %v5466
      %v5603 = vpop.f32.mrb[0].mxu0
      %v5604 = vadd.f32 0.0, %v5603
      %v5605 = vpop.f32.mrb[0].mxu0
      %v5606 = vpop.f32.mrb[0].mxu0
      %v5607 = vadd.f32 0.0, %v5606
      %v5608 = vpop.f32.mrb[0].mxu0
      %5609 = vmatprep.mubr.bf16.mxu0 0
      %5610 = vmatmul.mubr.bf16.gmra.mrb[0].mxu0 %v5467
      %v5611 = vpop.f32.mrb[0].mxu0
      %v5612 = vadd.f32 0.0, %v5611
      %v5613 = vpop.f32.mrb[0].mxu0
      %v5614 = vpop.f32.mrb[0].mxu0
      %v5615 = vadd.f32 0.0, %v5614
      %v5616 = vpop.f32.mrb[0].mxu0
      %5617 = vmatprep.mubr.bf16.mxu0 0
      %5618 = vmatmul.mubr.bf16.gmra.mrb[0].mxu0 %v5468
      %v5619 = vpop.f32.mrb[0].mxu0
      %v5620 = vadd.f32 0.0, %v5619
      %v5621 = vpop.f32.mrb[0].mxu0
      %v5622 = vpop.f32.mrb[0].mxu0
      %v5623 = vadd.f32 0.0, %v5622
      %v5624 = vpop.f32.mrb[0].mxu0
      %5625 = vmatprep.mubr.bf16.mxu0 0
      %5626 = vmatmul.mubr.bf16.gmra.mrb[0].mxu0 %v5469
      %v5627 = vpop.f32.mrb[0].mxu0
      %v5628 = vadd.f32 0.0, %v5627
      %v5629 = vpop.f32.mrb[0].mxu0
      %v5630 = vpop.f32.mrb[0].mxu0
      %v5631 = vadd.f32 0.0, %v5630
      %v5632 = vpop.f32.mrb[0].mxu0
      %5633 = vmatprep.mubr.bf16.mxu0 0
      %5634 = vmatmul.mubr.bf16.gmra.mrb[0].mxu0 %v5470
      %v5635 = vpop.f32.mrb[0].mxu0
      %v5636 = vadd.f32 0.0, %v5635
      %v5637 = vpop.f32.mrb[0].mxu0
      %v5638 = vpop.f32.mrb[0].mxu0
      %v5639 = vadd.f32 0.0, %v5638
      %v5640 = vpop.f32.mrb[0].mxu0
      %5641 = vmatprep.mubr.bf16.mxu0 0
      %5642 = vmatmul.mubr.bf16.gmra.mrb[0].mxu0 %v5471
      %v5643 = vpop.f32.mrb[0].mxu0
      %v5644 = vadd.f32 0.0, %v5643
      %v5645 = vpop.f32.mrb[0].mxu0
      %v5646 = vpop.f32.mrb[0].mxu0
      %v5647 = vadd.f32 0.0, %v5646
      %v5648 = vpop.f32.mrb[0].mxu0
      %5649 = vmatprep.mubr.bf16.mxu0 0
      %5650 = vmatmul.mubr.bf16.gmra.mrb[0].mxu0 %v5472
      %v5651 = vpop.f32.mrb[0].mxu0
      %v5652 = vadd.f32 0.0, %v5651
      %v5653 = vpop.f32.mrb[0].mxu0
      %v5654 = vpop.f32.mrb[0].mxu0
      %v5655 = vadd.f32 0.0, %v5654
      %v5656 = vpop.f32.mrb[0].mxu0
      %5657 = vmatprep.mubr.bf16.mxu0 0
      %5658 = vmatmul.mubr.bf16.gmra.mrb[0].mxu0 %v5473
      %v5659 = vpop.f32.mrb[0].mxu0
      %v5660 = vadd.f32 0.0, %v5659
      %v5661 = vpop.f32.mrb[0].mxu0
      %v5662 = vpop.f32.mrb[0].mxu0
      %v5663 = vadd.f32 0.0, %v5662
      %v5664 = vpop.f32.mrb[0].mxu0
      %5665 = vmatprep.mubr.bf16.mxu0 0
      %5666 = vmatmul.mubr.bf16.gmra.mrb[0].mxu0 %v5474
      %v5667 = vpop.f32.mrb[0].mxu0
      %v5668 = vadd.f32 0.0, %v5667
      %v5669 = vpop.f32.mrb[0].mxu0
      %v5670 = vpop.f32.mrb[0].mxu0
      %v5671 = vadd.f32 0.0, %v5670
      %v5672 = vpop.f32.mrb[0].mxu0
      %5673 = vmatprep.mubr.bf16.mxu0 0
      %5674 = vmatmul.mubr.bf16.gmra.mrb[0].mxu0 %v5475
      %v5675 = vpop.f32.mrb[0].mxu0
      %v5676 = vadd.f32 0.0, %v5675
      %v5677 = vpop.f32.mrb[0].mxu0
      %v5678 = vpop.f32.mrb[0].mxu0
      %v5679 = vadd.f32 0.0, %v5678
      %v5680 = vpop.f32.mrb[0].mxu0
      %5681 = vmatprep.mubr.bf16.mxu0 0
      %5682 = vmatmul.mubr.bf16.gmra.mrb[0].mxu0 %v5476
      %v5683 = vpop.f32.mrb[0].mxu0
      %v5684 = vadd.f32 0.0, %v5683
      %v5685 = vpop.f32.mrb[0].mxu0
      %v5686 = vpop.f32.mrb[0].mxu0
      %v5687 = vadd.f32 0.0, %v5686
      %v5688 = vpop.f32.mrb[0].mxu0
      %5689 = vmatprep.mubr.bf16.mxu0 0
      %5690 = vmatmul.mubr.bf16.gmra.mrb[0].mxu0 %v5477
      %v5691 = vpop.f32.mrb[0].mxu0
      %v5692 = vadd.f32 0.0, %v5691
      %v5693 = vpop.f32.mrb[0].mxu0
      %v5694 = vpop.f32.mrb[0].mxu0
      %v5695 = vadd.f32 0.0, %v5694
      %v5696 = vpop.f32.mrb[0].mxu0
      %5697 = vmatprep.mubr.bf16.mxu0 0
      %5698 = vmatmul.mubr.bf16.gmra.mrb[0].mxu0 %v5478
      %v5699 = vpop.f32.mrb[0].mxu0
      %v5700 = vadd.f32 0.0, %v5699
      %v5701 = vpop.f32.mrb[0].mxu0
      %v5702 = vpop.f32.mrb[0].mxu0
      %v5703 = vadd.f32 0.0, %v5702
      %v5704 = vpop.f32.mrb[0].mxu0
      %5705 = vmatprep.mubr.bf16.mxu0 0
      %5706 = vmatmul.mubr.bf16.gmra.mrb[0].mxu0 %v5479
      %v5707 = vpop.f32.mrb[0].mxu0
      %v5708 = vadd.f32 0.0, %v5707
      %v5709 = vpop.f32.mrb[0].mxu0
      %v5710 = vpop.f32.mrb[0].mxu0
      %v5711 = vadd.f32 0.0, %v5710
      %v5712 = vpop.f32.mrb[0].mxu0
      %5713 = vmatprep.mubr.bf16.mxu0 0
      %5714 = vmatmul.mubr.bf16.gmra.mrb[0].mxu0 %v5480
      %v5715 = vpop.f32.mrb[0].mxu0
      %v5716 = vadd.f32 0.0, %v5715
      %v5717 = vpop.f32.mrb[0].mxu0
      %v5718 = vpop.f32.mrb[0].mxu0
      %v5719 = vadd.f32 0.0, %v5718
      %v5720 = vpop.f32.mrb[0].mxu0
      %5721 = vmatprep.mubr.bf16.mxu0 0
      %5722 = vmatmul.mubr.bf16.gmra.mrb[0].mxu0 %v5481
      %v5723 = vpop.f32.mrb[0].mxu0
      %v5724 = vadd.f32 0.0, %v5723
      %v5725 = vpop.f32.mrb[0].mxu0
      %v5726 = vpop.f32.mrb[0].mxu0
      %v5727 = vadd.f32 0.0, %v5726
      %v5728 = vpop.f32.mrb[0].mxu0
      %5729 = vmatprep.mubr.bf16.mxu0 0
      %5730 = vmatmul.mubr.bf16.gmra.mrb[0].mxu0 %v5482
      %v5731 = vpop.f32.mrb[0].mxu0
      %v5732 = vadd.f32 0.0, %v5731
      %v5733 = vpop.f32.mrb[0].mxu0
      %v5734 = vpop.f32.mrb[0].mxu0
      %v5735 = vadd.f32 0.0, %v5734
      %v5736 = vpop.f32.mrb[0].mxu0
      %5737 = vmatprep.mubr.bf16.mxu0 0
      %5738 = vmatmul.mubr.bf16.gmra.mrb[0].mxu0 %v5483
      %v5739 = vpop.f32.mrb[0].mxu0
      %v5740 = vadd.f32 0.0, %v5739
      %v5741 = vpop.f32.mrb[0].mxu0
      %v5742 = vpop.f32.mrb[0].mxu0
      %v5743 = vadd.f32 0.0, %v5742
      %v5744 = vpop.f32.mrb[0].mxu0
      %5745 = vmatprep.mubr.bf16.mxu0 0
      %5746 = vmatmul.mubr.bf16.gmra.mrb[0].mxu0 %v5484
      %v5747 = vpop.f32.mrb[0].mxu0
      %v5748 = vadd.f32 0.0, %v5747
      %v5749 = vpop.f32.mrb[0].mxu0
      %v5750 = vpop.f32.mrb[0].mxu0
      %v5751 = vadd.f32 0.0, %v5750
      %v5752 = vpop.f32.mrb[0].mxu0
      %5753 = vmatprep.mubr.bf16.mxu0 0
      %5754 = vmatmul.mubr.bf16.gmra.mrb[0].mxu0 %v5485
      %v5755 = vpop.f32.mrb[0].mxu0
      %v5756 = vadd.f32 0.0, %v5755
      %v5757 = vpop.f32.mrb[0].mxu0
      %v5758 = vpop.f32.mrb[0].mxu0
      %v5759 = vadd.f32 0.0, %v5758
      %v5760 = vpop.f32.mrb[0].mxu0
      %5761 = vmatprep.mubr.bf16.mxu0 0
      %5762 = vmatmul.mubr.bf16.gmra.mrb[0].mxu0 %v5486
      %v5763 = vpop.f32.mrb[0].mxu0
      %v5764 = vadd.f32 0.0, %v5763
      %v5765 = vpop.f32.mrb[0].mxu0
      %v5766 = vpop.f32.mrb[0].mxu0
      %v5767 = vadd.f32 0.0, %v5766
      %v5768 = vpop.f32.mrb[0].mxu0
      %5769 = vmatprep.mubr.bf16.mxu0 0
      %5770 = vmatmul.mubr.bf16.gmra.mrb[0].mxu0 %v5487
      %v5771 = vpop.f32.mrb[0].mxu0
      %v5772 = vadd.f32 0.0, %v5771
      %v5773 = vpop.f32.mrb[0].mxu0
      %v5774 = vpop.f32.mrb[0].mxu0
      %v5775 = vadd.f32 0.0, %v5774
      %v5776 = vpop.f32.mrb[0].mxu0
      %5777 = vdwg.mxu0
      %v5794 = vunpack.c.l.b16 %v5400
      %v5795 = vunpack.c.l.b16 %v5401
      %v5796 = vunpack.c.l.b16 %v5402
      %v5797 = vunpack.c.l.b16 %v5403
      %v5798 = vunpack.c.l.b16 %v5404
      %v5799 = vunpack.c.l.b16 %v5405
      %v5800 = vunpack.c.l.b16 %v5406
      %v5801 = vunpack.c.l.b16 %v5407
      %v5802 = vunpack.c.l.b16 %v5408
      %v5803 = vunpack.c.l.b16 %v5409
      %v5804 = vunpack.c.l.b16 %v5410
      %v5805 = vunpack.c.l.b16 %v5411
      %v5806 = vunpack.c.l.b16 %v5412
      %v5807 = vunpack.c.l.b16 %v5413
      %v5808 = vunpack.c.l.b16 %v5414
      %v5809 = vunpack.c.l.b16 %v5415
      %v5810 = vpack.c.b16 %v5795, %v5794
      %v5811 = vpack.c.b16 %v5797, %v5796
      %v5812 = vpack.c.b16 %v5799, %v5798
      %v5813 = vpack.c.b16 %v5801, %v5800
      %v5814 = vpack.c.b16 %v5803, %v5802
      %v5815 = vpack.c.b16 %v5805, %v5804
      %v5816 = vpack.c.b16 %v5807, %v5806
      %v5817 = vpack.c.b16 %v5809, %v5808
      %5826 = vmatprep.subr.bf16.mxu0 0
      %5827 = vmatpush1.bf16.msra.mxu0 %v5810
      %5828 = vmatprep.subr.bf16.mxu0 0
      %5829 = vmatpush1.bf16.msra.mxu0 %v5811
      %5830 = vmatprep.subr.bf16.mxu0 0
      %5831 = vmatpush1.bf16.msra.mxu0 %v5812
      %5832 = vmatprep.subr.bf16.mxu0 0
      %5833 = vmatpush1.bf16.msra.mxu0 %v5813
      %5834 = vmatprep.subr.bf16.mxu0 0
      %5835 = vmatpush1.bf16.msra.mxu0 %v5814
      %5836 = vmatprep.subr.bf16.mxu0 0
      %5837 = vmatpush1.bf16.msra.mxu0 %v5815
      %5838 = vmatprep.subr.bf16.mxu0 0
      %5839 = vmatpush1.bf16.msra.mxu0 %v5816
      %5840 = vmatprep.subr.bf16.mxu0 0
      %5841 = vmatpush1.bf16.msra.mxu0 %v5817
      %5842 = vmatprep.subr.bf16.mxu0 0
      %5843 = vmatpush1.bf16.msra.mxu0 0
      %5844 = vmatprep.subr.bf16.mxu0 0
      %5845 = vmatpush1.bf16.msra.mxu0 0
      %5846 = vmatprep.subr.bf16.mxu0 0
      %5847 = vmatpush1.bf16.msra.mxu0 0
      %5848 = vmatprep.subr.bf16.mxu0 0
      %5849 = vmatpush1.bf16.msra.mxu0 0
      %5850 = vmatprep.subr.bf16.mxu0 0
      %5851 = vmatpush1.bf16.msra.mxu0 0
      %5852 = vmatprep.subr.bf16.mxu0 0
      %5853 = vmatpush1.bf16.msra.mxu0 0
      %5854 = vmatprep.subr.bf16.mxu0 0
      %5855 = vmatpush1.bf16.msra.mxu0 0
      %5856 = vmatprep.subr.bf16.mxu0 0
      %5857 = vmatpush1.bf16.msra.mxu0 0
      %5858 = vmatprep.mubr.bf16.mxu0 0
      %5859 = vmatmul.mubr.bf16.gmra.mrb[0].mxu0 %v5376
      %v5860 = vpop.f32.mrb[0].mxu0
      %v5861 = vadd.f32 %v5588, %v5860
      %v5862 = vpop.f32.mrb[0].mxu0
      %v5863 = vpop.f32.mrb[0].mxu0
      %v5864 = vadd.f32 %v5591, %v5863
      %v5865 = vpop.f32.mrb[0].mxu0
      %5866 = vmatprep.mubr.bf16.mxu0 0
      %5867 = vmatmul.mubr.bf16.gmra.mrb[0].mxu0 %v5377
      %v5868 = vpop.f32.mrb[0].mxu0
      %v5869 = vadd.f32 %v5596, %v5868
      %v5870 = vpop.f32.mrb[0].mxu0
      %v5871 = vpop.f32.mrb[0].mxu0
      %v5872 = vadd.f32 %v5599, %v5871
      %v5873 = vpop.f32.mrb[0].mxu0
      %5874 = vmatprep.mubr.bf16.mxu0 0
      %5875 = vmatmul.mubr.bf16.gmra.mrb[0].mxu0 %v5378
      %v5876 = vpop.f32.mrb[0].mxu0
      %v5877 = vadd.f32 %v5604, %v5876
      %v5878 = vpop.f32.mrb[0].mxu0
      %v5879 = vpop.f32.mrb[0].mxu0
      %v5880 = vadd.f32 %v5607, %v5879
      %v5881 = vpop.f32.mrb[0].mxu0
      %5882 = vmatprep.mubr.bf16.mxu0 0
      %5883 = vmatmul.mubr.bf16.gmra.mrb[0].mxu0 %v5379
      %v5884 = vpop.f32.mrb[0].mxu0
      %v5885 = vadd.f32 %v5612, %v5884
      %v5886 = vpop.f32.mrb[0].mxu0
      %v5887 = vpop.f32.mrb[0].mxu0
      %v5888 = vadd.f32 %v5615, %v5887
      %v5889 = vpop.f32.mrb[0].mxu0
      %5890 = vmatprep.mubr.bf16.mxu0 0
      %5891 = vmatmul.mubr.bf16.gmra.mrb[0].mxu0 %v5380
      %v5892 = vpop.f32.mrb[0].mxu0
      %v5893 = vadd.f32 %v5620, %v5892
      %v5894 = vpop.f32.mrb[0].mxu0
      %v5895 = vpop.f32.mrb[0].mxu0
      %v5896 = vadd.f32 %v5623, %v5895
      %v5897 = vpop.f32.mrb[0].mxu0
      %5898 = vmatprep.mubr.bf16.mxu0 0
      %5899 = vmatmul.mubr.bf16.gmra.mrb[0].mxu0 %v5381
      %v5900 = vpop.f32.mrb[0].mxu0
      %v5901 = vadd.f32 %v5628, %v5900
      %v5902 = vpop.f32.mrb[0].mxu0
      %v5903 = vpop.f32.mrb[0].mxu0
      %v5904 = vadd.f32 %v5631, %v5903
      %v5905 = vpop.f32.mrb[0].mxu0
      %5906 = vmatprep.mubr.bf16.mxu0 0
      %5907 = vmatmul.mubr.bf16.gmra.mrb[0].mxu0 %v5382
      %v5908 = vpop.f32.mrb[0].mxu0
      %v5909 = vadd.f32 %v5636, %v5908
      %v5910 = vpop.f32.mrb[0].mxu0
      %v5911 = vpop.f32.mrb[0].mxu0
      %v5912 = vadd.f32 %v5639, %v5911
      %v5913 = vpop.f32.mrb[0].mxu0
      %5914 = vmatprep.mubr.bf16.mxu0 0
      %5915 = vmatmul.mubr.bf16.gmra.mrb[0].mxu0 %v5383
      %v5916 = vpop.f32.mrb[0].mxu0
      %v5917 = vadd.f32 %v5644, %v5916
      %v5918 = vpop.f32.mrb[0].mxu0
      %v5919 = vpop.f32.mrb[0].mxu0
      %v5920 = vadd.f32 %v5647, %v5919
      %v5921 = vpop.f32.mrb[0].mxu0
      %5922 = vmatprep.mubr.bf16.mxu0 0
      %5923 = vmatmul.mubr.bf16.gmra.mrb[0].mxu0 %v5384
      %v5924 = vpop.f32.mrb[0].mxu0
      %v5925 = vadd.f32 %v5652, %v5924
      %v5926 = vpop.f32.mrb[0].mxu0
      %v5927 = vpop.f32.mrb[0].mxu0
      %v5928 = vadd.f32 %v5655, %v5927
      %v5929 = vpop.f32.mrb[0].mxu0
      %5930 = vmatprep.mubr.bf16.mxu0 0
      %5931 = vmatmul.mubr.bf16.gmra.mrb[0].mxu0 %v5385
      %v5932 = vpop.f32.mrb[0].mxu0
      %v5933 = vadd.f32 %v5660, %v5932
      %v5934 = vpop.f32.mrb[0].mxu0
      %v5935 = vpop.f32.mrb[0].mxu0
      %v5936 = vadd.f32 %v5663, %v5935
      %v5937 = vpop.f32.mrb[0].mxu0
      %5938 = vmatprep.mubr.bf16.mxu0 0
      %5939 = vmatmul.mubr.bf16.gmra.mrb[0].mxu0 %v5386
      %v5940 = vpop.f32.mrb[0].mxu0
      %v5941 = vadd.f32 %v5668, %v5940
      %v5942 = vpop.f32.mrb[0].mxu0
      %v5943 = vpop.f32.mrb[0].mxu0
      %v5944 = vadd.f32 %v5671, %v5943
      %v5945 = vpop.f32.mrb[0].mxu0
      %5946 = vmatprep.mubr.bf16.mxu0 0
      %5947 = vmatmul.mubr.bf16.gmra.mrb[0].mxu0 %v5387
      %v5948 = vpop.f32.mrb[0].mxu0
      %v5949 = vadd.f32 %v5676, %v5948
      %v5950 = vpop.f32.mrb[0].mxu0
      %v5951 = vpop.f32.mrb[0].mxu0
      %v5952 = vadd.f32 %v5679, %v5951
      %v5953 = vpop.f32.mrb[0].mxu0
      %5954 = vmatprep.mubr.bf16.mxu0 0
      %5955 = vmatmul.mubr.bf16.gmra.mrb[0].mxu0 %v5388
      %v5956 = vpop.f32.mrb[0].mxu0
      %v5957 = vadd.f32 %v5684, %v5956
      %v5958 = vpop.f32.mrb[0].mxu0
      %v5959 = vpop.f32.mrb[0].mxu0
      %v5960 = vadd.f32 %v5687, %v5959
      %v5961 = vpop.f32.mrb[0].mxu0
      %5962 = vmatprep.mubr.bf16.mxu0 0
      %5963 = vmatmul.mubr.bf16.gmra.mrb[0].mxu0 %v5389
      %v5964 = vpop.f32.mrb[0].mxu0
      %v5965 = vadd.f32 %v5692, %v5964
      %v5966 = vpop.f32.mrb[0].mxu0
      %v5967 = vpop.f32.mrb[0].mxu0
      %v5968 = vadd.f32 %v5695, %v5967
      %v5969 = vpop.f32.mrb[0].mxu0
      %5970 = vmatprep.mubr.bf16.mxu0 0
      %5971 = vmatmul.mubr.bf16.gmra.mrb[0].mxu0 %v5390
      %v5972 = vpop.f32.mrb[0].mxu0
      %v5973 = vadd.f32 %v5700, %v5972
      %v5974 = vpop.f32.mrb[0].mxu0
      %v5975 = vpop.f32.mrb[0].mxu0
      %v5976 = vadd.f32 %v5703, %v5975
      %v5977 = vpop.f32.mrb[0].mxu0
      %5978 = vmatprep.mubr.bf16.mxu0 0
      %5979 = vmatmul.mubr.bf16.gmra.mrb[0].mxu0 %v5391
      %v5980 = vpop.f32.mrb[0].mxu0
      %v5981 = vadd.f32 %v5708, %v5980
      %v5982 = vpop.f32.mrb[0].mxu0
      %v5983 = vpop.f32.mrb[0].mxu0
      %v5984 = vadd.f32 %v5711, %v5983
      %v5985 = vpop.f32.mrb[0].mxu0
      %5986 = vmatprep.mubr.bf16.mxu0 0
      %5987 = vmatmul.mubr.bf16.gmra.mrb[0].mxu0 %v5392
      %v5988 = vpop.f32.mrb[0].mxu0
      %v5989 = vadd.f32 %v5716, %v5988
      %v5990 = vpop.f32.mrb[0].mxu0
      %v5991 = vpop.f32.mrb[0].mxu0
      %v5992 = vadd.f32 %v5719, %v5991
      %v5993 = vpop.f32.mrb[0].mxu0
      %5994 = vmatprep.mubr.bf16.mxu0 0
      %5995 = vmatmul.mubr.bf16.gmra.mrb[0].mxu0 %v5393
      %v5996 = vpop.f32.mrb[0].mxu0
      %v5997 = vadd.f32 %v5724, %v5996
      %v5998 = vpop.f32.mrb[0].mxu0
      %v5999 = vpop.f32.mrb[0].mxu0
      %v6000 = vadd.f32 %v5727, %v5999
      %v6001 = vpop.f32.mrb[0].mxu0
      %6002 = vmatprep.mubr.bf16.mxu0 0
      %6003 = vmatmul.mubr.bf16.gmra.mrb[0].mxu0 %v5394
      %v6004 = vpop.f32.mrb[0].mxu0
      %v6005 = vadd.f32 %v5732, %v6004
      %v6006 = vpop.f32.mrb[0].mxu0
      %v6007 = vpop.f32.mrb[0].mxu0
      %v6008 = vadd.f32 %v5735, %v6007
      %v6009 = vpop.f32.mrb[0].mxu0
      %6010 = vmatprep.mubr.bf16.mxu0 0
      %6011 = vmatmul.mubr.bf16.gmra.mrb[0].mxu0 %v5395
      %v6012 = vpop.f32.mrb[0].mxu0
      %v6013 = vadd.f32 %v5740, %v6012
      %v6014 = vpop.f32.mrb[0].mxu0
      %v6015 = vpop.f32.mrb[0].mxu0
      %v6016 = vadd.f32 %v5743, %v6015
      %v6017 = vpop.f32.mrb[0].mxu0
      %6018 = vmatprep.mubr.bf16.mxu0 0
      %6019 = vmatmul.mubr.bf16.gmra.mrb[0].mxu0 %v5396
      %v6020 = vpop.f32.mrb[0].mxu0
      %v6021 = vadd.f32 %v5748, %v6020
      %v6022 = vpop.f32.mrb[0].mxu0
      %v6023 = vpop.f32.mrb[0].mxu0
      %v6024 = vadd.f32 %v5751, %v6023
      %v6025 = vpop.f32.mrb[0].mxu0
      %6026 = vmatprep.mubr.bf16.mxu0 0
      %6027 = vmatmul.mubr.bf16.gmra.mrb[0].mxu0 %v5397
      %v6028 = vpop.f32.mrb[0].mxu0
      %v6029 = vadd.f32 %v5756, %v6028
      %v6030 = vpop.f32.mrb[0].mxu0
      %v6031 = vpop.f32.mrb[0].mxu0
      %v6032 = vadd.f32 %v5759, %v6031
      %v6033 = vpop.f32.mrb[0].mxu0
      %6034 = vmatprep.mubr.bf16.mxu0 0
      %6035 = vmatmul.mubr.bf16.gmra.mrb[0].mxu0 %v5398
      %v6036 = vpop.f32.mrb[0].mxu0
      %v6037 = vadd.f32 %v5764, %v6036
      %v6038 = vpop.f32.mrb[0].mxu0
      %v6039 = vpop.f32.mrb[0].mxu0
      %v6040 = vadd.f32 %v5767, %v6039
      %v6041 = vpop.f32.mrb[0].mxu0
      %6042 = vmatprep.mubr.bf16.mxu0 0
      %6043 = vmatmul.mubr.bf16.gmra.mrb[0].mxu0 %v5399
      %v6044 = vpop.f32.mrb[0].mxu0
      %v6045 = vadd.f32 %v5772, %v6044
      %v6046 = vpop.f32.mrb[0].mxu0
      %v6047 = vpop.f32.mrb[0].mxu0
      %v6048 = vadd.f32 %v5775, %v6047
      %v6049 = vpop.f32.mrb[0].mxu0
      %6050 = vdwg.mxu0
      %v6051 = vld [vmem:[#allocation2 + $0x19] sm:$0xff]
      %v6052 = vld [vmem:[#allocation2 + $0x21] sm:$0xff]
      %v6053 = vld [vmem:[#allocation2 + $0x29] sm:$0xff]
      %v6054 = vld [vmem:[#allocation2 + $0x31] sm:$0xff]
      %v6055 = vld [vmem:[#allocation2 + $0x39] sm:$0xff]
      %v6056 = vld [vmem:[#allocation2 + $0x41] sm:$0xff]
      %v6057 = vld [vmem:[#allocation2 + $0x49] sm:$0xff]
      %v6058 = vld [vmem:[#allocation2 + $0x51] sm:$0xff]
      %v6059 = vld [vmem:[#allocation2 + $0x59] sm:$0xff]
      %v6060 = vld [vmem:[#allocation2 + $0x61] sm:$0xff]
      %v6061 = vld [vmem:[#allocation2 + $0x69] sm:$0xff]
      %v6062 = vld [vmem:[#allocation2 + $0x71] sm:$0xff]
      %v6063 = vld [vmem:[#allocation2 + $0x79] sm:$0xff]
      %v6064 = vld [vmem:[#allocation2 + $0x81] sm:$0xff]
      %v6065 = vld [vmem:[#allocation2 + $0x89] sm:$0xff]
      %v6066 = vld [vmem:[#allocation2 + $0x91] sm:$0xff]
      %v6067 = vld [vmem:[#allocation2 + $0x99] sm:$0xff]
      %v6068 = vld [vmem:[#allocation2 + $0xa1] sm:$0xff]
      %v6069 = vld [vmem:[#allocation2 + $0xa9] sm:$0xff]
      %v6070 = vld [vmem:[#allocation2 + $0xb1] sm:$0xff]
      %v6071 = vld [vmem:[#allocation2 + $0xb9] sm:$0xff]
      %v6072 = vld [vmem:[#allocation2 + $0xc1] sm:$0xff]
      %v6073 = vld [vmem:[#allocation2 + $0xc9] sm:$0xff]
      %v6074 = vld [vmem:[#allocation2 + $0xd1] sm:$0xff]
      %v6075 = vld [vmem:[#allocation2 + $0xd9] sm:$0xff]
      %v6076 = vld [vmem:[#allocation2 + $0xe1] sm:$0xff]
      %v6077 = vld [vmem:[#allocation2 + $0xe9] sm:$0xff]
      %v6078 = vld [vmem:[#allocation2 + $0xf1] sm:$0xff]
      %v6079 = vld [vmem:[#allocation2 + $0xf9] sm:$0xff]
      %v6080 = vld [vmem:[#allocation2 + $0x101] sm:$0xff]
      %v6081 = vld [vmem:[#allocation2 + $0x109] sm:$0xff]
      %v6082 = vld [vmem:[#allocation2 + $0x111] sm:$0xff]
      %v6083 = vld [vmem:[#allocation2 + $0x119] sm:$0xff]
      %v6084 = vld [vmem:[#allocation2 + $0x121] sm:$0xff]
      %v6085 = vld [vmem:[#allocation2 + $0x129] sm:$0xff]
      %v6086 = vld [vmem:[#allocation2 + $0x131] sm:$0xff]
      %v6087 = vld [vmem:[#allocation2 + $0x139] sm:$0xff]
      %v6088 = vld [vmem:[#allocation2 + $0x141] sm:$0xff]
      %v6089 = vld [vmem:[#allocation2 + $0x149] sm:$0xff]
      %v6090 = vld [vmem:[#allocation2 + $0x151] sm:$0xff]
      %v6091 = vld [vmem:[#allocation2 + $0x159] sm:$0xff]
      %v6092 = vld [vmem:[#allocation2 + $0x161] sm:$0xff]
      %v6093 = vld [vmem:[#allocation2 + $0x169] sm:$0xff]
      %v6094 = vld [vmem:[#allocation2 + $0x171] sm:$0xff]
      %v6095 = vld [vmem:[#allocation2 + $0x179] sm:$0xff]
      %v6096 = vld [vmem:[#allocation2 + $0x181] sm:$0xff]
      %v6097 = vld [vmem:[#allocation2 + $0x189] sm:$0xff]
      %v6098 = vld [vmem:[#allocation2 + $0x191] sm:$0xff]
      %v6099 = vpack.c.bf16 %v6052, %v6051
      %v6100 = vpack.c.bf16 %v6054, %v6053
      %v6101 = vpack.c.bf16 %v6056, %v6055
      %v6102 = vpack.c.bf16 %v6058, %v6057
      %v6103 = vpack.c.bf16 %v6060, %v6059
      %v6104 = vpack.c.bf16 %v6062, %v6061
      %v6105 = vpack.c.bf16 %v6064, %v6063
      %v6106 = vpack.c.bf16 %v6066, %v6065
      %v6107 = vpack.c.bf16 %v6068, %v6067
      %v6108 = vpack.c.bf16 %v6070, %v6069
      %v6109 = vpack.c.bf16 %v6072, %v6071
      %v6110 = vpack.c.bf16 %v6074, %v6073
      %v6111 = vpack.c.bf16 %v6076, %v6075
      %v6112 = vpack.c.bf16 %v6078, %v6077
      %v6113 = vpack.c.bf16 %v6080, %v6079
      %v6114 = vpack.c.bf16 %v6082, %v6081
      %v6115 = vpack.c.bf16 %v6084, %v6083
      %v6116 = vpack.c.bf16 %v6086, %v6085
      %v6117 = vpack.c.bf16 %v6088, %v6087
      %v6118 = vpack.c.bf16 %v6090, %v6089
      %v6119 = vpack.c.bf16 %v6092, %v6091
      %v6120 = vpack.c.bf16 %v6094, %v6093
      %v6121 = vpack.c.bf16 %v6096, %v6095
      %v6122 = vpack.c.bf16 %v6098, %v6097
      %s6123 = scalar_lea.vmem %s3, 128
      %v6124 = vld [vmem:[%s6123] sm:$0xf]
      %v6125 = vld [vmem:[%s6123 + $0x4] sm:$0xf]
      %v6126 = vld [vmem:[%s6123 + $0x8] sm:$0xf]
      %v6127 = vld [vmem:[%s6123 + $0xc] sm:$0xf]
      %v6128 = vld [vmem:[%s6123 + $0x10] sm:$0xf]
      %v6129 = vld [vmem:[%s6123 + $0x14] sm:$0xf]
      %v6130 = vld [vmem:[%s6123 + $0x18] sm:$0xf]
      %v6131 = vld [vmem:[%s6123 + $0x1c] sm:$0xf]
      %v6132 = vld [vmem:[%s6123 + $0x20] sm:$0xf]
      %v6133 = vld [vmem:[%s6123 + $0x24] sm:$0xf]
      %v6134 = vld [vmem:[%s6123 + $0x28] sm:$0xf]
      %v6135 = vld [vmem:[%s6123 + $0x2c] sm:$0xf]
      %v6136 = vld [vmem:[%s6123 + $0x30] sm:$0xf]
      %v6137 = vld [vmem:[%s6123 + $0x34] sm:$0xf]
      %v6138 = vld [vmem:[%s6123 + $0x38] sm:$0xf]
      %v6139 = vld [vmem:[%s6123 + $0x3c] sm:$0xf]
      %v6156 = vunpack.c.l.b16 %v6124
      %v6157 = vunpack.c.l.b16 %v6125
      %v6158 = vunpack.c.l.b16 %v6126
      %v6159 = vunpack.c.l.b16 %v6127
      %v6160 = vunpack.c.l.b16 %v6128
      %v6161 = vunpack.c.l.b16 %v6129
      %v6162 = vunpack.c.l.b16 %v6130
      %v6163 = vunpack.c.l.b16 %v6131
      %v6164 = vunpack.c.l.b16 %v6132
      %v6165 = vunpack.c.l.b16 %v6133
      %v6166 = vunpack.c.l.b16 %v6134
      %v6167 = vunpack.c.l.b16 %v6135
      %v6168 = vunpack.c.l.b16 %v6136
      %v6169 = vunpack.c.l.b16 %v6137
      %v6170 = vunpack.c.l.b16 %v6138
      %v6171 = vunpack.c.l.b16 %v6139
      %v6172 = vpack.c.b16 %v6157, %v6156
      %v6173 = vpack.c.b16 %v6159, %v6158
      %v6174 = vpack.c.b16 %v6161, %v6160
      %v6175 = vpack.c.b16 %v6163, %v6162
      %v6176 = vpack.c.b16 %v6165, %v6164
      %v6177 = vpack.c.b16 %v6167, %v6166
      %v6178 = vpack.c.b16 %v6169, %v6168
      %v6179 = vpack.c.b16 %v6171, %v6170
      %6188 = vmatprep.subr.bf16.mxu0 0
      %6189 = vmatpush1.bf16.msra.mxu0 %v6172
      %6190 = vmatprep.subr.bf16.mxu0 0
      %6191 = vmatpush1.bf16.msra.mxu0 %v6173
      %6192 = vmatprep.subr.bf16.mxu0 0
      %6193 = vmatpush1.bf16.msra.mxu0 %v6174
      %6194 = vmatprep.subr.bf16.mxu0 0
      %6195 = vmatpush1.bf16.msra.mxu0 %v6175
      %6196 = vmatprep.subr.bf16.mxu0 0
      %6197 = vmatpush1.bf16.msra.mxu0 %v6176
      %6198 = vmatprep.subr.bf16.mxu0 0
      %6199 = vmatpush1.bf16.msra.mxu0 %v6177
      %6200 = vmatprep.subr.bf16.mxu0 0
      %6201 = vmatpush1.bf16.msra.mxu0 %v6178
      %6202 = vmatprep.subr.bf16.mxu0 0
      %6203 = vmatpush1.bf16.msra.mxu0 %v6179
      %6204 = vmatprep.subr.bf16.mxu0 0
      %6205 = vmatpush1.bf16.msra.mxu0 0
      %6206 = vmatprep.subr.bf16.mxu0 0
      %6207 = vmatpush1.bf16.msra.mxu0 0
      %6208 = vmatprep.subr.bf16.mxu0 0
      %6209 = vmatpush1.bf16.msra.mxu0 0
      %6210 = vmatprep.subr.bf16.mxu0 0
      %6211 = vmatpush1.bf16.msra.mxu0 0
      %6212 = vmatprep.subr.bf16.mxu0 0
      %6213 = vmatpush1.bf16.msra.mxu0 0
      %6214 = vmatprep.subr.bf16.mxu0 0
      %6215 = vmatpush1.bf16.msra.mxu0 0
      %6216 = vmatprep.subr.bf16.mxu0 0
      %6217 = vmatpush1.bf16.msra.mxu0 0
      %6218 = vmatprep.subr.bf16.mxu0 0
      %6219 = vmatpush1.bf16.msra.mxu0 0
      %6220 = vmatprep.mubr.bf16.mxu0 0
      %6221 = vmatmul.mubr.bf16.gmra.mrb[0].mxu0 %v6099
      %v6222 = vpop.f32.mrb[0].mxu0
      %v6223 = vadd.f32 0.0, %v6222
      %v6224 = vpop.f32.mrb[0].mxu0
      %v6225 = vpop.f32.mrb[0].mxu0
      %v6226 = vadd.f32 0.0, %v6225
      %v6227 = vpop.f32.mrb[0].mxu0
      %6228 = vmatprep.mubr.bf16.mxu0 0
      %6229 = vmatmul.mubr.bf16.gmra.mrb[0].mxu0 %v6100
      %v6230 = vpop.f32.mrb[0].mxu0
      %v6231 = vadd.f32 0.0, %v6230
      %v6232 = vpop.f32.mrb[0].mxu0
      %v6233 = vpop.f32.mrb[0].mxu0
      %v6234 = vadd.f32 0.0, %v6233
      %v6235 = vpop.f32.mrb[0].mxu0
      %6236 = vmatprep.mubr.bf16.mxu0 0
      %6237 = vmatmul.mubr.bf16.gmra.mrb[0].mxu0 %v6101
      %v6238 = vpop.f32.mrb[0].mxu0
      %v6239 = vadd.f32 0.0, %v6238
      %v6240 = vpop.f32.mrb[0].mxu0
      %v6241 = vpop.f32.mrb[0].mxu0
      %v6242 = vadd.f32 0.0, %v6241
      %v6243 = vpop.f32.mrb[0].mxu0
      %6244 = vmatprep.mubr.bf16.mxu0 0
      %6245 = vmatmul.mubr.bf16.gmra.mrb[0].mxu0 %v6102
      %v6246 = vpop.f32.mrb[0].mxu0
      %v6247 = vadd.f32 0.0, %v6246
      %v6248 = vpop.f32.mrb[0].mxu0
      %v6249 = vpop.f32.mrb[0].mxu0
      %v6250 = vadd.f32 0.0, %v6249
      %v6251 = vpop.f32.mrb[0].mxu0
      %6252 = vmatprep.mubr.bf16.mxu0 0
      %6253 = vmatmul.mubr.bf16.gmra.mrb[0].mxu0 %v6103
      %v6254 = vpop.f32.mrb[0].mxu0
      %v6255 = vadd.f32 0.0, %v6254
      %v6256 = vpop.f32.mrb[0].mxu0
      %v6257 = vpop.f32.mrb[0].mxu0
      %v6258 = vadd.f32 0.0, %v6257
      %v6259 = vpop.f32.mrb[0].mxu0
      %6260 = vmatprep.mubr.bf16.mxu0 0
      %6261 = vmatmul.mubr.bf16.gmra.mrb[0].mxu0 %v6104
      %v6262 = vpop.f32.mrb[0].mxu0
      %v6263 = vadd.f32 0.0, %v6262
      %v6264 = vpop.f32.mrb[0].mxu0
      %v6265 = vpop.f32.mrb[0].mxu0
      %v6266 = vadd.f32 0.0, %v6265
      %v6267 = vpop.f32.mrb[0].mxu0
      %6268 = vmatprep.mubr.bf16.mxu0 0
      %6269 = vmatmul.mubr.bf16.gmra.mrb[0].mxu0 %v6105
      %v6270 = vpop.f32.mrb[0].mxu0
      %v6271 = vadd.f32 0.0, %v6270
      %v6272 = vpop.f32.mrb[0].mxu0
      %v6273 = vpop.f32.mrb[0].mxu0
      %v6274 = vadd.f32 0.0, %v6273
      %v6275 = vpop.f32.mrb[0].mxu0
      %6276 = vmatprep.mubr.bf16.mxu0 0
      %6277 = vmatmul.mubr.bf16.gmra.mrb[0].mxu0 %v6106
      %v6278 = vpop.f32.mrb[0].mxu0
      %v6279 = vadd.f32 0.0, %v6278
      %v6280 = vpop.f32.mrb[0].mxu0
      %v6281 = vpop.f32.mrb[0].mxu0
      %v6282 = vadd.f32 0.0, %v6281
      %v6283 = vpop.f32.mrb[0].mxu0
      %6284 = vmatprep.mubr.bf16.mxu0 0
      %6285 = vmatmul.mubr.bf16.gmra.mrb[0].mxu0 %v6107
      %v6286 = vpop.f32.mrb[0].mxu0
      %v6287 = vadd.f32 0.0, %v6286
      %v6288 = vpop.f32.mrb[0].mxu0
      %v6289 = vpop.f32.mrb[0].mxu0
      %v6290 = vadd.f32 0.0, %v6289
      %v6291 = vpop.f32.mrb[0].mxu0
      %6292 = vmatprep.mubr.bf16.mxu0 0
      %6293 = vmatmul.mubr.bf16.gmra.mrb[0].mxu0 %v6108
      %v6294 = vpop.f32.mrb[0].mxu0
      %v6295 = vadd.f32 0.0, %v6294
      %v6296 = vpop.f32.mrb[0].mxu0
      %v6297 = vpop.f32.mrb[0].mxu0
      %v6298 = vadd.f32 0.0, %v6297
      %v6299 = vpop.f32.mrb[0].mxu0
      %6300 = vmatprep.mubr.bf16.mxu0 0
      %6301 = vmatmul.mubr.bf16.gmra.mrb[0].mxu0 %v6109
      %v6302 = vpop.f32.mrb[0].mxu0
      %v6303 = vadd.f32 0.0, %v6302
      %v6304 = vpop.f32.mrb[0].mxu0
      %v6305 = vpop.f32.mrb[0].mxu0
      %v6306 = vadd.f32 0.0, %v6305
      %v6307 = vpop.f32.mrb[0].mxu0
      %6308 = vmatprep.mubr.bf16.mxu0 0
      %6309 = vmatmul.mubr.bf16.gmra.mrb[0].mxu0 %v6110
      %v6310 = vpop.f32.mrb[0].mxu0
      %v6311 = vadd.f32 0.0, %v6310
      %v6312 = vpop.f32.mrb[0].mxu0
      %v6313 = vpop.f32.mrb[0].mxu0
      %v6314 = vadd.f32 0.0, %v6313
      %v6315 = vpop.f32.mrb[0].mxu0
      %6316 = vmatprep.mubr.bf16.mxu0 0
      %6317 = vmatmul.mubr.bf16.gmra.mrb[0].mxu0 %v6111
      %v6318 = vpop.f32.mrb[0].mxu0
      %v6319 = vadd.f32 0.0, %v6318
      %v6320 = vpop.f32.mrb[0].mxu0
      %v6321 = vpop.f32.mrb[0].mxu0
      %v6322 = vadd.f32 0.0, %v6321
      %v6323 = vpop.f32.mrb[0].mxu0
      %6324 = vmatprep.mubr.bf16.mxu0 0
      %6325 = vmatmul.mubr.bf16.gmra.mrb[0].mxu0 %v6112
      %v6326 = vpop.f32.mrb[0].mxu0
      %v6327 = vadd.f32 0.0, %v6326
      %v6328 = vpop.f32.mrb[0].mxu0
      %v6329 = vpop.f32.mrb[0].mxu0
      %v6330 = vadd.f32 0.0, %v6329
      %v6331 = vpop.f32.mrb[0].mxu0
      %6332 = vmatprep.mubr.bf16.mxu0 0
      %6333 = vmatmul.mubr.bf16.gmra.mrb[0].mxu0 %v6113
      %v6334 = vpop.f32.mrb[0].mxu0
      %v6335 = vadd.f32 0.0, %v6334
      %v6336 = vpop.f32.mrb[0].mxu0
      %v6337 = vpop.f32.mrb[0].mxu0
      %v6338 = vadd.f32 0.0, %v6337
      %v6339 = vpop.f32.mrb[0].mxu0
      %6340 = vmatprep.mubr.bf16.mxu0 0
      %6341 = vmatmul.mubr.bf16.gmra.mrb[0].mxu0 %v6114
      %v6342 = vpop.f32.mrb[0].mxu0
      %v6343 = vadd.f32 0.0, %v6342
      %v6344 = vpop.f32.mrb[0].mxu0
      %v6345 = vpop.f32.mrb[0].mxu0
      %v6346 = vadd.f32 0.0, %v6345
      %v6347 = vpop.f32.mrb[0].mxu0
      %6348 = vmatprep.mubr.bf16.mxu0 0
      %6349 = vmatmul.mubr.bf16.gmra.mrb[0].mxu0 %v6115
      %v6350 = vpop.f32.mrb[0].mxu0
      %v6351 = vadd.f32 0.0, %v6350
      %v6352 = vpop.f32.mrb[0].mxu0
      %v6353 = vpop.f32.mrb[0].mxu0
      %v6354 = vadd.f32 0.0, %v6353
      %v6355 = vpop.f32.mrb[0].mxu0
      %6356 = vmatprep.mubr.bf16.mxu0 0
      %6357 = vmatmul.mubr.bf16.gmra.mrb[0].mxu0 %v6116
      %v6358 = vpop.f32.mrb[0].mxu0
      %v6359 = vadd.f32 0.0, %v6358
      %v6360 = vpop.f32.mrb[0].mxu0
      %v6361 = vpop.f32.mrb[0].mxu0
      %v6362 = vadd.f32 0.0, %v6361
      %v6363 = vpop.f32.mrb[0].mxu0
      %6364 = vmatprep.mubr.bf16.mxu0 0
      %6365 = vmatmul.mubr.bf16.gmra.mrb[0].mxu0 %v6117
      %v6366 = vpop.f32.mrb[0].mxu0
      %v6367 = vadd.f32 0.0, %v6366
      %v6368 = vpop.f32.mrb[0].mxu0
      %v6369 = vpop.f32.mrb[0].mxu0
      %v6370 = vadd.f32 0.0, %v6369
      %v6371 = vpop.f32.mrb[0].mxu0
      %6372 = vmatprep.mubr.bf16.mxu0 0
      %6373 = vmatmul.mubr.bf16.gmra.mrb[0].mxu0 %v6118
      %v6374 = vpop.f32.mrb[0].mxu0
      %v6375 = vadd.f32 0.0, %v6374
      %v6376 = vpop.f32.mrb[0].mxu0
      %v6377 = vpop.f32.mrb[0].mxu0
      %v6378 = vadd.f32 0.0, %v6377
      %v6379 = vpop.f32.mrb[0].mxu0
      %6380 = vmatprep.mubr.bf16.mxu0 0
      %6381 = vmatmul.mubr.bf16.gmra.mrb[0].mxu0 %v6119
      %v6382 = vpop.f32.mrb[0].mxu0
      %v6383 = vadd.f32 0.0, %v6382
      %v6384 = vpop.f32.mrb[0].mxu0
      %v6385 = vpop.f32.mrb[0].mxu0
      %v6386 = vadd.f32 0.0, %v6385
      %v6387 = vpop.f32.mrb[0].mxu0
      %6388 = vmatprep.mubr.bf16.mxu0 0
      %6389 = vmatmul.mubr.bf16.gmra.mrb[0].mxu0 %v6120
      %v6390 = vpop.f32.mrb[0].mxu0
      %v6391 = vadd.f32 0.0, %v6390
      %v6392 = vpop.f32.mrb[0].mxu0
      %v6393 = vpop.f32.mrb[0].mxu0
      %v6394 = vadd.f32 0.0, %v6393
      %v6395 = vpop.f32.mrb[0].mxu0
      %6396 = vmatprep.mubr.bf16.mxu0 0
      %6397 = vmatmul.mubr.bf16.gmra.mrb[0].mxu0 %v6121
      %v6398 = vpop.f32.mrb[0].mxu0
      %v6399 = vadd.f32 0.0, %v6398
      %v6400 = vpop.f32.mrb[0].mxu0
      %v6401 = vpop.f32.mrb[0].mxu0
      %v6402 = vadd.f32 0.0, %v6401
      %v6403 = vpop.f32.mrb[0].mxu0
      %6404 = vmatprep.mubr.bf16.mxu0 0
      %6405 = vmatmul.mubr.bf16.gmra.mrb[0].mxu0 %v6122
      %v6406 = vpop.f32.mrb[0].mxu0
      %v6407 = vadd.f32 0.0, %v6406
      %v6408 = vpop.f32.mrb[0].mxu0
      %v6409 = vpop.f32.mrb[0].mxu0
      %v6410 = vadd.f32 0.0, %v6409
      %v6411 = vpop.f32.mrb[0].mxu0
      %6412 = vdwg.mxu0
      %v6413 = vadd.f32 %v5861, %v6223
      %v6414 = vadd.f32 %v5864, %v6226
      %v6415 = vadd.f32 %v5869, %v6231
      %v6416 = vadd.f32 %v5872, %v6234
      %v6417 = vadd.f32 %v5877, %v6239
      %v6418 = vadd.f32 %v5880, %v6242
      %v6419 = vadd.f32 %v5885, %v6247
      %v6420 = vadd.f32 %v5888, %v6250
      %v6421 = vadd.f32 %v5893, %v6255
      %v6422 = vadd.f32 %v5896, %v6258
      %v6423 = vadd.f32 %v5901, %v6263
      %v6424 = vadd.f32 %v5904, %v6266
      %v6425 = vadd.f32 %v5909, %v6271
      %v6426 = vadd.f32 %v5912, %v6274
      %v6427 = vadd.f32 %v5917, %v6279
      %v6428 = vadd.f32 %v5920, %v6282
      %v6429 = vadd.f32 %v5925, %v6287
      %v6430 = vadd.f32 %v5928, %v6290
      %v6431 = vadd.f32 %v5933, %v6295
      %v6432 = vadd.f32 %v5936, %v6298
      %v6433 = vadd.f32 %v5941, %v6303
      %v6434 = vadd.f32 %v5944, %v6306
      %v6435 = vadd.f32 %v5949, %v6311
      %v6436 = vadd.f32 %v5952, %v6314
      %v6437 = vadd.f32 %v5957, %v6319
      %v6438 = vadd.f32 %v5960, %v6322
      %v6439 = vadd.f32 %v5965, %v6327
      %v6440 = vadd.f32 %v5968, %v6330
      %v6441 = vadd.f32 %v5973, %v6335
      %v6442 = vadd.f32 %v5976, %v6338
      %v6443 = vadd.f32 %v5981, %v6343
      %v6444 = vadd.f32 %v5984, %v6346
      %v6445 = vadd.f32 %v5989, %v6351
      %v6446 = vadd.f32 %v5992, %v6354
      %v6447 = vadd.f32 %v5997, %v6359
      %v6448 = vadd.f32 %v6000, %v6362
      %v6449 = vadd.f32 %v6005, %v6367
      %v6450 = vadd.f32 %v6008, %v6370
      %v6451 = vadd.f32 %v6013, %v6375
      %v6452 = vadd.f32 %v6016, %v6378
      %v6453 = vadd.f32 %v6021, %v6383
      %v6454 = vadd.f32 %v6024, %v6386
      %v6455 = vadd.f32 %v6029, %v6391
      %v6456 = vadd.f32 %v6032, %v6394
      %v6457 = vadd.f32 %v6037, %v6399
      %v6458 = vadd.f32 %v6040, %v6402
      %v6459 = vadd.f32 %v6045, %v6407
      %v6460 = vadd.f32 %v6048, %v6410
      %v6461 = vld [vmem:[#allocation2 + $0x2f] sm:$0xff]
      %v6462 = vld [vmem:[#allocation2 + $0x37] sm:$0xff]
      %v6463 = vld [vmem:[#allocation2 + $0x3f] sm:$0xff]
      %v6464 = vld [vmem:[#allocation2 + $0x47] sm:$0xff]
      %v6465 = vld [vmem:[#allocation2 + $0x4f] sm:$0xff]
      %v6466 = vld [vmem:[#allocation2 + $0x57] sm:$0xff]
      %v6467 = vld [vmem:[#allocation2 + $0x5f] sm:$0xff]
      %v6468 = vld [vmem:[#allocation2 + $0x67] sm:$0xff]
      %v6469 = vld [vmem:[#allocation2 + $0x6f] sm:$0xff]
      %v6470 = vld [vmem:[#allocation2 + $0x77] sm:$0xff]
      %v6471 = vld [vmem:[#allocation2 + $0x7f] sm:$0xff]
      %v6472 = vld [vmem:[#allocation2 + $0x87] sm:$0xff]
      %v6473 = vld [vmem:[#allocation2 + $0x8f] sm:$0xff]
      %v6474 = vld [vmem:[#allocation2 + $0x97] sm:$0xff]
      %v6475 = vld [vmem:[#allocation2 + $0x9f] sm:$0xff]
      %v6476 = vld [vmem:[#allocation2 + $0xa7] sm:$0xff]
      %v6477 = vld [vmem:[#allocation2 + $0xaf] sm:$0xff]
      %v6478 = vld [vmem:[#allocation2 + $0xb7] sm:$0xff]
      %v6479 = vld [vmem:[#allocation2 + $0xbf] sm:$0xff]
      %v6480 = vld [vmem:[#allocation2 + $0xc7] sm:$0xff]
      %v6481 = vld [vmem:[#allocation2 + $0xcf] sm:$0xff]
      %v6482 = vld [vmem:[#allocation2 + $0xd7] sm:$0xff]
      %v6483 = vld [vmem:[#allocation2 + $0xdf] sm:$0xff]
      %v6484 = vld [vmem:[#allocation2 + $0xe7] sm:$0xff]
      %v6485 = vld [vmem:[#allocation2 + $0xef] sm:$0xff]
      %v6486 = vld [vmem:[#allocation2 + $0xf7] sm:$0xff]
      %v6487 = vld [vmem:[#allocation2 + $0xff] sm:$0xff]
      %v6488 = vld [vmem:[#allocation2 + $0x107] sm:$0xff]
      %v6489 = vld [vmem:[#allocation2 + $0x10f] sm:$0xff]
      %v6490 = vld [vmem:[#allocation2 + $0x117] sm:$0xff]
      %v6491 = vld [vmem:[#allocation2 + $0x11f] sm:$0xff]
      %v6492 = vld [vmem:[#allocation2 + $0x127] sm:$0xff]
      %v6493 = vld [vmem:[#allocation2 + $0x12f] sm:$0xff]
      %v6494 = vld [vmem:[#allocation2 + $0x137] sm:$0xff]
      %v6495 = vld [vmem:[#allocation2 + $0x13f] sm:$0xff]
      %v6496 = vld [vmem:[#allocation2 + $0x147] sm:$0xff]
      %v6497 = vld [vmem:[#allocation2 + $0x14f] sm:$0xff]
      %v6498 = vld [vmem:[#allocation2 + $0x157] sm:$0xff]
      %v6499 = vld [vmem:[#allocation2 + $0x15f] sm:$0xff]
      %v6500 = vld [vmem:[#allocation2 + $0x167] sm:$0xff]
      %v6501 = vld [vmem:[#allocation2 + $0x16f] sm:$0xff]
      %v6502 = vld [vmem:[#allocation2 + $0x177] sm:$0xff]
      %v6503 = vld [vmem:[#allocation2 + $0x17f] sm:$0xff]
      %v6504 = vld [vmem:[#allocation2 + $0x187] sm:$0xff]
      %v6505 = vld [vmem:[#allocation2 + $0x18f] sm:$0xff]
      %v6506 = vld [vmem:[#allocation2 + $0x197] sm:$0xff]
      %v6507 = vld [vmem:[#allocation2 + $0x19f] sm:$0xff]
      %v6508 = vld [vmem:[#allocation2 + $0x1a7] sm:$0xff]
      %v6509 = vpack.c.bf16 %v6462, %v6461
      %v6510 = vpack.c.bf16 %v6464, %v6463
      %v6511 = vpack.c.bf16 %v6466, %v6465
      %v6512 = vpack.c.bf16 %v6468, %v6467
      %v6513 = vpack.c.bf16 %v6470, %v6469
      %v6514 = vpack.c.bf16 %v6472, %v6471
      %v6515 = vpack.c.bf16 %v6474, %v6473
      %v6516 = vpack.c.bf16 %v6476, %v6475
      %v6517 = vpack.c.bf16 %v6478, %v6477
      %v6518 = vpack.c.bf16 %v6480, %v6479
      %v6519 = vpack.c.bf16 %v6482, %v6481
      %v6520 = vpack.c.bf16 %v6484, %v6483
      %v6521 = vpack.c.bf16 %v6486, %v6485
      %v6522 = vpack.c.bf16 %v6488, %v6487
      %v6523 = vpack.c.bf16 %v6490, %v6489
      %v6524 = vpack.c.bf16 %v6492, %v6491
      %v6525 = vpack.c.bf16 %v6494, %v6493
      %v6526 = vpack.c.bf16 %v6496, %v6495
      %v6527 = vpack.c.bf16 %v6498, %v6497
      %v6528 = vpack.c.bf16 %v6500, %v6499
      %v6529 = vpack.c.bf16 %v6502, %v6501
      %v6530 = vpack.c.bf16 %v6504, %v6503
      %v6531 = vpack.c.bf16 %v6506, %v6505
      %v6532 = vpack.c.bf16 %v6508, %v6507
      %s6533 = scalar_lea.vmem %s3, 192
      %v6534 = vld [vmem:[%s6533] sm:$0xf]
      %v6535 = vld [vmem:[%s6533 + $0x4] sm:$0xf]
      %v6536 = vld [vmem:[%s6533 + $0x8] sm:$0xf]
      %v6537 = vld [vmem:[%s6533 + $0xc] sm:$0xf]
      %v6538 = vld [vmem:[%s6533 + $0x10] sm:$0xf]
      %v6539 = vld [vmem:[%s6533 + $0x14] sm:$0xf]
      %v6540 = vld [vmem:[%s6533 + $0x18] sm:$0xf]
      %v6541 = vld [vmem:[%s6533 + $0x1c] sm:$0xf]
      %v6542 = vld [vmem:[%s6533 + $0x20] sm:$0xf]
      %v6543 = vld [vmem:[%s6533 + $0x24] sm:$0xf]
      %v6544 = vld [vmem:[%s6533 + $0x28] sm:$0xf]
      %v6545 = vld [vmem:[%s6533 + $0x2c] sm:$0xf]
      %v6546 = vld [vmem:[%s6533 + $0x30] sm:$0xf]
      %v6547 = vld [vmem:[%s6533 + $0x34] sm:$0xf]
      %v6548 = vld [vmem:[%s6533 + $0x38] sm:$0xf]
      %v6549 = vld [vmem:[%s6533 + $0x3c] sm:$0xf]
      %v6566 = vunpack.c.l.b16 %v6534
      %v6567 = vunpack.c.l.b16 %v6535
      %v6568 = vunpack.c.l.b16 %v6536
      %v6569 = vunpack.c.l.b16 %v6537
      %v6570 = vunpack.c.l.b16 %v6538
      %v6571 = vunpack.c.l.b16 %v6539
      %v6572 = vunpack.c.l.b16 %v6540
      %v6573 = vunpack.c.l.b16 %v6541
      %v6574 = vunpack.c.l.b16 %v6542
      %v6575 = vunpack.c.l.b16 %v6543
      %v6576 = vunpack.c.l.b16 %v6544
      %v6577 = vunpack.c.l.b16 %v6545
      %v6578 = vunpack.c.l.b16 %v6546
      %v6579 = vunpack.c.l.b16 %v6547
      %v6580 = vunpack.c.l.b16 %v6548
      %v6581 = vunpack.c.l.b16 %v6549
      %v6582 = vpack.c.b16 %v6567, %v6566
      %v6583 = vpack.c.b16 %v6569, %v6568
      %v6584 = vpack.c.b16 %v6571, %v6570
      %v6585 = vpack.c.b16 %v6573, %v6572
      %v6586 = vpack.c.b16 %v6575, %v6574
      %v6587 = vpack.c.b16 %v6577, %v6576
      %v6588 = vpack.c.b16 %v6579, %v6578
      %v6589 = vpack.c.b16 %v6581, %v6580
      %6598 = vmatprep.subr.bf16.mxu0 0
      %6599 = vmatpush1.bf16.msra.mxu0 %v6582
      %6600 = vmatprep.subr.bf16.mxu0 0
      %6601 = vmatpush1.bf16.msra.mxu0 %v6583
      %6602 = vmatprep.subr.bf16.mxu0 0
      %6603 = vmatpush1.bf16.msra.mxu0 %v6584
      %6604 = vmatprep.subr.bf16.mxu0 0
      %6605 = vmatpush1.bf16.msra.mxu0 %v6585
      %6606 = vmatprep.subr.bf16.mxu0 0
      %6607 = vmatpush1.bf16.msra.mxu0 %v6586
      %6608 = vmatprep.subr.bf16.mxu0 0
      %6609 = vmatpush1.bf16.msra.mxu0 %v6587
      %6610 = vmatprep.subr.bf16.mxu0 0
      %6611 = vmatpush1.bf16.msra.mxu0 %v6588
      %6612 = vmatprep.subr.bf16.mxu0 0
      %6613 = vmatpush1.bf16.msra.mxu0 %v6589
      %6614 = vmatprep.subr.bf16.mxu0 0
      %6615 = vmatpush1.bf16.msra.mxu0 0
      %6616 = vmatprep.subr.bf16.mxu0 0
      %6617 = vmatpush1.bf16.msra.mxu0 0
      %6618 = vmatprep.subr.bf16.mxu0 0
      %6619 = vmatpush1.bf16.msra.mxu0 0
      %6620 = vmatprep.subr.bf16.mxu0 0
      %6621 = vmatpush1.bf16.msra.mxu0 0
      %6622 = vmatprep.subr.bf16.mxu0 0
      %6623 = vmatpush1.bf16.msra.mxu0 0
      %6624 = vmatprep.subr.bf16.mxu0 0
      %6625 = vmatpush1.bf16.msra.mxu0 0
      %6626 = vmatprep.subr.bf16.mxu0 0
      %6627 = vmatpush1.bf16.msra.mxu0 0
      %6628 = vmatprep.subr.bf16.mxu0 0
      %6629 = vmatpush1.bf16.msra.mxu0 0
      %6630 = vmatprep.mubr.bf16.mxu0 0
      %6631 = vmatmul.mubr.bf16.gmra.mrb[0].mxu0 %v6509
      %v6632 = vpop.f32.mrb[0].mxu0
      %v6633 = vadd.f32 0.0, %v6632
      %v6634 = vpop.f32.mrb[0].mxu0
      %v6635 = vpop.f32.mrb[0].mxu0
      %v6636 = vadd.f32 0.0, %v6635
      %v6637 = vpop.f32.mrb[0].mxu0
      %6638 = vmatprep.mubr.bf16.mxu0 0
      %6639 = vmatmul.mubr.bf16.gmra.mrb[0].mxu0 %v6510
      %v6640 = vpop.f32.mrb[0].mxu0
      %v6641 = vadd.f32 0.0, %v6640
      %v6642 = vpop.f32.mrb[0].mxu0
      %v6643 = vpop.f32.mrb[0].mxu0
      %v6644 = vadd.f32 0.0, %v6643
      %v6645 = vpop.f32.mrb[0].mxu0
      %6646 = vmatprep.mubr.bf16.mxu0 0
      %6647 = vmatmul.mubr.bf16.gmra.mrb[0].mxu0 %v6511
      %v6648 = vpop.f32.mrb[0].mxu0
      %v6649 = vadd.f32 0.0, %v6648
      %v6650 = vpop.f32.mrb[0].mxu0
      %v6651 = vpop.f32.mrb[0].mxu0
      %v6652 = vadd.f32 0.0, %v6651
      %v6653 = vpop.f32.mrb[0].mxu0
      %6654 = vmatprep.mubr.bf16.mxu0 0
      %6655 = vmatmul.mubr.bf16.gmra.mrb[0].mxu0 %v6512
      %v6656 = vpop.f32.mrb[0].mxu0
      %v6657 = vadd.f32 0.0, %v6656
      %v6658 = vpop.f32.mrb[0].mxu0
      %v6659 = vpop.f32.mrb[0].mxu0
      %v6660 = vadd.f32 0.0, %v6659
      %v6661 = vpop.f32.mrb[0].mxu0
      %6662 = vmatprep.mubr.bf16.mxu0 0
      %6663 = vmatmul.mubr.bf16.gmra.mrb[0].mxu0 %v6513
      %v6664 = vpop.f32.mrb[0].mxu0
      %v6665 = vadd.f32 0.0, %v6664
      %v6666 = vpop.f32.mrb[0].mxu0
      %v6667 = vpop.f32.mrb[0].mxu0
      %v6668 = vadd.f32 0.0, %v6667
      %v6669 = vpop.f32.mrb[0].mxu0
      %6670 = vmatprep.mubr.bf16.mxu0 0
      %6671 = vmatmul.mubr.bf16.gmra.mrb[0].mxu0 %v6514
      %v6672 = vpop.f32.mrb[0].mxu0
      %v6673 = vadd.f32 0.0, %v6672
      %v6674 = vpop.f32.mrb[0].mxu0
      %v6675 = vpop.f32.mrb[0].mxu0
      %v6676 = vadd.f32 0.0, %v6675
      %v6677 = vpop.f32.mrb[0].mxu0
      %6678 = vmatprep.mubr.bf16.mxu0 0
      %6679 = vmatmul.mubr.bf16.gmra.mrb[0].mxu0 %v6515
      %v6680 = vpop.f32.mrb[0].mxu0
      %v6681 = vadd.f32 0.0, %v6680
      %v6682 = vpop.f32.mrb[0].mxu0
      %v6683 = vpop.f32.mrb[0].mxu0
      %v6684 = vadd.f32 0.0, %v6683
      %v6685 = vpop.f32.mrb[0].mxu0
      %6686 = vmatprep.mubr.bf16.mxu0 0
      %6687 = vmatmul.mubr.bf16.gmra.mrb[0].mxu0 %v6516
      %v6688 = vpop.f32.mrb[0].mxu0
      %v6689 = vadd.f32 0.0, %v6688
      %v6690 = vpop.f32.mrb[0].mxu0
      %v6691 = vpop.f32.mrb[0].mxu0
      %v6692 = vadd.f32 0.0, %v6691
      %v6693 = vpop.f32.mrb[0].mxu0
      %6694 = vmatprep.mubr.bf16.mxu0 0
      %6695 = vmatmul.mubr.bf16.gmra.mrb[0].mxu0 %v6517
      %v6696 = vpop.f32.mrb[0].mxu0
      %v6697 = vadd.f32 0.0, %v6696
      %v6698 = vpop.f32.mrb[0].mxu0
      %v6699 = vpop.f32.mrb[0].mxu0
      %v6700 = vadd.f32 0.0, %v6699
      %v6701 = vpop.f32.mrb[0].mxu0
      %6702 = vmatprep.mubr.bf16.mxu0 0
      %6703 = vmatmul.mubr.bf16.gmra.mrb[0].mxu0 %v6518
      %v6704 = vpop.f32.mrb[0].mxu0
      %v6705 = vadd.f32 0.0, %v6704
      %v6706 = vpop.f32.mrb[0].mxu0
      %v6707 = vpop.f32.mrb[0].mxu0
      %v6708 = vadd.f32 0.0, %v6707
      %v6709 = vpop.f32.mrb[0].mxu0
      %6710 = vmatprep.mubr.bf16.mxu0 0
      %6711 = vmatmul.mubr.bf16.gmra.mrb[0].mxu0 %v6519
      %v6712 = vpop.f32.mrb[0].mxu0
      %v6713 = vadd.f32 0.0, %v6712
      %v6714 = vpop.f32.mrb[0].mxu0
      %v6715 = vpop.f32.mrb[0].mxu0
      %v6716 = vadd.f32 0.0, %v6715
      %v6717 = vpop.f32.mrb[0].mxu0
      %6718 = vmatprep.mubr.bf16.mxu0 0
      %6719 = vmatmul.mubr.bf16.gmra.mrb[0].mxu0 %v6520
      %v6720 = vpop.f32.mrb[0].mxu0
      %v6721 = vadd.f32 0.0, %v6720
      %v6722 = vpop.f32.mrb[0].mxu0
      %v6723 = vpop.f32.mrb[0].mxu0
      %v6724 = vadd.f32 0.0, %v6723
      %v6725 = vpop.f32.mrb[0].mxu0
      %6726 = vmatprep.mubr.bf16.mxu0 0
      %6727 = vmatmul.mubr.bf16.gmra.mrb[0].mxu0 %v6521
      %v6728 = vpop.f32.mrb[0].mxu0
      %v6729 = vadd.f32 0.0, %v6728
      %v6730 = vpop.f32.mrb[0].mxu0
      %v6731 = vpop.f32.mrb[0].mxu0
      %v6732 = vadd.f32 0.0, %v6731
      %v6733 = vpop.f32.mrb[0].mxu0
      %6734 = vmatprep.mubr.bf16.mxu0 0
      %6735 = vmatmul.mubr.bf16.gmra.mrb[0].mxu0 %v6522
      %v6736 = vpop.f32.mrb[0].mxu0
      %v6737 = vadd.f32 0.0, %v6736
      %v6738 = vpop.f32.mrb[0].mxu0
      %v6739 = vpop.f32.mrb[0].mxu0
      %v6740 = vadd.f32 0.0, %v6739
      %v6741 = vpop.f32.mrb[0].mxu0
      %6742 = vmatprep.mubr.bf16.mxu0 0
      %6743 = vmatmul.mubr.bf16.gmra.mrb[0].mxu0 %v6523
      %v6744 = vpop.f32.mrb[0].mxu0
      %v6745 = vadd.f32 0.0, %v6744
      %v6746 = vpop.f32.mrb[0].mxu0
      %v6747 = vpop.f32.mrb[0].mxu0
      %v6748 = vadd.f32 0.0, %v6747
      %v6749 = vpop.f32.mrb[0].mxu0
      %6750 = vmatprep.mubr.bf16.mxu0 0
      %6751 = vmatmul.mubr.bf16.gmra.mrb[0].mxu0 %v6524
      %v6752 = vpop.f32.mrb[0].mxu0
      %v6753 = vadd.f32 0.0, %v6752
      %v6754 = vpop.f32.mrb[0].mxu0
      %v6755 = vpop.f32.mrb[0].mxu0
      %v6756 = vadd.f32 0.0, %v6755
      %v6757 = vpop.f32.mrb[0].mxu0
      %6758 = vmatprep.mubr.bf16.mxu0 0
      %6759 = vmatmul.mubr.bf16.gmra.mrb[0].mxu0 %v6525
      %v6760 = vpop.f32.mrb[0].mxu0
      %v6761 = vadd.f32 0.0, %v6760
      %v6762 = vpop.f32.mrb[0].mxu0
      %v6763 = vpop.f32.mrb[0].mxu0
      %v6764 = vadd.f32 0.0, %v6763
      %v6765 = vpop.f32.mrb[0].mxu0
      %6766 = vmatprep.mubr.bf16.mxu0 0
      %6767 = vmatmul.mubr.bf16.gmra.mrb[0].mxu0 %v6526
      %v6768 = vpop.f32.mrb[0].mxu0
      %v6769 = vadd.f32 0.0, %v6768
      %v6770 = vpop.f32.mrb[0].mxu0
      %v6771 = vpop.f32.mrb[0].mxu0
      %v6772 = vadd.f32 0.0, %v6771
      %v6773 = vpop.f32.mrb[0].mxu0
      %6774 = vmatprep.mubr.bf16.mxu0 0
      %6775 = vmatmul.mubr.bf16.gmra.mrb[0].mxu0 %v6527
      %v6776 = vpop.f32.mrb[0].mxu0
      %v6777 = vadd.f32 0.0, %v6776
      %v6778 = vpop.f32.mrb[0].mxu0
      %v6779 = vpop.f32.mrb[0].mxu0
      %v6780 = vadd.f32 0.0, %v6779
      %v6781 = vpop.f32.mrb[0].mxu0
      %6782 = vmatprep.mubr.bf16.mxu0 0
      %6783 = vmatmul.mubr.bf16.gmra.mrb[0].mxu0 %v6528
      %v6784 = vpop.f32.mrb[0].mxu0
      %v6785 = vadd.f32 0.0, %v6784
      %v6786 = vpop.f32.mrb[0].mxu0
      %v6787 = vpop.f32.mrb[0].mxu0
      %v6788 = vadd.f32 0.0, %v6787
      %v6789 = vpop.f32.mrb[0].mxu0
      %6790 = vmatprep.mubr.bf16.mxu0 0
      %6791 = vmatmul.mubr.bf16.gmra.mrb[0].mxu0 %v6529
      %v6792 = vpop.f32.mrb[0].mxu0
      %v6793 = vadd.f32 0.0, %v6792
      %v6794 = vpop.f32.mrb[0].mxu0
      %v6795 = vpop.f32.mrb[0].mxu0
      %v6796 = vadd.f32 0.0, %v6795
      %v6797 = vpop.f32.mrb[0].mxu0
      %6798 = vmatprep.mubr.bf16.mxu0 0
      %6799 = vmatmul.mubr.bf16.gmra.mrb[0].mxu0 %v6530
      %v6800 = vpop.f32.mrb[0].mxu0
      %v6801 = vadd.f32 0.0, %v6800
      %v6802 = vpop.f32.mrb[0].mxu0
      %v6803 = vpop.f32.mrb[0].mxu0
      %v6804 = vadd.f32 0.0, %v6803
      %v6805 = vpop.f32.mrb[0].mxu0
      %6806 = vmatprep.mubr.bf16.mxu0 0
      %6807 = vmatmul.mubr.bf16.gmra.mrb[0].mxu0 %v6531
      %v6808 = vpop.f32.mrb[0].mxu0
      %v6809 = vadd.f32 0.0, %v6808
      %v6810 = vpop.f32.mrb[0].mxu0
      %v6811 = vpop.f32.mrb[0].mxu0
      %v6812 = vadd.f32 0.0, %v6811
      %v6813 = vpop.f32.mrb[0].mxu0
      %6814 = vmatprep.mubr.bf16.mxu0 0
      %6815 = vmatmul.mubr.bf16.gmra.mrb[0].mxu0 %v6532
      %v6816 = vpop.f32.mrb[0].mxu0
      %v6817 = vadd.f32 0.0, %v6816
      %v6818 = vpop.f32.mrb[0].mxu0
      %v6819 = vpop.f32.mrb[0].mxu0
      %v6820 = vadd.f32 0.0, %v6819
      %v6821 = vpop.f32.mrb[0].mxu0
      %6822 = vdwg.mxu0
      %v6823 = vadd.f32 %v6413, %v6633
      %v6824 = vadd.f32 %v6414, %v6636
      %v6825 = vadd.f32 %v6415, %v6641
      %v6826 = vadd.f32 %v6416, %v6644
      %v6827 = vadd.f32 %v6417, %v6649
      %v6828 = vadd.f32 %v6418, %v6652
      %v6829 = vadd.f32 %v6419, %v6657
      %v6830 = vadd.f32 %v6420, %v6660
      %v6831 = vadd.f32 %v6421, %v6665
      %v6832 = vadd.f32 %v6422, %v6668
      %v6833 = vadd.f32 %v6423, %v6673
      %v6834 = vadd.f32 %v6424, %v6676
      %v6835 = vadd.f32 %v6425, %v6681
      %v6836 = vadd.f32 %v6426, %v6684
      %v6837 = vadd.f32 %v6427, %v6689
      %v6838 = vadd.f32 %v6428, %v6692
      %v6839 = vadd.f32 %v6429, %v6697
      %v6840 = vadd.f32 %v6430, %v6700
      %v6841 = vadd.f32 %v6431, %v6705
      %v6842 = vadd.f32 %v6432, %v6708
      %v6843 = vadd.f32 %v6433, %v6713
      %v6844 = vadd.f32 %v6434, %v6716
      %v6845 = vadd.f32 %v6435, %v6721
      %v6846 = vadd.f32 %v6436, %v6724
      %v6847 = vadd.f32 %v6437, %v6729
      %v6848 = vadd.f32 %v6438, %v6732
      %v6849 = vadd.f32 %v6439, %v6737
      %v6850 = vadd.f32 %v6440, %v6740
      %v6851 = vadd.f32 %v6441, %v6745
      %v6852 = vadd.f32 %v6442, %v6748
      %v6853 = vadd.f32 %v6443, %v6753
      %v6854 = vadd.f32 %v6444, %v6756
      %v6855 = vadd.f32 %v6445, %v6761
      %v6856 = vadd.f32 %v6446, %v6764
      %v6857 = vadd.f32 %v6447, %v6769
      %v6858 = vadd.f32 %v6448, %v6772
      %v6859 = vadd.f32 %v6449, %v6777
      %v6860 = vadd.f32 %v6450, %v6780
      %v6861 = vadd.f32 %v6451, %v6785
      %v6862 = vadd.f32 %v6452, %v6788
      %v6863 = vadd.f32 %v6453, %v6793
      %v6864 = vadd.f32 %v6454, %v6796
      %v6865 = vadd.f32 %v6455, %v6801
      %v6866 = vadd.f32 %v6456, %v6804
      %v6867 = vadd.f32 %v6457, %v6809
      %v6868 = vadd.f32 %v6458, %v6812
      %v6869 = vadd.f32 %v6459, %v6817
      %v6870 = vadd.f32 %v6460, %v6820
      %v6871 = vld [vmem:[#allocation2 + $0x30] sm:$0xff]
      %v6872 = vld [vmem:[#allocation2 + $0x38] sm:$0xff]
      %v6873 = vld [vmem:[#allocation2 + $0x40] sm:$0xff]
      %v6874 = vld [vmem:[#allocation2 + $0x48] sm:$0xff]
      %v6875 = vld [vmem:[#allocation2 + $0x50] sm:$0xff]
      %v6876 = vld [vmem:[#allocation2 + $0x58] sm:$0xff]
      %v6877 = vld [vmem:[#allocation2 + $0x60] sm:$0xff]
      %v6878 = vld [vmem:[#allocation2 + $0x68] sm:$0xff]
      %v6879 = vld [vmem:[#allocation2 + $0x70] sm:$0xff]
      %v6880 = vld [vmem:[#allocation2 + $0x78] sm:$0xff]
      %v6881 = vld [vmem:[#allocation2 + $0x80] sm:$0xff]
      %v6882 = vld [vmem:[#allocation2 + $0x88] sm:$0xff]
      %v6883 = vld [vmem:[#allocation2 + $0x90] sm:$0xff]
      %v6884 = vld [vmem:[#allocation2 + $0x98] sm:$0xff]
      %v6885 = vld [vmem:[#allocation2 + $0xa0] sm:$0xff]
      %v6886 = vld [vmem:[#allocation2 + $0xa8] sm:$0xff]
      %v6887 = vld [vmem:[#allocation2 + $0xb0] sm:$0xff]
      %v6888 = vld [vmem:[#allocation2 + $0xb8] sm:$0xff]
      %v6889 = vld [vmem:[#allocation2 + $0xc0] sm:$0xff]
      %v6890 = vld [vmem:[#allocation2 + $0xc8] sm:$0xff]
      %v6891 = vld [vmem:[#allocation2 + $0xd0] sm:$0xff]
      %v6892 = vld [vmem:[#allocation2 + $0xd8] sm:$0xff]
      %v6893 = vld [vmem:[#allocation2 + $0xe0] sm:$0xff]
      %v6894 = vld [vmem:[#allocation2 + $0xe8] sm:$0xff]
      %v6895 = vld [vmem:[#allocation2 + $0xf0] sm:$0xff]
      %v6896 = vld [vmem:[#allocation2 + $0xf8] sm:$0xff]
      %v6897 = vld [vmem:[#allocation2 + $0x100] sm:$0xff]
      %v6898 = vld [vmem:[#allocation2 + $0x108] sm:$0xff]
      %v6899 = vld [vmem:[#allocation2 + $0x110] sm:$0xff]
      %v6900 = vld [vmem:[#allocation2 + $0x118] sm:$0xff]
      %v6901 = vld [vmem:[#allocation2 + $0x120] sm:$0xff]
      %v6902 = vld [vmem:[#allocation2 + $0x128] sm:$0xff]
      %v6903 = vld [vmem:[#allocation2 + $0x130] sm:$0xff]
      %v6904 = vld [vmem:[#allocation2 + $0x138] sm:$0xff]
      %v6905 = vld [vmem:[#allocation2 + $0x140] sm:$0xff]
      %v6906 = vld [vmem:[#allocation2 + $0x148] sm:$0xff]
      %v6907 = vld [vmem:[#allocation2 + $0x150] sm:$0xff]
      %v6908 = vld [vmem:[#allocation2 + $0x158] sm:$0xff]
      %v6909 = vld [vmem:[#allocation2 + $0x160] sm:$0xff]
      %v6910 = vld [vmem:[#allocation2 + $0x168] sm:$0xff]
      %v6911 = vld [vmem:[#allocation2 + $0x170] sm:$0xff]
      %v6912 = vld [vmem:[#allocation2 + $0x178] sm:$0xff]
      %v6913 = vld [vmem:[#allocation2 + $0x180] sm:$0xff]
      %v6914 = vld [vmem:[#allocation2 + $0x188] sm:$0xff]
      %v6915 = vld [vmem:[#allocation2 + $0x190] sm:$0xff]
      %v6916 = vld [vmem:[#allocation2 + $0x198] sm:$0xff]
      %v6917 = vld [vmem:[#allocation2 + $0x1a0] sm:$0xff]
      %v6918 = vld [vmem:[#allocation2 + $0x1a8] sm:$0xff]
      %v6919 = vpack.c.bf16 %v6872, %v6871
      %v6920 = vpack.c.bf16 %v6874, %v6873
      %v6921 = vpack.c.bf16 %v6876, %v6875
      %v6922 = vpack.c.bf16 %v6878, %v6877
      %v6923 = vpack.c.bf16 %v6880, %v6879
      %v6924 = vpack.c.bf16 %v6882, %v6881
      %v6925 = vpack.c.bf16 %v6884, %v6883
      %v6926 = vpack.c.bf16 %v6886, %v6885
      %v6927 = vpack.c.bf16 %v6888, %v6887
      %v6928 = vpack.c.bf16 %v6890, %v6889
      %v6929 = vpack.c.bf16 %v6892, %v6891
      %v6930 = vpack.c.bf16 %v6894, %v6893
      %v6931 = vpack.c.bf16 %v6896, %v6895
      %v6932 = vpack.c.bf16 %v6898, %v6897
      %v6933 = vpack.c.bf16 %v6900, %v6899
      %v6934 = vpack.c.bf16 %v6902, %v6901
      %v6935 = vpack.c.bf16 %v6904, %v6903
      %v6936 = vpack.c.bf16 %v6906, %v6905
      %v6937 = vpack.c.bf16 %v6908, %v6907
      %v6938 = vpack.c.bf16 %v6910, %v6909
      %v6939 = vpack.c.bf16 %v6912, %v6911
      %v6940 = vpack.c.bf16 %v6914, %v6913
      %v6941 = vpack.c.bf16 %v6916, %v6915
      %v6942 = vpack.c.bf16 %v6918, %v6917
      %s6943 = scalar_lea.vmem %s3, 256
      %v6944 = vld [vmem:[%s6943] sm:$0xf]
      %v6945 = vld [vmem:[%s6943 + $0x4] sm:$0xf]
      %v6946 = vld [vmem:[%s6943 + $0x8] sm:$0xf]
      %v6947 = vld [vmem:[%s6943 + $0xc] sm:$0xf]
      %v6948 = vld [vmem:[%s6943 + $0x10] sm:$0xf]
      %v6949 = vld [vmem:[%s6943 + $0x14] sm:$0xf]
      %v6950 = vld [vmem:[%s6943 + $0x18] sm:$0xf]
      %v6951 = vld [vmem:[%s6943 + $0x1c] sm:$0xf]
      %v6952 = vld [vmem:[%s6943 + $0x20] sm:$0xf]
      %v6953 = vld [vmem:[%s6943 + $0x24] sm:$0xf]
      %v6954 = vld [vmem:[%s6943 + $0x28] sm:$0xf]
      %v6955 = vld [vmem:[%s6943 + $0x2c] sm:$0xf]
      %v6956 = vld [vmem:[%s6943 + $0x30] sm:$0xf]
      %v6957 = vld [vmem:[%s6943 + $0x34] sm:$0xf]
      %v6958 = vld [vmem:[%s6943 + $0x38] sm:$0xf]
      %v6959 = vld [vmem:[%s6943 + $0x3c] sm:$0xf]
      %v6976 = vunpack.c.l.b16 %v6944
      %v6977 = vunpack.c.l.b16 %v6945
      %v6978 = vunpack.c.l.b16 %v6946
      %v6979 = vunpack.c.l.b16 %v6947
      %v6980 = vunpack.c.l.b16 %v6948
      %v6981 = vunpack.c.l.b16 %v6949
      %v6982 = vunpack.c.l.b16 %v6950
      %v6983 = vunpack.c.l.b16 %v6951
      %v6984 = vunpack.c.l.b16 %v6952
      %v6985 = vunpack.c.l.b16 %v6953
      %v6986 = vunpack.c.l.b16 %v6954
      %v6987 = vunpack.c.l.b16 %v6955
      %v6988 = vunpack.c.l.b16 %v6956
      %v6989 = vunpack.c.l.b16 %v6957
      %v6990 = vunpack.c.l.b16 %v6958
      %v6991 = vunpack.c.l.b16 %v6959
      %v6992 = vpack.c.b16 %v6977, %v6976
      %v6993 = vpack.c.b16 %v6979, %v6978
      %v6994 = vpack.c.b16 %v6981, %v6980
      %v6995 = vpack.c.b16 %v6983, %v6982
      %v6996 = vpack.c.b16 %v6985, %v6984
      %v6997 = vpack.c.b16 %v6987, %v6986
      %v6998 = vpack.c.b16 %v6989, %v6988
      %v6999 = vpack.c.b16 %v6991, %v6990
      %7008 = vmatprep.subr.bf16.mxu0 0
      %7009 = vmatpush1.bf16.msra.mxu0 %v6992
      %7010 = vmatprep.subr.bf16.mxu0 0
      %7011 = vmatpush1.bf16.msra.mxu0 %v6993
      %7012 = vmatprep.subr.bf16.mxu0 0
      %7013 = vmatpush1.bf16.msra.mxu0 %v6994
      %7014 = vmatprep.subr.bf16.mxu0 0
      %7015 = vmatpush1.bf16.msra.mxu0 %v6995
      %7016 = vmatprep.subr.bf16.mxu0 0
      %7017 = vmatpush1.bf16.msra.mxu0 %v6996
      %7018 = vmatprep.subr.bf16.mxu0 0
      %7019 = vmatpush1.bf16.msra.mxu0 %v6997
      %7020 = vmatprep.subr.bf16.mxu0 0
      %7021 = vmatpush1.bf16.msra.mxu0 %v6998
      %7022 = vmatprep.subr.bf16.mxu0 0
      %7023 = vmatpush1.bf16.msra.mxu0 %v6999
      %7024 = vmatprep.subr.bf16.mxu0 0
      %7025 = vmatpush1.bf16.msra.mxu0 0
      %7026 = vmatprep.subr.bf16.mxu0 0
      %7027 = vmatpush1.bf16.msra.mxu0 0
      %7028 = vmatprep.subr.bf16.mxu0 0
      %7029 = vmatpush1.bf16.msra.mxu0 0
      %7030 = vmatprep.subr.bf16.mxu0 0
      %7031 = vmatpush1.bf16.msra.mxu0 0
      %7032 = vmatprep.subr.bf16.mxu0 0
      %7033 = vmatpush1.bf16.msra.mxu0 0
      %7034 = vmatprep.subr.bf16.mxu0 0
      %7035 = vmatpush1.bf16.msra.mxu0 0
      %7036 = vmatprep.subr.bf16.mxu0 0
      %7037 = vmatpush1.bf16.msra.mxu0 0
      %7038 = vmatprep.subr.bf16.mxu0 0
      %7039 = vmatpush1.bf16.msra.mxu0 0
      %7040 = vmatprep.mubr.bf16.mxu0 0
      %7041 = vmatmul.mubr.bf16.gmra.mrb[0].mxu0 %v6919
      %v7042 = vpop.f32.mrb[0].mxu0
      %v7043 = vadd.f32 0.0, %v7042
      %v7044 = vpop.f32.mrb[0].mxu0
      %v7045 = vpop.f32.mrb[0].mxu0
      %v7046 = vadd.f32 0.0, %v7045
      %v7047 = vpop.f32.mrb[0].mxu0
      %7048 = vmatprep.mubr.bf16.mxu0 0
      %7049 = vmatmul.mubr.bf16.gmra.mrb[0].mxu0 %v6920
      %v7050 = vpop.f32.mrb[0].mxu0
      %v7051 = vadd.f32 0.0, %v7050
      %v7052 = vpop.f32.mrb[0].mxu0
      %v7053 = vpop.f32.mrb[0].mxu0
      %v7054 = vadd.f32 0.0, %v7053
      %v7055 = vpop.f32.mrb[0].mxu0
      %7056 = vmatprep.mubr.bf16.mxu0 0
      %7057 = vmatmul.mubr.bf16.gmra.mrb[0].mxu0 %v6921
      %v7058 = vpop.f32.mrb[0].mxu0
      %v7059 = vadd.f32 0.0, %v7058
      %v7060 = vpop.f32.mrb[0].mxu0
      %v7061 = vpop.f32.mrb[0].mxu0
      %v7062 = vadd.f32 0.0, %v7061
      %v7063 = vpop.f32.mrb[0].mxu0
      %7064 = vmatprep.mubr.bf16.mxu0 0
      %7065 = vmatmul.mubr.bf16.gmra.mrb[0].mxu0 %v6922
      %v7066 = vpop.f32.mrb[0].mxu0
      %v7067 = vadd.f32 0.0, %v7066
      %v7068 = vpop.f32.mrb[0].mxu0
      %v7069 = vpop.f32.mrb[0].mxu0
      %v7070 = vadd.f32 0.0, %v7069
      %v7071 = vpop.f32.mrb[0].mxu0
      %7072 = vmatprep.mubr.bf16.mxu0 0
      %7073 = vmatmul.mubr.bf16.gmra.mrb[0].mxu0 %v6923
      %v7074 = vpop.f32.mrb[0].mxu0
      %v7075 = vadd.f32 0.0, %v7074
      %v7076 = vpop.f32.mrb[0].mxu0
      %v7077 = vpop.f32.mrb[0].mxu0
      %v7078 = vadd.f32 0.0, %v7077
      %v7079 = vpop.f32.mrb[0].mxu0
      %7080 = vmatprep.mubr.bf16.mxu0 0
      %7081 = vmatmul.mubr.bf16.gmra.mrb[0].mxu0 %v6924
      %v7082 = vpop.f32.mrb[0].mxu0
      %v7083 = vadd.f32 0.0, %v7082
      %v7084 = vpop.f32.mrb[0].mxu0
      %v7085 = vpop.f32.mrb[0].mxu0
      %v7086 = vadd.f32 0.0, %v7085
      %v7087 = vpop.f32.mrb[0].mxu0
      %7088 = vmatprep.mubr.bf16.mxu0 0
      %7089 = vmatmul.mubr.bf16.gmra.mrb[0].mxu0 %v6925
      %v7090 = vpop.f32.mrb[0].mxu0
      %v7091 = vadd.f32 0.0, %v7090
      %v7092 = vpop.f32.mrb[0].mxu0
      %v7093 = vpop.f32.mrb[0].mxu0
      %v7094 = vadd.f32 0.0, %v7093
      %v7095 = vpop.f32.mrb[0].mxu0
      %7096 = vmatprep.mubr.bf16.mxu0 0
      %7097 = vmatmul.mubr.bf16.gmra.mrb[0].mxu0 %v6926
      %v7098 = vpop.f32.mrb[0].mxu0
      %v7099 = vadd.f32 0.0, %v7098
      %v7100 = vpop.f32.mrb[0].mxu0
      %v7101 = vpop.f32.mrb[0].mxu0
      %v7102 = vadd.f32 0.0, %v7101
      %v7103 = vpop.f32.mrb[0].mxu0
      %7104 = vmatprep.mubr.bf16.mxu0 0
      %7105 = vmatmul.mubr.bf16.gmra.mrb[0].mxu0 %v6927
      %v7106 = vpop.f32.mrb[0].mxu0
      %v7107 = vadd.f32 0.0, %v7106
      %v7108 = vpop.f32.mrb[0].mxu0
      %v7109 = vpop.f32.mrb[0].mxu0
      %v7110 = vadd.f32 0.0, %v7109
      %v7111 = vpop.f32.mrb[0].mxu0
      %7112 = vmatprep.mubr.bf16.mxu0 0
      %7113 = vmatmul.mubr.bf16.gmra.mrb[0].mxu0 %v6928
      %v7114 = vpop.f32.mrb[0].mxu0
      %v7115 = vadd.f32 0.0, %v7114
      %v7116 = vpop.f32.mrb[0].mxu0
      %v7117 = vpop.f32.mrb[0].mxu0
      %v7118 = vadd.f32 0.0, %v7117
      %v7119 = vpop.f32.mrb[0].mxu0
      %7120 = vmatprep.mubr.bf16.mxu0 0
      %7121 = vmatmul.mubr.bf16.gmra.mrb[0].mxu0 %v6929
      %v7122 = vpop.f32.mrb[0].mxu0
      %v7123 = vadd.f32 0.0, %v7122
      %v7124 = vpop.f32.mrb[0].mxu0
      %v7125 = vpop.f32.mrb[0].mxu0
      %v7126 = vadd.f32 0.0, %v7125
      %v7127 = vpop.f32.mrb[0].mxu0
      %7128 = vmatprep.mubr.bf16.mxu0 0
      %7129 = vmatmul.mubr.bf16.gmra.mrb[0].mxu0 %v6930
      %v7130 = vpop.f32.mrb[0].mxu0
      %v7131 = vadd.f32 0.0, %v7130
      %v7132 = vpop.f32.mrb[0].mxu0
      %v7133 = vpop.f32.mrb[0].mxu0
      %v7134 = vadd.f32 0.0, %v7133
      %v7135 = vpop.f32.mrb[0].mxu0
      %7136 = vmatprep.mubr.bf16.mxu0 0
      %7137 = vmatmul.mubr.bf16.gmra.mrb[0].mxu0 %v6931
      %v7138 = vpop.f32.mrb[0].mxu0
      %v7139 = vadd.f32 0.0, %v7138
      %v7140 = vpop.f32.mrb[0].mxu0
      %v7141 = vpop.f32.mrb[0].mxu0
      %v7142 = vadd.f32 0.0, %v7141
      %v7143 = vpop.f32.mrb[0].mxu0
      %7144 = vmatprep.mubr.bf16.mxu0 0
      %7145 = vmatmul.mubr.bf16.gmra.mrb[0].mxu0 %v6932
      %v7146 = vpop.f32.mrb[0].mxu0
      %v7147 = vadd.f32 0.0, %v7146
      %v7148 = vpop.f32.mrb[0].mxu0
      %v7149 = vpop.f32.mrb[0].mxu0
      %v7150 = vadd.f32 0.0, %v7149
      %v7151 = vpop.f32.mrb[0].mxu0
      %7152 = vmatprep.mubr.bf16.mxu0 0
      %7153 = vmatmul.mubr.bf16.gmra.mrb[0].mxu0 %v6933
      %v7154 = vpop.f32.mrb[0].mxu0
      %v7155 = vadd.f32 0.0, %v7154
      %v7156 = vpop.f32.mrb[0].mxu0
      %v7157 = vpop.f32.mrb[0].mxu0
      %v7158 = vadd.f32 0.0, %v7157
      %v7159 = vpop.f32.mrb[0].mxu0
      %7160 = vmatprep.mubr.bf16.mxu0 0
      %7161 = vmatmul.mubr.bf16.gmra.mrb[0].mxu0 %v6934
      %v7162 = vpop.f32.mrb[0].mxu0
      %v7163 = vadd.f32 0.0, %v7162
      %v7164 = vpop.f32.mrb[0].mxu0
      %v7165 = vpop.f32.mrb[0].mxu0
      %v7166 = vadd.f32 0.0, %v7165
      %v7167 = vpop.f32.mrb[0].mxu0
      %7168 = vmatprep.mubr.bf16.mxu0 0
      %7169 = vmatmul.mubr.bf16.gmra.mrb[0].mxu0 %v6935
      %v7170 = vpop.f32.mrb[0].mxu0
      %v7171 = vadd.f32 0.0, %v7170
      %v7172 = vpop.f32.mrb[0].mxu0
      %v7173 = vpop.f32.mrb[0].mxu0
      %v7174 = vadd.f32 0.0, %v7173
      %v7175 = vpop.f32.mrb[0].mxu0
      %7176 = vmatprep.mubr.bf16.mxu0 0
      %7177 = vmatmul.mubr.bf16.gmra.mrb[0].mxu0 %v6936
      %v7178 = vpop.f32.mrb[0].mxu0
      %v7179 = vadd.f32 0.0, %v7178
      %v7180 = vpop.f32.mrb[0].mxu0
      %v7181 = vpop.f32.mrb[0].mxu0
      %v7182 = vadd.f32 0.0, %v7181
      %v7183 = vpop.f32.mrb[0].mxu0
      %7184 = vmatprep.mubr.bf16.mxu0 0
      %7185 = vmatmul.mubr.bf16.gmra.mrb[0].mxu0 %v6937
      %v7186 = vpop.f32.mrb[0].mxu0
      %v7187 = vadd.f32 0.0, %v7186
      %v7188 = vpop.f32.mrb[0].mxu0
      %v7189 = vpop.f32.mrb[0].mxu0
      %v7190 = vadd.f32 0.0, %v7189
      %v7191 = vpop.f32.mrb[0].mxu0
      %7192 = vmatprep.mubr.bf16.mxu0 0
      %7193 = vmatmul.mubr.bf16.gmra.mrb[0].mxu0 %v6938
      %v7194 = vpop.f32.mrb[0].mxu0
      %v7195 = vadd.f32 0.0, %v7194
      %v7196 = vpop.f32.mrb[0].mxu0
      %v7197 = vpop.f32.mrb[0].mxu0
      %v7198 = vadd.f32 0.0, %v7197
      %v7199 = vpop.f32.mrb[0].mxu0
      %7200 = vmatprep.mubr.bf16.mxu0 0
      %7201 = vmatmul.mubr.bf16.gmra.mrb[0].mxu0 %v6939
      %v7202 = vpop.f32.mrb[0].mxu0
      %v7203 = vadd.f32 0.0, %v7202
      %v7204 = vpop.f32.mrb[0].mxu0
      %v7205 = vpop.f32.mrb[0].mxu0
      %v7206 = vadd.f32 0.0, %v7205
      %v7207 = vpop.f32.mrb[0].mxu0
      %7208 = vmatprep.mubr.bf16.mxu0 0
      %7209 = vmatmul.mubr.bf16.gmra.mrb[0].mxu0 %v6940
      %v7210 = vpop.f32.mrb[0].mxu0
      %v7211 = vadd.f32 0.0, %v7210
      %v7212 = vpop.f32.mrb[0].mxu0
      %v7213 = vpop.f32.mrb[0].mxu0
      %v7214 = vadd.f32 0.0, %v7213
      %v7215 = vpop.f32.mrb[0].mxu0
      %7216 = vmatprep.mubr.bf16.mxu0 0
      %7217 = vmatmul.mubr.bf16.gmra.mrb[0].mxu0 %v6941
      %v7218 = vpop.f32.mrb[0].mxu0
      %v7219 = vadd.f32 0.0, %v7218
      %v7220 = vpop.f32.mrb[0].mxu0
      %v7221 = vpop.f32.mrb[0].mxu0
      %v7222 = vadd.f32 0.0, %v7221
      %v7223 = vpop.f32.mrb[0].mxu0
      %7224 = vmatprep.mubr.bf16.mxu0 0
      %7225 = vmatmul.mubr.bf16.gmra.mrb[0].mxu0 %v6942
      %v7226 = vpop.f32.mrb[0].mxu0
      %v7227 = vadd.f32 0.0, %v7226
      %v7228 = vpop.f32.mrb[0].mxu0
      %v7229 = vpop.f32.mrb[0].mxu0
      %v7230 = vadd.f32 0.0, %v7229
      %v7231 = vpop.f32.mrb[0].mxu0
      %7232 = vdwg.mxu0
      %v7233 = vadd.f32 %v6823, %v7043
      %v7234 = vadd.f32 %v6824, %v7046
      %v7235 = vadd.f32 %v6825, %v7051
      %v7236 = vadd.f32 %v6826, %v7054
      %v7237 = vadd.f32 %v6827, %v7059
      %v7238 = vadd.f32 %v6828, %v7062
      %v7239 = vadd.f32 %v6829, %v7067
      %v7240 = vadd.f32 %v6830, %v7070
      %v7241 = vadd.f32 %v6831, %v7075
      %v7242 = vadd.f32 %v6832, %v7078
      %v7243 = vadd.f32 %v6833, %v7083
      %v7244 = vadd.f32 %v6834, %v7086
      %v7245 = vadd.f32 %v6835, %v7091
      %v7246 = vadd.f32 %v6836, %v7094
      %v7247 = vadd.f32 %v6837, %v7099
      %v7248 = vadd.f32 %v6838, %v7102
      %v7249 = vadd.f32 %v6839, %v7107
      %v7250 = vadd.f32 %v6840, %v7110
      %v7251 = vadd.f32 %v6841, %v7115
      %v7252 = vadd.f32 %v6842, %v7118
      %v7253 = vadd.f32 %v6843, %v7123
      %v7254 = vadd.f32 %v6844, %v7126
      %v7255 = vadd.f32 %v6845, %v7131
      %v7256 = vadd.f32 %v6846, %v7134
      %v7257 = vadd.f32 %v6847, %v7139
      %v7258 = vadd.f32 %v6848, %v7142
      %v7259 = vadd.f32 %v6849, %v7147
      %v7260 = vadd.f32 %v6850, %v7150
      %v7261 = vadd.f32 %v6851, %v7155
      %v7262 = vadd.f32 %v6852, %v7158
      %v7263 = vadd.f32 %v6853, %v7163
      %v7264 = vadd.f32 %v6854, %v7166
      %v7265 = vadd.f32 %v6855, %v7171
      %v7266 = vadd.f32 %v6856, %v7174
      %v7267 = vadd.f32 %v6857, %v7179
      %v7268 = vadd.f32 %v6858, %v7182
      %v7269 = vadd.f32 %v6859, %v7187
      %v7270 = vadd.f32 %v6860, %v7190
      %v7271 = vadd.f32 %v6861, %v7195
      %v7272 = vadd.f32 %v6862, %v7198
      %v7273 = vadd.f32 %v6863, %v7203
      %v7274 = vadd.f32 %v6864, %v7206
      %v7275 = vadd.f32 %v6865, %v7211
      %v7276 = vadd.f32 %v6866, %v7214
      %v7277 = vadd.f32 %v6867, %v7219
      %v7278 = vadd.f32 %v6868, %v7222
      %v7279 = vadd.f32 %v6869, %v7227
      %v7280 = vadd.f32 %v6870, %v7230
      %v7281 = vld [vmem:[#allocation2 + $0x31] sm:$0xff]
      %v7282 = vld [vmem:[#allocation2 + $0x39] sm:$0xff]
      %v7283 = vld [vmem:[#allocation2 + $0x41] sm:$0xff]
      %v7284 = vld [vmem:[#allocation2 + $0x49] sm:$0xff]
      %v7285 = vld [vmem:[#allocation2 + $0x51] sm:$0xff]
      %v7286 = vld [vmem:[#allocation2 + $0x59] sm:$0xff]
      %v7287 = vld [vmem:[#allocation2 + $0x61] sm:$0xff]
      %v7288 = vld [vmem:[#allocation2 + $0x69] sm:$0xff]
      %v7289 = vld [vmem:[#allocation2 + $0x71] sm:$0xff]
      %v7290 = vld [vmem:[#allocation2 + $0x79] sm:$0xff]
      %v7291 = vld [vmem:[#allocation2 + $0x81] sm:$0xff]
      %v7292 = vld [vmem:[#allocation2 + $0x89] sm:$0xff]
      %v7293 = vld [vmem:[#allocation2 + $0x91] sm:$0xff]
      %v7294 = vld [vmem:[#allocation2 + $0x99] sm:$0xff]
      %v7295 = vld [vmem:[#allocation2 + $0xa1] sm:$0xff]
      %v7296 = vld [vmem:[#allocation2 + $0xa9] sm:$0xff]
      %v7297 = vld [vmem:[#allocation2 + $0xb1] sm:$0xff]
      %v7298 = vld [vmem:[#allocation2 + $0xb9] sm:$0xff]
      %v7299 = vld [vmem:[#allocation2 + $0xc1] sm:$0xff]
      %v7300 = vld [vmem:[#allocation2 + $0xc9] sm:$0xff]
      %v7301 = vld [vmem:[#allocation2 + $0xd1] sm:$0xff]
      %v7302 = vld [vmem:[#allocation2 + $0xd9] sm:$0xff]
      %v7303 = vld [vmem:[#allocation2 + $0xe1] sm:$0xff]
      %v7304 = vld [vmem:[#allocation2 + $0xe9] sm:$0xff]
      %v7305 = vld [vmem:[#allocation2 + $0xf1] sm:$0xff]
      %v7306 = vld [vmem:[#allocation2 + $0xf9] sm:$0xff]
      %v7307 = vld [vmem:[#allocation2 + $0x101] sm:$0xff]
      %v7308 = vld [vmem:[#allocation2 + $0x109] sm:$0xff]
      %v7309 = vld [vmem:[#allocation2 + $0x111] sm:$0xff]
      %v7310 = vld [vmem:[#allocation2 + $0x119] sm:$0xff]
      %v7311 = vld [vmem:[#allocation2 + $0x121] sm:$0xff]
      %v7312 = vld [vmem:[#allocation2 + $0x129] sm:$0xff]
      %v7313 = vld [vmem:[#allocation2 + $0x131] sm:$0xff]
      %v7314 = vld [vmem:[#allocation2 + $0x139] sm:$0xff]
      %v7315 = vld [vmem:[#allocation2 + $0x141] sm:$0xff]
      %v7316 = vld [vmem:[#allocation2 + $0x149] sm:$0xff]
      %v7317 = vld [vmem:[#allocation2 + $0x151] sm:$0xff]
      %v7318 = vld [vmem:[#allocation2 + $0x159] sm:$0xff]
      %v7319 = vld [vmem:[#allocation2 + $0x161] sm:$0xff]
      %v7320 = vld [vmem:[#allocation2 + $0x169] sm:$0xff]
      %v7321 = vld [vmem:[#allocation2 + $0x171] sm:$0xff]
      %v7322 = vld [vmem:[#allocation2 + $0x179] sm:$0xff]
      %v7323 = vld [vmem:[#allocation2 + $0x181] sm:$0xff]
      %v7324 = vld [vmem:[#allocation2 + $0x189] sm:$0xff]
      %v7325 = vld [vmem:[#allocation2 + $0x191] sm:$0xff]
      %v7326 = vld [vmem:[#allocation2 + $0x199] sm:$0xff]
      %v7327 = vld [vmem:[#allocation2 + $0x1a1] sm:$0xff]
      %v7328 = vld [vmem:[#allocation2 + $0x1a9] sm:$0xff]
      %v7329 = vpack.c.bf16 %v7282, %v7281
      %v7330 = vpack.c.bf16 %v7284, %v7283
      %v7331 = vpack.c.bf16 %v7286, %v7285
      %v7332 = vpack.c.bf16 %v7288, %v7287
      %v7333 = vpack.c.bf16 %v7290, %v7289
      %v7334 = vpack.c.bf16 %v7292, %v7291
      %v7335 = vpack.c.bf16 %v7294, %v7293
      %v7336 = vpack.c.bf16 %v7296, %v7295
      %v7337 = vpack.c.bf16 %v7298, %v7297
      %v7338 = vpack.c.bf16 %v7300, %v7299
      %v7339 = vpack.c.bf16 %v7302, %v7301
      %v7340 = vpack.c.bf16 %v7304, %v7303
      %v7341 = vpack.c.bf16 %v7306, %v7305
      %v7342 = vpack.c.bf16 %v7308, %v7307
      %v7343 = vpack.c.bf16 %v7310, %v7309
      %v7344 = vpack.c.bf16 %v7312, %v7311
      %v7345 = vpack.c.bf16 %v7314, %v7313
      %v7346 = vpack.c.bf16 %v7316, %v7315
      %v7347 = vpack.c.bf16 %v7318, %v7317
      %v7348 = vpack.c.bf16 %v7320, %v7319
      %v7349 = vpack.c.bf16 %v7322, %v7321
      %v7350 = vpack.c.bf16 %v7324, %v7323
      %v7351 = vpack.c.bf16 %v7326, %v7325
      %v7352 = vpack.c.bf16 %v7328, %v7327
      %s7353 = scalar_lea.vmem %s3, 320
      %v7354 = vld [vmem:[%s7353] sm:$0xf]
      %v7355 = vld [vmem:[%s7353 + $0x4] sm:$0xf]
      %v7356 = vld [vmem:[%s7353 + $0x8] sm:$0xf]
      %v7357 = vld [vmem:[%s7353 + $0xc] sm:$0xf]
      %v7358 = vld [vmem:[%s7353 + $0x10] sm:$0xf]
      %v7359 = vld [vmem:[%s7353 + $0x14] sm:$0xf]
      %v7360 = vld [vmem:[%s7353 + $0x18] sm:$0xf]
      %v7361 = vld [vmem:[%s7353 + $0x1c] sm:$0xf]
      %v7362 = vld [vmem:[%s7353 + $0x20] sm:$0xf]
      %v7363 = vld [vmem:[%s7353 + $0x24] sm:$0xf]
      %v7364 = vld [vmem:[%s7353 + $0x28] sm:$0xf]
      %v7365 = vld [vmem:[%s7353 + $0x2c] sm:$0xf]
      %v7366 = vld [vmem:[%s7353 + $0x30] sm:$0xf]
      %v7367 = vld [vmem:[%s7353 + $0x34] sm:$0xf]
      %v7368 = vld [vmem:[%s7353 + $0x38] sm:$0xf]
      %v7369 = vld [vmem:[%s7353 + $0x3c] sm:$0xf]
      %v7386 = vunpack.c.l.b16 %v7354
      %v7387 = vunpack.c.l.b16 %v7355
      %v7388 = vunpack.c.l.b16 %v7356
      %v7389 = vunpack.c.l.b16 %v7357
      %v7390 = vunpack.c.l.b16 %v7358
      %v7391 = vunpack.c.l.b16 %v7359
      %v7392 = vunpack.c.l.b16 %v7360
      %v7393 = vunpack.c.l.b16 %v7361
      %v7394 = vunpack.c.l.b16 %v7362
      %v7395 = vunpack.c.l.b16 %v7363
      %v7396 = vunpack.c.l.b16 %v7364
      %v7397 = vunpack.c.l.b16 %v7365
      %v7398 = vunpack.c.l.b16 %v7366
      %v7399 = vunpack.c.l.b16 %v7367
      %v7400 = vunpack.c.l.b16 %v7368
      %v7401 = vunpack.c.l.b16 %v7369
      %v7402 = vpack.c.b16 %v7387, %v7386
      %v7403 = vpack.c.b16 %v7389, %v7388
      %v7404 = vpack.c.b16 %v7391, %v7390
      %v7405 = vpack.c.b16 %v7393, %v7392
      %v7406 = vpack.c.b16 %v7395, %v7394
      %v7407 = vpack.c.b16 %v7397, %v7396
      %v7408 = vpack.c.b16 %v7399, %v7398
      %v7409 = vpack.c.b16 %v7401, %v7400
      %7418 = vmatprep.subr.bf16.mxu0 0
      %7419 = vmatpush1.bf16.msra.mxu0 %v7402
      %7420 = vmatprep.subr.bf16.mxu0 0
      %7421 = vmatpush1.bf16.msra.mxu0 %v7403
      %7422 = vmatprep.subr.bf16.mxu0 0
      %7423 = vmatpush1.bf16.msra.mxu0 %v7404
      %7424 = vmatprep.subr.bf16.mxu0 0
      %7425 = vmatpush1.bf16.msra.mxu0 %v7405
      %7426 = vmatprep.subr.bf16.mxu0 0
      %7427 = vmatpush1.bf16.msra.mxu0 %v7406
      %7428 = vmatprep.subr.bf16.mxu0 0
      %7429 = vmatpush1.bf16.msra.mxu0 %v7407
      %7430 = vmatprep.subr.bf16.mxu0 0
      %7431 = vmatpush1.bf16.msra.mxu0 %v7408
      %7432 = vmatprep.subr.bf16.mxu0 0
      %7433 = vmatpush1.bf16.msra.mxu0 %v7409
      %7434 = vmatprep.subr.bf16.mxu0 0
      %7435 = vmatpush1.bf16.msra.mxu0 0
      %7436 = vmatprep.subr.bf16.mxu0 0
      %7437 = vmatpush1.bf16.msra.mxu0 0
      %7438 = vmatprep.subr.bf16.mxu0 0
      %7439 = vmatpush1.bf16.msra.mxu0 0
      %7440 = vmatprep.subr.bf16.mxu0 0
      %7441 = vmatpush1.bf16.msra.mxu0 0
      %7442 = vmatprep.subr.bf16.mxu0 0
      %7443 = vmatpush1.bf16.msra.mxu0 0
      %7444 = vmatprep.subr.bf16.mxu0 0
      %7445 = vmatpush1.bf16.msra.mxu0 0
      %7446 = vmatprep.subr.bf16.mxu0 0
      %7447 = vmatpush1.bf16.msra.mxu0 0
      %7448 = vmatprep.subr.bf16.mxu0 0
      %7449 = vmatpush1.bf16.msra.mxu0 0
      %7450 = vmatprep.mubr.bf16.mxu0 0
      %7451 = vmatmul.mubr.bf16.gmra.mrb[0].mxu0 %v7329
      %v7452 = vpop.f32.mrb[0].mxu0
      %v7453 = vadd.f32 0.0, %v7452
      %v7454 = vpop.f32.mrb[0].mxu0
      %v7455 = vpop.f32.mrb[0].mxu0
      %v7456 = vadd.f32 0.0, %v7455
      %v7457 = vpop.f32.mrb[0].mxu0
      %7458 = vmatprep.mubr.bf16.mxu0 0
      %7459 = vmatmul.mubr.bf16.gmra.mrb[0].mxu0 %v7330
      %v7460 = vpop.f32.mrb[0].mxu0
      %v7461 = vadd.f32 0.0, %v7460
      %v7462 = vpop.f32.mrb[0].mxu0
      %v7463 = vpop.f32.mrb[0].mxu0
      %v7464 = vadd.f32 0.0, %v7463
      %v7465 = vpop.f32.mrb[0].mxu0
      %7466 = vmatprep.mubr.bf16.mxu0 0
      %7467 = vmatmul.mubr.bf16.gmra.mrb[0].mxu0 %v7331
      %v7468 = vpop.f32.mrb[0].mxu0
      %v7469 = vadd.f32 0.0, %v7468
      %v7470 = vpop.f32.mrb[0].mxu0
      %v7471 = vpop.f32.mrb[0].mxu0
      %v7472 = vadd.f32 0.0, %v7471
      %v7473 = vpop.f32.mrb[0].mxu0
      %7474 = vmatprep.mubr.bf16.mxu0 0
      %7475 = vmatmul.mubr.bf16.gmra.mrb[0].mxu0 %v7332
      %v7476 = vpop.f32.mrb[0].mxu0
      %v7477 = vadd.f32 0.0, %v7476
      %v7478 = vpop.f32.mrb[0].mxu0
      %v7479 = vpop.f32.mrb[0].mxu0
      %v7480 = vadd.f32 0.0, %v7479
      %v7481 = vpop.f32.mrb[0].mxu0
      %7482 = vmatprep.mubr.bf16.mxu0 0
      %7483 = vmatmul.mubr.bf16.gmra.mrb[0].mxu0 %v7333
      %v7484 = vpop.f32.mrb[0].mxu0
      %v7485 = vadd.f32 0.0, %v7484
      %v7486 = vpop.f32.mrb[0].mxu0
      %v7487 = vpop.f32.mrb[0].mxu0
      %v7488 = vadd.f32 0.0, %v7487
      %v7489 = vpop.f32.mrb[0].mxu0
      %7490 = vmatprep.mubr.bf16.mxu0 0
      %7491 = vmatmul.mubr.bf16.gmra.mrb[0].mxu0 %v7334
      %v7492 = vpop.f32.mrb[0].mxu0
      %v7493 = vadd.f32 0.0, %v7492
      %v7494 = vpop.f32.mrb[0].mxu0
      %v7495 = vpop.f32.mrb[0].mxu0
      %v7496 = vadd.f32 0.0, %v7495
      %v7497 = vpop.f32.mrb[0].mxu0
      %7498 = vmatprep.mubr.bf16.mxu0 0
      %7499 = vmatmul.mubr.bf16.gmra.mrb[0].mxu0 %v7335
      %v7500 = vpop.f32.mrb[0].mxu0
      %v7501 = vadd.f32 0.0, %v7500
      %v7502 = vpop.f32.mrb[0].mxu0
      %v7503 = vpop.f32.mrb[0].mxu0
      %v7504 = vadd.f32 0.0, %v7503
      %v7505 = vpop.f32.mrb[0].mxu0
      %7506 = vmatprep.mubr.bf16.mxu0 0
      %7507 = vmatmul.mubr.bf16.gmra.mrb[0].mxu0 %v7336
      %v7508 = vpop.f32.mrb[0].mxu0
      %v7509 = vadd.f32 0.0, %v7508
      %v7510 = vpop.f32.mrb[0].mxu0
      %v7511 = vpop.f32.mrb[0].mxu0
      %v7512 = vadd.f32 0.0, %v7511
      %v7513 = vpop.f32.mrb[0].mxu0
      %7514 = vmatprep.mubr.bf16.mxu0 0
      %7515 = vmatmul.mubr.bf16.gmra.mrb[0].mxu0 %v7337
      %v7516 = vpop.f32.mrb[0].mxu0
      %v7517 = vadd.f32 0.0, %v7516
      %v7518 = vpop.f32.mrb[0].mxu0
      %v7519 = vpop.f32.mrb[0].mxu0
      %v7520 = vadd.f32 0.0, %v7519
      %v7521 = vpop.f32.mrb[0].mxu0
      %7522 = vmatprep.mubr.bf16.mxu0 0
      %7523 = vmatmul.mubr.bf16.gmra.mrb[0].mxu0 %v7338
      %v7524 = vpop.f32.mrb[0].mxu0
      %v7525 = vadd.f32 0.0, %v7524
      %v7526 = vpop.f32.mrb[0].mxu0
      %v7527 = vpop.f32.mrb[0].mxu0
      %v7528 = vadd.f32 0.0, %v7527
      %v7529 = vpop.f32.mrb[0].mxu0
      %7530 = vmatprep.mubr.bf16.mxu0 0
      %7531 = vmatmul.mubr.bf16.gmra.mrb[0].mxu0 %v7339
      %v7532 = vpop.f32.mrb[0].mxu0
      %v7533 = vadd.f32 0.0, %v7532
      %v7534 = vpop.f32.mrb[0].mxu0
      %v7535 = vpop.f32.mrb[0].mxu0
      %v7536 = vadd.f32 0.0, %v7535
      %v7537 = vpop.f32.mrb[0].mxu0
      %7538 = vmatprep.mubr.bf16.mxu0 0
      %7539 = vmatmul.mubr.bf16.gmra.mrb[0].mxu0 %v7340
      %v7540 = vpop.f32.mrb[0].mxu0
      %v7541 = vadd.f32 0.0, %v7540
      %v7542 = vpop.f32.mrb[0].mxu0
      %v7543 = vpop.f32.mrb[0].mxu0
      %v7544 = vadd.f32 0.0, %v7543
      %v7545 = vpop.f32.mrb[0].mxu0
      %7546 = vmatprep.mubr.bf16.mxu0 0
      %7547 = vmatmul.mubr.bf16.gmra.mrb[0].mxu0 %v7341
      %v7548 = vpop.f32.mrb[0].mxu0
      %v7549 = vadd.f32 0.0, %v7548
      %v7550 = vpop.f32.mrb[0].mxu0
      %v7551 = vpop.f32.mrb[0].mxu0
      %v7552 = vadd.f32 0.0, %v7551
      %v7553 = vpop.f32.mrb[0].mxu0
      %7554 = vmatprep.mubr.bf16.mxu0 0
      %7555 = vmatmul.mubr.bf16.gmra.mrb[0].mxu0 %v7342
      %v7556 = vpop.f32.mrb[0].mxu0
      %v7557 = vadd.f32 0.0, %v7556
      %v7558 = vpop.f32.mrb[0].mxu0
      %v7559 = vpop.f32.mrb[0].mxu0
      %v7560 = vadd.f32 0.0, %v7559
      %v7561 = vpop.f32.mrb[0].mxu0
      %7562 = vmatprep.mubr.bf16.mxu0 0
      %7563 = vmatmul.mubr.bf16.gmra.mrb[0].mxu0 %v7343
      %v7564 = vpop.f32.mrb[0].mxu0
      %v7565 = vadd.f32 0.0, %v7564
      %v7566 = vpop.f32.mrb[0].mxu0
      %v7567 = vpop.f32.mrb[0].mxu0
      %v7568 = vadd.f32 0.0, %v7567
      %v7569 = vpop.f32.mrb[0].mxu0
      %7570 = vmatprep.mubr.bf16.mxu0 0
      %7571 = vmatmul.mubr.bf16.gmra.mrb[0].mxu0 %v7344
      %v7572 = vpop.f32.mrb[0].mxu0
      %v7573 = vadd.f32 0.0, %v7572
      %v7574 = vpop.f32.mrb[0].mxu0
      %v7575 = vpop.f32.mrb[0].mxu0
      %v7576 = vadd.f32 0.0, %v7575
      %v7577 = vpop.f32.mrb[0].mxu0
      %7578 = vmatprep.mubr.bf16.mxu0 0
      %7579 = vmatmul.mubr.bf16.gmra.mrb[0].mxu0 %v7345
      %v7580 = vpop.f32.mrb[0].mxu0
      %v7581 = vadd.f32 0.0, %v7580
      %v7582 = vpop.f32.mrb[0].mxu0
      %v7583 = vpop.f32.mrb[0].mxu0
      %v7584 = vadd.f32 0.0, %v7583
      %v7585 = vpop.f32.mrb[0].mxu0
      %7586 = vmatprep.mubr.bf16.mxu0 0
      %7587 = vmatmul.mubr.bf16.gmra.mrb[0].mxu0 %v7346
      %v7588 = vpop.f32.mrb[0].mxu0
      %v7589 = vadd.f32 0.0, %v7588
      %v7590 = vpop.f32.mrb[0].mxu0
      %v7591 = vpop.f32.mrb[0].mxu0
      %v7592 = vadd.f32 0.0, %v7591
      %v7593 = vpop.f32.mrb[0].mxu0
      %7594 = vmatprep.mubr.bf16.mxu0 0
      %7595 = vmatmul.mubr.bf16.gmra.mrb[0].mxu0 %v7347
      %v7596 = vpop.f32.mrb[0].mxu0
      %v7597 = vadd.f32 0.0, %v7596
      %v7598 = vpop.f32.mrb[0].mxu0
      %v7599 = vpop.f32.mrb[0].mxu0
      %v7600 = vadd.f32 0.0, %v7599
      %v7601 = vpop.f32.mrb[0].mxu0
      %7602 = vmatprep.mubr.bf16.mxu0 0
      %7603 = vmatmul.mubr.bf16.gmra.mrb[0].mxu0 %v7348
      %v7604 = vpop.f32.mrb[0].mxu0
      %v7605 = vadd.f32 0.0, %v7604
      %v7606 = vpop.f32.mrb[0].mxu0
      %v7607 = vpop.f32.mrb[0].mxu0
      %v7608 = vadd.f32 0.0, %v7607
      %v7609 = vpop.f32.mrb[0].mxu0
      %7610 = vmatprep.mubr.bf16.mxu0 0
      %7611 = vmatmul.mubr.bf16.gmra.mrb[0].mxu0 %v7349
      %v7612 = vpop.f32.mrb[0].mxu0
      %v7613 = vadd.f32 0.0, %v7612
      %v7614 = vpop.f32.mrb[0].mxu0
      %v7615 = vpop.f32.mrb[0].mxu0
      %v7616 = vadd.f32 0.0, %v7615
      %v7617 = vpop.f32.mrb[0].mxu0
      %7618 = vmatprep.mubr.bf16.mxu0 0
      %7619 = vmatmul.mubr.bf16.gmra.mrb[0].mxu0 %v7350
      %v7620 = vpop.f32.mrb[0].mxu0
      %v7621 = vadd.f32 0.0, %v7620
      %v7622 = vpop.f32.mrb[0].mxu0
      %v7623 = vpop.f32.mrb[0].mxu0
      %v7624 = vadd.f32 0.0, %v7623
      %v7625 = vpop.f32.mrb[0].mxu0
      %7626 = vmatprep.mubr.bf16.mxu0 0
      %7627 = vmatmul.mubr.bf16.gmra.mrb[0].mxu0 %v7351
      %v7628 = vpop.f32.mrb[0].mxu0
      %v7629 = vadd.f32 0.0, %v7628
      %v7630 = vpop.f32.mrb[0].mxu0
      %v7631 = vpop.f32.mrb[0].mxu0
      %v7632 = vadd.f32 0.0, %v7631
      %v7633 = vpop.f32.mrb[0].mxu0
      %7634 = vmatprep.mubr.bf16.mxu0 0
      %7635 = vmatmul.mubr.bf16.gmra.mrb[0].mxu0 %v7352
      %v7636 = vpop.f32.mrb[0].mxu0
      %v7637 = vadd.f32 0.0, %v7636
      %v7638 = vpop.f32.mrb[0].mxu0
      %v7639 = vpop.f32.mrb[0].mxu0
      %v7640 = vadd.f32 0.0, %v7639
      %v7641 = vpop.f32.mrb[0].mxu0
      %7642 = vdwg.mxu0
      %v7643 = vadd.f32 %v7233, %v7453
      %v7644 = vadd.f32 %v7234, %v7456
      %v7645 = vadd.f32 %v7235, %v7461
      %v7646 = vadd.f32 %v7236, %v7464
      %v7647 = vadd.f32 %v7237, %v7469
      %v7648 = vadd.f32 %v7238, %v7472
      %v7649 = vadd.f32 %v7239, %v7477
      %v7650 = vadd.f32 %v7240, %v7480
      %v7651 = vadd.f32 %v7241, %v7485
      %v7652 = vadd.f32 %v7242, %v7488
      %v7653 = vadd.f32 %v7243, %v7493
      %v7654 = vadd.f32 %v7244, %v7496
      %v7655 = vadd.f32 %v7245, %v7501
      %v7656 = vadd.f32 %v7246, %v7504
      %v7657 = vadd.f32 %v7247, %v7509
      %v7658 = vadd.f32 %v7248, %v7512
      %v7659 = vadd.f32 %v7249, %v7517
      %v7660 = vadd.f32 %v7250, %v7520
      %v7661 = vadd.f32 %v7251, %v7525
      %v7662 = vadd.f32 %v7252, %v7528
      %v7663 = vadd.f32 %v7253, %v7533
      %v7664 = vadd.f32 %v7254, %v7536
      %v7665 = vadd.f32 %v7255, %v7541
      %v7666 = vadd.f32 %v7256, %v7544
      %v7667 = vadd.f32 %v7257, %v7549
      %v7668 = vadd.f32 %v7258, %v7552
      %v7669 = vadd.f32 %v7259, %v7557
      %v7670 = vadd.f32 %v7260, %v7560
      %v7671 = vadd.f32 %v7261, %v7565
      %v7672 = vadd.f32 %v7262, %v7568
      %v7673 = vadd.f32 %v7263, %v7573
      %v7674 = vadd.f32 %v7264, %v7576
      %v7675 = vadd.f32 %v7265, %v7581
      %v7676 = vadd.f32 %v7266, %v7584
      %v7677 = vadd.f32 %v7267, %v7589
      %v7678 = vadd.f32 %v7268, %v7592
      %v7679 = vadd.f32 %v7269, %v7597
      %v7680 = vadd.f32 %v7270, %v7600
      %v7681 = vadd.f32 %v7271, %v7605
      %v7682 = vadd.f32 %v7272, %v7608
      %v7683 = vadd.f32 %v7273, %v7613
      %v7684 = vadd.f32 %v7274, %v7616
      %v7685 = vadd.f32 %v7275, %v7621
      %v7686 = vadd.f32 %v7276, %v7624
      %v7687 = vadd.f32 %v7277, %v7629
      %v7688 = vadd.f32 %v7278, %v7632
      %v7689 = vadd.f32 %v7279, %v7637
      %v7690 = vadd.f32 %v7280, %v7640
      %v7691 = vld [vmem:[#allocation2 + $0x47] sm:$0xff]
      %v7692 = vld [vmem:[#allocation2 + $0x4f] sm:$0xff]
      %v7693 = vld [vmem:[#allocation2 + $0x57] sm:$0xff]
      %v7694 = vld [vmem:[#allocation2 + $0x5f] sm:$0xff]
      %v7695 = vld [vmem:[#allocation2 + $0x67] sm:$0xff]
      %v7696 = vld [vmem:[#allocation2 + $0x6f] sm:$0xff]
      %v7697 = vld [vmem:[#allocation2 + $0x77] sm:$0xff]
      %v7698 = vld [vmem:[#allocation2 + $0x7f] sm:$0xff]
      %v7699 = vld [vmem:[#allocation2 + $0x87] sm:$0xff]
      %v7700 = vld [vmem:[#allocation2 + $0x8f] sm:$0xff]
      %v7701 = vld [vmem:[#allocation2 + $0x97] sm:$0xff]
      %v7702 = vld [vmem:[#allocation2 + $0x9f] sm:$0xff]
      %v7703 = vld [vmem:[#allocation2 + $0xa7] sm:$0xff]
      %v7704 = vld [vmem:[#allocation2 + $0xaf] sm:$0xff]
      %v7705 = vld [vmem:[#allocation2 + $0xb7] sm:$0xff]
      %v7706 = vld [vmem:[#allocation2 + $0xbf] sm:$0xff]
      %v7707 = vld [vmem:[#allocation2 + $0xc7] sm:$0xff]
      %v7708 = vld [vmem:[#allocation2 + $0xcf] sm:$0xff]
      %v7709 = vld [vmem:[#allocation2 + $0xd7] sm:$0xff]
      %v7710 = vld [vmem:[#allocation2 + $0xdf] sm:$0xff]
      %v7711 = vld [vmem:[#allocation2 + $0xe7] sm:$0xff]
      %v7712 = vld [vmem:[#allocation2 + $0xef] sm:$0xff]
      %v7713 = vld [vmem:[#allocation2 + $0xf7] sm:$0xff]
      %v7714 = vld [vmem:[#allocation2 + $0xff] sm:$0xff]
      %v7715 = vld [vmem:[#allocation2 + $0x107] sm:$0xff]
      %v7716 = vld [vmem:[#allocation2 + $0x10f] sm:$0xff]
      %v7717 = vld [vmem:[#allocation2 + $0x117] sm:$0xff]
      %v7718 = vld [vmem:[#allocation2 + $0x11f] sm:$0xff]
      %v7719 = vld [vmem:[#allocation2 + $0x127] sm:$0xff]
      %v7720 = vld [vmem:[#allocation2 + $0x12f] sm:$0xff]
      %v7721 = vld [vmem:[#allocation2 + $0x137] sm:$0xff]
      %v7722 = vld [vmem:[#allocation2 + $0x13f] sm:$0xff]
      %v7723 = vld [vmem:[#allocation2 + $0x147] sm:$0xff]
      %v7724 = vld [vmem:[#allocation2 + $0x14f] sm:$0xff]
      %v7725 = vld [vmem:[#allocation2 + $0x157] sm:$0xff]
      %v7726 = vld [vmem:[#allocation2 + $0x15f] sm:$0xff]
      %v7727 = vld [vmem:[#allocation2 + $0x167] sm:$0xff]
      %v7728 = vld [vmem:[#allocation2 + $0x16f] sm:$0xff]
      %v7729 = vld [vmem:[#allocation2 + $0x177] sm:$0xff]
      %v7730 = vld [vmem:[#allocation2 + $0x17f] sm:$0xff]
      %v7731 = vld [vmem:[#allocation2 + $0x187] sm:$0xff]
      %v7732 = vld [vmem:[#allocation2 + $0x18f] sm:$0xff]
      %v7733 = vld [vmem:[#allocation2 + $0x197] sm:$0xff]
      %v7734 = vld [vmem:[#allocation2 + $0x19f] sm:$0xff]
      %v7735 = vld [vmem:[#allocation2 + $0x1a7] sm:$0xff]
      %v7736 = vld [vmem:[#allocation2 + $0x1af] sm:$0xff]
      %v7737 = vld [vmem:[#allocation2 + $0x1b7] sm:$0xff]
      %v7738 = vld [vmem:[#allocation2 + $0x1bf] sm:$0xff]
      %v7739 = vpack.c.bf16 %v7692, %v7691
      %v7740 = vpack.c.bf16 %v7694, %v7693
      %v7741 = vpack.c.bf16 %v7696, %v7695
      %v7742 = vpack.c.bf16 %v7698, %v7697
      %v7743 = vpack.c.bf16 %v7700, %v7699
      %v7744 = vpack.c.bf16 %v7702, %v7701
      %v7745 = vpack.c.bf16 %v7704, %v7703
      %v7746 = vpack.c.bf16 %v7706, %v7705
      %v7747 = vpack.c.bf16 %v7708, %v7707
      %v7748 = vpack.c.bf16 %v7710, %v7709
      %v7749 = vpack.c.bf16 %v7712, %v7711
      %v7750 = vpack.c.bf16 %v7714, %v7713
      %v7751 = vpack.c.bf16 %v7716, %v7715
      %v7752 = vpack.c.bf16 %v7718, %v7717
      %v7753 = vpack.c.bf16 %v7720, %v7719
      %v7754 = vpack.c.bf16 %v7722, %v7721
      %v7755 = vpack.c.bf16 %v7724, %v7723
      %v7756 = vpack.c.bf16 %v7726, %v7725
      %v7757 = vpack.c.bf16 %v7728, %v7727
      %v7758 = vpack.c.bf16 %v7730, %v7729
      %v7759 = vpack.c.bf16 %v7732, %v7731
      %v7760 = vpack.c.bf16 %v7734, %v7733
      %v7761 = vpack.c.bf16 %v7736, %v7735
      %v7762 = vpack.c.bf16 %v7738, %v7737
      %s7763 = scalar_lea.vmem %s3, 384
      %v7764 = vld [vmem:[%s7763] sm:$0xf]
      %v7765 = vld [vmem:[%s7763 + $0x4] sm:$0xf]
      %v7766 = vld [vmem:[%s7763 + $0x8] sm:$0xf]
      %v7767 = vld [vmem:[%s7763 + $0xc] sm:$0xf]
      %v7768 = vld [vmem:[%s7763 + $0x10] sm:$0xf]
      %v7769 = vld [vmem:[%s7763 + $0x14] sm:$0xf]
      %v7770 = vld [vmem:[%s7763 + $0x18] sm:$0xf]
      %v7771 = vld [vmem:[%s7763 + $0x1c] sm:$0xf]
      %v7772 = vld [vmem:[%s7763 + $0x20] sm:$0xf]
      %v7773 = vld [vmem:[%s7763 + $0x24] sm:$0xf]
      %v7774 = vld [vmem:[%s7763 + $0x28] sm:$0xf]
      %v7775 = vld [vmem:[%s7763 + $0x2c] sm:$0xf]
      %v7776 = vld [vmem:[%s7763 + $0x30] sm:$0xf]
      %v7777 = vld [vmem:[%s7763 + $0x34] sm:$0xf]
      %v7778 = vld [vmem:[%s7763 + $0x38] sm:$0xf]
      %v7779 = vld [vmem:[%s7763 + $0x3c] sm:$0xf]
      %v7796 = vunpack.c.l.b16 %v7764
      %v7797 = vunpack.c.l.b16 %v7765
      %v7798 = vunpack.c.l.b16 %v7766
      %v7799 = vunpack.c.l.b16 %v7767
      %v7800 = vunpack.c.l.b16 %v7768
      %v7801 = vunpack.c.l.b16 %v7769
      %v7802 = vunpack.c.l.b16 %v7770
      %v7803 = vunpack.c.l.b16 %v7771
      %v7804 = vunpack.c.l.b16 %v7772
      %v7805 = vunpack.c.l.b16 %v7773
      %v7806 = vunpack.c.l.b16 %v7774
      %v7807 = vunpack.c.l.b16 %v7775
      %v7808 = vunpack.c.l.b16 %v7776
      %v7809 = vunpack.c.l.b16 %v7777
      %v7810 = vunpack.c.l.b16 %v7778
      %v7811 = vunpack.c.l.b16 %v7779
      %v7812 = vpack.c.b16 %v7797, %v7796
      %v7813 = vpack.c.b16 %v7799, %v7798
      %v7814 = vpack.c.b16 %v7801, %v7800
      %v7815 = vpack.c.b16 %v7803, %v7802
      %v7816 = vpack.c.b16 %v7805, %v7804
      %v7817 = vpack.c.b16 %v7807, %v7806
      %v7818 = vpack.c.b16 %v7809, %v7808
      %v7819 = vpack.c.b16 %v7811, %v7810
      %7828 = vmatprep.subr.bf16.mxu0 0
      %7829 = vmatpush1.bf16.msra.mxu0 %v7812
      %7830 = vmatprep.subr.bf16.mxu0 0
      %7831 = vmatpush1.bf16.msra.mxu0 %v7813
      %7832 = vmatprep.subr.bf16.mxu0 0
      %7833 = vmatpush1.bf16.msra.mxu0 %v7814
      %7834 = vmatprep.subr.bf16.mxu0 0
      %7835 = vmatpush1.bf16.msra.mxu0 %v7815
      %7836 = vmatprep.subr.bf16.mxu0 0
      %7837 = vmatpush1.bf16.msra.mxu0 %v7816
      %7838 = vmatprep.subr.bf16.mxu0 0
      %7839 = vmatpush1.bf16.msra.mxu0 %v7817
      %7840 = vmatprep.subr.bf16.mxu0 0
      %7841 = vmatpush1.bf16.msra.mxu0 %v7818
      %7842 = vmatprep.subr.bf16.mxu0 0
      %7843 = vmatpush1.bf16.msra.mxu0 %v7819
      %7844 = vmatprep.subr.bf16.mxu0 0
      %7845 = vmatpush1.bf16.msra.mxu0 0
      %7846 = vmatprep.subr.bf16.mxu0 0
      %7847 = vmatpush1.bf16.msra.mxu0 0
      %7848 = vmatprep.subr.bf16.mxu0 0
      %7849 = vmatpush1.bf16.msra.mxu0 0
      %7850 = vmatprep.subr.bf16.mxu0 0
      %7851 = vmatpush1.bf16.msra.mxu0 0
      %7852 = vmatprep.subr.bf16.mxu0 0
      %7853 = vmatpush1.bf16.msra.mxu0 0
      %7854 = vmatprep.subr.bf16.mxu0 0
      %7855 = vmatpush1.bf16.msra.mxu0 0
      %7856 = vmatprep.subr.bf16.mxu0 0
      %7857 = vmatpush1.bf16.msra.mxu0 0
      %7858 = vmatprep.subr.bf16.mxu0 0
      %7859 = vmatpush1.bf16.msra.mxu0 0
      %7860 = vmatprep.mubr.bf16.mxu0 0
      %7861 = vmatmul.mubr.bf16.gmra.mrb[0].mxu0 %v7739
      %v7862 = vpop.f32.mrb[0].mxu0
      %v7863 = vadd.f32 0.0, %v7862
      %v7864 = vpop.f32.mrb[0].mxu0
      %v7865 = vpop.f32.mrb[0].mxu0
      %v7866 = vadd.f32 0.0, %v7865
      %v7867 = vpop.f32.mrb[0].mxu0
      %7868 = vmatprep.mubr.bf16.mxu0 0
      %7869 = vmatmul.mubr.bf16.gmra.mrb[0].mxu0 %v7740
      %v7870 = vpop.f32.mrb[0].mxu0
      %v7871 = vadd.f32 0.0, %v7870
      %v7872 = vpop.f32.mrb[0].mxu0
      %v7873 = vpop.f32.mrb[0].mxu0
      %v7874 = vadd.f32 0.0, %v7873
      %v7875 = vpop.f32.mrb[0].mxu0
      %7876 = vmatprep.mubr.bf16.mxu0 0
      %7877 = vmatmul.mubr.bf16.gmra.mrb[0].mxu0 %v7741
      %v7878 = vpop.f32.mrb[0].mxu0
      %v7879 = vadd.f32 0.0, %v7878
      %v7880 = vpop.f32.mrb[0].mxu0
      %v7881 = vpop.f32.mrb[0].mxu0
      %v7882 = vadd.f32 0.0, %v7881
      %v7883 = vpop.f32.mrb[0].mxu0
      %7884 = vmatprep.mubr.bf16.mxu0 0
      %7885 = vmatmul.mubr.bf16.gmra.mrb[0].mxu0 %v7742
      %v7886 = vpop.f32.mrb[0].mxu0
      %v7887 = vadd.f32 0.0, %v7886
      %v7888 = vpop.f32.mrb[0].mxu0
      %v7889 = vpop.f32.mrb[0].mxu0
      %v7890 = vadd.f32 0.0, %v7889
      %v7891 = vpop.f32.mrb[0].mxu0
      %7892 = vmatprep.mubr.bf16.mxu0 0
      %7893 = vmatmul.mubr.bf16.gmra.mrb[0].mxu0 %v7743
      %v7894 = vpop.f32.mrb[0].mxu0
      %v7895 = vadd.f32 0.0, %v7894
      %v7896 = vpop.f32.mrb[0].mxu0
      %v7897 = vpop.f32.mrb[0].mxu0
      %v7898 = vadd.f32 0.0, %v7897
      %v7899 = vpop.f32.mrb[0].mxu0
      %7900 = vmatprep.mubr.bf16.mxu0 0
      %7901 = vmatmul.mubr.bf16.gmra.mrb[0].mxu0 %v7744
      %v7902 = vpop.f32.mrb[0].mxu0
      %v7903 = vadd.f32 0.0, %v7902
      %v7904 = vpop.f32.mrb[0].mxu0
      %v7905 = vpop.f32.mrb[0].mxu0
      %v7906 = vadd.f32 0.0, %v7905
      %v7907 = vpop.f32.mrb[0].mxu0
      %7908 = vmatprep.mubr.bf16.mxu0 0
      %7909 = vmatmul.mubr.bf16.gmra.mrb[0].mxu0 %v7745
      %v7910 = vpop.f32.mrb[0].mxu0
      %v7911 = vadd.f32 0.0, %v7910
      %v7912 = vpop.f32.mrb[0].mxu0
      %v7913 = vpop.f32.mrb[0].mxu0
      %v7914 = vadd.f32 0.0, %v7913
      %v7915 = vpop.f32.mrb[0].mxu0
      %7916 = vmatprep.mubr.bf16.mxu0 0
      %7917 = vmatmul.mubr.bf16.gmra.mrb[0].mxu0 %v7746
      %v7918 = vpop.f32.mrb[0].mxu0
      %v7919 = vadd.f32 0.0, %v7918
      %v7920 = vpop.f32.mrb[0].mxu0
      %v7921 = vpop.f32.mrb[0].mxu0
      %v7922 = vadd.f32 0.0, %v7921
      %v7923 = vpop.f32.mrb[0].mxu0
      %7924 = vmatprep.mubr.bf16.mxu0 0
      %7925 = vmatmul.mubr.bf16.gmra.mrb[0].mxu0 %v7747
      %v7926 = vpop.f32.mrb[0].mxu0
      %v7927 = vadd.f32 0.0, %v7926
      %v7928 = vpop.f32.mrb[0].mxu0
      %v7929 = vpop.f32.mrb[0].mxu0
      %v7930 = vadd.f32 0.0, %v7929
      %v7931 = vpop.f32.mrb[0].mxu0
      %7932 = vmatprep.mubr.bf16.mxu0 0
      %7933 = vmatmul.mubr.bf16.gmra.mrb[0].mxu0 %v7748
      %v7934 = vpop.f32.mrb[0].mxu0
      %v7935 = vadd.f32 0.0, %v7934
      %v7936 = vpop.f32.mrb[0].mxu0
      %v7937 = vpop.f32.mrb[0].mxu0
      %v7938 = vadd.f32 0.0, %v7937
      %v7939 = vpop.f32.mrb[0].mxu0
      %7940 = vmatprep.mubr.bf16.mxu0 0
      %7941 = vmatmul.mubr.bf16.gmra.mrb[0].mxu0 %v7749
      %v7942 = vpop.f32.mrb[0].mxu0
      %v7943 = vadd.f32 0.0, %v7942
      %v7944 = vpop.f32.mrb[0].mxu0
      %v7945 = vpop.f32.mrb[0].mxu0
      %v7946 = vadd.f32 0.0, %v7945
      %v7947 = vpop.f32.mrb[0].mxu0
      %7948 = vmatprep.mubr.bf16.mxu0 0
      %7949 = vmatmul.mubr.bf16.gmra.mrb[0].mxu0 %v7750
      %v7950 = vpop.f32.mrb[0].mxu0
      %v7951 = vadd.f32 0.0, %v7950
      %v7952 = vpop.f32.mrb[0].mxu0
      %v7953 = vpop.f32.mrb[0].mxu0
      %v7954 = vadd.f32 0.0, %v7953
      %v7955 = vpop.f32.mrb[0].mxu0
      %7956 = vmatprep.mubr.bf16.mxu0 0
      %7957 = vmatmul.mubr.bf16.gmra.mrb[0].mxu0 %v7751
      %v7958 = vpop.f32.mrb[0].mxu0
      %v7959 = vadd.f32 0.0, %v7958
      %v7960 = vpop.f32.mrb[0].mxu0
      %v7961 = vpop.f32.mrb[0].mxu0
      %v7962 = vadd.f32 0.0, %v7961
      %v7963 = vpop.f32.mrb[0].mxu0
      %7964 = vmatprep.mubr.bf16.mxu0 0
      %7965 = vmatmul.mubr.bf16.gmra.mrb[0].mxu0 %v7752
      %v7966 = vpop.f32.mrb[0].mxu0
      %v7967 = vadd.f32 0.0, %v7966
      %v7968 = vpop.f32.mrb[0].mxu0
      %v7969 = vpop.f32.mrb[0].mxu0
      %v7970 = vadd.f32 0.0, %v7969
      %v7971 = vpop.f32.mrb[0].mxu0
      %7972 = vmatprep.mubr.bf16.mxu0 0
      %7973 = vmatmul.mubr.bf16.gmra.mrb[0].mxu0 %v7753
      %v7974 = vpop.f32.mrb[0].mxu0
      %v7975 = vadd.f32 0.0, %v7974
      %v7976 = vpop.f32.mrb[0].mxu0
      %v7977 = vpop.f32.mrb[0].mxu0
      %v7978 = vadd.f32 0.0, %v7977
      %v7979 = vpop.f32.mrb[0].mxu0
      %7980 = vmatprep.mubr.bf16.mxu0 0
      %7981 = vmatmul.mubr.bf16.gmra.mrb[0].mxu0 %v7754
      %v7982 = vpop.f32.mrb[0].mxu0
      %v7983 = vadd.f32 0.0, %v7982
      %v7984 = vpop.f32.mrb[0].mxu0
      %v7985 = vpop.f32.mrb[0].mxu0
      %v7986 = vadd.f32 0.0, %v7985
      %v7987 = vpop.f32.mrb[0].mxu0
      %7988 = vmatprep.mubr.bf16.mxu0 0
      %7989 = vmatmul.mubr.bf16.gmra.mrb[0].mxu0 %v7755
      %v7990 = vpop.f32.mrb[0].mxu0
      %v7991 = vadd.f32 0.0, %v7990
      %v7992 = vpop.f32.mrb[0].mxu0
      %v7993 = vpop.f32.mrb[0].mxu0
      %v7994 = vadd.f32 0.0, %v7993
      %v7995 = vpop.f32.mrb[0].mxu0
      %7996 = vmatprep.mubr.bf16.mxu0 0
      %7997 = vmatmul.mubr.bf16.gmra.mrb[0].mxu0 %v7756
      %v7998 = vpop.f32.mrb[0].mxu0
      %v7999 = vadd.f32 0.0, %v7998
      %v8000 = vpop.f32.mrb[0].mxu0
      %v8001 = vpop.f32.mrb[0].mxu0
      %v8002 = vadd.f32 0.0, %v8001
      %v8003 = vpop.f32.mrb[0].mxu0
      %8004 = vmatprep.mubr.bf16.mxu0 0
      %8005 = vmatmul.mubr.bf16.gmra.mrb[0].mxu0 %v7757
      %v8006 = vpop.f32.mrb[0].mxu0
      %v8007 = vadd.f32 0.0, %v8006
      %v8008 = vpop.f32.mrb[0].mxu0
      %v8009 = vpop.f32.mrb[0].mxu0
      %v8010 = vadd.f32 0.0, %v8009
      %v8011 = vpop.f32.mrb[0].mxu0
      %8012 = vmatprep.mubr.bf16.mxu0 0
      %8013 = vmatmul.mubr.bf16.gmra.mrb[0].mxu0 %v7758
      %v8014 = vpop.f32.mrb[0].mxu0
      %v8015 = vadd.f32 0.0, %v8014
      %v8016 = vpop.f32.mrb[0].mxu0
      %v8017 = vpop.f32.mrb[0].mxu0
      %v8018 = vadd.f32 0.0, %v8017
      %v8019 = vpop.f32.mrb[0].mxu0
      %8020 = vmatprep.mubr.bf16.mxu0 0
      %8021 = vmatmul.mubr.bf16.gmra.mrb[0].mxu0 %v7759
      %v8022 = vpop.f32.mrb[0].mxu0
      %v8023 = vadd.f32 0.0, %v8022
      %v8024 = vpop.f32.mrb[0].mxu0
      %v8025 = vpop.f32.mrb[0].mxu0
      %v8026 = vadd.f32 0.0, %v8025
      %v8027 = vpop.f32.mrb[0].mxu0
      %8028 = vmatprep.mubr.bf16.mxu0 0
      %8029 = vmatmul.mubr.bf16.gmra.mrb[0].mxu0 %v7760
      %v8030 = vpop.f32.mrb[0].mxu0
      %v8031 = vadd.f32 0.0, %v8030
      %v8032 = vpop.f32.mrb[0].mxu0
      %v8033 = vpop.f32.mrb[0].mxu0
      %v8034 = vadd.f32 0.0, %v8033
      %v8035 = vpop.f32.mrb[0].mxu0
      %8036 = vmatprep.mubr.bf16.mxu0 0
      %8037 = vmatmul.mubr.bf16.gmra.mrb[0].mxu0 %v7761
      %v8038 = vpop.f32.mrb[0].mxu0
      %v8039 = vadd.f32 0.0, %v8038
      %v8040 = vpop.f32.mrb[0].mxu0
      %v8041 = vpop.f32.mrb[0].mxu0
      %v8042 = vadd.f32 0.0, %v8041
      %v8043 = vpop.f32.mrb[0].mxu0
      %8044 = vmatprep.mubr.bf16.mxu0 0
      %8045 = vmatmul.mubr.bf16.gmra.mrb[0].mxu0 %v7762
      %v8046 = vpop.f32.mrb[0].mxu0
      %v8047 = vadd.f32 0.0, %v8046
      %v8048 = vpop.f32.mrb[0].mxu0
      %v8049 = vpop.f32.mrb[0].mxu0
      %v8050 = vadd.f32 0.0, %v8049
      %v8051 = vpop.f32.mrb[0].mxu0
      %8052 = vdwg.mxu0
      %v8053 = vadd.f32 %v7643, %v7863
      %v8054 = vadd.f32 %v7644, %v7866
      %v8055 = vadd.f32 %v7645, %v7871
      %v8056 = vadd.f32 %v7646, %v7874
      %v8057 = vadd.f32 %v7647, %v7879
      %v8058 = vadd.f32 %v7648, %v7882
      %v8059 = vadd.f32 %v7649, %v7887
      %v8060 = vadd.f32 %v7650, %v7890
      %v8061 = vadd.f32 %v7651, %v7895
      %v8062 = vadd.f32 %v7652, %v7898
      %v8063 = vadd.f32 %v7653, %v7903
      %v8064 = vadd.f32 %v7654, %v7906
      %v8065 = vadd.f32 %v7655, %v7911
      %v8066 = vadd.f32 %v7656, %v7914
      %v8067 = vadd.f32 %v7657, %v7919
      %v8068 = vadd.f32 %v7658, %v7922
      %v8069 = vadd.f32 %v7659, %v7927
      %v8070 = vadd.f32 %v7660, %v7930
      %v8071 = vadd.f32 %v7661, %v7935
      %v8072 = vadd.f32 %v7662, %v7938
      %v8073 = vadd.f32 %v7663, %v7943
      %v8074 = vadd.f32 %v7664, %v7946
      %v8075 = vadd.f32 %v7665, %v7951
      %v8076 = vadd.f32 %v7666, %v7954
      %v8077 = vadd.f32 %v7667, %v7959
      %v8078 = vadd.f32 %v7668, %v7962
      %v8079 = vadd.f32 %v7669, %v7967
      %v8080 = vadd.f32 %v7670, %v7970
      %v8081 = vadd.f32 %v7671, %v7975
      %v8082 = vadd.f32 %v7672, %v7978
      %v8083 = vadd.f32 %v7673, %v7983
      %v8084 = vadd.f32 %v7674, %v7986
      %v8085 = vadd.f32 %v7675, %v7991
      %v8086 = vadd.f32 %v7676, %v7994
      %v8087 = vadd.f32 %v7677, %v7999
      %v8088 = vadd.f32 %v7678, %v8002
      %v8089 = vadd.f32 %v7679, %v8007
      %v8090 = vadd.f32 %v7680, %v8010
      %v8091 = vadd.f32 %v7681, %v8015
      %v8092 = vadd.f32 %v7682, %v8018
      %v8093 = vadd.f32 %v7683, %v8023
      %v8094 = vadd.f32 %v7684, %v8026
      %v8095 = vadd.f32 %v7685, %v8031
      %v8096 = vadd.f32 %v7686, %v8034
      %v8097 = vadd.f32 %v7687, %v8039
      %v8098 = vadd.f32 %v7688, %v8042
      %v8099 = vadd.f32 %v7689, %v8047
      %v8100 = vadd.f32 %v7690, %v8050
      %v8101 = vld [vmem:[#allocation2 + $0x48] sm:$0xff]
      %v8102 = vld [vmem:[#allocation2 + $0x50] sm:$0xff]
      %v8103 = vld [vmem:[#allocation2 + $0x58] sm:$0xff]
      %v8104 = vld [vmem:[#allocation2 + $0x60] sm:$0xff]
      %v8105 = vld [vmem:[#allocation2 + $0x68] sm:$0xff]
      %v8106 = vld [vmem:[#allocation2 + $0x70] sm:$0xff]
      %v8107 = vld [vmem:[#allocation2 + $0x78] sm:$0xff]
      %v8108 = vld [vmem:[#allocation2 + $0x80] sm:$0xff]
      %v8109 = vld [vmem:[#allocation2 + $0x88] sm:$0xff]
      %v8110 = vld [vmem:[#allocation2 + $0x90] sm:$0xff]
      %v8111 = vld [vmem:[#allocation2 + $0x98] sm:$0xff]
      %v8112 = vld [vmem:[#allocation2 + $0xa0] sm:$0xff]
      %v8113 = vld [vmem:[#allocation2 + $0xa8] sm:$0xff]
      %v8114 = vld [vmem:[#allocation2 + $0xb0] sm:$0xff]
      %v8115 = vld [vmem:[#allocation2 + $0xb8] sm:$0xff]
      %v8116 = vld [vmem:[#allocation2 + $0xc0] sm:$0xff]
      %v8117 = vld [vmem:[#allocation2 + $0xc8] sm:$0xff]
      %v8118 = vld [vmem:[#allocation2 + $0xd0] sm:$0xff]
      %v8119 = vld [vmem:[#allocation2 + $0xd8] sm:$0xff]
      %v8120 = vld [vmem:[#allocation2 + $0xe0] sm:$0xff]
      %v8121 = vld [vmem:[#allocation2 + $0xe8] sm:$0xff]
      %v8122 = vld [vmem:[#allocation2 + $0xf0] sm:$0xff]
      %v8123 = vld [vmem:[#allocation2 + $0xf8] sm:$0xff]
      %v8124 = vld [vmem:[#allocation2 + $0x100] sm:$0xff]
      %v8125 = vld [vmem:[#allocation2 + $0x108] sm:$0xff]
      %v8126 = vld [vmem:[#allocation2 + $0x110] sm:$0xff]
      %v8127 = vld [vmem:[#allocation2 + $0x118] sm:$0xff]
      %v8128 = vld [vmem:[#allocation2 + $0x120] sm:$0xff]
      %v8129 = vld [vmem:[#allocation2 + $0x128] sm:$0xff]
      %v8130 = vld [vmem:[#allocation2 + $0x130] sm:$0xff]
      %v8131 = vld [vmem:[#allocation2 + $0x138] sm:$0xff]
      %v8132 = vld [vmem:[#allocation2 + $0x140] sm:$0xff]
      %v8133 = vld [vmem:[#allocation2 + $0x148] sm:$0xff]
      %v8134 = vld [vmem:[#allocation2 + $0x150] sm:$0xff]
      %v8135 = vld [vmem:[#allocation2 + $0x158] sm:$0xff]
      %v8136 = vld [vmem:[#allocation2 + $0x160] sm:$0xff]
      %v8137 = vld [vmem:[#allocation2 + $0x168] sm:$0xff]
      %v8138 = vld [vmem:[#allocation2 + $0x170] sm:$0xff]
      %v8139 = vld [vmem:[#allocation2 + $0x178] sm:$0xff]
      %v8140 = vld [vmem:[#allocation2 + $0x180] sm:$0xff]
      %v8141 = vld [vmem:[#allocation2 + $0x188] sm:$0xff]
      %v8142 = vld [vmem:[#allocation2 + $0x190] sm:$0xff]
      %v8143 = vld [vmem:[#allocation2 + $0x198] sm:$0xff]
      %v8144 = vld [vmem:[#allocation2 + $0x1a0] sm:$0xff]
      %v8145 = vld [vmem:[#allocation2 + $0x1a8] sm:$0xff]
      %v8146 = vld [vmem:[#allocation2 + $0x1b0] sm:$0xff]
      %v8147 = vld [vmem:[#allocation2 + $0x1b8] sm:$0xff]
      %v8148 = vld [vmem:[#allocation2 + $0x1c0] sm:$0xff]
      %v8149 = vpack.c.bf16 %v8102, %v8101
      %v8150 = vpack.c.bf16 %v8104, %v8103
      %v8151 = vpack.c.bf16 %v8106, %v8105
      %v8152 = vpack.c.bf16 %v8108, %v8107
      %v8153 = vpack.c.bf16 %v8110, %v8109
      %v8154 = vpack.c.bf16 %v8112, %v8111
      %v8155 = vpack.c.bf16 %v8114, %v8113
      %v8156 = vpack.c.bf16 %v8116, %v8115
      %v8157 = vpack.c.bf16 %v8118, %v8117
      %v8158 = vpack.c.bf16 %v8120, %v8119
      %v8159 = vpack.c.bf16 %v8122, %v8121
      %v8160 = vpack.c.bf16 %v8124, %v8123
      %v8161 = vpack.c.bf16 %v8126, %v8125
      %v8162 = vpack.c.bf16 %v8128, %v8127
      %v8163 = vpack.c.bf16 %v8130, %v8129
      %v8164 = vpack.c.bf16 %v8132, %v8131
      %v8165 = vpack.c.bf16 %v8134, %v8133
      %v8166 = vpack.c.bf16 %v8136, %v8135
      %v8167 = vpack.c.bf16 %v8138, %v8137
      %v8168 = vpack.c.bf16 %v8140, %v8139
      %v8169 = vpack.c.bf16 %v8142, %v8141
      %v8170 = vpack.c.bf16 %v8144, %v8143
      %v8171 = vpack.c.bf16 %v8146, %v8145
      %v8172 = vpack.c.bf16 %v8148, %v8147
      %s8173 = scalar_lea.vmem %s3, 448
      %v8174 = vld [vmem:[%s8173] sm:$0xf]
      %v8175 = vld [vmem:[%s8173 + $0x4] sm:$0xf]
      %v8176 = vld [vmem:[%s8173 + $0x8] sm:$0xf]
      %v8177 = vld [vmem:[%s8173 + $0xc] sm:$0xf]
      %v8178 = vld [vmem:[%s8173 + $0x10] sm:$0xf]
      %v8179 = vld [vmem:[%s8173 + $0x14] sm:$0xf]
      %v8180 = vld [vmem:[%s8173 + $0x18] sm:$0xf]
      %v8181 = vld [vmem:[%s8173 + $0x1c] sm:$0xf]
      %v8182 = vld [vmem:[%s8173 + $0x20] sm:$0xf]
      %v8183 = vld [vmem:[%s8173 + $0x24] sm:$0xf]
      %v8184 = vld [vmem:[%s8173 + $0x28] sm:$0xf]
      %v8185 = vld [vmem:[%s8173 + $0x2c] sm:$0xf]
      %v8186 = vld [vmem:[%s8173 + $0x30] sm:$0xf]
      %v8187 = vld [vmem:[%s8173 + $0x34] sm:$0xf]
      %v8188 = vld [vmem:[%s8173 + $0x38] sm:$0xf]
      %v8189 = vld [vmem:[%s8173 + $0x3c] sm:$0xf]
      %v8206 = vunpack.c.l.b16 %v8174
      %v8207 = vunpack.c.l.b16 %v8175
      %v8208 = vunpack.c.l.b16 %v8176
      %v8209 = vunpack.c.l.b16 %v8177
      %v8210 = vunpack.c.l.b16 %v8178
      %v8211 = vunpack.c.l.b16 %v8179
      %v8212 = vunpack.c.l.b16 %v8180
      %v8213 = vunpack.c.l.b16 %v8181
      %v8214 = vunpack.c.l.b16 %v8182
      %v8215 = vunpack.c.l.b16 %v8183
      %v8216 = vunpack.c.l.b16 %v8184
      %v8217 = vunpack.c.l.b16 %v8185
      %v8218 = vunpack.c.l.b16 %v8186
      %v8219 = vunpack.c.l.b16 %v8187
      %v8220 = vunpack.c.l.b16 %v8188
      %v8221 = vunpack.c.l.b16 %v8189
      %v8222 = vpack.c.b16 %v8207, %v8206
      %v8223 = vpack.c.b16 %v8209, %v8208
      %v8224 = vpack.c.b16 %v8211, %v8210
      %v8225 = vpack.c.b16 %v8213, %v8212
      %v8226 = vpack.c.b16 %v8215, %v8214
      %v8227 = vpack.c.b16 %v8217, %v8216
      %v8228 = vpack.c.b16 %v8219, %v8218
      %v8229 = vpack.c.b16 %v8221, %v8220
      %8238 = vmatprep.subr.bf16.mxu0 0
      %8239 = vmatpush1.bf16.msra.mxu0 %v8222
      %8240 = vmatprep.subr.bf16.mxu0 0
      %8241 = vmatpush1.bf16.msra.mxu0 %v8223
      %8242 = vmatprep.subr.bf16.mxu0 0
      %8243 = vmatpush1.bf16.msra.mxu0 %v8224
      %8244 = vmatprep.subr.bf16.mxu0 0
      %8245 = vmatpush1.bf16.msra.mxu0 %v8225
      %8246 = vmatprep.subr.bf16.mxu0 0
      %8247 = vmatpush1.bf16.msra.mxu0 %v8226
      %8248 = vmatprep.subr.bf16.mxu0 0
      %8249 = vmatpush1.bf16.msra.mxu0 %v8227
      %8250 = vmatprep.subr.bf16.mxu0 0
      %8251 = vmatpush1.bf16.msra.mxu0 %v8228
      %8252 = vmatprep.subr.bf16.mxu0 0
      %8253 = vmatpush1.bf16.msra.mxu0 %v8229
      %8254 = vmatprep.subr.bf16.mxu0 0
      %8255 = vmatpush1.bf16.msra.mxu0 0
      %8256 = vmatprep.subr.bf16.mxu0 0
      %8257 = vmatpush1.bf16.msra.mxu0 0
      %8258 = vmatprep.subr.bf16.mxu0 0
      %8259 = vmatpush1.bf16.msra.mxu0 0
      %8260 = vmatprep.subr.bf16.mxu0 0
      %8261 = vmatpush1.bf16.msra.mxu0 0
      %8262 = vmatprep.subr.bf16.mxu0 0
      %8263 = vmatpush1.bf16.msra.mxu0 0
      %8264 = vmatprep.subr.bf16.mxu0 0
      %8265 = vmatpush1.bf16.msra.mxu0 0
      %8266 = vmatprep.subr.bf16.mxu0 0
      %8267 = vmatpush1.bf16.msra.mxu0 0
      %8268 = vmatprep.subr.bf16.mxu0 0
      %8269 = vmatpush1.bf16.msra.mxu0 0
      %8270 = vmatprep.mubr.bf16.mxu0 0
      %8271 = vmatmul.mubr.bf16.gmra.mrb[0].mxu0 %v8149
      %v8272 = vpop.f32.mrb[0].mxu0
      %v8273 = vadd.f32 0.0, %v8272
      %v8274 = vpop.f32.mrb[0].mxu0
      %v8275 = vpop.f32.mrb[0].mxu0
      %v8276 = vadd.f32 0.0, %v8275
      %v8277 = vpop.f32.mrb[0].mxu0
      %8278 = vmatprep.mubr.bf16.mxu0 0
      %8279 = vmatmul.mubr.bf16.gmra.mrb[0].mxu0 %v8150
      %v8280 = vpop.f32.mrb[0].mxu0
      %v8281 = vadd.f32 0.0, %v8280
      %v8282 = vpop.f32.mrb[0].mxu0
      %v8283 = vpop.f32.mrb[0].mxu0
      %v8284 = vadd.f32 0.0, %v8283
      %v8285 = vpop.f32.mrb[0].mxu0
      %8286 = vmatprep.mubr.bf16.mxu0 0
      %8287 = vmatmul.mubr.bf16.gmra.mrb[0].mxu0 %v8151
      %v8288 = vpop.f32.mrb[0].mxu0
      %v8289 = vadd.f32 0.0, %v8288
      %v8290 = vpop.f32.mrb[0].mxu0
      %v8291 = vpop.f32.mrb[0].mxu0
      %v8292 = vadd.f32 0.0, %v8291
      %v8293 = vpop.f32.mrb[0].mxu0
      %8294 = vmatprep.mubr.bf16.mxu0 0
      %8295 = vmatmul.mubr.bf16.gmra.mrb[0].mxu0 %v8152
      %v8296 = vpop.f32.mrb[0].mxu0
      %v8297 = vadd.f32 0.0, %v8296
      %v8298 = vpop.f32.mrb[0].mxu0
      %v8299 = vpop.f32.mrb[0].mxu0
      %v8300 = vadd.f32 0.0, %v8299
      %v8301 = vpop.f32.mrb[0].mxu0
      %8302 = vmatprep.mubr.bf16.mxu0 0
      %8303 = vmatmul.mubr.bf16.gmra.mrb[0].mxu0 %v8153
      %v8304 = vpop.f32.mrb[0].mxu0
      %v8305 = vadd.f32 0.0, %v8304
      %v8306 = vpop.f32.mrb[0].mxu0
      %v8307 = vpop.f32.mrb[0].mxu0
      %v8308 = vadd.f32 0.0, %v8307
      %v8309 = vpop.f32.mrb[0].mxu0
      %8310 = vmatprep.mubr.bf16.mxu0 0
      %8311 = vmatmul.mubr.bf16.gmra.mrb[0].mxu0 %v8154
      %v8312 = vpop.f32.mrb[0].mxu0
      %v8313 = vadd.f32 0.0, %v8312
      %v8314 = vpop.f32.mrb[0].mxu0
      %v8315 = vpop.f32.mrb[0].mxu0
      %v8316 = vadd.f32 0.0, %v8315
      %v8317 = vpop.f32.mrb[0].mxu0
      %8318 = vmatprep.mubr.bf16.mxu0 0
      %8319 = vmatmul.mubr.bf16.gmra.mrb[0].mxu0 %v8155
      %v8320 = vpop.f32.mrb[0].mxu0
      %v8321 = vadd.f32 0.0, %v8320
      %v8322 = vpop.f32.mrb[0].mxu0
      %v8323 = vpop.f32.mrb[0].mxu0
      %v8324 = vadd.f32 0.0, %v8323
      %v8325 = vpop.f32.mrb[0].mxu0
      %8326 = vmatprep.mubr.bf16.mxu0 0
      %8327 = vmatmul.mubr.bf16.gmra.mrb[0].mxu0 %v8156
      %v8328 = vpop.f32.mrb[0].mxu0
      %v8329 = vadd.f32 0.0, %v8328
      %v8330 = vpop.f32.mrb[0].mxu0
      %v8331 = vpop.f32.mrb[0].mxu0
      %v8332 = vadd.f32 0.0, %v8331
      %v8333 = vpop.f32.mrb[0].mxu0
      %8334 = vmatprep.mubr.bf16.mxu0 0
      %8335 = vmatmul.mubr.bf16.gmra.mrb[0].mxu0 %v8157
      %v8336 = vpop.f32.mrb[0].mxu0
      %v8337 = vadd.f32 0.0, %v8336
      %v8338 = vpop.f32.mrb[0].mxu0
      %v8339 = vpop.f32.mrb[0].mxu0
      %v8340 = vadd.f32 0.0, %v8339
      %v8341 = vpop.f32.mrb[0].mxu0
      %8342 = vmatprep.mubr.bf16.mxu0 0
      %8343 = vmatmul.mubr.bf16.gmra.mrb[0].mxu0 %v8158
      %v8344 = vpop.f32.mrb[0].mxu0
      %v8345 = vadd.f32 0.0, %v8344
      %v8346 = vpop.f32.mrb[0].mxu0
      %v8347 = vpop.f32.mrb[0].mxu0
      %v8348 = vadd.f32 0.0, %v8347
      %v8349 = vpop.f32.mrb[0].mxu0
      %8350 = vmatprep.mubr.bf16.mxu0 0
      %8351 = vmatmul.mubr.bf16.gmra.mrb[0].mxu0 %v8159
      %v8352 = vpop.f32.mrb[0].mxu0
      %v8353 = vadd.f32 0.0, %v8352
      %v8354 = vpop.f32.mrb[0].mxu0
      %v8355 = vpop.f32.mrb[0].mxu0
      %v8356 = vadd.f32 0.0, %v8355
      %v8357 = vpop.f32.mrb[0].mxu0
      %8358 = vmatprep.mubr.bf16.mxu0 0
      %8359 = vmatmul.mubr.bf16.gmra.mrb[0].mxu0 %v8160
      %v8360 = vpop.f32.mrb[0].mxu0
      %v8361 = vadd.f32 0.0, %v8360
      %v8362 = vpop.f32.mrb[0].mxu0
      %v8363 = vpop.f32.mrb[0].mxu0
      %v8364 = vadd.f32 0.0, %v8363
      %v8365 = vpop.f32.mrb[0].mxu0
      %8366 = vmatprep.mubr.bf16.mxu0 0
      %8367 = vmatmul.mubr.bf16.gmra.mrb[0].mxu0 %v8161
      %v8368 = vpop.f32.mrb[0].mxu0
      %v8369 = vadd.f32 0.0, %v8368
      %v8370 = vpop.f32.mrb[0].mxu0
      %v8371 = vpop.f32.mrb[0].mxu0
      %v8372 = vadd.f32 0.0, %v8371
      %v8373 = vpop.f32.mrb[0].mxu0
      %8374 = vmatprep.mubr.bf16.mxu0 0
      %8375 = vmatmul.mubr.bf16.gmra.mrb[0].mxu0 %v8162
      %v8376 = vpop.f32.mrb[0].mxu0
      %v8377 = vadd.f32 0.0, %v8376
      %v8378 = vpop.f32.mrb[0].mxu0
      %v8379 = vpop.f32.mrb[0].mxu0
      %v8380 = vadd.f32 0.0, %v8379
      %v8381 = vpop.f32.mrb[0].mxu0
      %8382 = vmatprep.mubr.bf16.mxu0 0
      %8383 = vmatmul.mubr.bf16.gmra.mrb[0].mxu0 %v8163
      %v8384 = vpop.f32.mrb[0].mxu0
      %v8385 = vadd.f32 0.0, %v8384
      %v8386 = vpop.f32.mrb[0].mxu0
      %v8387 = vpop.f32.mrb[0].mxu0
      %v8388 = vadd.f32 0.0, %v8387
      %v8389 = vpop.f32.mrb[0].mxu0
      %8390 = vmatprep.mubr.bf16.mxu0 0
      %8391 = vmatmul.mubr.bf16.gmra.mrb[0].mxu0 %v8164
      %v8392 = vpop.f32.mrb[0].mxu0
      %v8393 = vadd.f32 0.0, %v8392
      %v8394 = vpop.f32.mrb[0].mxu0
      %v8395 = vpop.f32.mrb[0].mxu0
      %v8396 = vadd.f32 0.0, %v8395
      %v8397 = vpop.f32.mrb[0].mxu0
      %8398 = vmatprep.mubr.bf16.mxu0 0
      %8399 = vmatmul.mubr.bf16.gmra.mrb[0].mxu0 %v8165
      %v8400 = vpop.f32.mrb[0].mxu0
      %v8401 = vadd.f32 0.0, %v8400
      %v8402 = vpop.f32.mrb[0].mxu0
      %v8403 = vpop.f32.mrb[0].mxu0
      %v8404 = vadd.f32 0.0, %v8403
      %v8405 = vpop.f32.mrb[0].mxu0
      %8406 = vmatprep.mubr.bf16.mxu0 0
      %8407 = vmatmul.mubr.bf16.gmra.mrb[0].mxu0 %v8166
      %v8408 = vpop.f32.mrb[0].mxu0
      %v8409 = vadd.f32 0.0, %v8408
      %v8410 = vpop.f32.mrb[0].mxu0
      %v8411 = vpop.f32.mrb[0].mxu0
      %v8412 = vadd.f32 0.0, %v8411
      %v8413 = vpop.f32.mrb[0].mxu0
      %8414 = vmatprep.mubr.bf16.mxu0 0
      %8415 = vmatmul.mubr.bf16.gmra.mrb[0].mxu0 %v8167
      %v8416 = vpop.f32.mrb[0].mxu0
      %v8417 = vadd.f32 0.0, %v8416
      %v8418 = vpop.f32.mrb[0].mxu0
      %v8419 = vpop.f32.mrb[0].mxu0
      %v8420 = vadd.f32 0.0, %v8419
      %v8421 = vpop.f32.mrb[0].mxu0
      %8422 = vmatprep.mubr.bf16.mxu0 0
      %8423 = vmatmul.mubr.bf16.gmra.mrb[0].mxu0 %v8168
      %v8424 = vpop.f32.mrb[0].mxu0
      %v8425 = vadd.f32 0.0, %v8424
      %v8426 = vpop.f32.mrb[0].mxu0
      %v8427 = vpop.f32.mrb[0].mxu0
      %v8428 = vadd.f32 0.0, %v8427
      %v8429 = vpop.f32.mrb[0].mxu0
      %8430 = vmatprep.mubr.bf16.mxu0 0
      %8431 = vmatmul.mubr.bf16.gmra.mrb[0].mxu0 %v8169
      %v8432 = vpop.f32.mrb[0].mxu0
      %v8433 = vadd.f32 0.0, %v8432
      %v8434 = vpop.f32.mrb[0].mxu0
      %v8435 = vpop.f32.mrb[0].mxu0
      %v8436 = vadd.f32 0.0, %v8435
      %v8437 = vpop.f32.mrb[0].mxu0
      %8438 = vmatprep.mubr.bf16.mxu0 0
      %8439 = vmatmul.mubr.bf16.gmra.mrb[0].mxu0 %v8170
      %v8440 = vpop.f32.mrb[0].mxu0
      %v8441 = vadd.f32 0.0, %v8440
      %v8442 = vpop.f32.mrb[0].mxu0
      %v8443 = vpop.f32.mrb[0].mxu0
      %v8444 = vadd.f32 0.0, %v8443
      %v8445 = vpop.f32.mrb[0].mxu0
      %8446 = vmatprep.mubr.bf16.mxu0 0
      %8447 = vmatmul.mubr.bf16.gmra.mrb[0].mxu0 %v8171
      %v8448 = vpop.f32.mrb[0].mxu0
      %v8449 = vadd.f32 0.0, %v8448
      %v8450 = vpop.f32.mrb[0].mxu0
      %v8451 = vpop.f32.mrb[0].mxu0
      %v8452 = vadd.f32 0.0, %v8451
      %v8453 = vpop.f32.mrb[0].mxu0
      %8454 = vmatprep.mubr.bf16.mxu0 0
      %8455 = vmatmul.mubr.bf16.gmra.mrb[0].mxu0 %v8172
      %v8456 = vpop.f32.mrb[0].mxu0
      %v8457 = vadd.f32 0.0, %v8456
      %v8458 = vpop.f32.mrb[0].mxu0
      %v8459 = vpop.f32.mrb[0].mxu0
      %v8460 = vadd.f32 0.0, %v8459
      %v8461 = vpop.f32.mrb[0].mxu0
      %8462 = vdwg.mxu0
      %v8463 = vadd.f32 %v8053, %v8273
      %v8464 = vadd.f32 %v8054, %v8276
      %v8465 = vadd.f32 %v8055, %v8281
      %v8466 = vadd.f32 %v8056, %v8284
      %v8467 = vadd.f32 %v8057, %v8289
      %v8468 = vadd.f32 %v8058, %v8292
      %v8469 = vadd.f32 %v8059, %v8297
      %v8470 = vadd.f32 %v8060, %v8300
      %v8471 = vadd.f32 %v8061, %v8305
      %v8472 = vadd.f32 %v8062, %v8308
      %v8473 = vadd.f32 %v8063, %v8313
      %v8474 = vadd.f32 %v8064, %v8316
      %v8475 = vadd.f32 %v8065, %v8321
      %v8476 = vadd.f32 %v8066, %v8324
      %v8477 = vadd.f32 %v8067, %v8329
      %v8478 = vadd.f32 %v8068, %v8332
      %v8479 = vadd.f32 %v8069, %v8337
      %v8480 = vadd.f32 %v8070, %v8340
      %v8481 = vadd.f32 %v8071, %v8345
      %v8482 = vadd.f32 %v8072, %v8348
      %v8483 = vadd.f32 %v8073, %v8353
      %v8484 = vadd.f32 %v8074, %v8356
      %v8485 = vadd.f32 %v8075, %v8361
      %v8486 = vadd.f32 %v8076, %v8364
      %v8487 = vadd.f32 %v8077, %v8369
      %v8488 = vadd.f32 %v8078, %v8372
      %v8489 = vadd.f32 %v8079, %v8377
      %v8490 = vadd.f32 %v8080, %v8380
      %v8491 = vadd.f32 %v8081, %v8385
      %v8492 = vadd.f32 %v8082, %v8388
      %v8493 = vadd.f32 %v8083, %v8393
      %v8494 = vadd.f32 %v8084, %v8396
      %v8495 = vadd.f32 %v8085, %v8401
      %v8496 = vadd.f32 %v8086, %v8404
      %v8497 = vadd.f32 %v8087, %v8409
      %v8498 = vadd.f32 %v8088, %v8412
      %v8499 = vadd.f32 %v8089, %v8417
      %v8500 = vadd.f32 %v8090, %v8420
      %v8501 = vadd.f32 %v8091, %v8425
      %v8502 = vadd.f32 %v8092, %v8428
      %v8503 = vadd.f32 %v8093, %v8433
      %v8504 = vadd.f32 %v8094, %v8436
      %v8505 = vadd.f32 %v8095, %v8441
      %v8506 = vadd.f32 %v8096, %v8444
      %v8507 = vadd.f32 %v8097, %v8449
      %v8508 = vadd.f32 %v8098, %v8452
      %v8509 = vadd.f32 %v8099, %v8457
      %v8510 = vadd.f32 %v8100, %v8460
      %v8511 = vld [vmem:[#allocation2 + $0x49] sm:$0xff]
      %v8512 = vld [vmem:[#allocation2 + $0x51] sm:$0xff]
      %v8513 = vld [vmem:[#allocation2 + $0x59] sm:$0xff]
      %v8514 = vld [vmem:[#allocation2 + $0x61] sm:$0xff]
      %v8515 = vld [vmem:[#allocation2 + $0x69] sm:$0xff]
      %v8516 = vld [vmem:[#allocation2 + $0x71] sm:$0xff]
      %v8517 = vld [vmem:[#allocation2 + $0x79] sm:$0xff]
      %v8518 = vld [vmem:[#allocation2 + $0x81] sm:$0xff]
      %v8519 = vld [vmem:[#allocation2 + $0x89] sm:$0xff]
      %v8520 = vld [vmem:[#allocation2 + $0x91] sm:$0xff]
      %v8521 = vld [vmem:[#allocation2 + $0x99] sm:$0xff]
      %v8522 = vld [vmem:[#allocation2 + $0xa1] sm:$0xff]
      %v8523 = vld [vmem:[#allocation2 + $0xa9] sm:$0xff]
      %v8524 = vld [vmem:[#allocation2 + $0xb1] sm:$0xff]
      %v8525 = vld [vmem:[#allocation2 + $0xb9] sm:$0xff]
      %v8526 = vld [vmem:[#allocation2 + $0xc1] sm:$0xff]
      %v8527 = vld [vmem:[#allocation2 + $0xc9] sm:$0xff]
      %v8528 = vld [vmem:[#allocation2 + $0xd1] sm:$0xff]
      %v8529 = vld [vmem:[#allocation2 + $0xd9] sm:$0xff]
      %v8530 = vld [vmem:[#allocation2 + $0xe1] sm:$0xff]
      %v8531 = vld [vmem:[#allocation2 + $0xe9] sm:$0xff]
      %v8532 = vld [vmem:[#allocation2 + $0xf1] sm:$0xff]
      %v8533 = vld [vmem:[#allocation2 + $0xf9] sm:$0xff]
      %v8534 = vld [vmem:[#allocation2 + $0x101] sm:$0xff]
      %v8535 = vld [vmem:[#allocation2 + $0x109] sm:$0xff]
      %v8536 = vld [vmem:[#allocation2 + $0x111] sm:$0xff]
      %v8537 = vld [vmem:[#allocation2 + $0x119] sm:$0xff]
      %v8538 = vld [vmem:[#allocation2 + $0x121] sm:$0xff]
      %v8539 = vld [vmem:[#allocation2 + $0x129] sm:$0xff]
      %v8540 = vld [vmem:[#allocation2 + $0x131] sm:$0xff]
      %v8541 = vld [vmem:[#allocation2 + $0x139] sm:$0xff]
      %v8542 = vld [vmem:[#allocation2 + $0x141] sm:$0xff]
      %v8543 = vld [vmem:[#allocation2 + $0x149] sm:$0xff]
      %v8544 = vld [vmem:[#allocation2 + $0x151] sm:$0xff]
      %v8545 = vld [vmem:[#allocation2 + $0x159] sm:$0xff]
      %v8546 = vld [vmem:[#allocation2 + $0x161] sm:$0xff]
      %v8547 = vld [vmem:[#allocation2 + $0x169] sm:$0xff]
      %v8548 = vld [vmem:[#allocation2 + $0x171] sm:$0xff]
      %v8549 = vld [vmem:[#allocation2 + $0x179] sm:$0xff]
      %v8550 = vld [vmem:[#allocation2 + $0x181] sm:$0xff]
      %v8551 = vld [vmem:[#allocation2 + $0x189] sm:$0xff]
      %v8552 = vld [vmem:[#allocation2 + $0x191] sm:$0xff]
      %v8553 = vld [vmem:[#allocation2 + $0x199] sm:$0xff]
      %v8554 = vld [vmem:[#allocation2 + $0x1a1] sm:$0xff]
      %v8555 = vld [vmem:[#allocation2 + $0x1a9] sm:$0xff]
      %v8556 = vld [vmem:[#allocation2 + $0x1b1] sm:$0xff]
      %v8557 = vld [vmem:[#allocation2 + $0x1b9] sm:$0xff]
      %v8558 = vld [vmem:[#allocation2 + $0x1c1] sm:$0xff]
      %v8559 = vpack.c.bf16 %v8512, %v8511
      %v8560 = vpack.c.bf16 %v8514, %v8513
      %v8561 = vpack.c.bf16 %v8516, %v8515
      %v8562 = vpack.c.bf16 %v8518, %v8517
      %v8563 = vpack.c.bf16 %v8520, %v8519
      %v8564 = vpack.c.bf16 %v8522, %v8521
      %v8565 = vpack.c.bf16 %v8524, %v8523
      %v8566 = vpack.c.bf16 %v8526, %v8525
      %v8567 = vpack.c.bf16 %v8528, %v8527
      %v8568 = vpack.c.bf16 %v8530, %v8529
      %v8569 = vpack.c.bf16 %v8532, %v8531
      %v8570 = vpack.c.bf16 %v8534, %v8533
      %v8571 = vpack.c.bf16 %v8536, %v8535
      %v8572 = vpack.c.bf16 %v8538, %v8537
      %v8573 = vpack.c.bf16 %v8540, %v8539
      %v8574 = vpack.c.bf16 %v8542, %v8541
      %v8575 = vpack.c.bf16 %v8544, %v8543
      %v8576 = vpack.c.bf16 %v8546, %v8545
      %v8577 = vpack.c.bf16 %v8548, %v8547
      %v8578 = vpack.c.bf16 %v8550, %v8549
      %v8579 = vpack.c.bf16 %v8552, %v8551
      %v8580 = vpack.c.bf16 %v8554, %v8553
      %v8581 = vpack.c.bf16 %v8556, %v8555
      %v8582 = vpack.c.bf16 %v8558, %v8557
      %s8583 = scalar_lea.vmem %s3, 512
      %v8584 = vld [vmem:[%s8583] sm:$0xf]
      %v8585 = vld [vmem:[%s8583 + $0x4] sm:$0xf]
      %v8586 = vld [vmem:[%s8583 + $0x8] sm:$0xf]
      %v8587 = vld [vmem:[%s8583 + $0xc] sm:$0xf]
      %v8588 = vld [vmem:[%s8583 + $0x10] sm:$0xf]
      %v8589 = vld [vmem:[%s8583 + $0x14] sm:$0xf]
      %v8590 = vld [vmem:[%s8583 + $0x18] sm:$0xf]
      %v8591 = vld [vmem:[%s8583 + $0x1c] sm:$0xf]
      %v8592 = vld [vmem:[%s8583 + $0x20] sm:$0xf]
      %v8593 = vld [vmem:[%s8583 + $0x24] sm:$0xf]
      %v8594 = vld [vmem:[%s8583 + $0x28] sm:$0xf]
      %v8595 = vld [vmem:[%s8583 + $0x2c] sm:$0xf]
      %v8596 = vld [vmem:[%s8583 + $0x30] sm:$0xf]
      %v8597 = vld [vmem:[%s8583 + $0x34] sm:$0xf]
      %v8598 = vld [vmem:[%s8583 + $0x38] sm:$0xf]
      %v8599 = vld [vmem:[%s8583 + $0x3c] sm:$0xf]
      %v8616 = vunpack.c.l.b16 %v8584
      %v8617 = vunpack.c.l.b16 %v8585
      %v8618 = vunpack.c.l.b16 %v8586
      %v8619 = vunpack.c.l.b16 %v8587
      %v8620 = vunpack.c.l.b16 %v8588
      %v8621 = vunpack.c.l.b16 %v8589
      %v8622 = vunpack.c.l.b16 %v8590
      %v8623 = vunpack.c.l.b16 %v8591
      %v8624 = vunpack.c.l.b16 %v8592
      %v8625 = vunpack.c.l.b16 %v8593
      %v8626 = vunpack.c.l.b16 %v8594
      %v8627 = vunpack.c.l.b16 %v8595
      %v8628 = vunpack.c.l.b16 %v8596
      %v8629 = vunpack.c.l.b16 %v8597
      %v8630 = vunpack.c.l.b16 %v8598
      %v8631 = vunpack.c.l.b16 %v8599
      %v8632 = vpack.c.b16 %v8617, %v8616
      %v8633 = vpack.c.b16 %v8619, %v8618
      %v8634 = vpack.c.b16 %v8621, %v8620
      %v8635 = vpack.c.b16 %v8623, %v8622
      %v8636 = vpack.c.b16 %v8625, %v8624
      %v8637 = vpack.c.b16 %v8627, %v8626
      %v8638 = vpack.c.b16 %v8629, %v8628
      %v8639 = vpack.c.b16 %v8631, %v8630
      %8648 = vmatprep.subr.bf16.mxu0 0
      %8649 = vmatpush1.bf16.msra.mxu0 %v8632
      %8650 = vmatprep.subr.bf16.mxu0 0
      %8651 = vmatpush1.bf16.msra.mxu0 %v8633
      %8652 = vmatprep.subr.bf16.mxu0 0
      %8653 = vmatpush1.bf16.msra.mxu0 %v8634
      %8654 = vmatprep.subr.bf16.mxu0 0
      %8655 = vmatpush1.bf16.msra.mxu0 %v8635
      %8656 = vmatprep.subr.bf16.mxu0 0
      %8657 = vmatpush1.bf16.msra.mxu0 %v8636
      %8658 = vmatprep.subr.bf16.mxu0 0
      %8659 = vmatpush1.bf16.msra.mxu0 %v8637
      %8660 = vmatprep.subr.bf16.mxu0 0
      %8661 = vmatpush1.bf16.msra.mxu0 %v8638
      %8662 = vmatprep.subr.bf16.mxu0 0
      %8663 = vmatpush1.bf16.msra.mxu0 %v8639
      %8664 = vmatprep.subr.bf16.mxu0 0
      %8665 = vmatpush1.bf16.msra.mxu0 0
      %8666 = vmatprep.subr.bf16.mxu0 0
      %8667 = vmatpush1.bf16.msra.mxu0 0
      %8668 = vmatprep.subr.bf16.mxu0 0
      %8669 = vmatpush1.bf16.msra.mxu0 0
      %8670 = vmatprep.subr.bf16.mxu0 0
      %8671 = vmatpush1.bf16.msra.mxu0 0
      %8672 = vmatprep.subr.bf16.mxu0 0
      %8673 = vmatpush1.bf16.msra.mxu0 0
      %8674 = vmatprep.subr.bf16.mxu0 0
      %8675 = vmatpush1.bf16.msra.mxu0 0
      %8676 = vmatprep.subr.bf16.mxu0 0
      %8677 = vmatpush1.bf16.msra.mxu0 0
      %8678 = vmatprep.subr.bf16.mxu0 0
      %8679 = vmatpush1.bf16.msra.mxu0 0
      %8680 = vmatprep.mubr.bf16.mxu0 0
      %8681 = vmatmul.mubr.bf16.gmra.mrb[0].mxu0 %v8559
      %v8682 = vpop.f32.mrb[0].mxu0
      %v8683 = vadd.f32 0.0, %v8682
      %v8684 = vpop.f32.mrb[0].mxu0
      %v8685 = vpop.f32.mrb[0].mxu0
      %v8686 = vadd.f32 0.0, %v8685
      %v8687 = vpop.f32.mrb[0].mxu0
      %8688 = vmatprep.mubr.bf16.mxu0 0
      %8689 = vmatmul.mubr.bf16.gmra.mrb[0].mxu0 %v8560
      %v8690 = vpop.f32.mrb[0].mxu0
      %v8691 = vadd.f32 0.0, %v8690
      %v8692 = vpop.f32.mrb[0].mxu0
      %v8693 = vpop.f32.mrb[0].mxu0
      %v8694 = vadd.f32 0.0, %v8693
      %v8695 = vpop.f32.mrb[0].mxu0
      %8696 = vmatprep.mubr.bf16.mxu0 0
      %8697 = vmatmul.mubr.bf16.gmra.mrb[0].mxu0 %v8561
      %v8698 = vpop.f32.mrb[0].mxu0
      %v8699 = vadd.f32 0.0, %v8698
      %v8700 = vpop.f32.mrb[0].mxu0
      %v8701 = vpop.f32.mrb[0].mxu0
      %v8702 = vadd.f32 0.0, %v8701
      %v8703 = vpop.f32.mrb[0].mxu0
      %8704 = vmatprep.mubr.bf16.mxu0 0
      %8705 = vmatmul.mubr.bf16.gmra.mrb[0].mxu0 %v8562
      %v8706 = vpop.f32.mrb[0].mxu0
      %v8707 = vadd.f32 0.0, %v8706
      %v8708 = vpop.f32.mrb[0].mxu0
      %v8709 = vpop.f32.mrb[0].mxu0
      %v8710 = vadd.f32 0.0, %v8709
      %v8711 = vpop.f32.mrb[0].mxu0
      %8712 = vmatprep.mubr.bf16.mxu0 0
      %8713 = vmatmul.mubr.bf16.gmra.mrb[0].mxu0 %v8563
      %v8714 = vpop.f32.mrb[0].mxu0
      %v8715 = vadd.f32 0.0, %v8714
      %v8716 = vpop.f32.mrb[0].mxu0
      %v8717 = vpop.f32.mrb[0].mxu0
      %v8718 = vadd.f32 0.0, %v8717
      %v8719 = vpop.f32.mrb[0].mxu0
      %8720 = vmatprep.mubr.bf16.mxu0 0
      %8721 = vmatmul.mubr.bf16.gmra.mrb[0].mxu0 %v8564
      %v8722 = vpop.f32.mrb[0].mxu0
      %v8723 = vadd.f32 0.0, %v8722
      %v8724 = vpop.f32.mrb[0].mxu0
      %v8725 = vpop.f32.mrb[0].mxu0
      %v8726 = vadd.f32 0.0, %v8725
      %v8727 = vpop.f32.mrb[0].mxu0
      %8728 = vmatprep.mubr.bf16.mxu0 0
      %8729 = vmatmul.mubr.bf16.gmra.mrb[0].mxu0 %v8565
      %v8730 = vpop.f32.mrb[0].mxu0
      %v8731 = vadd.f32 0.0, %v8730
      %v8732 = vpop.f32.mrb[0].mxu0
      %v8733 = vpop.f32.mrb[0].mxu0
      %v8734 = vadd.f32 0.0, %v8733
      %v8735 = vpop.f32.mrb[0].mxu0
      %8736 = vmatprep.mubr.bf16.mxu0 0
      %8737 = vmatmul.mubr.bf16.gmra.mrb[0].mxu0 %v8566
      %v8738 = vpop.f32.mrb[0].mxu0
      %v8739 = vadd.f32 0.0, %v8738
      %v8740 = vpop.f32.mrb[0].mxu0
      %v8741 = vpop.f32.mrb[0].mxu0
      %v8742 = vadd.f32 0.0, %v8741
      %v8743 = vpop.f32.mrb[0].mxu0
      %8744 = vmatprep.mubr.bf16.mxu0 0
      %8745 = vmatmul.mubr.bf16.gmra.mrb[0].mxu0 %v8567
      %v8746 = vpop.f32.mrb[0].mxu0
      %v8747 = vadd.f32 0.0, %v8746
      %v8748 = vpop.f32.mrb[0].mxu0
      %v8749 = vpop.f32.mrb[0].mxu0
      %v8750 = vadd.f32 0.0, %v8749
      %v8751 = vpop.f32.mrb[0].mxu0
      %8752 = vmatprep.mubr.bf16.mxu0 0
      %8753 = vmatmul.mubr.bf16.gmra.mrb[0].mxu0 %v8568
      %v8754 = vpop.f32.mrb[0].mxu0
      %v8755 = vadd.f32 0.0, %v8754
      %v8756 = vpop.f32.mrb[0].mxu0
      %v8757 = vpop.f32.mrb[0].mxu0
      %v8758 = vadd.f32 0.0, %v8757
      %v8759 = vpop.f32.mrb[0].mxu0
      %8760 = vmatprep.mubr.bf16.mxu0 0
      %8761 = vmatmul.mubr.bf16.gmra.mrb[0].mxu0 %v8569
      %v8762 = vpop.f32.mrb[0].mxu0
      %v8763 = vadd.f32 0.0, %v8762
      %v8764 = vpop.f32.mrb[0].mxu0
      %v8765 = vpop.f32.mrb[0].mxu0
      %v8766 = vadd.f32 0.0, %v8765
      %v8767 = vpop.f32.mrb[0].mxu0
      %8768 = vmatprep.mubr.bf16.mxu0 0
      %8769 = vmatmul.mubr.bf16.gmra.mrb[0].mxu0 %v8570
      %v8770 = vpop.f32.mrb[0].mxu0
      %v8771 = vadd.f32 0.0, %v8770
      %v8772 = vpop.f32.mrb[0].mxu0
      %v8773 = vpop.f32.mrb[0].mxu0
      %v8774 = vadd.f32 0.0, %v8773
      %v8775 = vpop.f32.mrb[0].mxu0
      %8776 = vmatprep.mubr.bf16.mxu0 0
      %8777 = vmatmul.mubr.bf16.gmra.mrb[0].mxu0 %v8571
      %v8778 = vpop.f32.mrb[0].mxu0
      %v8779 = vadd.f32 0.0, %v8778
      %v8780 = vpop.f32.mrb[0].mxu0
      %v8781 = vpop.f32.mrb[0].mxu0
      %v8782 = vadd.f32 0.0, %v8781
      %v8783 = vpop.f32.mrb[0].mxu0
      %8784 = vmatprep.mubr.bf16.mxu0 0
      %8785 = vmatmul.mubr.bf16.gmra.mrb[0].mxu0 %v8572
      %v8786 = vpop.f32.mrb[0].mxu0
      %v8787 = vadd.f32 0.0, %v8786
      %v8788 = vpop.f32.mrb[0].mxu0
      %v8789 = vpop.f32.mrb[0].mxu0
      %v8790 = vadd.f32 0.0, %v8789
      %v8791 = vpop.f32.mrb[0].mxu0
      %8792 = vmatprep.mubr.bf16.mxu0 0
      %8793 = vmatmul.mubr.bf16.gmra.mrb[0].mxu0 %v8573
      %v8794 = vpop.f32.mrb[0].mxu0
      %v8795 = vadd.f32 0.0, %v8794
      %v8796 = vpop.f32.mrb[0].mxu0
      %v8797 = vpop.f32.mrb[0].mxu0
      %v8798 = vadd.f32 0.0, %v8797
      %v8799 = vpop.f32.mrb[0].mxu0
      %8800 = vmatprep.mubr.bf16.mxu0 0
      %8801 = vmatmul.mubr.bf16.gmra.mrb[0].mxu0 %v8574
      %v8802 = vpop.f32.mrb[0].mxu0
      %v8803 = vadd.f32 0.0, %v8802
      %v8804 = vpop.f32.mrb[0].mxu0
      %v8805 = vpop.f32.mrb[0].mxu0
      %v8806 = vadd.f32 0.0, %v8805
      %v8807 = vpop.f32.mrb[0].mxu0
      %8808 = vmatprep.mubr.bf16.mxu0 0
      %8809 = vmatmul.mubr.bf16.gmra.mrb[0].mxu0 %v8575
      %v8810 = vpop.f32.mrb[0].mxu0
      %v8811 = vadd.f32 0.0, %v8810
      %v8812 = vpop.f32.mrb[0].mxu0
      %v8813 = vpop.f32.mrb[0].mxu0
      %v8814 = vadd.f32 0.0, %v8813
      %v8815 = vpop.f32.mrb[0].mxu0
      %8816 = vmatprep.mubr.bf16.mxu0 0
      %8817 = vmatmul.mubr.bf16.gmra.mrb[0].mxu0 %v8576
      %v8818 = vpop.f32.mrb[0].mxu0
      %v8819 = vadd.f32 0.0, %v8818
      %v8820 = vpop.f32.mrb[0].mxu0
      %v8821 = vpop.f32.mrb[0].mxu0
      %v8822 = vadd.f32 0.0, %v8821
      %v8823 = vpop.f32.mrb[0].mxu0
      %8824 = vmatprep.mubr.bf16.mxu0 0
      %8825 = vmatmul.mubr.bf16.gmra.mrb[0].mxu0 %v8577
      %v8826 = vpop.f32.mrb[0].mxu0
      %v8827 = vadd.f32 0.0, %v8826
      %v8828 = vpop.f32.mrb[0].mxu0
      %v8829 = vpop.f32.mrb[0].mxu0
      %v8830 = vadd.f32 0.0, %v8829
      %v8831 = vpop.f32.mrb[0].mxu0
      %8832 = vmatprep.mubr.bf16.mxu0 0
      %8833 = vmatmul.mubr.bf16.gmra.mrb[0].mxu0 %v8578
      %v8834 = vpop.f32.mrb[0].mxu0
      %v8835 = vadd.f32 0.0, %v8834
      %v8836 = vpop.f32.mrb[0].mxu0
      %v8837 = vpop.f32.mrb[0].mxu0
      %v8838 = vadd.f32 0.0, %v8837
      %v8839 = vpop.f32.mrb[0].mxu0
      %8840 = vmatprep.mubr.bf16.mxu0 0
      %8841 = vmatmul.mubr.bf16.gmra.mrb[0].mxu0 %v8579
      %v8842 = vpop.f32.mrb[0].mxu0
      %v8843 = vadd.f32 0.0, %v8842
      %v8844 = vpop.f32.mrb[0].mxu0
      %v8845 = vpop.f32.mrb[0].mxu0
      %v8846 = vadd.f32 0.0, %v8845
      %v8847 = vpop.f32.mrb[0].mxu0
      %8848 = vmatprep.mubr.bf16.mxu0 0
      %8849 = vmatmul.mubr.bf16.gmra.mrb[0].mxu0 %v8580
      %v8850 = vpop.f32.mrb[0].mxu0
      %v8851 = vadd.f32 0.0, %v8850
      %v8852 = vpop.f32.mrb[0].mxu0
      %v8853 = vpop.f32.mrb[0].mxu0
      %v8854 = vadd.f32 0.0, %v8853
      %v8855 = vpop.f32.mrb[0].mxu0
      %8856 = vmatprep.mubr.bf16.mxu0 0
      %8857 = vmatmul.mubr.bf16.gmra.mrb[0].mxu0 %v8581
      %v8858 = vpop.f32.mrb[0].mxu0
      %v8859 = vadd.f32 0.0, %v8858
      %v8860 = vpop.f32.mrb[0].mxu0
      %v8861 = vpop.f32.mrb[0].mxu0
      %v8862 = vadd.f32 0.0, %v8861
      %v8863 = vpop.f32.mrb[0].mxu0
      %8864 = vmatprep.mubr.bf16.mxu0 0
      %8865 = vmatmul.mubr.bf16.gmra.mrb[0].mxu0 %v8582
      %v8866 = vpop.f32.mrb[0].mxu0
      %v8867 = vadd.f32 0.0, %v8866
      %v8868 = vpop.f32.mrb[0].mxu0
      %v8869 = vpop.f32.mrb[0].mxu0
      %v8870 = vadd.f32 0.0, %v8869
      %v8871 = vpop.f32.mrb[0].mxu0
      %8872 = vdwg.mxu0
      %v8873 = vadd.f32 %v8463, %v8683
      %v8874 = vadd.f32 %v8464, %v8686
      %v8875 = vadd.f32 %v8465, %v8691
      %v8876 = vadd.f32 %v8466, %v8694
      %v8877 = vadd.f32 %v8467, %v8699
      %v8878 = vadd.f32 %v8468, %v8702
      %v8879 = vadd.f32 %v8469, %v8707
      %v8880 = vadd.f32 %v8470, %v8710
      %v8881 = vadd.f32 %v8471, %v8715
      %v8882 = vadd.f32 %v8472, %v8718
      %v8883 = vadd.f32 %v8473, %v8723
      %v8884 = vadd.f32 %v8474, %v8726
      %v8885 = vadd.f32 %v8475, %v8731
      %v8886 = vadd.f32 %v8476, %v8734
      %v8887 = vadd.f32 %v8477, %v8739
      %v8888 = vadd.f32 %v8478, %v8742
      %v8889 = vadd.f32 %v8479, %v8747
      %v8890 = vadd.f32 %v8480, %v8750
      %v8891 = vadd.f32 %v8481, %v8755
      %v8892 = vadd.f32 %v8482, %v8758
      %v8893 = vadd.f32 %v8483, %v8763
      %v8894 = vadd.f32 %v8484, %v8766
      %v8895 = vadd.f32 %v8485, %v8771
      %v8896 = vadd.f32 %v8486, %v8774
      %v8897 = vadd.f32 %v8487, %v8779
      %v8898 = vadd.f32 %v8488, %v8782
      %v8899 = vadd.f32 %v8489, %v8787
      %v8900 = vadd.f32 %v8490, %v8790
      %v8901 = vadd.f32 %v8491, %v8795
      %v8902 = vadd.f32 %v8492, %v8798
      %v8903 = vadd.f32 %v8493, %v8803
      %v8904 = vadd.f32 %v8494, %v8806
      %v8905 = vadd.f32 %v8495, %v8811
      %v8906 = vadd.f32 %v8496, %v8814
      %v8907 = vadd.f32 %v8497, %v8819
      %v8908 = vadd.f32 %v8498, %v8822
      %v8909 = vadd.f32 %v8499, %v8827
      %v8910 = vadd.f32 %v8500, %v8830
      %v8911 = vadd.f32 %v8501, %v8835
      %v8912 = vadd.f32 %v8502, %v8838
      %v8913 = vadd.f32 %v8503, %v8843
      %v8914 = vadd.f32 %v8504, %v8846
      %v8915 = vadd.f32 %v8505, %v8851
      %v8916 = vadd.f32 %v8506, %v8854
      %v8917 = vadd.f32 %v8507, %v8859
      %v8918 = vadd.f32 %v8508, %v8862
      %v8919 = vadd.f32 %v8509, %v8867
      %v8920 = vadd.f32 %v8510, %v8870
      %v8921 = vld [vmem:[%s365 + $0x60] sm:$0xff]
      %v8922 = vld [vmem:[%s365 + $0x68] sm:$0xff]
      %v8923 = vld [vmem:[%s365 + $0x70] sm:$0xff]
      %v8924 = vld [vmem:[%s365 + $0x78] sm:$0xff]
      %v8925 = vld [vmem:[%s365 + $0x80] sm:$0xff]
      %v8926 = vld [vmem:[%s365 + $0x88] sm:$0xff]
      %v8927 = vld [vmem:[%s365 + $0x90] sm:$0xff]
      %v8928 = vld [vmem:[%s365 + $0x98] sm:$0xff]
      %v8929 = vld [vmem:[%s365 + $0xa0] sm:$0xff]
      %v8930 = vld [vmem:[%s365 + $0xa8] sm:$0xff]
      %v8931 = vld [vmem:[%s365 + $0xb0] sm:$0xff]
      %v8932 = vld [vmem:[%s365 + $0xb8] sm:$0xff]
      %v8933 = vld [vmem:[%s365 + $0xc0] sm:$0xff]
      %v8934 = vld [vmem:[%s365 + $0xc8] sm:$0xff]
      %v8935 = vld [vmem:[%s365 + $0xd0] sm:$0xff]
      %v8936 = vld [vmem:[%s365 + $0xd8] sm:$0xff]
      %v8937 = vld [vmem:[%s365 + $0xe0] sm:$0xff]
      %v8938 = vld [vmem:[%s365 + $0xe8] sm:$0xff]
      %v8939 = vld [vmem:[%s365 + $0xf0] sm:$0xff]
      %v8940 = vld [vmem:[%s365 + $0xf8] sm:$0xff]
      %v8941 = vld [vmem:[%s365 + $0x100] sm:$0xff]
      %v8942 = vld [vmem:[%s365 + $0x108] sm:$0xff]
      %v8943 = vld [vmem:[%s365 + $0x110] sm:$0xff]
      %v8944 = vld [vmem:[%s365 + $0x118] sm:$0xff]
      %v8945 = vld [vmem:[%s365 + $0x120] sm:$0xff]
      %v8946 = vld [vmem:[%s365 + $0x128] sm:$0xff]
      %v8947 = vld [vmem:[%s365 + $0x130] sm:$0xff]
      %v8948 = vld [vmem:[%s365 + $0x138] sm:$0xff]
      %v8949 = vld [vmem:[%s365 + $0x140] sm:$0xff]
      %v8950 = vld [vmem:[%s365 + $0x148] sm:$0xff]
      %v8951 = vld [vmem:[%s365 + $0x150] sm:$0xff]
      %v8952 = vld [vmem:[%s365 + $0x158] sm:$0xff]
      %v8953 = vld [vmem:[%s365 + $0x160] sm:$0xff]
      %v8954 = vld [vmem:[%s365 + $0x168] sm:$0xff]
      %v8955 = vld [vmem:[%s365 + $0x170] sm:$0xff]
      %v8956 = vld [vmem:[%s365 + $0x178] sm:$0xff]
      %v8957 = vld [vmem:[%s365 + $0x180] sm:$0xff]
      %v8958 = vld [vmem:[%s365 + $0x188] sm:$0xff]
      %v8959 = vld [vmem:[%s365 + $0x190] sm:$0xff]
      %v8960 = vld [vmem:[%s365 + $0x198] sm:$0xff]
      %v8961 = vld [vmem:[%s365 + $0x1a0] sm:$0xff]
      %v8962 = vld [vmem:[%s365 + $0x1a8] sm:$0xff]
      %v8963 = vld [vmem:[%s365 + $0x1b0] sm:$0xff]
      %v8964 = vld [vmem:[%s365 + $0x1b8] sm:$0xff]
      %v8965 = vld [vmem:[%s365 + $0x1c0] sm:$0xff]
      %v8966 = vld [vmem:[%s365 + $0x1c8] sm:$0xff]
      %v8967 = vld [vmem:[%s365 + $0x1d0] sm:$0xff]
      %v8968 = vld [vmem:[%s365 + $0x1d8] sm:$0xff]
      %v8969 = vpack.c.bf16 %v8922, %v8921
      %v8970 = vpack.c.bf16 %v8924, %v8923
      %v8971 = vpack.c.bf16 %v8926, %v8925
      %v8972 = vpack.c.bf16 %v8928, %v8927
      %v8973 = vpack.c.bf16 %v8930, %v8929
      %v8974 = vpack.c.bf16 %v8932, %v8931
      %v8975 = vpack.c.bf16 %v8934, %v8933
      %v8976 = vpack.c.bf16 %v8936, %v8935
      %v8977 = vpack.c.bf16 %v8938, %v8937
      %v8978 = vpack.c.bf16 %v8940, %v8939
      %v8979 = vpack.c.bf16 %v8942, %v8941
      %v8980 = vpack.c.bf16 %v8944, %v8943
      %v8981 = vpack.c.bf16 %v8946, %v8945
      %v8982 = vpack.c.bf16 %v8948, %v8947
      %v8983 = vpack.c.bf16 %v8950, %v8949
      %v8984 = vpack.c.bf16 %v8952, %v8951
      %v8985 = vpack.c.bf16 %v8954, %v8953
      %v8986 = vpack.c.bf16 %v8956, %v8955
      %v8987 = vpack.c.bf16 %v8958, %v8957
      %v8988 = vpack.c.bf16 %v8960, %v8959
      %v8989 = vpack.c.bf16 %v8962, %v8961
      %v8990 = vpack.c.bf16 %v8964, %v8963
      %v8991 = vpack.c.bf16 %v8966, %v8965
      %v8992 = vpack.c.bf16 %v8968, %v8967
      %v8993 = vld [vmem:[%s4] sm:$0xf]
      %v8994 = vld [vmem:[%s4 + $0x4] sm:$0xf]
      %v8995 = vld [vmem:[%s4 + $0x8] sm:$0xf]
      %v8996 = vld [vmem:[%s4 + $0xc] sm:$0xf]
      %v8997 = vld [vmem:[%s4 + $0x10] sm:$0xf]
      %v8998 = vld [vmem:[%s4 + $0x14] sm:$0xf]
      %v8999 = vld [vmem:[%s4 + $0x18] sm:$0xf]
      %v9000 = vld [vmem:[%s4 + $0x1c] sm:$0xf]
      %v9001 = vld [vmem:[%s4 + $0x20] sm:$0xf]
      %v9002 = vld [vmem:[%s4 + $0x24] sm:$0xf]
      %v9003 = vld [vmem:[%s4 + $0x28] sm:$0xf]
      %v9004 = vld [vmem:[%s4 + $0x2c] sm:$0xf]
      %v9005 = vld [vmem:[%s4 + $0x30] sm:$0xf]
      %v9006 = vld [vmem:[%s4 + $0x34] sm:$0xf]
      %v9007 = vld [vmem:[%s4 + $0x38] sm:$0xf]
      %v9008 = vld [vmem:[%s4 + $0x3c] sm:$0xf]
      %v9025 = vunpack.c.l.b16 %v8993
      %v9026 = vunpack.c.l.b16 %v8994
      %v9027 = vunpack.c.l.b16 %v8995
      %v9028 = vunpack.c.l.b16 %v8996
      %v9029 = vunpack.c.l.b16 %v8997
      %v9030 = vunpack.c.l.b16 %v8998
      %v9031 = vunpack.c.l.b16 %v8999
      %v9032 = vunpack.c.l.b16 %v9000
      %v9033 = vunpack.c.l.b16 %v9001
      %v9034 = vunpack.c.l.b16 %v9002
      %v9035 = vunpack.c.l.b16 %v9003
      %v9036 = vunpack.c.l.b16 %v9004
      %v9037 = vunpack.c.l.b16 %v9005
      %v9038 = vunpack.c.l.b16 %v9006
      %v9039 = vunpack.c.l.b16 %v9007
      %v9040 = vunpack.c.l.b16 %v9008
      %v9041 = vpack.c.b16 %v9026, %v9025
      %v9042 = vpack.c.b16 %v9028, %v9027
      %v9043 = vpack.c.b16 %v9030, %v9029
      %v9044 = vpack.c.b16 %v9032, %v9031
      %v9045 = vpack.c.b16 %v9034, %v9033
      %v9046 = vpack.c.b16 %v9036, %v9035
      %v9047 = vpack.c.b16 %v9038, %v9037
      %v9048 = vpack.c.b16 %v9040, %v9039
      %9057 = vmatprep.subr.bf16.mxu0 0
      %9058 = vmatpush1.bf16.msra.mxu0 %v9041
      %9059 = vmatprep.subr.bf16.mxu0 0
      %9060 = vmatpush1.bf16.msra.mxu0 %v9042
      %9061 = vmatprep.subr.bf16.mxu0 0
      %9062 = vmatpush1.bf16.msra.mxu0 %v9043
      %9063 = vmatprep.subr.bf16.mxu0 0
      %9064 = vmatpush1.bf16.msra.mxu0 %v9044
      %9065 = vmatprep.subr.bf16.mxu0 0
      %9066 = vmatpush1.bf16.msra.mxu0 %v9045
      %9067 = vmatprep.subr.bf16.mxu0 0
      %9068 = vmatpush1.bf16.msra.mxu0 %v9046
      %9069 = vmatprep.subr.bf16.mxu0 0
      %9070 = vmatpush1.bf16.msra.mxu0 %v9047
      %9071 = vmatprep.subr.bf16.mxu0 0
      %9072 = vmatpush1.bf16.msra.mxu0 %v9048
      %9073 = vmatprep.subr.bf16.mxu0 0
      %9074 = vmatpush1.bf16.msra.mxu0 0
      %9075 = vmatprep.subr.bf16.mxu0 0
      %9076 = vmatpush1.bf16.msra.mxu0 0
      %9077 = vmatprep.subr.bf16.mxu0 0
      %9078 = vmatpush1.bf16.msra.mxu0 0
      %9079 = vmatprep.subr.bf16.mxu0 0
      %9080 = vmatpush1.bf16.msra.mxu0 0
      %9081 = vmatprep.subr.bf16.mxu0 0
      %9082 = vmatpush1.bf16.msra.mxu0 0
      %9083 = vmatprep.subr.bf16.mxu0 0
      %9084 = vmatpush1.bf16.msra.mxu0 0
      %9085 = vmatprep.subr.bf16.mxu0 0
      %9086 = vmatpush1.bf16.msra.mxu0 0
      %9087 = vmatprep.subr.bf16.mxu0 0
      %9088 = vmatpush1.bf16.msra.mxu0 0
      %9089 = vmatprep.mubr.bf16.mxu0 0
      %9090 = vmatmul.mubr.bf16.gmra.mrb[0].mxu0 %v8969
      %v9091 = vpop.f32.mrb[0].mxu0
      %v9092 = vadd.f32 0.0, %v9091
      %v9093 = vpop.f32.mrb[0].mxu0
      %v9094 = vpop.f32.mrb[0].mxu0
      %v9095 = vadd.f32 0.0, %v9094
      %v9096 = vpop.f32.mrb[0].mxu0
      %9097 = vmatprep.mubr.bf16.mxu0 0
      %9098 = vmatmul.mubr.bf16.gmra.mrb[0].mxu0 %v8970
      %v9099 = vpop.f32.mrb[0].mxu0
      %v9100 = vadd.f32 0.0, %v9099
      %v9101 = vpop.f32.mrb[0].mxu0
      %v9102 = vpop.f32.mrb[0].mxu0
      %v9103 = vadd.f32 0.0, %v9102
      %v9104 = vpop.f32.mrb[0].mxu0
      %9105 = vmatprep.mubr.bf16.mxu0 0
      %9106 = vmatmul.mubr.bf16.gmra.mrb[0].mxu0 %v8971
      %v9107 = vpop.f32.mrb[0].mxu0
      %v9108 = vadd.f32 0.0, %v9107
      %v9109 = vpop.f32.mrb[0].mxu0
      %v9110 = vpop.f32.mrb[0].mxu0
      %v9111 = vadd.f32 0.0, %v9110
      %v9112 = vpop.f32.mrb[0].mxu0
      %9113 = vmatprep.mubr.bf16.mxu0 0
      %9114 = vmatmul.mubr.bf16.gmra.mrb[0].mxu0 %v8972
      %v9115 = vpop.f32.mrb[0].mxu0
      %v9116 = vadd.f32 0.0, %v9115
      %v9117 = vpop.f32.mrb[0].mxu0
      %v9118 = vpop.f32.mrb[0].mxu0
      %v9119 = vadd.f32 0.0, %v9118
      %v9120 = vpop.f32.mrb[0].mxu0
      %9121 = vmatprep.mubr.bf16.mxu0 0
      %9122 = vmatmul.mubr.bf16.gmra.mrb[0].mxu0 %v8973
      %v9123 = vpop.f32.mrb[0].mxu0
      %v9124 = vadd.f32 0.0, %v9123
      %v9125 = vpop.f32.mrb[0].mxu0
      %v9126 = vpop.f32.mrb[0].mxu0
      %v9127 = vadd.f32 0.0, %v9126
      %v9128 = vpop.f32.mrb[0].mxu0
      %9129 = vmatprep.mubr.bf16.mxu0 0
      %9130 = vmatmul.mubr.bf16.gmra.mrb[0].mxu0 %v8974
      %v9131 = vpop.f32.mrb[0].mxu0
      %v9132 = vadd.f32 0.0, %v9131
      %v9133 = vpop.f32.mrb[0].mxu0
      %v9134 = vpop.f32.mrb[0].mxu0
      %v9135 = vadd.f32 0.0, %v9134
      %v9136 = vpop.f32.mrb[0].mxu0
      %9137 = vmatprep.mubr.bf16.mxu0 0
      %9138 = vmatmul.mubr.bf16.gmra.mrb[0].mxu0 %v8975
      %v9139 = vpop.f32.mrb[0].mxu0
      %v9140 = vadd.f32 0.0, %v9139
      %v9141 = vpop.f32.mrb[0].mxu0
      %v9142 = vpop.f32.mrb[0].mxu0
      %v9143 = vadd.f32 0.0, %v9142
      %v9144 = vpop.f32.mrb[0].mxu0
      %9145 = vmatprep.mubr.bf16.mxu0 0
      %9146 = vmatmul.mubr.bf16.gmra.mrb[0].mxu0 %v8976
      %v9147 = vpop.f32.mrb[0].mxu0
      %v9148 = vadd.f32 0.0, %v9147
      %v9149 = vpop.f32.mrb[0].mxu0
      %v9150 = vpop.f32.mrb[0].mxu0
      %v9151 = vadd.f32 0.0, %v9150
      %v9152 = vpop.f32.mrb[0].mxu0
      %9153 = vmatprep.mubr.bf16.mxu0 0
      %9154 = vmatmul.mubr.bf16.gmra.mrb[0].mxu0 %v8977
      %v9155 = vpop.f32.mrb[0].mxu0
      %v9156 = vadd.f32 0.0, %v9155
      %v9157 = vpop.f32.mrb[0].mxu0
      %v9158 = vpop.f32.mrb[0].mxu0
      %v9159 = vadd.f32 0.0, %v9158
      %v9160 = vpop.f32.mrb[0].mxu0
      %9161 = vmatprep.mubr.bf16.mxu0 0
      %9162 = vmatmul.mubr.bf16.gmra.mrb[0].mxu0 %v8978
      %v9163 = vpop.f32.mrb[0].mxu0
      %v9164 = vadd.f32 0.0, %v9163
      %v9165 = vpop.f32.mrb[0].mxu0
      %v9166 = vpop.f32.mrb[0].mxu0
      %v9167 = vadd.f32 0.0, %v9166
      %v9168 = vpop.f32.mrb[0].mxu0
      %9169 = vmatprep.mubr.bf16.mxu0 0
      %9170 = vmatmul.mubr.bf16.gmra.mrb[0].mxu0 %v8979
      %v9171 = vpop.f32.mrb[0].mxu0
      %v9172 = vadd.f32 0.0, %v9171
      %v9173 = vpop.f32.mrb[0].mxu0
      %v9174 = vpop.f32.mrb[0].mxu0
      %v9175 = vadd.f32 0.0, %v9174
      %v9176 = vpop.f32.mrb[0].mxu0
      %9177 = vmatprep.mubr.bf16.mxu0 0
      %9178 = vmatmul.mubr.bf16.gmra.mrb[0].mxu0 %v8980
      %v9179 = vpop.f32.mrb[0].mxu0
      %v9180 = vadd.f32 0.0, %v9179
      %v9181 = vpop.f32.mrb[0].mxu0
      %v9182 = vpop.f32.mrb[0].mxu0
      %v9183 = vadd.f32 0.0, %v9182
      %v9184 = vpop.f32.mrb[0].mxu0
      %9185 = vmatprep.mubr.bf16.mxu0 0
      %9186 = vmatmul.mubr.bf16.gmra.mrb[0].mxu0 %v8981
      %v9187 = vpop.f32.mrb[0].mxu0
      %v9188 = vadd.f32 0.0, %v9187
      %v9189 = vpop.f32.mrb[0].mxu0
      %v9190 = vpop.f32.mrb[0].mxu0
      %v9191 = vadd.f32 0.0, %v9190
      %v9192 = vpop.f32.mrb[0].mxu0
      %9193 = vmatprep.mubr.bf16.mxu0 0
      %9194 = vmatmul.mubr.bf16.gmra.mrb[0].mxu0 %v8982
      %v9195 = vpop.f32.mrb[0].mxu0
      %v9196 = vadd.f32 0.0, %v9195
      %v9197 = vpop.f32.mrb[0].mxu0
      %v9198 = vpop.f32.mrb[0].mxu0
      %v9199 = vadd.f32 0.0, %v9198
      %v9200 = vpop.f32.mrb[0].mxu0
      %9201 = vmatprep.mubr.bf16.mxu0 0
      %9202 = vmatmul.mubr.bf16.gmra.mrb[0].mxu0 %v8983
      %v9203 = vpop.f32.mrb[0].mxu0
      %v9204 = vadd.f32 0.0, %v9203
      %v9205 = vpop.f32.mrb[0].mxu0
      %v9206 = vpop.f32.mrb[0].mxu0
      %v9207 = vadd.f32 0.0, %v9206
      %v9208 = vpop.f32.mrb[0].mxu0
      %9209 = vmatprep.mubr.bf16.mxu0 0
      %9210 = vmatmul.mubr.bf16.gmra.mrb[0].mxu0 %v8984
      %v9211 = vpop.f32.mrb[0].mxu0
      %v9212 = vadd.f32 0.0, %v9211
      %v9213 = vpop.f32.mrb[0].mxu0
      %v9214 = vpop.f32.mrb[0].mxu0
      %v9215 = vadd.f32 0.0, %v9214
      %v9216 = vpop.f32.mrb[0].mxu0
      %9217 = vmatprep.mubr.bf16.mxu0 0
      %9218 = vmatmul.mubr.bf16.gmra.mrb[0].mxu0 %v8985
      %v9219 = vpop.f32.mrb[0].mxu0
      %v9220 = vadd.f32 0.0, %v9219
      %v9221 = vpop.f32.mrb[0].mxu0
      %v9222 = vpop.f32.mrb[0].mxu0
      %v9223 = vadd.f32 0.0, %v9222
      %v9224 = vpop.f32.mrb[0].mxu0
      %9225 = vmatprep.mubr.bf16.mxu0 0
      %9226 = vmatmul.mubr.bf16.gmra.mrb[0].mxu0 %v8986
      %v9227 = vpop.f32.mrb[0].mxu0
      %v9228 = vadd.f32 0.0, %v9227
      %v9229 = vpop.f32.mrb[0].mxu0
      %v9230 = vpop.f32.mrb[0].mxu0
      %v9231 = vadd.f32 0.0, %v9230
      %v9232 = vpop.f32.mrb[0].mxu0
      %9233 = vmatprep.mubr.bf16.mxu0 0
      %9234 = vmatmul.mubr.bf16.gmra.mrb[0].mxu0 %v8987
      %v9235 = vpop.f32.mrb[0].mxu0
      %v9236 = vadd.f32 0.0, %v9235
      %v9237 = vpop.f32.mrb[0].mxu0
      %v9238 = vpop.f32.mrb[0].mxu0
      %v9239 = vadd.f32 0.0, %v9238
      %v9240 = vpop.f32.mrb[0].mxu0
      %9241 = vmatprep.mubr.bf16.mxu0 0
      %9242 = vmatmul.mubr.bf16.gmra.mrb[0].mxu0 %v8988
      %v9243 = vpop.f32.mrb[0].mxu0
      %v9244 = vadd.f32 0.0, %v9243
      %v9245 = vpop.f32.mrb[0].mxu0
      %v9246 = vpop.f32.mrb[0].mxu0
      %v9247 = vadd.f32 0.0, %v9246
      %v9248 = vpop.f32.mrb[0].mxu0
      %9249 = vmatprep.mubr.bf16.mxu0 0
      %9250 = vmatmul.mubr.bf16.gmra.mrb[0].mxu0 %v8989
      %v9251 = vpop.f32.mrb[0].mxu0
      %v9252 = vadd.f32 0.0, %v9251
      %v9253 = vpop.f32.mrb[0].mxu0
      %v9254 = vpop.f32.mrb[0].mxu0
      %v9255 = vadd.f32 0.0, %v9254
      %v9256 = vpop.f32.mrb[0].mxu0
      %9257 = vmatprep.mubr.bf16.mxu0 0
      %9258 = vmatmul.mubr.bf16.gmra.mrb[0].mxu0 %v8990
      %v9259 = vpop.f32.mrb[0].mxu0
      %v9260 = vadd.f32 0.0, %v9259
      %v9261 = vpop.f32.mrb[0].mxu0
      %v9262 = vpop.f32.mrb[0].mxu0
      %v9263 = vadd.f32 0.0, %v9262
      %v9264 = vpop.f32.mrb[0].mxu0
      %9265 = vmatprep.mubr.bf16.mxu0 0
      %9266 = vmatmul.mubr.bf16.gmra.mrb[0].mxu0 %v8991
      %v9267 = vpop.f32.mrb[0].mxu0
      %v9268 = vadd.f32 0.0, %v9267
      %v9269 = vpop.f32.mrb[0].mxu0
      %v9270 = vpop.f32.mrb[0].mxu0
      %v9271 = vadd.f32 0.0, %v9270
      %v9272 = vpop.f32.mrb[0].mxu0
      %9273 = vmatprep.mubr.bf16.mxu0 0
      %9274 = vmatmul.mubr.bf16.gmra.mrb[0].mxu0 %v8992
      %v9275 = vpop.f32.mrb[0].mxu0
      %v9276 = vadd.f32 0.0, %v9275
      %v9277 = vpop.f32.mrb[0].mxu0
      %v9278 = vpop.f32.mrb[0].mxu0
      %v9279 = vadd.f32 0.0, %v9278
      %v9280 = vpop.f32.mrb[0].mxu0
      %9281 = vdwg.mxu0
      %v9282 = vld [vmem:[%s7] sm:$0x1]
      %v9284 = vlaneseq
      %v9285 = vshrl.u32 %v9284, 7
      %v9286 = vsub.s32 0, %v9285
      %v9287 = vrot.slane %v9282, %v9286
      %v9289 = vmul.f32 %v8873, %v9287
      %v9290 = vmul.f32 %v8874, %v9287
      %v9291 = vmul.f32 %v8875, %v9287
      %v9292 = vmul.f32 %v8876, %v9287
      %v9293 = vmul.f32 %v8877, %v9287
      %v9294 = vmul.f32 %v8878, %v9287
      %v9295 = vmul.f32 %v8879, %v9287
      %v9296 = vmul.f32 %v8880, %v9287
      %v9297 = vmul.f32 %v8881, %v9287
      %v9298 = vmul.f32 %v8882, %v9287
      %v9299 = vmul.f32 %v8883, %v9287
      %v9300 = vmul.f32 %v8884, %v9287
      %v9301 = vmul.f32 %v8885, %v9287
      %v9302 = vmul.f32 %v8886, %v9287
      %v9303 = vmul.f32 %v8887, %v9287
      %v9304 = vmul.f32 %v8888, %v9287
      %v9305 = vmul.f32 %v8889, %v9287
      %v9306 = vmul.f32 %v8890, %v9287
      %v9307 = vmul.f32 %v8891, %v9287
      %v9308 = vmul.f32 %v8892, %v9287
      %v9309 = vmul.f32 %v8893, %v9287
      %v9310 = vmul.f32 %v8894, %v9287
      %v9311 = vmul.f32 %v8895, %v9287
      %v9312 = vmul.f32 %v8896, %v9287
      %v9313 = vmul.f32 %v8897, %v9287
      %v9314 = vmul.f32 %v8898, %v9287
      %v9315 = vmul.f32 %v8899, %v9287
      %v9316 = vmul.f32 %v8900, %v9287
      %v9317 = vmul.f32 %v8901, %v9287
      %v9318 = vmul.f32 %v8902, %v9287
      %v9319 = vmul.f32 %v8903, %v9287
      %v9320 = vmul.f32 %v8904, %v9287
      %v9321 = vmul.f32 %v8905, %v9287
      %v9322 = vmul.f32 %v8906, %v9287
      %v9323 = vmul.f32 %v8907, %v9287
      %v9324 = vmul.f32 %v8908, %v9287
      %v9325 = vmul.f32 %v8909, %v9287
      %v9326 = vmul.f32 %v8910, %v9287
      %v9327 = vmul.f32 %v8911, %v9287
      %v9328 = vmul.f32 %v8912, %v9287
      %v9329 = vmul.f32 %v8913, %v9287
      %v9330 = vmul.f32 %v8914, %v9287
      %v9331 = vmul.f32 %v8915, %v9287
      %v9332 = vmul.f32 %v8916, %v9287
      %v9333 = vmul.f32 %v8917, %v9287
      %v9334 = vmul.f32 %v8918, %v9287
      %v9335 = vmul.f32 %v8919, %v9287
      %v9336 = vmul.f32 %v8920, %v9287
      %v9337 = vadd.f32 %v9289, %v9092
      %v9338 = vadd.f32 %v9290, %v9095
      %v9339 = vadd.f32 %v9291, %v9100
      %v9340 = vadd.f32 %v9292, %v9103
      %v9341 = vadd.f32 %v9293, %v9108
      %v9342 = vadd.f32 %v9294, %v9111
      %v9343 = vadd.f32 %v9295, %v9116
      %v9344 = vadd.f32 %v9296, %v9119
      %v9345 = vadd.f32 %v9297, %v9124
      %v9346 = vadd.f32 %v9298, %v9127
      %v9347 = vadd.f32 %v9299, %v9132
      %v9348 = vadd.f32 %v9300, %v9135
      %v9349 = vadd.f32 %v9301, %v9140
      %v9350 = vadd.f32 %v9302, %v9143
      %v9351 = vadd.f32 %v9303, %v9148
      %v9352 = vadd.f32 %v9304, %v9151
      %v9353 = vadd.f32 %v9305, %v9156
      %v9354 = vadd.f32 %v9306, %v9159
      %v9355 = vadd.f32 %v9307, %v9164
      %v9356 = vadd.f32 %v9308, %v9167
      %v9357 = vadd.f32 %v9309, %v9172
      %v9358 = vadd.f32 %v9310, %v9175
      %v9359 = vadd.f32 %v9311, %v9180
      %v9360 = vadd.f32 %v9312, %v9183
      %v9361 = vadd.f32 %v9313, %v9188
      %v9362 = vadd.f32 %v9314, %v9191
      %v9363 = vadd.f32 %v9315, %v9196
      %v9364 = vadd.f32 %v9316, %v9199
      %v9365 = vadd.f32 %v9317, %v9204
      %v9366 = vadd.f32 %v9318, %v9207
      %v9367 = vadd.f32 %v9319, %v9212
      %v9368 = vadd.f32 %v9320, %v9215
      %v9369 = vadd.f32 %v9321, %v9220
      %v9370 = vadd.f32 %v9322, %v9223
      %v9371 = vadd.f32 %v9323, %v9228
      %v9372 = vadd.f32 %v9324, %v9231
      %v9373 = vadd.f32 %v9325, %v9236
      %v9374 = vadd.f32 %v9326, %v9239
      %v9375 = vadd.f32 %v9327, %v9244
      %v9376 = vadd.f32 %v9328, %v9247
      %v9377 = vadd.f32 %v9329, %v9252
      %v9378 = vadd.f32 %v9330, %v9255
      %v9379 = vadd.f32 %v9331, %v9260
      %v9380 = vadd.f32 %v9332, %v9263
      %v9381 = vadd.f32 %v9333, %v9268
      %v9382 = vadd.f32 %v9334, %v9271
      %v9383 = vadd.f32 %v9335, %v9276
      %v9384 = vadd.f32 %v9336, %v9279
      %v9385 = vld [vmem:[%s8] sm:$0x1]
      %v9387 = vlaneseq
      %v9388 = vshrl.u32 %v9387, 7
      %v9389 = vsub.s32 0, %v9388
      %v9390 = vrot.slane %v9385, %v9389
      %v9392 = vadd.f32 %v9337, %v9390
      %v9393 = vadd.f32 %v9338, %v9390
      %v9394 = vadd.f32 %v9339, %v9390
      %v9395 = vadd.f32 %v9340, %v9390
      %v9396 = vadd.f32 %v9341, %v9390
      %v9397 = vadd.f32 %v9342, %v9390
      %v9398 = vadd.f32 %v9343, %v9390
      %v9399 = vadd.f32 %v9344, %v9390
      %v9400 = vadd.f32 %v9345, %v9390
      %v9401 = vadd.f32 %v9346, %v9390
      %v9402 = vadd.f32 %v9347, %v9390
      %v9403 = vadd.f32 %v9348, %v9390
      %v9404 = vadd.f32 %v9349, %v9390
      %v9405 = vadd.f32 %v9350, %v9390
      %v9406 = vadd.f32 %v9351, %v9390
      %v9407 = vadd.f32 %v9352, %v9390
      %v9408 = vadd.f32 %v9353, %v9390
      %v9409 = vadd.f32 %v9354, %v9390
      %v9410 = vadd.f32 %v9355, %v9390
      %v9411 = vadd.f32 %v9356, %v9390
      %v9412 = vadd.f32 %v9357, %v9390
      %v9413 = vadd.f32 %v9358, %v9390
      %v9414 = vadd.f32 %v9359, %v9390
      %v9415 = vadd.f32 %v9360, %v9390
      %v9416 = vadd.f32 %v9361, %v9390
      %v9417 = vadd.f32 %v9362, %v9390
      %v9418 = vadd.f32 %v9363, %v9390
      %v9419 = vadd.f32 %v9364, %v9390
      %v9420 = vadd.f32 %v9365, %v9390
      %v9421 = vadd.f32 %v9366, %v9390
      %v9422 = vadd.f32 %v9367, %v9390
      %v9423 = vadd.f32 %v9368, %v9390
      %v9424 = vadd.f32 %v9369, %v9390
      %v9425 = vadd.f32 %v9370, %v9390
      %v9426 = vadd.f32 %v9371, %v9390
      %v9427 = vadd.f32 %v9372, %v9390
      %v9428 = vadd.f32 %v9373, %v9390
      %v9429 = vadd.f32 %v9374, %v9390
      %v9430 = vadd.f32 %v9375, %v9390
      %v9431 = vadd.f32 %v9376, %v9390
      %v9432 = vadd.f32 %v9377, %v9390
      %v9433 = vadd.f32 %v9378, %v9390
      %v9434 = vadd.f32 %v9379, %v9390
      %v9435 = vadd.f32 %v9380, %v9390
      %v9436 = vadd.f32 %v9381, %v9390
      %v9437 = vadd.f32 %v9382, %v9390
      %v9438 = vadd.f32 %v9383, %v9390
      %v9439 = vadd.f32 %v9384, %v9390
      %v9440 = vmax.f32 %v9392, 0.0
      %v9441 = vmax.f32 %v9393, 0.0
      %v9442 = vmax.f32 %v9394, 0.0
      %v9443 = vmax.f32 %v9395, 0.0
      %v9444 = vmax.f32 %v9396, 0.0
      %v9445 = vmax.f32 %v9397, 0.0
      %v9446 = vmax.f32 %v9398, 0.0
      %v9447 = vmax.f32 %v9399, 0.0
      %v9448 = vmax.f32 %v9400, 0.0
      %v9449 = vmax.f32 %v9401, 0.0
      %v9450 = vmax.f32 %v9402, 0.0
      %v9451 = vmax.f32 %v9403, 0.0
      %v9452 = vmax.f32 %v9404, 0.0
      %v9453 = vmax.f32 %v9405, 0.0
      %v9454 = vmax.f32 %v9406, 0.0
      %v9455 = vmax.f32 %v9407, 0.0
      %v9456 = vmax.f32 %v9408, 0.0
      %v9457 = vmax.f32 %v9409, 0.0
      %v9458 = vmax.f32 %v9410, 0.0
      %v9459 = vmax.f32 %v9411, 0.0
      %v9460 = vmax.f32 %v9412, 0.0
      %v9461 = vmax.f32 %v9413, 0.0
      %v9462 = vmax.f32 %v9414, 0.0
      %v9463 = vmax.f32 %v9415, 0.0
      %v9464 = vmax.f32 %v9416, 0.0
      %v9465 = vmax.f32 %v9417, 0.0
      %v9466 = vmax.f32 %v9418, 0.0
      %v9467 = vmax.f32 %v9419, 0.0
      %v9468 = vmax.f32 %v9420, 0.0
      %v9469 = vmax.f32 %v9421, 0.0
      %v9470 = vmax.f32 %v9422, 0.0
      %v9471 = vmax.f32 %v9423, 0.0
      %v9472 = vmax.f32 %v9424, 0.0
      %v9473 = vmax.f32 %v9425, 0.0
      %v9474 = vmax.f32 %v9426, 0.0
      %v9475 = vmax.f32 %v9427, 0.0
      %v9476 = vmax.f32 %v9428, 0.0
      %v9477 = vmax.f32 %v9429, 0.0
      %v9478 = vmax.f32 %v9430, 0.0
      %v9479 = vmax.f32 %v9431, 0.0
      %v9480 = vmax.f32 %v9432, 0.0
      %v9481 = vmax.f32 %v9433, 0.0
      %v9482 = vmax.f32 %v9434, 0.0
      %v9483 = vmax.f32 %v9435, 0.0
      %v9484 = vmax.f32 %v9436, 0.0
      %v9485 = vmax.f32 %v9437, 0.0
      %v9486 = vmax.f32 %v9438, 0.0
      %v9487 = vmax.f32 %v9439, 0.0
      %9488 = vst [vmem:[%s379] sm:$0xff] %v9440
      %9489 = vst [vmem:[%s379 + $0x8] sm:$0xff] %v9441
      %9490 = vst [vmem:[%s379 + $0x10] sm:$0xff] %v9442
      %9491 = vst [vmem:[%s379 + $0x18] sm:$0xff] %v9443
      %9492 = vst [vmem:[%s379 + $0x20] sm:$0xff] %v9444
      %9493 = vst [vmem:[%s379 + $0x28] sm:$0xff] %v9445
      %9494 = vst [vmem:[%s379 + $0x30] sm:$0xff] %v9446
      %9495 = vst [vmem:[%s379 + $0x38] sm:$0xff] %v9447
      %9496 = vst [vmem:[%s379 + $0x40] sm:$0xff] %v9448
      %9497 = vst [vmem:[%s379 + $0x48] sm:$0xff] %v9449
      %9498 = vst [vmem:[%s379 + $0x50] sm:$0xff] %v9450
      %9499 = vst [vmem:[%s379 + $0x58] sm:$0xff] %v9451
      %9500 = vst [vmem:[%s379 + $0x60] sm:$0xff] %v9452
      %9501 = vst [vmem:[%s379 + $0x68] sm:$0xff] %v9453
      %9502 = vst [vmem:[%s379 + $0x70] sm:$0xff] %v9454
      %9503 = vst [vmem:[%s379 + $0x78] sm:$0xff] %v9455
      %9504 = vst [vmem:[%s379 + $0x80] sm:$0xff] %v9456
      %9505 = vst [vmem:[%s379 + $0x88] sm:$0xff] %v9457
      %9506 = vst [vmem:[%s379 + $0x90] sm:$0xff] %v9458
      %9507 = vst [vmem:[%s379 + $0x98] sm:$0xff] %v9459
      %9508 = vst [vmem:[%s379 + $0xa0] sm:$0xff] %v9460
      %9509 = vst [vmem:[%s379 + $0xa8] sm:$0xff] %v9461
      %9510 = vst [vmem:[%s379 + $0xb0] sm:$0xff] %v9462
      %9511 = vst [vmem:[%s379 + $0xb8] sm:$0xff] %v9463
      %9512 = vst [vmem:[%s379 + $0xc0] sm:$0xff] %v9464
      %9513 = vst [vmem:[%s379 + $0xc8] sm:$0xff] %v9465
      %9514 = vst [vmem:[%s379 + $0xd0] sm:$0xff] %v9466
      %9515 = vst [vmem:[%s379 + $0xd8] sm:$0xff] %v9467
      %9516 = vst [vmem:[%s379 + $0xe0] sm:$0xff] %v9468
      %9517 = vst [vmem:[%s379 + $0xe8] sm:$0xff] %v9469
      %9518 = vst [vmem:[%s379 + $0xf0] sm:$0xff] %v9470
      %9519 = vst [vmem:[%s379 + $0xf8] sm:$0xff] %v9471
      %9520 = vst [vmem:[%s379 + $0x100] sm:$0xff] %v9472
      %9521 = vst [vmem:[%s379 + $0x108] sm:$0xff] %v9473
      %9522 = vst [vmem:[%s379 + $0x110] sm:$0xff] %v9474
      %9523 = vst [vmem:[%s379 + $0x118] sm:$0xff] %v9475
      %9524 = vst [vmem:[%s379 + $0x120] sm:$0xff] %v9476
      %9525 = vst [vmem:[%s379 + $0x128] sm:$0xff] %v9477
      %9526 = vst [vmem:[%s379 + $0x130] sm:$0xff] %v9478
      %9527 = vst [vmem:[%s379 + $0x138] sm:$0xff] %v9479
      %9528 = vst [vmem:[%s379 + $0x140] sm:$0xff] %v9480
      %9529 = vst [vmem:[%s379 + $0x148] sm:$0xff] %v9481
      %9530 = vst [vmem:[%s379 + $0x150] sm:$0xff] %v9482
      %9531 = vst [vmem:[%s379 + $0x158] sm:$0xff] %v9483
      %9532 = vst [vmem:[%s379 + $0x160] sm:$0xff] %v9484
      %9533 = vst [vmem:[%s379 + $0x168] sm:$0xff] %v9485
      %9534 = vst [vmem:[%s379 + $0x170] sm:$0xff] %v9486
      %9535 = vst [vmem:[%s379 + $0x178] sm:$0xff] %v9487
      %s9536 = sadd.s32 %s24, %s25
      %s9537 = smul.u32 48, %s9536
      %p9538 = scmp.lt.s32.totalorder %s9537, 95
      %s9539 = scalar_select %p9538, %s9537, 95
      %s9540 = smul.addr %s9539, 8
      %s9541 = scalar_lea.vmem %s9, %s9540
      // Predicated region
      $region57: #{resblock_forward.1} parent=55 // pred_check
        %p9542 = pneg %p253
      $region58: #{resblock_forward.1} parent=55 // pred_check_branch
        %9544 = sbr.rel (%p9542) target = $region60
      $region59: #{resblock_forward.1} parent=55 // pred_region
        %s9545 = sadd.s32 %s24, %s25
        %s9546 = smul.u32 48, %s9545
      $region60: #{resblock_forward.1} parent=55 // pred_fallthru
        _
    $region56: #{resblock_forward.1} parent=5 // pred_fallthru
      _
    %p9547 = scmp.le.s32.totalorder 2, %s15
    // Predicated region
    $region61: #{resblock_forward.1} parent=5 // pred_check
      %p9548 = pneg %p9547
    $region62: #{resblock_forward.1} parent=5 // pred_check_branch
      %9550 = sbr.rel (%p9548) target = $region64
    $region63: #{resblock_forward.1} parent=5 // pred_region
      %s9551 = ssub.s32 %s15, 2
      // Predicated region
      $region65: #{resblock_forward.1} parent=63 // pred_check
        %p9552 = pneg %p259
      $region66: #{resblock_forward.1} parent=63 // pred_check_branch
        %9554 = sbr.rel (%p9552) target = $region68
      $region67: #{resblock_forward.1} parent=63 // pred_region
        %s9555 = sadd.s32 %s26, %s27
        %s9556 = smul.u32 48, %s9555
        %p9557 = scmp.lt.s32.totalorder %s9556, 95
        %s9558 = scalar_select %p9557, %s9556, 95
        %s9559 = smul.addr %s9558, 8
        %s9560 = scalar_lea.vmem %s9, %s9559
      $region68: #{resblock_forward.1} parent=63 // pred_fallthru
        _
    $region64: #{resblock_forward.1} parent=5 // pred_fallthru
      _
  $region6: #{resblock_forward.1} parent=0 // loop_footer
    %s19 = sadd.s32 1, %s15
  $region7: #{resblock_forward.1} parent=0 // loop_footer_branch
    %14 = sbr.rel target = $region3
  $region8: #{resblock_forward.1} parent=0 // loop_exit
    _

</llo_original>
